<compile_context>
chip_gen: v6e
topology: v6e:2x2x1
jax: 0.10.0
libtpu: 0.0.40
codegen_flags: <defaults>
</compile_context>

<pallas_src>
import functools

import jax
import jax.numpy as jnp
from jax.experimental import pallas as pl
from jax.experimental.pallas import tpu as pltpu

_LANE = 128


def _round_up(x, m):
    return ((x + m - 1) // m) * m


def _vmem_budget_bytes():
    """~75% of per-core VMEM: ~96 MiB on v5e/v6e (128 MiB), ~48 MiB on v7x (64 MiB)."""
    cap = 64 * 1024 * 1024  # conservative fallback (v7x per-TC)
    try:
        cap = int(pltpu.get_tpu_info().vmem_capacity_bytes)
    except Exception:
        pass
    return int(cap * 3 // 4)


def _tap_bounds(ky, kx, H, W):
    dy, dx = ky - 1, kx - 1
    y0, y1 = max(0, -dy), H - max(0, dy)
    x0, x1 = max(0, -dx), W - max(0, dx)
    return dy, dx, y0, y1, x0, x1


def _residual_stack_kernel(x_ref, w3_ref, w1_ref, o_ref, patches_ref, *, n_layers):
    """ResidualStack forward for one batch tile (NHWC, channels on lanes).

    x_ref       : (Bt, H, W, CP)    input tile (f32); CP = C padded to 128
    w3_ref      : (9*CP, RH)        shared 3x3 conv weight, im2col layout
    w1_ref      : (RH, CP)          shared 1x1 conv weight
    o_ref       : (Bt, H, W, CP)    output tile; also holds the f32 residual carry
    patches_ref : (Bt, H, W, 9*CP)  im2col scratch (MXU dtype); per-tap border strips
                                    encode the conv's padding=1 zeros
    """
    Bt, H, W, CP = x_ref.shape
    K9 = patches_ref.shape[-1]          # 9 * CP
    M = Bt * H * W
    mxu_dtype = patches_ref.dtype

    # --- zero ONLY the per-tap border strips of the im2col scratch, once per grid
    # step.  The interior is fully rewritten every layer; the borders stay zero and
    # supply the conv's padding=1.  Done per grid step (not pl.when(pid == 0)) so it
    # remains correct when the "parallel" batch axis is sharded across TensorCores
    # (each core has its own scratch and only one of them sees program_id 0).
    for ky in range(3):
        for kx in range(3):
            dy, dx, _, _, _, _ = _tap_bounds(ky, kx, H, W)
            c0 = (ky * 3 + kx) * CP
            if dy == -1:
                patches_ref[:, 0:1, :, c0:c0 + CP] = jnp.zeros((Bt, 1, W, CP), mxu_dtype)
            elif dy == 1:
                patches_ref[:, H - 1:H, :, c0:c0 + CP] = jnp.zeros((Bt, 1, W, CP), mxu_dtype)
            if dx == -1:
                patches_ref[:, :, 0:1, c0:c0 + CP] = jnp.zeros((Bt, H, 1, CP), mxu_dtype)
            elif dx == 1:
                patches_ref[:, :, W - 1:W, c0:c0 + CP] = jnp.zeros((Bt, H, 1, CP), mxu_dtype)

    # Residual carry lives in the resident f32 output block.
    o_ref[...] = x_ref[...]

    def layer_body(_, carry):
        r = jnp.maximum(o_ref[...], 0.0).astype(mxu_dtype)        # ReLU before conv3x3

        # im2col: 9 shifted interior stores of r into the patch scratch.  With CP a
        # multiple of 128 every tap block is lane-tile aligned (unmasked stores).
        for ky in range(3):
            for kx in range(3):
                dy, dx, y0, y1, x0, x1 = _tap_bounds(ky, kx, H, W)
                c0 = (ky * 3 + kx) * CP
                patches_ref[:, y0:y1, x0:x1, c0:c0 + CP] = (
                    r[:, y0 + dy:y1 + dy, x0 + dx:x1 + dx, :])

        # Single K = 9*CP matmul per layer (conv3x3, padding=1, bias=False).
        # Weight refs are read lazily at the point of use (no hoisted tap values).
        p = patches_ref[...].reshape(M, K9)
        acc = jnp.dot(p, w3_ref[...], preferred_element_type=jnp.float32)      # (M, RH)

        h = jnp.maximum(acc, 0.0).astype(mxu_dtype)               # ReLU before conv1x1
        y = jnp.dot(h, w1_ref[...], preferred_element_type=jnp.float32)        # (M, CP)

        o_ref[...] = o_ref[...] + y.reshape(Bt, H, W, CP).astype(o_ref.dtype)  # residual
        return carry

    jax.lax.fori_loop(0, n_layers, layer_body, 0, unroll=True)

    o_ref[...] = jnp.maximum(o_ref[...], 0.0)                     # final F.relu


@functools.partial(jax.jit, static_argnames=("n_res_layers", "mxu_dtype"))
def residual_stack_forward(x_nchw, w3_torch, w1_torch, *, n_res_layers,
                           mxu_dtype=jnp.bfloat16):
    """x_nchw  : (B, C, H, W) f32 (PyTorch layout)
       w3_torch: (res_h, C, 3, 3)  Conv2d weight, bias=False
       w1_torch: (C, res_h, 1, 1)  Conv2d weight, bias=False
    """
    B, C, H, W = x_nchw.shape
    res_h = w3_torch.shape[0]
    assert w1_torch.shape[0] == C, "h_dim must equal in_dim for the residual add"
    assert w3_torch.shape[1] == C and w3_torch.shape[2:] == (3, 3)
    assert w1_torch.shape[1] == res_h and w1_torch.shape[2:] == (1, 1)

    CP = _round_up(C, _LANE)         # lane-dense I/O channels
    RH = _round_up(res_h, _LANE)     # lane-dense hidden channels
    mxu_bytes = jnp.dtype(mxu_dtype).itemsize
    # Note: W % 8 == 0 keeps the in-kernel (Bt,H,W,9CP)->(Bt*H*W,9CP) reshape a pure
    # re-indexing (no relayout).  Other W still work, just slower.

    # --- weights in shared im2col layout -------------------------------------
    # (res_h, C, 3, 3) -> (ky, kx, Cin, Cout) -> zero-pad -> (9*CP, RH)
    w3 = jnp.transpose(w3_torch, (2, 3, 1, 0)).astype(jnp.float32)
    w3 = jnp.pad(w3, ((0, 0), (0, 0), (0, CP - C), (0, RH - res_h)))
    w3 = w3.reshape(9 * CP, RH).astype(mxu_dtype)
    # (C, res_h, 1, 1) -> (res_h, C) -> zero-pad -> (RH, CP)
    w1 = jnp.transpose(w1_torch[:, :, 0, 0], (1, 0)).astype(jnp.float32)
    w1 = jnp.pad(w1, ((0, RH - res_h), (0, CP - C))).astype(mxu_dtype)

    # --- lane-dense NHWC activations ------------------------------------------
    x_nhwc = jnp.transpose(x_nchw, (0, 2, 3, 1)).astype(jnp.float32)
    x_nhwc = jnp.pad(x_nhwc, ((0, 0), (0, 0), (0, 0), (0, CP - C)))

    # --- batch tile sized from the per-generation VMEM budget -----------------
    budget = _vmem_budget_bytes()
    io_block = H * W * CP * 4
    per_elem = (2 * 2 * io_block                                   # in+out blocks, 2x buffered
                + H * W * 9 * CP * mxu_bytes                       # im2col scratch
                + H * W * (RH * 4 + RH * mxu_bytes + CP * mxu_bytes + CP * 4))  # live vals
    fixed = 2 * (9 * CP * RH + RH * CP) * mxu_bytes                # weights
    Bt = 1
    for cand in range(1, B + 1):
        if B % cand:
            continue
        if fixed + cand * per_elem > budget:
            continue
        if B // cand < 2 and B >= 2:
            continue                                               # keep >= 2 grid steps (megacore)
        Bt = cand

    kernel = functools.partial(_residual_stack_kernel, n_layers=n_res_layers)

    out_nhwc = pl.pallas_call(
        kernel,
        out_shape=jax.ShapeDtypeStruct((B, H, W, CP), jnp.float32),
        grid_spec=pltpu.PrefetchScalarGridSpec(
            num_scalar_prefetch=0,
            grid=(B // Bt,),                                       # Bt batch elements / step
            in_specs=[
                pl.BlockSpec((Bt, H, W, CP), lambda b: (b, 0, 0, 0)),
                pl.BlockSpec((9 * CP, RH), lambda b: (0, 0)),      # constant index map
                pl.BlockSpec((RH, CP), lambda b: (0, 0)),          # constant index map
            ],
            out_specs=pl.BlockSpec((Bt, H, W, CP), lambda b: (b, 0, 0, 0)),
            scratch_shapes=[pltpu.VMEM((Bt, H, W, 9 * CP), mxu_dtype)],
        ),
        input_output_aliases={0: 0},                               # x tile aliased to output
        compiler_params=pltpu.CompilerParams(
            dimension_semantics=("parallel",),                     # megacore on v7x
            vmem_limit_bytes=budget,                               # ~96 MiB v5e/v6e, ~48 MiB v7x
        ),
    )(x_nhwc, w3, w1)

    out_nhwc = out_nhwc[..., :C]                                   # drop channel padding
    return jnp.transpose(out_nhwc, (0, 3, 1, 2))                   # back to NCHW


def _reference_forward(x_nchw, w3_torch, w1_torch, n_res_layers):
    """Pure-JAX reference matching the PyTorch module (NCHW convs, shared weights)."""
    dn = jax.lax.conv_dimension_numbers(x_nchw.shape, w3_torch.shape,
                                        ("NCHW", "OIHW", "NCHW"))
    x = x_nchw
    for _ in range(n_res_layers):
        h = jax.nn.relu(x)
        h = jax.lax.conv_general_dilated(h, w3_torch, (1, 1), ((1, 1), (1, 1)),
                                         dimension_numbers=dn)
        h = jax.nn.relu(h)
        h = jax.lax.conv_general_dilated(h, w1_torch, (1, 1), ((0, 0), (0, 0)),
                                         dimension_numbers=dn)
        x = x + h
    return jax.nn.relu(x)


if __name__ == "__main__":
    # Small shapes consistent with the module: in_dim == h_dim (residual add).
    B, C, H, W = 2, 4, 16, 16
    res_h_dim = 8
    n_res_layers = 3

    key = jax.random.PRNGKey(0)
    kx, k3, k1 = jax.random.split(key, 3)

    x = jax.random.normal(kx, (B, C, H, W), dtype=jnp.float32)
    # Deterministic synthetic weights (PyTorch Conv2d layouts, bias=False).
    w3 = jax.random.normal(k3, (res_h_dim, C, 3, 3), dtype=jnp.float32) * 0.1
    w1 = jax.random.normal(k1, (C, res_h_dim, 1, 1), dtype=jnp.float32) * 0.1

    ref = jax.block_until_ready(_reference_forward(x, w3, w1, n_res_layers))

    # f32-operand MXU path: tight-ish check against the XLA conv reference.
    out_f32 = jax.block_until_ready(
        residual_stack_forward(x, w3, w1, n_res_layers=n_res_layers,
                               mxu_dtype=jnp.float32))
    if not jnp.allclose(out_f32, ref, atol=2e-3, rtol=2e-3):
        raise AssertionError("f32 Pallas ResidualStack does not match JAX reference")

    # Default bf16-operand / f32-accumulate MXU path: looser tolerance
    # (activations quantized to bf16 per layer; error compounds over layers).
    out_bf16 = jax.block_until_ready(
        residual_stack_forward(x, w3, w1, n_res_layers=n_res_layers))
    if not jnp.allclose(out_bf16, ref, atol=5e-2, rtol=5e-2):
        raise AssertionError("bf16 Pallas ResidualStack does not match JAX reference")

    print("KERNEL_OK")
</pallas_src>

<mosaic_0001>
module attributes {stable_mosaic.version = 11 : i64} {
  func.func @_residual_stack_kernel(%arg0: i32, %arg1: memref<1x16x16x128xf32, #tpu.memory_space<vmem>>, %arg2: memref<1152x128xf32, #tpu.memory_space<vmem>>, %arg3: memref<128x128xf32, #tpu.memory_space<vmem>>, %arg4: memref<1x16x16x128xf32, #tpu.memory_space<vmem>>, %arg5: memref<1x16x16x1152xf32, #tpu.memory_space<vmem>>) attributes {dimension_semantics = [#tpu.dimension_semantics<parallel>], iteration_bounds = array<i64: 2>, scalar_prefetch = 0 : i64, scratch_operands = 1 : i64, tpu.core_type = #tpu.core_type<tc>, window_params = [{transform_indices = @transform_0, window_bounds = array<i64: 1, 16, 16, 128>}, {pipeline_mode = #tpu.pipeline_mode<synchronous>, transform_indices = @transform_1, window_bounds = array<i64: 1152, 128>}, {pipeline_mode = #tpu.pipeline_mode<synchronous>, transform_indices = @transform_2, window_bounds = array<i64: 128, 128>}, {transform_indices = @transform_3, window_bounds = array<i64: 1, 16, 16, 128>}]} {
    %cst = arith.constant 0.000000e+00 : f32
    %0 = vector.broadcast %cst : f32 to vector<1x1x16x128xf32>
    %c0 = arith.constant 0 : index
    %c0_0 = arith.constant 0 : index
    %c0_1 = arith.constant 0 : index
    %c0_2 = arith.constant 0 : index
    %1 = vector.load %arg5[%c0, %c0_0, %c0_1, %c0_2] : memref<1x16x16x1152xf32, #tpu.memory_space<vmem>>, vector<1x1x16x128xf32>
    tpu.vector_store %arg5[%c0, %c0_0, %c0_1, %c0_2], %0 {strides = array<i32>} : memref<1x16x16x1152xf32, #tpu.memory_space<vmem>>, vector<1x1x16x128xf32>,
    %cst_3 = arith.constant 0.000000e+00 : f32
    %2 = vector.broadcast %cst_3 : f32 to vector<1x16x1x128xf32>
    %c0_4 = arith.constant 0 : index
    %c0_5 = arith.constant 0 : index
    %c0_6 = arith.constant 0 : index
    %c0_7 = arith.constant 0 : index
    %3 = vector.load %arg5[%c0_4, %c0_5, %c0_6, %c0_7] : memref<1x16x16x1152xf32, #tpu.memory_space<vmem>>, vector<1x16x1x128xf32>
    tpu.vector_store %arg5[%c0_4, %c0_5, %c0_6, %c0_7], %2 {strides = array<i32>} : memref<1x16x16x1152xf32, #tpu.memory_space<vmem>>, vector<1x16x1x128xf32>,
    %cst_8 = arith.constant 0.000000e+00 : f32
    %4 = vector.broadcast %cst_8 : f32 to vector<1x1x16x128xf32>
    %c0_9 = arith.constant 0 : index
    %c0_10 = arith.constant 0 : index
    %c0_11 = arith.constant 0 : index
    %c128 = arith.constant 128 : index
    %5 = vector.load %arg5[%c0_9, %c0_10, %c0_11, %c128] : memref<1x16x16x1152xf32, #tpu.memory_space<vmem>>, vector<1x1x16x128xf32>
    tpu.vector_store %arg5[%c0_9, %c0_10, %c0_11, %c128], %4 {strides = array<i32>} : memref<1x16x16x1152xf32, #tpu.memory_space<vmem>>, vector<1x1x16x128xf32>,
    %cst_12 = arith.constant 0.000000e+00 : f32
    %6 = vector.broadcast %cst_12 : f32 to vector<1x1x16x128xf32>
    %c0_13 = arith.constant 0 : index
    %c0_14 = arith.constant 0 : index
    %c0_15 = arith.constant 0 : index
    %c256 = arith.constant 256 : index
    %7 = vector.load %arg5[%c0_13, %c0_14, %c0_15, %c256] : memref<1x16x16x1152xf32, #tpu.memory_space<vmem>>, vector<1x1x16x128xf32>
    tpu.vector_store %arg5[%c0_13, %c0_14, %c0_15, %c256], %6 {strides = array<i32>} : memref<1x16x16x1152xf32, #tpu.memory_space<vmem>>, vector<1x1x16x128xf32>,
    %cst_16 = arith.constant 0.000000e+00 : f32
    %8 = vector.broadcast %cst_16 : f32 to vector<1x16x1x128xf32>
    %c0_17 = arith.constant 0 : index
    %c0_18 = arith.constant 0 : index
    %c15 = arith.constant 15 : index
    %c256_19 = arith.constant 256 : index
    %9 = vector.load %arg5[%c0_17, %c0_18, %c15, %c256_19] : memref<1x16x16x1152xf32, #tpu.memory_space<vmem>>, vector<1x16x1x128xf32>
    tpu.vector_store %arg5[%c0_17, %c0_18, %c15, %c256_19], %8 {strides = array<i32>} : memref<1x16x16x1152xf32, #tpu.memory_space<vmem>>, vector<1x16x1x128xf32>,
    %cst_20 = arith.constant 0.000000e+00 : f32
    %10 = vector.broadcast %cst_20 : f32 to vector<1x16x1x128xf32>
    %c0_21 = arith.constant 0 : index
    %c0_22 = arith.constant 0 : index
    %c0_23 = arith.constant 0 : index
    %c384 = arith.constant 384 : index
    %11 = vector.load %arg5[%c0_21, %c0_22, %c0_23, %c384] : memref<1x16x16x1152xf32, #tpu.memory_space<vmem>>, vector<1x16x1x128xf32>
    tpu.vector_store %arg5[%c0_21, %c0_22, %c0_23, %c384], %10 {strides = array<i32>} : memref<1x16x16x1152xf32, #tpu.memory_space<vmem>>, vector<1x16x1x128xf32>,
    %cst_24 = arith.constant 0.000000e+00 : f32
    %12 = vector.broadcast %cst_24 : f32 to vector<1x16x1x128xf32>
    %c0_25 = arith.constant 0 : index
    %c0_26 = arith.constant 0 : index
    %c15_27 = arith.constant 15 : index
    %c640 = arith.constant 640 : index
    %13 = vector.load %arg5[%c0_25, %c0_26, %c15_27, %c640] : memref<1x16x16x1152xf32, #tpu.memory_space<vmem>>, vector<1x16x1x128xf32>
    tpu.vector_store %arg5[%c0_25, %c0_26, %c15_27, %c640], %12 {strides = array<i32>} : memref<1x16x16x1152xf32, #tpu.memory_space<vmem>>, vector<1x16x1x128xf32>,
    %cst_28 = arith.constant 0.000000e+00 : f32
    %14 = vector.broadcast %cst_28 : f32 to vector<1x1x16x128xf32>
    %c0_29 = arith.constant 0 : index
    %c15_30 = arith.constant 15 : index
    %c0_31 = arith.constant 0 : index
    %c768 = arith.constant 768 : index
    %15 = vector.load %arg5[%c0_29, %c15_30, %c0_31, %c768] : memref<1x16x16x1152xf32, #tpu.memory_space<vmem>>, vector<1x1x16x128xf32>
    tpu.vector_store %arg5[%c0_29, %c15_30, %c0_31, %c768], %14 {strides = array<i32>} : memref<1x16x16x1152xf32, #tpu.memory_space<vmem>>, vector<1x1x16x128xf32>,
    %cst_32 = arith.constant 0.000000e+00 : f32
    %16 = vector.broadcast %cst_32 : f32 to vector<1x16x1x128xf32>
    %c0_33 = arith.constant 0 : index
    %c0_34 = arith.constant 0 : index
    %c0_35 = arith.constant 0 : index
    %c768_36 = arith.constant 768 : index
    %17 = vector.load %arg5[%c0_33, %c0_34, %c0_35, %c768_36] : memref<1x16x16x1152xf32, #tpu.memory_space<vmem>>, vector<1x16x1x128xf32>
    tpu.vector_store %arg5[%c0_33, %c0_34, %c0_35, %c768_36], %16 {strides = array<i32>} : memref<1x16x16x1152xf32, #tpu.memory_space<vmem>>, vector<1x16x1x128xf32>,
    %cst_37 = arith.constant 0.000000e+00 : f32
    %18 = vector.broadcast %cst_37 : f32 to vector<1x1x16x128xf32>
    %c0_38 = arith.constant 0 : index
    %c15_39 = arith.constant 15 : index
    %c0_40 = arith.constant 0 : index
    %c896 = arith.constant 896 : index
    %19 = vector.load %arg5[%c0_38, %c15_39, %c0_40, %c896] : memref<1x16x16x1152xf32, #tpu.memory_space<vmem>>, vector<1x1x16x128xf32>
    tpu.vector_store %arg5[%c0_38, %c15_39, %c0_40, %c896], %18 {strides = array<i32>} : memref<1x16x16x1152xf32, #tpu.memory_space<vmem>>, vector<1x1x16x128xf32>,
    %cst_41 = arith.constant 0.000000e+00 : f32
    %20 = vector.broadcast %cst_41 : f32 to vector<1x1x16x128xf32>
    %c0_42 = arith.constant 0 : index
    %c15_43 = arith.constant 15 : index
    %c0_44 = arith.constant 0 : index
    %c1024 = arith.constant 1024 : index
    %21 = vector.load %arg5[%c0_42, %c15_43, %c0_44, %c1024] : memref<1x16x16x1152xf32, #tpu.memory_space<vmem>>, vector<1x1x16x128xf32>
    tpu.vector_store %arg5[%c0_42, %c15_43, %c0_44, %c1024], %20 {strides = array<i32>} : memref<1x16x16x1152xf32, #tpu.memory_space<vmem>>, vector<1x1x16x128xf32>,
    %cst_45 = arith.constant 0.000000e+00 : f32
    %22 = vector.broadcast %cst_45 : f32 to vector<1x16x1x128xf32>
    %c0_46 = arith.constant 0 : index
    %c0_47 = arith.constant 0 : index
    %c15_48 = arith.constant 15 : index
    %c1024_49 = arith.constant 1024 : index
    %23 = vector.load %arg5[%c0_46, %c0_47, %c15_48, %c1024_49] : memref<1x16x16x1152xf32, #tpu.memory_space<vmem>>, vector<1x16x1x128xf32>
    tpu.vector_store %arg5[%c0_46, %c0_47, %c15_48, %c1024_49], %22 {strides = array<i32>} : memref<1x16x16x1152xf32, #tpu.memory_space<vmem>>, vector<1x16x1x128xf32>,
    %c0_50 = arith.constant 0 : index
    %c0_51 = arith.constant 0 : index
    %c0_52 = arith.constant 0 : index
    %c0_53 = arith.constant 0 : index
    %24 = vector.load %arg1[%c0_50, %c0_51, %c0_52, %c0_53] : memref<1x16x16x128xf32, #tpu.memory_space<vmem>>, vector<1x16x16x128xf32>
    %c0_54 = arith.constant 0 : index
    %c0_55 = arith.constant 0 : index
    %c0_56 = arith.constant 0 : index
    %c0_57 = arith.constant 0 : index
    %25 = vector.load %arg4[%c0_54, %c0_55, %c0_56, %c0_57] : memref<1x16x16x128xf32, #tpu.memory_space<vmem>>, vector<1x16x16x128xf32>
    tpu.vector_store %arg4[%c0_54, %c0_55, %c0_56, %c0_57], %24 {strides = array<i32>} : memref<1x16x16x128xf32, #tpu.memory_space<vmem>>, vector<1x16x16x128xf32>,
    %c0_i32 = arith.constant 0 : i32
    %c0_58 = arith.constant 0 : index
    %c0_59 = arith.constant 0 : index
    %c0_60 = arith.constant 0 : index
    %c0_61 = arith.constant 0 : index
    %26 = vector.load %arg4[%c0_58, %c0_59, %c0_60, %c0_61] : memref<1x16x16x128xf32, #tpu.memory_space<vmem>>, vector<1x16x16x128xf32>
    %cst_62 = arith.constant 0.000000e+00 : f32
    %27 = vector.broadcast %cst_62 : f32 to vector<1x16x16x128xf32>
    %28 = arith.maximumf %26, %27 : vector<1x16x16x128xf32>
    %29 = vector.extract_strided_slice %28 {offsets = [0, 0, 0, 0], sizes = [1, 15, 15, 128], strides = [1, 1, 1, 1]} : vector<1x16x16x128xf32> to vector<1x15x15x128xf32>
    %c0_63 = arith.constant 0 : index
    %c1 = arith.constant 1 : index
    %c1_64 = arith.constant 1 : index
    %c0_65 = arith.constant 0 : index
    %30 = vector.load %arg5[%c0_63, %c1, %c1_64, %c0_65] : memref<1x16x16x1152xf32, #tpu.memory_space<vmem>>, vector<1x15x15x128xf32>
    tpu.vector_store %arg5[%c0_63, %c1, %c1_64, %c0_65], %29 {strides = array<i32>} : memref<1x16x16x1152xf32, #tpu.memory_space<vmem>>, vector<1x15x15x128xf32>,
    %31 = vector.extract_strided_slice %28 {offsets = [0, 0, 0, 0], sizes = [1, 15, 16, 128], strides = [1, 1, 1, 1]} : vector<1x16x16x128xf32> to vector<1x15x16x128xf32>
    %c0_66 = arith.constant 0 : index
    %c1_67 = arith.constant 1 : index
    %c0_68 = arith.constant 0 : index
    %c128_69 = arith.constant 128 : index
    %32 = vector.load %arg5[%c0_66, %c1_67, %c0_68, %c128_69] : memref<1x16x16x1152xf32, #tpu.memory_space<vmem>>, vector<1x15x16x128xf32>
    tpu.vector_store %arg5[%c0_66, %c1_67, %c0_68, %c128_69], %31 {strides = array<i32>} : memref<1x16x16x1152xf32, #tpu.memory_space<vmem>>, vector<1x15x16x128xf32>,
    %33 = vector.extract_strided_slice %28 {offsets = [0, 0, 1, 0], sizes = [1, 15, 15, 128], strides = [1, 1, 1, 1]} : vector<1x16x16x128xf32> to vector<1x15x15x128xf32>
    %c0_70 = arith.constant 0 : index
    %c1_71 = arith.constant 1 : index
    %c0_72 = arith.constant 0 : index
    %c256_73 = arith.constant 256 : index
    %34 = vector.load %arg5[%c0_70, %c1_71, %c0_72, %c256_73] : memref<1x16x16x1152xf32, #tpu.memory_space<vmem>>, vector<1x15x15x128xf32>
    tpu.vector_store %arg5[%c0_70, %c1_71, %c0_72, %c256_73], %33 {strides = array<i32>} : memref<1x16x16x1152xf32, #tpu.memory_space<vmem>>, vector<1x15x15x128xf32>,
    %35 = vector.extract_strided_slice %28 {offsets = [0, 0, 0, 0], sizes = [1, 16, 15, 128], strides = [1, 1, 1, 1]} : vector<1x16x16x128xf32> to vector<1x16x15x128xf32>
    %c0_74 = arith.constant 0 : index
    %c0_75 = arith.constant 0 : index
    %c1_76 = arith.constant 1 : index
    %c384_77 = arith.constant 384 : index
    %36 = vector.load %arg5[%c0_74, %c0_75, %c1_76, %c384_77] : memref<1x16x16x1152xf32, #tpu.memory_space<vmem>>, vector<1x16x15x128xf32>
    tpu.vector_store %arg5[%c0_74, %c0_75, %c1_76, %c384_77], %35 {strides = array<i32>} : memref<1x16x16x1152xf32, #tpu.memory_space<vmem>>, vector<1x16x15x128xf32>,
    %c0_78 = arith.constant 0 : index
    %c0_79 = arith.constant 0 : index
    %c0_80 = arith.constant 0 : index
    %c512 = arith.constant 512 : index
    %37 = vector.load %arg5[%c0_78, %c0_79, %c0_80, %c512] : memref<1x16x16x1152xf32, #tpu.memory_space<vmem>>, vector<1x16x16x128xf32>
    tpu.vector_store %arg5[%c0_78, %c0_79, %c0_80, %c512], %28 {strides = array<i32>} : memref<1x16x16x1152xf32, #tpu.memory_space<vmem>>, vector<1x16x16x128xf32>,
    %38 = vector.extract_strided_slice %28 {offsets = [0, 0, 1, 0], sizes = [1, 16, 15, 128], strides = [1, 1, 1, 1]} : vector<1x16x16x128xf32> to vector<1x16x15x128xf32>
    %c0_81 = arith.constant 0 : index
    %c0_82 = arith.constant 0 : index
    %c0_83 = arith.constant 0 : index
    %c640_84 = arith.constant 640 : index
    %39 = vector.load %arg5[%c0_81, %c0_82, %c0_83, %c640_84] : memref<1x16x16x1152xf32, #tpu.memory_space<vmem>>, vector<1x16x15x128xf32>
    tpu.vector_store %arg5[%c0_81, %c0_82, %c0_83, %c640_84], %38 {strides = array<i32>} : memref<1x16x16x1152xf32, #tpu.memory_space<vmem>>, vector<1x16x15x128xf32>,
    %40 = vector.extract_strided_slice %28 {offsets = [0, 1, 0, 0], sizes = [1, 15, 15, 128], strides = [1, 1, 1, 1]} : vector<1x16x16x128xf32> to vector<1x15x15x128xf32>
    %c0_85 = arith.constant 0 : index
    %c0_86 = arith.constant 0 : index
    %c1_87 = arith.constant 1 : index
    %c768_88 = arith.constant 768 : index
    %41 = vector.load %arg5[%c0_85, %c0_86, %c1_87, %c768_88] : memref<1x16x16x1152xf32, #tpu.memory_space<vmem>>, vector<1x15x15x128xf32>
    tpu.vector_store %arg5[%c0_85, %c0_86, %c1_87, %c768_88], %40 {strides = array<i32>} : memref<1x16x16x1152xf32, #tpu.memory_space<vmem>>, vector<1x15x15x128xf32>,
    %42 = vector.extract_strided_slice %28 {offsets = [0, 1, 0, 0], sizes = [1, 15, 16, 128], strides = [1, 1, 1, 1]} : vector<1x16x16x128xf32> to vector<1x15x16x128xf32>
    %c0_89 = arith.constant 0 : index
    %c0_90 = arith.constant 0 : index
    %c0_91 = arith.constant 0 : index
    %c896_92 = arith.constant 896 : index
    %43 = vector.load %arg5[%c0_89, %c0_90, %c0_91, %c896_92] : memref<1x16x16x1152xf32, #tpu.memory_space<vmem>>, vector<1x15x16x128xf32>
    tpu.vector_store %arg5[%c0_89, %c0_90, %c0_91, %c896_92], %42 {strides = array<i32>} : memref<1x16x16x1152xf32, #tpu.memory_space<vmem>>, vector<1x15x16x128xf32>,
    %44 = vector.extract_strided_slice %28 {offsets = [0, 1, 1, 0], sizes = [1, 15, 15, 128], strides = [1, 1, 1, 1]} : vector<1x16x16x128xf32> to vector<1x15x15x128xf32>
    %c0_93 = arith.constant 0 : index
    %c0_94 = arith.constant 0 : index
    %c0_95 = arith.constant 0 : index
    %c1024_96 = arith.constant 1024 : index
    %45 = vector.load %arg5[%c0_93, %c0_94, %c0_95, %c1024_96] : memref<1x16x16x1152xf32, #tpu.memory_space<vmem>>, vector<1x15x15x128xf32>
    tpu.vector_store %arg5[%c0_93, %c0_94, %c0_95, %c1024_96], %44 {strides = array<i32>} : memref<1x16x16x1152xf32, #tpu.memory_space<vmem>>, vector<1x15x15x128xf32>,
    %c0_97 = arith.constant 0 : index
    %c0_98 = arith.constant 0 : index
    %c0_99 = arith.constant 0 : index
    %c0_100 = arith.constant 0 : index
    %46 = vector.load %arg5[%c0_97, %c0_98, %c0_99, %c0_100] : memref<1x16x16x1152xf32, #tpu.memory_space<vmem>>, vector<1x16x16x1152xf32>
    %47 = vector.shape_cast %46 : vector<1x16x16x1152xf32> to vector<256x1152xf32>
    %c0_101 = arith.constant 0 : index
    %c0_102 = arith.constant 0 : index
    %48 = vector.load %arg2[%c0_101, %c0_102] : memref<1152x128xf32, #tpu.memory_space<vmem>>, vector<1152x128xf32>
    %cst_103 = arith.constant dense<0.000000e+00> : vector<256x128xf32>
    %49 = tpu.matmul %47, %48, %cst_103 {dimension_numbers = #tpu.dot_dimension_numbers<[1], [0], [0], [1], [0, 0, 1, 1], [], []>} : vector<256x1152xf32>, vector<1152x128xf32>, vector<256x128xf32> -> vector<256x128xf32>
    %cst_104 = arith.constant 0.000000e+00 : f32
    %50 = vector.broadcast %cst_104 : f32 to vector<256x128xf32>
    %51 = arith.maximumf %49, %50 : vector<256x128xf32>
    %c0_105 = arith.constant 0 : index
    %c0_106 = arith.constant 0 : index
    %52 = vector.load %arg3[%c0_105, %c0_106] : memref<128x128xf32, #tpu.memory_space<vmem>>, vector<128x128xf32>
    %cst_107 = arith.constant dense<0.000000e+00> : vector<256x128xf32>
    %53 = tpu.matmul %51, %52, %cst_107 {dimension_numbers = #tpu.dot_dimension_numbers<[1], [0], [0], [1], [0, 0, 1, 1], [], []>} : vector<256x128xf32>, vector<128x128xf32>, vector<256x128xf32> -> vector<256x128xf32>
    %c0_108 = arith.constant 0 : index
    %c0_109 = arith.constant 0 : index
    %c0_110 = arith.constant 0 : index
    %c0_111 = arith.constant 0 : index
    %54 = vector.load %arg4[%c0_108, %c0_109, %c0_110, %c0_111] : memref<1x16x16x128xf32, #tpu.memory_space<vmem>>, vector<1x16x16x128xf32>
    %55 = vector.shape_cast %53 : vector<256x128xf32> to vector<1x16x16x128xf32>
    %56 = arith.addf %54, %55 : vector<1x16x16x128xf32>
    %c0_112 = arith.constant 0 : index
    %c0_113 = arith.constant 0 : index
    %c0_114 = arith.constant 0 : index
    %c0_115 = arith.constant 0 : index
    %57 = vector.load %arg4[%c0_112, %c0_113, %c0_114, %c0_115] : memref<1x16x16x128xf32, #tpu.memory_space<vmem>>, vector<1x16x16x128xf32>
    tpu.vector_store %arg4[%c0_112, %c0_113, %c0_114, %c0_115], %56 {strides = array<i32>} : memref<1x16x16x128xf32, #tpu.memory_space<vmem>>, vector<1x16x16x128xf32>,
    %c1_i32 = arith.constant 1 : i32
    %c0_116 = arith.constant 0 : index
    %c0_117 = arith.constant 0 : index
    %c0_118 = arith.constant 0 : index
    %c0_119 = arith.constant 0 : index
    %58 = vector.load %arg4[%c0_116, %c0_117, %c0_118, %c0_119] : memref<1x16x16x128xf32, #tpu.memory_space<vmem>>, vector<1x16x16x128xf32>
    %cst_120 = arith.constant 0.000000e+00 : f32
    %59 = vector.broadcast %cst_120 : f32 to vector<1x16x16x128xf32>
    %60 = arith.maximumf %58, %59 : vector<1x16x16x128xf32>
    %61 = vector.extract_strided_slice %60 {offsets = [0, 0, 0, 0], sizes = [1, 15, 15, 128], strides = [1, 1, 1, 1]} : vector<1x16x16x128xf32> to vector<1x15x15x128xf32>
    %c0_121 = arith.constant 0 : index
    %c1_122 = arith.constant 1 : index
    %c1_123 = arith.constant 1 : index
    %c0_124 = arith.constant 0 : index
    %62 = vector.load %arg5[%c0_121, %c1_122, %c1_123, %c0_124] : memref<1x16x16x1152xf32, #tpu.memory_space<vmem>>, vector<1x15x15x128xf32>
    tpu.vector_store %arg5[%c0_121, %c1_122, %c1_123, %c0_124], %61 {strides = array<i32>} : memref<1x16x16x1152xf32, #tpu.memory_space<vmem>>, vector<1x15x15x128xf32>,
    %63 = vector.extract_strided_slice %60 {offsets = [0, 0, 0, 0], sizes = [1, 15, 16, 128], strides = [1, 1, 1, 1]} : vector<1x16x16x128xf32> to vector<1x15x16x128xf32>
    %c0_125 = arith.constant 0 : index
    %c1_126 = arith.constant 1 : index
    %c0_127 = arith.constant 0 : index
    %c128_128 = arith.constant 128 : index
    %64 = vector.load %arg5[%c0_125, %c1_126, %c0_127, %c128_128] : memref<1x16x16x1152xf32, #tpu.memory_space<vmem>>, vector<1x15x16x128xf32>
    tpu.vector_store %arg5[%c0_125, %c1_126, %c0_127, %c128_128], %63 {strides = array<i32>} : memref<1x16x16x1152xf32, #tpu.memory_space<vmem>>, vector<1x15x16x128xf32>,
    %65 = vector.extract_strided_slice %60 {offsets = [0, 0, 1, 0], sizes = [1, 15, 15, 128], strides = [1, 1, 1, 1]} : vector<1x16x16x128xf32> to vector<1x15x15x128xf32>
    %c0_129 = arith.constant 0 : index
    %c1_130 = arith.constant 1 : index
    %c0_131 = arith.constant 0 : index
    %c256_132 = arith.constant 256 : index
    %66 = vector.load %arg5[%c0_129, %c1_130, %c0_131, %c256_132] : memref<1x16x16x1152xf32, #tpu.memory_space<vmem>>, vector<1x15x15x128xf32>
    tpu.vector_store %arg5[%c0_129, %c1_130, %c0_131, %c256_132], %65 {strides = array<i32>} : memref<1x16x16x1152xf32, #tpu.memory_space<vmem>>, vector<1x15x15x128xf32>,
    %67 = vector.extract_strided_slice %60 {offsets = [0, 0, 0, 0], sizes = [1, 16, 15, 128], strides = [1, 1, 1, 1]} : vector<1x16x16x128xf32> to vector<1x16x15x128xf32>
    %c0_133 = arith.constant 0 : index
    %c0_134 = arith.constant 0 : index
    %c1_135 = arith.constant 1 : index
    %c384_136 = arith.constant 384 : index
    %68 = vector.load %arg5[%c0_133, %c0_134, %c1_135, %c384_136] : memref<1x16x16x1152xf32, #tpu.memory_space<vmem>>, vector<1x16x15x128xf32>
    tpu.vector_store %arg5[%c0_133, %c0_134, %c1_135, %c384_136], %67 {strides = array<i32>} : memref<1x16x16x1152xf32, #tpu.memory_space<vmem>>, vector<1x16x15x128xf32>,
    %c0_137 = arith.constant 0 : index
    %c0_138 = arith.constant 0 : index
    %c0_139 = arith.constant 0 : index
    %c512_140 = arith.constant 512 : index
    %69 = vector.load %arg5[%c0_137, %c0_138, %c0_139, %c512_140] : memref<1x16x16x1152xf32, #tpu.memory_space<vmem>>, vector<1x16x16x128xf32>
    tpu.vector_store %arg5[%c0_137, %c0_138, %c0_139, %c512_140], %60 {strides = array<i32>} : memref<1x16x16x1152xf32, #tpu.memory_space<vmem>>, vector<1x16x16x128xf32>,
    %70 = vector.extract_strided_slice %60 {offsets = [0, 0, 1, 0], sizes = [1, 16, 15, 128], strides = [1, 1, 1, 1]} : vector<1x16x16x128xf32> to vector<1x16x15x128xf32>
    %c0_141 = arith.constant 0 : index
    %c0_142 = arith.constant 0 : index
    %c0_143 = arith.constant 0 : index
    %c640_144 = arith.constant 640 : index
    %71 = vector.load %arg5[%c0_141, %c0_142, %c0_143, %c640_144] : memref<1x16x16x1152xf32, #tpu.memory_space<vmem>>, vector<1x16x15x128xf32>
    tpu.vector_store %arg5[%c0_141, %c0_142, %c0_143, %c640_144], %70 {strides = array<i32>} : memref<1x16x16x1152xf32, #tpu.memory_space<vmem>>, vector<1x16x15x128xf32>,
    %72 = vector.extract_strided_slice %60 {offsets = [0, 1, 0, 0], sizes = [1, 15, 15, 128], strides = [1, 1, 1, 1]} : vector<1x16x16x128xf32> to vector<1x15x15x128xf32>
    %c0_145 = arith.constant 0 : index
    %c0_146 = arith.constant 0 : index
    %c1_147 = arith.constant 1 : index
    %c768_148 = arith.constant 768 : index
    %73 = vector.load %arg5[%c0_145, %c0_146, %c1_147, %c768_148] : memref<1x16x16x1152xf32, #tpu.memory_space<vmem>>, vector<1x15x15x128xf32>
    tpu.vector_store %arg5[%c0_145, %c0_146, %c1_147, %c768_148], %72 {strides = array<i32>} : memref<1x16x16x1152xf32, #tpu.memory_space<vmem>>, vector<1x15x15x128xf32>,
    %74 = vector.extract_strided_slice %60 {offsets = [0, 1, 0, 0], sizes = [1, 15, 16, 128], strides = [1, 1, 1, 1]} : vector<1x16x16x128xf32> to vector<1x15x16x128xf32>
    %c0_149 = arith.constant 0 : index
    %c0_150 = arith.constant 0 : index
    %c0_151 = arith.constant 0 : index
    %c896_152 = arith.constant 896 : index
    %75 = vector.load %arg5[%c0_149, %c0_150, %c0_151, %c896_152] : memref<1x16x16x1152xf32, #tpu.memory_space<vmem>>, vector<1x15x16x128xf32>
    tpu.vector_store %arg5[%c0_149, %c0_150, %c0_151, %c896_152], %74 {strides = array<i32>} : memref<1x16x16x1152xf32, #tpu.memory_space<vmem>>, vector<1x15x16x128xf32>,
    %76 = vector.extract_strided_slice %60 {offsets = [0, 1, 1, 0], sizes = [1, 15, 15, 128], strides = [1, 1, 1, 1]} : vector<1x16x16x128xf32> to vector<1x15x15x128xf32>
    %c0_153 = arith.constant 0 : index
    %c0_154 = arith.constant 0 : index
    %c0_155 = arith.constant 0 : index
    %c1024_156 = arith.constant 1024 : index
    %77 = vector.load %arg5[%c0_153, %c0_154, %c0_155, %c1024_156] : memref<1x16x16x1152xf32, #tpu.memory_space<vmem>>, vector<1x15x15x128xf32>
    tpu.vector_store %arg5[%c0_153, %c0_154, %c0_155, %c1024_156], %76 {strides = array<i32>} : memref<1x16x16x1152xf32, #tpu.memory_space<vmem>>, vector<1x15x15x128xf32>,
    %c0_157 = arith.constant 0 : index
    %c0_158 = arith.constant 0 : index
    %c0_159 = arith.constant 0 : index
    %c0_160 = arith.constant 0 : index
    %78 = vector.load %arg5[%c0_157, %c0_158, %c0_159, %c0_160] : memref<1x16x16x1152xf32, #tpu.memory_space<vmem>>, vector<1x16x16x1152xf32>
    %79 = vector.shape_cast %78 : vector<1x16x16x1152xf32> to vector<256x1152xf32>
    %c0_161 = arith.constant 0 : index
    %c0_162 = arith.constant 0 : index
    %80 = vector.load %arg2[%c0_161, %c0_162] : memref<1152x128xf32, #tpu.memory_space<vmem>>, vector<1152x128xf32>
    %cst_163 = arith.constant dense<0.000000e+00> : vector<256x128xf32>
    %81 = tpu.matmul %79, %80, %cst_163 {dimension_numbers = #tpu.dot_dimension_numbers<[1], [0], [0], [1], [0, 0, 1, 1], [], []>} : vector<256x1152xf32>, vector<1152x128xf32>, vector<256x128xf32> -> vector<256x128xf32>
    %cst_164 = arith.constant 0.000000e+00 : f32
    %82 = vector.broadcast %cst_164 : f32 to vector<256x128xf32>
    %83 = arith.maximumf %81, %82 : vector<256x128xf32>
    %c0_165 = arith.constant 0 : index
    %c0_166 = arith.constant 0 : index
    %84 = vector.load %arg3[%c0_165, %c0_166] : memref<128x128xf32, #tpu.memory_space<vmem>>, vector<128x128xf32>
    %cst_167 = arith.constant dense<0.000000e+00> : vector<256x128xf32>
    %85 = tpu.matmul %83, %84, %cst_167 {dimension_numbers = #tpu.dot_dimension_numbers<[1], [0], [0], [1], [0, 0, 1, 1], [], []>} : vector<256x128xf32>, vector<128x128xf32>, vector<256x128xf32> -> vector<256x128xf32>
    %c0_168 = arith.constant 0 : index
    %c0_169 = arith.constant 0 : index
    %c0_170 = arith.constant 0 : index
    %c0_171 = arith.constant 0 : index
    %86 = vector.load %arg4[%c0_168, %c0_169, %c0_170, %c0_171] : memref<1x16x16x128xf32, #tpu.memory_space<vmem>>, vector<1x16x16x128xf32>
    %87 = vector.shape_cast %85 : vector<256x128xf32> to vector<1x16x16x128xf32>
    %88 = arith.addf %86, %87 : vector<1x16x16x128xf32>
    %c0_172 = arith.constant 0 : index
    %c0_173 = arith.constant 0 : index
    %c0_174 = arith.constant 0 : index
    %c0_175 = arith.constant 0 : index
    %89 = vector.load %arg4[%c0_172, %c0_173, %c0_174, %c0_175] : memref<1x16x16x128xf32, #tpu.memory_space<vmem>>, vector<1x16x16x128xf32>
    tpu.vector_store %arg4[%c0_172, %c0_173, %c0_174, %c0_175], %88 {strides = array<i32>} : memref<1x16x16x128xf32, #tpu.memory_space<vmem>>, vector<1x16x16x128xf32>,
    %c2_i32 = arith.constant 2 : i32
    %c0_176 = arith.constant 0 : index
    %c0_177 = arith.constant 0 : index
    %c0_178 = arith.constant 0 : index
    %c0_179 = arith.constant 0 : index
    %90 = vector.load %arg4[%c0_176, %c0_177, %c0_178, %c0_179] : memref<1x16x16x128xf32, #tpu.memory_space<vmem>>, vector<1x16x16x128xf32>
    %cst_180 = arith.constant 0.000000e+00 : f32
    %91 = vector.broadcast %cst_180 : f32 to vector<1x16x16x128xf32>
    %92 = arith.maximumf %90, %91 : vector<1x16x16x128xf32>
    %93 = vector.extract_strided_slice %92 {offsets = [0, 0, 0, 0], sizes = [1, 15, 15, 128], strides = [1, 1, 1, 1]} : vector<1x16x16x128xf32> to vector<1x15x15x128xf32>
    %c0_181 = arith.constant 0 : index
    %c1_182 = arith.constant 1 : index
    %c1_183 = arith.constant 1 : index
    %c0_184 = arith.constant 0 : index
    %94 = vector.load %arg5[%c0_181, %c1_182, %c1_183, %c0_184] : memref<1x16x16x1152xf32, #tpu.memory_space<vmem>>, vector<1x15x15x128xf32>
    tpu.vector_store %arg5[%c0_181, %c1_182, %c1_183, %c0_184], %93 {strides = array<i32>} : memref<1x16x16x1152xf32, #tpu.memory_space<vmem>>, vector<1x15x15x128xf32>,
    %95 = vector.extract_strided_slice %92 {offsets = [0, 0, 0, 0], sizes = [1, 15, 16, 128], strides = [1, 1, 1, 1]} : vector<1x16x16x128xf32> to vector<1x15x16x128xf32>
    %c0_185 = arith.constant 0 : index
    %c1_186 = arith.constant 1 : index
    %c0_187 = arith.constant 0 : index
    %c128_188 = arith.constant 128 : index
    %96 = vector.load %arg5[%c0_185, %c1_186, %c0_187, %c128_188] : memref<1x16x16x1152xf32, #tpu.memory_space<vmem>>, vector<1x15x16x128xf32>
    tpu.vector_store %arg5[%c0_185, %c1_186, %c0_187, %c128_188], %95 {strides = array<i32>} : memref<1x16x16x1152xf32, #tpu.memory_space<vmem>>, vector<1x15x16x128xf32>,
    %97 = vector.extract_strided_slice %92 {offsets = [0, 0, 1, 0], sizes = [1, 15, 15, 128], strides = [1, 1, 1, 1]} : vector<1x16x16x128xf32> to vector<1x15x15x128xf32>
    %c0_189 = arith.constant 0 : index
    %c1_190 = arith.constant 1 : index
    %c0_191 = arith.constant 0 : index
    %c256_192 = arith.constant 256 : index
    %98 = vector.load %arg5[%c0_189, %c1_190, %c0_191, %c256_192] : memref<1x16x16x1152xf32, #tpu.memory_space<vmem>>, vector<1x15x15x128xf32>
    tpu.vector_store %arg5[%c0_189, %c1_190, %c0_191, %c256_192], %97 {strides = array<i32>} : memref<1x16x16x1152xf32, #tpu.memory_space<vmem>>, vector<1x15x15x128xf32>,
    %99 = vector.extract_strided_slice %92 {offsets = [0, 0, 0, 0], sizes = [1, 16, 15, 128], strides = [1, 1, 1, 1]} : vector<1x16x16x128xf32> to vector<1x16x15x128xf32>
    %c0_193 = arith.constant 0 : index
    %c0_194 = arith.constant 0 : index
    %c1_195 = arith.constant 1 : index
    %c384_196 = arith.constant 384 : index
    %100 = vector.load %arg5[%c0_193, %c0_194, %c1_195, %c384_196] : memref<1x16x16x1152xf32, #tpu.memory_space<vmem>>, vector<1x16x15x128xf32>
    tpu.vector_store %arg5[%c0_193, %c0_194, %c1_195, %c384_196], %99 {strides = array<i32>} : memref<1x16x16x1152xf32, #tpu.memory_space<vmem>>, vector<1x16x15x128xf32>,
    %c0_197 = arith.constant 0 : index
    %c0_198 = arith.constant 0 : index
    %c0_199 = arith.constant 0 : index
    %c512_200 = arith.constant 512 : index
    %101 = vector.load %arg5[%c0_197, %c0_198, %c0_199, %c512_200] : memref<1x16x16x1152xf32, #tpu.memory_space<vmem>>, vector<1x16x16x128xf32>
    tpu.vector_store %arg5[%c0_197, %c0_198, %c0_199, %c512_200], %92 {strides = array<i32>} : memref<1x16x16x1152xf32, #tpu.memory_space<vmem>>, vector<1x16x16x128xf32>,
    %102 = vector.extract_strided_slice %92 {offsets = [0, 0, 1, 0], sizes = [1, 16, 15, 128], strides = [1, 1, 1, 1]} : vector<1x16x16x128xf32> to vector<1x16x15x128xf32>
    %c0_201 = arith.constant 0 : index
    %c0_202 = arith.constant 0 : index
    %c0_203 = arith.constant 0 : index
    %c640_204 = arith.constant 640 : index
    %103 = vector.load %arg5[%c0_201, %c0_202, %c0_203, %c640_204] : memref<1x16x16x1152xf32, #tpu.memory_space<vmem>>, vector<1x16x15x128xf32>
    tpu.vector_store %arg5[%c0_201, %c0_202, %c0_203, %c640_204], %102 {strides = array<i32>} : memref<1x16x16x1152xf32, #tpu.memory_space<vmem>>, vector<1x16x15x128xf32>,
    %104 = vector.extract_strided_slice %92 {offsets = [0, 1, 0, 0], sizes = [1, 15, 15, 128], strides = [1, 1, 1, 1]} : vector<1x16x16x128xf32> to vector<1x15x15x128xf32>
    %c0_205 = arith.constant 0 : index
    %c0_206 = arith.constant 0 : index
    %c1_207 = arith.constant 1 : index
    %c768_208 = arith.constant 768 : index
    %105 = vector.load %arg5[%c0_205, %c0_206, %c1_207, %c768_208] : memref<1x16x16x1152xf32, #tpu.memory_space<vmem>>, vector<1x15x15x128xf32>
    tpu.vector_store %arg5[%c0_205, %c0_206, %c1_207, %c768_208], %104 {strides = array<i32>} : memref<1x16x16x1152xf32, #tpu.memory_space<vmem>>, vector<1x15x15x128xf32>,
    %106 = vector.extract_strided_slice %92 {offsets = [0, 1, 0, 0], sizes = [1, 15, 16, 128], strides = [1, 1, 1, 1]} : vector<1x16x16x128xf32> to vector<1x15x16x128xf32>
    %c0_209 = arith.constant 0 : index
    %c0_210 = arith.constant 0 : index
    %c0_211 = arith.constant 0 : index
    %c896_212 = arith.constant 896 : index
    %107 = vector.load %arg5[%c0_209, %c0_210, %c0_211, %c896_212] : memref<1x16x16x1152xf32, #tpu.memory_space<vmem>>, vector<1x15x16x128xf32>
    tpu.vector_store %arg5[%c0_209, %c0_210, %c0_211, %c896_212], %106 {strides = array<i32>} : memref<1x16x16x1152xf32, #tpu.memory_space<vmem>>, vector<1x15x16x128xf32>,
    %108 = vector.extract_strided_slice %92 {offsets = [0, 1, 1, 0], sizes = [1, 15, 15, 128], strides = [1, 1, 1, 1]} : vector<1x16x16x128xf32> to vector<1x15x15x128xf32>
    %c0_213 = arith.constant 0 : index
    %c0_214 = arith.constant 0 : index
    %c0_215 = arith.constant 0 : index
    %c1024_216 = arith.constant 1024 : index
    %109 = vector.load %arg5[%c0_213, %c0_214, %c0_215, %c1024_216] : memref<1x16x16x1152xf32, #tpu.memory_space<vmem>>, vector<1x15x15x128xf32>
    tpu.vector_store %arg5[%c0_213, %c0_214, %c0_215, %c1024_216], %108 {strides = array<i32>} : memref<1x16x16x1152xf32, #tpu.memory_space<vmem>>, vector<1x15x15x128xf32>,
    %c0_217 = arith.constant 0 : index
    %c0_218 = arith.constant 0 : index
    %c0_219 = arith.constant 0 : index
    %c0_220 = arith.constant 0 : index
    %110 = vector.load %arg5[%c0_217, %c0_218, %c0_219, %c0_220] : memref<1x16x16x1152xf32, #tpu.memory_space<vmem>>, vector<1x16x16x1152xf32>
    %111 = vector.shape_cast %110 : vector<1x16x16x1152xf32> to vector<256x1152xf32>
    %c0_221 = arith.constant 0 : index
    %c0_222 = arith.constant 0 : index
    %112 = vector.load %arg2[%c0_221, %c0_222] : memref<1152x128xf32, #tpu.memory_space<vmem>>, vector<1152x128xf32>
    %cst_223 = arith.constant dense<0.000000e+00> : vector<256x128xf32>
    %113 = tpu.matmul %111, %112, %cst_223 {dimension_numbers = #tpu.dot_dimension_numbers<[1], [0], [0], [1], [0, 0, 1, 1], [], []>} : vector<256x1152xf32>, vector<1152x128xf32>, vector<256x128xf32> -> vector<256x128xf32>
    %cst_224 = arith.constant 0.000000e+00 : f32
    %114 = vector.broadcast %cst_224 : f32 to vector<256x128xf32>
    %115 = arith.maximumf %113, %114 : vector<256x128xf32>
    %c0_225 = arith.constant 0 : index
    %c0_226 = arith.constant 0 : index
    %116 = vector.load %arg3[%c0_225, %c0_226] : memref<128x128xf32, #tpu.memory_space<vmem>>, vector<128x128xf32>
    %cst_227 = arith.constant dense<0.000000e+00> : vector<256x128xf32>
    %117 = tpu.matmul %115, %116, %cst_227 {dimension_numbers = #tpu.dot_dimension_numbers<[1], [0], [0], [1], [0, 0, 1, 1], [], []>} : vector<256x128xf32>, vector<128x128xf32>, vector<256x128xf32> -> vector<256x128xf32>
    %c0_228 = arith.constant 0 : index
    %c0_229 = arith.constant 0 : index
    %c0_230 = arith.constant 0 : index
    %c0_231 = arith.constant 0 : index
    %118 = vector.load %arg4[%c0_228, %c0_229, %c0_230, %c0_231] : memref<1x16x16x128xf32, #tpu.memory_space<vmem>>, vector<1x16x16x128xf32>
    %119 = vector.shape_cast %117 : vector<256x128xf32> to vector<1x16x16x128xf32>
    %120 = arith.addf %118, %119 : vector<1x16x16x128xf32>
    %c0_232 = arith.constant 0 : index
    %c0_233 = arith.constant 0 : index
    %c0_234 = arith.constant 0 : index
    %c0_235 = arith.constant 0 : index
    %121 = vector.load %arg4[%c0_232, %c0_233, %c0_234, %c0_235] : memref<1x16x16x128xf32, #tpu.memory_space<vmem>>, vector<1x16x16x128xf32>
    tpu.vector_store %arg4[%c0_232, %c0_233, %c0_234, %c0_235], %120 {strides = array<i32>} : memref<1x16x16x128xf32, #tpu.memory_space<vmem>>, vector<1x16x16x128xf32>,
    %c0_236 = arith.constant 0 : index
    %c0_237 = arith.constant 0 : index
    %c0_238 = arith.constant 0 : index
    %c0_239 = arith.constant 0 : index
    %122 = vector.load %arg4[%c0_236, %c0_237, %c0_238, %c0_239] : memref<1x16x16x128xf32, #tpu.memory_space<vmem>>, vector<1x16x16x128xf32>
    %cst_240 = arith.constant 0.000000e+00 : f32
    %123 = vector.broadcast %cst_240 : f32 to vector<1x16x16x128xf32>
    %124 = arith.maximumf %122, %123 : vector<1x16x16x128xf32>
    %c0_241 = arith.constant 0 : index
    %c0_242 = arith.constant 0 : index
    %c0_243 = arith.constant 0 : index
    %c0_244 = arith.constant 0 : index
    %125 = vector.load %arg4[%c0_241, %c0_242, %c0_243, %c0_244] : memref<1x16x16x128xf32, #tpu.memory_space<vmem>>, vector<1x16x16x128xf32>
    tpu.vector_store %arg4[%c0_241, %c0_242, %c0_243, %c0_244], %124 {strides = array<i32>} : memref<1x16x16x128xf32, #tpu.memory_space<vmem>>, vector<1x16x16x128xf32>,
    return
  }
  func.func @transform_0(%arg0: i32) -> (i32, i32, i32, i32) {
    %c0_i32 = arith.constant 0 : i32
    %c0_i32_0 = arith.constant 0 : i32
    %c0_i32_1 = arith.constant 0 : i32
    %c0_i32_2 = arith.constant 0 : i32
    return %arg0, %c0_i32, %c0_i32_0, %c0_i32_1 : i32, i32, i32, i32
  }
  func.func @transform_1(%arg0: i32) -> (i32, i32) {
    %c0_i32 = arith.constant 0 : i32
    %c0_i32_0 = arith.constant 0 : i32
    %c0_i32_1 = arith.constant 0 : i32
    return %c0_i32, %c0_i32_0 : i32, i32
  }
  func.func @transform_2(%arg0: i32) -> (i32, i32) {
    %c0_i32 = arith.constant 0 : i32
    %c0_i32_0 = arith.constant 0 : i32
    %c0_i32_1 = arith.constant 0 : i32
    return %c0_i32, %c0_i32_0 : i32, i32
  }
  func.func @transform_3(%arg0: i32) -> (i32, i32, i32, i32) {
    %c0_i32 = arith.constant 0 : i32
    %c0_i32_0 = arith.constant 0 : i32
    %c0_i32_1 = arith.constant 0 : i32
    %c0_i32_2 = arith.constant 0 : i32
    return %arg0, %c0_i32, %c0_i32_0, %c0_i32_1 : i32, i32, i32, i32
  }
}

</mosaic_0001>

<llo_original>
// kernel: residual_stack_forward.1
$region0: #{residual_stack_forward.1}
  #allocation0 [shape = 'u32[]', space=smem, size = 0x4, offset = 0x4, fixed_abs, tag = 'smem constant byte address 0x4 - core index']
  #allocation1 [shape = 'u32[144,128]{1,0:T(1,128)}', space=vmem, size = 0x12000, scoped, tag = 'internal scratch']
  #allocation2 [shape = 'f32[1,16,16,1152]{3,2,1,0:T(8,128)}', space=vmem, size = 0x120000, scoped, tag = 'scratch operand']
  %s0 = inlined_call_operand.vmem [shape: f32[2,16,16,128], index: 0, kind: input, shape index: {}, may-alias: {0,3}]
  %s1 = inlined_call_operand.vmem [shape: f32[1152,128], index: 1, kind: input, shape index: {}]
  %s2 = inlined_call_operand.vmem [shape: f32[128,128], index: 2, kind: input, shape index: {}]
  %s3 = inlined_call_operand.vmem [shape: f32[2,16,16,128], index: 3, kind: output, shape index: {}, may-alias: {0,3}]
  %s4 = sld [smem:[#allocation0]]
  $region45: #{residual_stack_forward.1} parent=0
    _
  %s6 = ssub.s32 1, %s4
  %s7 = scalar_select 0, %s6, %s4
  loop: start=0, step=1, limit=4
  $region2: #{residual_stack_forward.1} parent=0 // loop_pre_header
    _
  $region3: #{residual_stack_forward.1} parent=0 // loop_header
    %s9 = sphi 0, %s13
    %p10 = scmp.ge.s32.totalorder %s9, 4
    %s19 = sphi 0, %s21
    %s22 = sphi 0, %s19
    %s23 = sphi 0, %s22
    %s39 = sphi 0, %s23
    %s43 = sphi 0, %s43
    %s45 = sphi 0, %s43
    %s46 = sphi 0, %s45
    %s60 = sphi 0, %s46
    %s64 = sphi 0, %s64
    %s66 = sphi 0, %s64
    %s67 = sphi 0, %s66
    %s81 = sphi 0, %s67
    %s87 = sphi 0, %s89
    %s90 = sphi 0, %s87
    %s91 = sphi 0, %s90
    %s107 = sphi 0, %s91
  $region4: #{residual_stack_forward.1} parent=0 // loop_header_branch
    %12 = sbr.rel (%p10) target = $region8
  $region5: #{residual_stack_forward.1} parent=0 // loop_body
    %s14 = ssub.s32 %s9, 1
    %s15 = ssub.s32 %s9, 2
    %s16 = sadd.s32 %s9, 1
    %s17 = ssub.s32 %s9, %s16
    %p18 = scmp.eq.s32.totalorder %s17, 0
    %s20 = sadd.s32 %s19, 1
    %s21 = scalar_select %p18, %s19, %s20
    %p24 = pneg %p18
    %p25 = scmp.eq.s32.totalorder %s9, 1
    %p26 = por %p24, %p25
    %p27 = scmp.ne.s32.totalorder %s19, %s22
    %p28 = scmp.eq.s32.totalorder %s9, 0
    %p29 = por %p27, %p28
    %p30 = scmp.ne.s32.totalorder %s19, %s22
    %p31 = scmp.eq.s32.totalorder %s14, 1
    %p32 = por %p30, %p31
    %p33 = scmp.ne.s32.totalorder %s22, %s23
    %p34 = scmp.eq.s32.totalorder %s14, 0
    %p35 = por %p33, %p34
    %p36 = scmp.ne.s32.totalorder %s22, %s23
    %p37 = scmp.eq.s32.totalorder %s15, 1
    %p38 = por %p36, %p37
    %p40 = scmp.ne.s32.totalorder %s23, %s39
    %p41 = scmp.eq.s32.totalorder %s15, 0
    %p42 = por %p40, %p41
    %s44 = sadd.s32 %s43, 1
    %p47 = scmp.eq.s32.totalorder %s9, 1
    %p48 = scmp.ne.s32.totalorder %s43, %s45
    %p49 = scmp.eq.s32.totalorder %s9, 0
    %p50 = por %p48, %p49
    %p51 = scmp.ne.s32.totalorder %s43, %s45
    %p52 = scmp.eq.s32.totalorder %s14, 1
    %p53 = por %p51, %p52
    %p54 = scmp.ne.s32.totalorder %s45, %s46
    %p55 = scmp.eq.s32.totalorder %s14, 0
    %p56 = por %p54, %p55
    %p57 = scmp.ne.s32.totalorder %s45, %s46
    %p58 = scmp.eq.s32.totalorder %s15, 1
    %p59 = por %p57, %p58
    %p61 = scmp.ne.s32.totalorder %s46, %s60
    %p62 = scmp.eq.s32.totalorder %s15, 0
    %p63 = por %p61, %p62
    %s65 = sadd.s32 %s64, 1
    %p68 = scmp.eq.s32.totalorder %s9, 1
    %p69 = scmp.ne.s32.totalorder %s64, %s66
    %p70 = scmp.eq.s32.totalorder %s9, 0
    %p71 = por %p69, %p70
    %p72 = scmp.ne.s32.totalorder %s64, %s66
    %p73 = scmp.eq.s32.totalorder %s14, 1
    %p74 = por %p72, %p73
    %p75 = scmp.ne.s32.totalorder %s66, %s67
    %p76 = scmp.eq.s32.totalorder %s14, 0
    %p77 = por %p75, %p76
    %p78 = scmp.ne.s32.totalorder %s66, %s67
    %p79 = scmp.eq.s32.totalorder %s15, 1
    %p80 = por %p78, %p79
    %p82 = scmp.ne.s32.totalorder %s67, %s81
    %p83 = scmp.eq.s32.totalorder %s15, 0
    %p84 = por %p82, %p83
    %s85 = ssub.s32 %s9, %s16
    %p86 = scmp.eq.s32.totalorder %s85, 0
    %s88 = sadd.s32 %s87, 1
    %s89 = scalar_select %p86, %s87, %s88
    %p92 = pneg %p86
    %p93 = scmp.eq.s32.totalorder %s9, 1
    %p94 = por %p92, %p93
    %p95 = scmp.ne.s32.totalorder %s87, %s90
    %p96 = scmp.eq.s32.totalorder %s9, 0
    %p97 = por %p95, %p96
    %p98 = scmp.ne.s32.totalorder %s87, %s90
    %p99 = scmp.eq.s32.totalorder %s14, 1
    %p100 = por %p98, %p99
    %p101 = scmp.ne.s32.totalorder %s90, %s91
    %p102 = scmp.eq.s32.totalorder %s14, 0
    %p103 = por %p101, %p102
    %p104 = scmp.ne.s32.totalorder %s90, %s91
    %p105 = scmp.eq.s32.totalorder %s15, 1
    %p106 = por %p104, %p105
    %p108 = scmp.ne.s32.totalorder %s91, %s107
    %p109 = scmp.eq.s32.totalorder %s15, 0
    %p110 = por %p108, %p109
    %p111 = scmp.le.s32.totalorder 1, %s9
    %p112 = scmp.lt.s32.totalorder %s9, 3
    %p113 = pnand %p111, %p112
    %p114 = pneg %p113
    // Predicated region
    $region9: #{residual_stack_forward.1} parent=5 // pred_check
      _
    $region10: #{residual_stack_forward.1} parent=5 // pred_check_branch
      %116 = sbr.rel (%p113) target = $region12
    $region11: #{residual_stack_forward.1} parent=5 // pred_region
      %s117 = ssub.s32 %s9, 1
      // Predicated region
      $region13: #{residual_stack_forward.1} parent=11 // pred_check
        %p118 = pneg %p56
      $region14: #{residual_stack_forward.1} parent=11 // pred_check_branch
        %120 = sbr.rel (%p118) target = $region16
      $region15: #{residual_stack_forward.1} parent=11 // pred_region
        _
      $region16: #{residual_stack_forward.1} parent=11 // pred_fallthru
        _
      // Predicated region
      $region17: #{residual_stack_forward.1} parent=11 // pred_check
        %p121 = pneg %p77
      $region18: #{residual_stack_forward.1} parent=11 // pred_check_branch
        %123 = sbr.rel (%p121) target = $region20
      $region19: #{residual_stack_forward.1} parent=11 // pred_region
        _
      $region20: #{residual_stack_forward.1} parent=11 // pred_fallthru
        _
    $region12: #{residual_stack_forward.1} parent=5 // pred_fallthru
      _
    %p124 = scmp.lt.s32.totalorder %s9, 2
    // Predicated region
    $region21: #{residual_stack_forward.1} parent=5 // pred_check
      %p125 = pneg %p124
    $region22: #{residual_stack_forward.1} parent=5 // pred_check_branch
      %127 = sbr.rel (%p125) target = $region24
    $region23: #{residual_stack_forward.1} parent=5 // pred_region
      // Predicated region
      $region25: #{residual_stack_forward.1} parent=23 // pred_check
        %p128 = pneg %p29
      $region26: #{residual_stack_forward.1} parent=23 // pred_check_branch
        %130 = sbr.rel (%p128) target = $region28
      $region27: #{residual_stack_forward.1} parent=23 // pred_region
        %p131 = scmp.lt.s32.totalorder %s9, 1
        %s132 = scalar_select %p131, %s9, 1
        %s133 = smul.addr %s132, 32
        %s134 = smul.addr %s133, 8
        %s135 = scalar_lea.vmem %s0, %s134
      $region28: #{residual_stack_forward.1} parent=23 // pred_fallthru
        _
    $region24: #{residual_stack_forward.1} parent=5 // pred_fallthru
      _
    %p136 = scmp.le.s32.totalorder 1, %s9
    %p137 = scmp.lt.s32.totalorder %s9, 3
    %p138 = pnand %p136, %p137
    %p139 = pneg %p138
    // Predicated region
    $region29: #{residual_stack_forward.1} parent=5 // pred_check
      _
    $region30: #{residual_stack_forward.1} parent=5 // pred_check_branch
      %141 = sbr.rel (%p138) target = $region32
    $region31: #{residual_stack_forward.1} parent=5 // pred_region
      %s142 = ssub.s32 %s9, 1
      %p143 = scmp.lt.s32.totalorder %s14, 1
      %s144 = scalar_select %p143, %s14, 1
      %s145 = smul.addr %s144, 32
      %s146 = smul.addr %s145, 8
      %s147 = scalar_lea.vmem %s0, %s146
      %p148 = pneg %p35
      %p149 = pneg %p32
      %p150 = pneg %p56
      %p151 = pneg %p53
      %p152 = pneg %p77
      %p153 = pneg %p74
      %p154 = pneg %p103
      %p155 = pneg %p100
      %p156 = scmp.lt.s32.totalorder %s14, 1
      %s157 = scalar_select %p156, %s14, 1
      %s158 = smul.addr %s157, 32
      %s159 = smul.addr %s158, 8
      %s160 = scalar_lea.vmem %s3, %s159
      %p161 = scmp.lt.s32.totalorder %s14, 1
      %s162 = scalar_select %p161, %s14, 1
      %s163 = smul.addr %s162, 32
      %s164 = smul.addr %s163, 8
      %s165 = scalar_lea.vmem %s0, %s164
      %p166 = scmp.lt.s32.totalorder %s14, 1
      %s167 = scalar_select %p166, %s14, 1
      %s168 = smul.addr %s167, 32
      %s169 = smul.addr %s168, 8
      %s170 = scalar_lea.vmem %s3, %s169
      %171 = vst [vmem:[#allocation2] sm:$0xff] 0.0
      %172 = vst [vmem:[#allocation2 + $0x48] sm:$0xff] 0.0
      %173 = vst [vmem:[#allocation2] sm:$0x1] 0.0
      %174 = vst [vmem:[#allocation2 + $0x90] sm:$0x1] 0.0
      %175 = vst [vmem:[#allocation2 + $0x120] sm:$0x1] 0.0
      %176 = vst [vmem:[#allocation2 + $0x1b0] sm:$0x1] 0.0
      %177 = vst [vmem:[#allocation2 + $0x240] sm:$0x1] 0.0
      %178 = vst [vmem:[#allocation2 + $0x2d0] sm:$0x1] 0.0
      %179 = vst [vmem:[#allocation2 + $0x360] sm:$0x1] 0.0
      %180 = vst [vmem:[#allocation2 + $0x3f0] sm:$0x1] 0.0
      %181 = vst [vmem:[#allocation2 + $0x480] sm:$0x1] 0.0
      %182 = vst [vmem:[#allocation2 + $0x510] sm:$0x1] 0.0
      %183 = vst [vmem:[#allocation2 + $0x5a0] sm:$0x1] 0.0
      %184 = vst [vmem:[#allocation2 + $0x630] sm:$0x1] 0.0
      %185 = vst [vmem:[#allocation2 + $0x6c0] sm:$0x1] 0.0
      %186 = vst [vmem:[#allocation2 + $0x750] sm:$0x1] 0.0
      %187 = vst [vmem:[#allocation2 + $0x7e0] sm:$0x1] 0.0
      %188 = vst [vmem:[#allocation2 + $0x870] sm:$0x1] 0.0
      %189 = vst [vmem:[#allocation2 + $0x8] sm:$0xff] 0.0
      %190 = vst [vmem:[#allocation2 + $0x50] sm:$0xff] 0.0
      %191 = vst [vmem:[#allocation2 + $0x10] sm:$0xff] 0.0
      %192 = vst [vmem:[#allocation2 + $0x58] sm:$0xff] 0.0
      %193 = vst [vmem:[#allocation2 + $0x5f] sm:$0x1] 0.0
      %194 = vst [vmem:[#allocation2 + $0xef] sm:$0x1] 0.0
      %195 = vst [vmem:[#allocation2 + $0x17f] sm:$0x1] 0.0
      %196 = vst [vmem:[#allocation2 + $0x20f] sm:$0x1] 0.0
      %197 = vst [vmem:[#allocation2 + $0x29f] sm:$0x1] 0.0
      %198 = vst [vmem:[#allocation2 + $0x32f] sm:$0x1] 0.0
      %199 = vst [vmem:[#allocation2 + $0x3bf] sm:$0x1] 0.0
      %200 = vst [vmem:[#allocation2 + $0x44f] sm:$0x1] 0.0
      %201 = vst [vmem:[#allocation2 + $0x4df] sm:$0x1] 0.0
      %202 = vst [vmem:[#allocation2 + $0x56f] sm:$0x1] 0.0
      %203 = vst [vmem:[#allocation2 + $0x5ff] sm:$0x1] 0.0
      %204 = vst [vmem:[#allocation2 + $0x68f] sm:$0x1] 0.0
      %205 = vst [vmem:[#allocation2 + $0x71f] sm:$0x1] 0.0
      %206 = vst [vmem:[#allocation2 + $0x7af] sm:$0x1] 0.0
      %207 = vst [vmem:[#allocation2 + $0x83f] sm:$0x1] 0.0
      %208 = vst [vmem:[#allocation2 + $0x8cf] sm:$0x1] 0.0
      %209 = vst [vmem:[#allocation2 + $0x18] sm:$0x1] 0.0
      %210 = vst [vmem:[#allocation2 + $0xa8] sm:$0x1] 0.0
      %211 = vst [vmem:[#allocation2 + $0x138] sm:$0x1] 0.0
      %212 = vst [vmem:[#allocation2 + $0x1c8] sm:$0x1] 0.0
      %213 = vst [vmem:[#allocation2 + $0x258] sm:$0x1] 0.0
      %214 = vst [vmem:[#allocation2 + $0x2e8] sm:$0x1] 0.0
      %215 = vst [vmem:[#allocation2 + $0x378] sm:$0x1] 0.0
      %216 = vst [vmem:[#allocation2 + $0x408] sm:$0x1] 0.0
      %217 = vst [vmem:[#allocation2 + $0x498] sm:$0x1] 0.0
      %218 = vst [vmem:[#allocation2 + $0x528] sm:$0x1] 0.0
      %219 = vst [vmem:[#allocation2 + $0x5b8] sm:$0x1] 0.0
      %220 = vst [vmem:[#allocation2 + $0x648] sm:$0x1] 0.0
      %221 = vst [vmem:[#allocation2 + $0x6d8] sm:$0x1] 0.0
      %222 = vst [vmem:[#allocation2 + $0x768] sm:$0x1] 0.0
      %223 = vst [vmem:[#allocation2 + $0x7f8] sm:$0x1] 0.0
      %224 = vst [vmem:[#allocation2 + $0x888] sm:$0x1] 0.0
      %225 = vst [vmem:[#allocation2 + $0x77] sm:$0x1] 0.0
      %226 = vst [vmem:[#allocation2 + $0x107] sm:$0x1] 0.0
      %227 = vst [vmem:[#allocation2 + $0x197] sm:$0x1] 0.0
      %228 = vst [vmem:[#allocation2 + $0x227] sm:$0x1] 0.0
      %229 = vst [vmem:[#allocation2 + $0x2b7] sm:$0x1] 0.0
      %230 = vst [vmem:[#allocation2 + $0x347] sm:$0x1] 0.0
      %231 = vst [vmem:[#allocation2 + $0x3d7] sm:$0x1] 0.0
      %232 = vst [vmem:[#allocation2 + $0x467] sm:$0x1] 0.0
      %233 = vst [vmem:[#allocation2 + $0x4f7] sm:$0x1] 0.0
      %234 = vst [vmem:[#allocation2 + $0x587] sm:$0x1] 0.0
      %235 = vst [vmem:[#allocation2 + $0x617] sm:$0x1] 0.0
      %236 = vst [vmem:[#allocation2 + $0x6a7] sm:$0x1] 0.0
      %237 = vst [vmem:[#allocation2 + $0x737] sm:$0x1] 0.0
      %238 = vst [vmem:[#allocation2 + $0x7c7] sm:$0x1] 0.0
      %239 = vst [vmem:[#allocation2 + $0x857] sm:$0x1] 0.0
      %240 = vst [vmem:[#allocation2 + $0x8e7] sm:$0x1] 0.0
      %s241 = scalar_lea.vmem [#allocation2], 2160
      %242 = vst [vmem:[%s241 + $0x30] sm:$0xff] 0.0
      %243 = vst [vmem:[%s241 + $0x78] sm:$0xff] 0.0
      %244 = vst [vmem:[#allocation2 + $0x30] sm:$0x1] 0.0
      %245 = vst [vmem:[#allocation2 + $0xc0] sm:$0x1] 0.0
      %246 = vst [vmem:[#allocation2 + $0x150] sm:$0x1] 0.0
      %247 = vst [vmem:[#allocation2 + $0x1e0] sm:$0x1] 0.0
      %248 = vst [vmem:[#allocation2 + $0x270] sm:$0x1] 0.0
      %249 = vst [vmem:[#allocation2 + $0x300] sm:$0x1] 0.0
      %250 = vst [vmem:[#allocation2 + $0x390] sm:$0x1] 0.0
      %251 = vst [vmem:[#allocation2 + $0x420] sm:$0x1] 0.0
      %252 = vst [vmem:[#allocation2 + $0x4b0] sm:$0x1] 0.0
      %253 = vst [vmem:[#allocation2 + $0x540] sm:$0x1] 0.0
      %254 = vst [vmem:[#allocation2 + $0x5d0] sm:$0x1] 0.0
      %255 = vst [vmem:[#allocation2 + $0x660] sm:$0x1] 0.0
      %256 = vst [vmem:[#allocation2 + $0x6f0] sm:$0x1] 0.0
      %257 = vst [vmem:[#allocation2 + $0x780] sm:$0x1] 0.0
      %258 = vst [vmem:[#allocation2 + $0x810] sm:$0x1] 0.0
      %259 = vst [vmem:[#allocation2 + $0x8a0] sm:$0x1] 0.0
      %260 = vst [vmem:[%s241 + $0x38] sm:$0xff] 0.0
      %261 = vst [vmem:[%s241 + $0x80] sm:$0xff] 0.0
      %262 = vst [vmem:[%s241 + $0x40] sm:$0xff] 0.0
      %263 = vst [vmem:[%s241 + $0x88] sm:$0xff] 0.0
      %264 = vst [vmem:[#allocation2 + $0x8f] sm:$0x1] 0.0
      %265 = vst [vmem:[#allocation2 + $0x11f] sm:$0x1] 0.0
      %266 = vst [vmem:[#allocation2 + $0x1af] sm:$0x1] 0.0
      %267 = vst [vmem:[#allocation2 + $0x23f] sm:$0x1] 0.0
      %268 = vst [vmem:[#allocation2 + $0x2cf] sm:$0x1] 0.0
      %269 = vst [vmem:[#allocation2 + $0x35f] sm:$0x1] 0.0
      %270 = vst [vmem:[#allocation2 + $0x3ef] sm:$0x1] 0.0
      %271 = vst [vmem:[#allocation2 + $0x47f] sm:$0x1] 0.0
      %272 = vst [vmem:[#allocation2 + $0x50f] sm:$0x1] 0.0
      %273 = vst [vmem:[#allocation2 + $0x59f] sm:$0x1] 0.0
      %274 = vst [vmem:[#allocation2 + $0x62f] sm:$0x1] 0.0
      %275 = vst [vmem:[#allocation2 + $0x6bf] sm:$0x1] 0.0
      %276 = vst [vmem:[#allocation2 + $0x74f] sm:$0x1] 0.0
      %277 = vst [vmem:[#allocation2 + $0x7df] sm:$0x1] 0.0
      %278 = vst [vmem:[#allocation2 + $0x86f] sm:$0x1] 0.0
      %279 = vst [vmem:[#allocation2 + $0x8ff] sm:$0x1] 0.0
      %v280 = vld [vmem:[%s165] sm:$0xff]
      %v281 = vld [vmem:[%s165 + $0x8] sm:$0xff]
      %v282 = vld [vmem:[%s165 + $0x10] sm:$0xff]
      %v283 = vld [vmem:[%s165 + $0x18] sm:$0xff]
      %v284 = vld [vmem:[%s165 + $0x20] sm:$0xff]
      %v285 = vld [vmem:[%s165 + $0x28] sm:$0xff]
      %v286 = vld [vmem:[%s165 + $0x30] sm:$0xff]
      %v287 = vld [vmem:[%s165 + $0x38] sm:$0xff]
      %v288 = vld [vmem:[%s165 + $0x40] sm:$0xff]
      %v289 = vld [vmem:[%s165 + $0x48] sm:$0xff]
      %v290 = vld [vmem:[%s165 + $0x50] sm:$0xff]
      %v291 = vld [vmem:[%s165 + $0x58] sm:$0xff]
      %v292 = vld [vmem:[%s165 + $0x60] sm:$0xff]
      %v293 = vld [vmem:[%s165 + $0x68] sm:$0xff]
      %v294 = vld [vmem:[%s165 + $0x70] sm:$0xff]
      %v295 = vld [vmem:[%s165 + $0x78] sm:$0xff]
      %v296 = vld [vmem:[%s165 + $0x80] sm:$0xff]
      %v297 = vld [vmem:[%s165 + $0x88] sm:$0xff]
      %v298 = vld [vmem:[%s165 + $0x90] sm:$0xff]
      %v299 = vld [vmem:[%s165 + $0x98] sm:$0xff]
      %v300 = vld [vmem:[%s165 + $0xa0] sm:$0xff]
      %v301 = vld [vmem:[%s165 + $0xa8] sm:$0xff]
      %v302 = vld [vmem:[%s165 + $0xb0] sm:$0xff]
      %v303 = vld [vmem:[%s165 + $0xb8] sm:$0xff]
      %v304 = vld [vmem:[%s165 + $0xc0] sm:$0xff]
      %v305 = vld [vmem:[%s165 + $0xc8] sm:$0xff]
      %v306 = vld [vmem:[%s165 + $0xd0] sm:$0xff]
      %v307 = vld [vmem:[%s165 + $0xd8] sm:$0xff]
      %v308 = vld [vmem:[%s165 + $0xe0] sm:$0xff]
      %v309 = vld [vmem:[%s165 + $0xe8] sm:$0xff]
      %v310 = vld [vmem:[%s165 + $0xf0] sm:$0xff]
      %v311 = vld [vmem:[%s165 + $0xf8] sm:$0xff]
      %312 = vst [vmem:[%s170] sm:$0xff] %v280
      %313 = vst [vmem:[%s170 + $0x8] sm:$0xff] %v281
      %314 = vst [vmem:[%s170 + $0x10] sm:$0xff] %v282
      %315 = vst [vmem:[%s170 + $0x18] sm:$0xff] %v283
      %316 = vst [vmem:[%s170 + $0x20] sm:$0xff] %v284
      %317 = vst [vmem:[%s170 + $0x28] sm:$0xff] %v285
      %318 = vst [vmem:[%s170 + $0x30] sm:$0xff] %v286
      %319 = vst [vmem:[%s170 + $0x38] sm:$0xff] %v287
      %320 = vst [vmem:[%s170 + $0x40] sm:$0xff] %v288
      %321 = vst [vmem:[%s170 + $0x48] sm:$0xff] %v289
      %322 = vst [vmem:[%s170 + $0x50] sm:$0xff] %v290
      %323 = vst [vmem:[%s170 + $0x58] sm:$0xff] %v291
      %324 = vst [vmem:[%s170 + $0x60] sm:$0xff] %v292
      %325 = vst [vmem:[%s170 + $0x68] sm:$0xff] %v293
      %326 = vst [vmem:[%s170 + $0x70] sm:$0xff] %v294
      %327 = vst [vmem:[%s170 + $0x78] sm:$0xff] %v295
      %328 = vst [vmem:[%s170 + $0x80] sm:$0xff] %v296
      %329 = vst [vmem:[%s170 + $0x88] sm:$0xff] %v297
      %330 = vst [vmem:[%s170 + $0x90] sm:$0xff] %v298
      %331 = vst [vmem:[%s170 + $0x98] sm:$0xff] %v299
      %332 = vst [vmem:[%s170 + $0xa0] sm:$0xff] %v300
      %333 = vst [vmem:[%s170 + $0xa8] sm:$0xff] %v301
      %334 = vst [vmem:[%s170 + $0xb0] sm:$0xff] %v302
      %335 = vst [vmem:[%s170 + $0xb8] sm:$0xff] %v303
      %336 = vst [vmem:[%s170 + $0xc0] sm:$0xff] %v304
      %337 = vst [vmem:[%s170 + $0xc8] sm:$0xff] %v305
      %338 = vst [vmem:[%s170 + $0xd0] sm:$0xff] %v306
      %339 = vst [vmem:[%s170 + $0xd8] sm:$0xff] %v307
      %340 = vst [vmem:[%s170 + $0xe0] sm:$0xff] %v308
      %341 = vst [vmem:[%s170 + $0xe8] sm:$0xff] %v309
      %342 = vst [vmem:[%s170 + $0xf0] sm:$0xff] %v310
      %343 = vst [vmem:[%s170 + $0xf8] sm:$0xff] %v311
      %v344 = vld [vmem:[%s170] sm:$0xff]
      %v345 = vld [vmem:[%s170 + $0x8] sm:$0xff]
      %v346 = vld [vmem:[%s170 + $0x10] sm:$0xff]
      %v347 = vld [vmem:[%s170 + $0x18] sm:$0xff]
      %v348 = vld [vmem:[%s170 + $0x20] sm:$0xff]
      %v349 = vld [vmem:[%s170 + $0x28] sm:$0xff]
      %v350 = vld [vmem:[%s170 + $0x30] sm:$0xff]
      %v351 = vld [vmem:[%s170 + $0x38] sm:$0xff]
      %v352 = vld [vmem:[%s170 + $0x40] sm:$0xff]
      %v353 = vld [vmem:[%s170 + $0x48] sm:$0xff]
      %v354 = vld [vmem:[%s170 + $0x50] sm:$0xff]
      %v355 = vld [vmem:[%s170 + $0x58] sm:$0xff]
      %v356 = vld [vmem:[%s170 + $0x60] sm:$0xff]
      %v357 = vld [vmem:[%s170 + $0x68] sm:$0xff]
      %v358 = vld [vmem:[%s170 + $0x70] sm:$0xff]
      %v359 = vld [vmem:[%s170 + $0x78] sm:$0xff]
      %v360 = vld [vmem:[%s170 + $0x80] sm:$0xff]
      %v361 = vld [vmem:[%s170 + $0x88] sm:$0xff]
      %v362 = vld [vmem:[%s170 + $0x90] sm:$0xff]
      %v363 = vld [vmem:[%s170 + $0x98] sm:$0xff]
      %v364 = vld [vmem:[%s170 + $0xa0] sm:$0xff]
      %v365 = vld [vmem:[%s170 + $0xa8] sm:$0xff]
      %v366 = vld [vmem:[%s170 + $0xb0] sm:$0xff]
      %v367 = vld [vmem:[%s170 + $0xb8] sm:$0xff]
      %v368 = vld [vmem:[%s170 + $0xc0] sm:$0xff]
      %v369 = vld [vmem:[%s170 + $0xc8] sm:$0xff]
      %v370 = vld [vmem:[%s170 + $0xd0] sm:$0xff]
      %v371 = vld [vmem:[%s170 + $0xd8] sm:$0xff]
      %v372 = vld [vmem:[%s170 + $0xe0] sm:$0xff]
      %v373 = vld [vmem:[%s170 + $0xe8] sm:$0xff]
      %v374 = vld [vmem:[%s170 + $0xf0] sm:$0xff]
      %v375 = vld [vmem:[%s170 + $0xf8] sm:$0xff]
      %v376 = vmax.f32 %v344, 0.0
      %v377 = vmax.f32 %v345, 0.0
      %v378 = vmax.f32 %v346, 0.0
      %v379 = vmax.f32 %v347, 0.0
      %v380 = vmax.f32 %v348, 0.0
      %v381 = vmax.f32 %v349, 0.0
      %v382 = vmax.f32 %v350, 0.0
      %v383 = vmax.f32 %v351, 0.0
      %v384 = vmax.f32 %v352, 0.0
      %v385 = vmax.f32 %v353, 0.0
      %v386 = vmax.f32 %v354, 0.0
      %v387 = vmax.f32 %v355, 0.0
      %v388 = vmax.f32 %v356, 0.0
      %v389 = vmax.f32 %v357, 0.0
      %v390 = vmax.f32 %v358, 0.0
      %v391 = vmax.f32 %v359, 0.0
      %v392 = vmax.f32 %v360, 0.0
      %v393 = vmax.f32 %v361, 0.0
      %v394 = vmax.f32 %v362, 0.0
      %v395 = vmax.f32 %v363, 0.0
      %v396 = vmax.f32 %v364, 0.0
      %v397 = vmax.f32 %v365, 0.0
      %v398 = vmax.f32 %v366, 0.0
      %v399 = vmax.f32 %v367, 0.0
      %v400 = vmax.f32 %v368, 0.0
      %v401 = vmax.f32 %v369, 0.0
      %v402 = vmax.f32 %v370, 0.0
      %v403 = vmax.f32 %v371, 0.0
      %v404 = vmax.f32 %v372, 0.0
      %v405 = vmax.f32 %v373, 0.0
      %v406 = vmax.f32 %v374, 0.0
      %v407 = vmax.f32 %v375, 0.0
      %vm438 = vcmask 1040384
      %v439 = vrot.slane %v376, 7
      %v440 = vrot.slane %v377, 7
      %v441 = vsel %vm438, %v439, %v440
      %v442 = vrot.slane %v378, 7
      %v443 = vrot.slane %v379, 7
      %v444 = vsel %vm438, %v442, %v443
      %v445 = vrot.slane %v380, 7
      %v446 = vrot.slane %v381, 7
      %v447 = vsel %vm438, %v445, %v446
      %v448 = vrot.slane %v382, 7
      %v449 = vrot.slane %v383, 7
      %v450 = vsel %vm438, %v448, %v449
      %v451 = vrot.slane %v384, 7
      %v452 = vrot.slane %v385, 7
      %v453 = vsel %vm438, %v451, %v452
      %v454 = vrot.slane %v386, 7
      %v455 = vrot.slane %v387, 7
      %v456 = vsel %vm438, %v454, %v455
      %v457 = vrot.slane %v388, 7
      %v458 = vrot.slane %v389, 7
      %v459 = vsel %vm438, %v457, %v458
      %v460 = vrot.slane %v390, 7
      %v461 = vrot.slane %v391, 7
      %v462 = vsel %vm438, %v460, %v461
      %v463 = vrot.slane %v392, 7
      %v464 = vrot.slane %v393, 7
      %v465 = vsel %vm438, %v463, %v464
      %v466 = vrot.slane %v394, 7
      %v467 = vrot.slane %v395, 7
      %v468 = vsel %vm438, %v466, %v467
      %v469 = vrot.slane %v396, 7
      %v470 = vrot.slane %v397, 7
      %v471 = vsel %vm438, %v469, %v470
      %v472 = vrot.slane %v398, 7
      %v473 = vrot.slane %v399, 7
      %v474 = vsel %vm438, %v472, %v473
      %v475 = vrot.slane %v400, 7
      %v476 = vrot.slane %v401, 7
      %v477 = vsel %vm438, %v475, %v476
      %v478 = vrot.slane %v402, 7
      %v479 = vrot.slane %v403, 7
      %v480 = vsel %vm438, %v478, %v479
      %v481 = vrot.slane %v404, 7
      %v482 = vrot.slane %v405, 7
      %v483 = vsel %vm438, %v481, %v482
      %s514 = scalar_lea.vmem [#allocation2], 144
      %515 = vst [vmem:[%s514] sm:$0xfe] %v439
      %516 = vst [vmem:[%s514 + $0x48] sm:$0xff] %v441
      %517 = vst [vmem:[%s514 + $0x90] sm:$0xfe] %v442
      %518 = vst [vmem:[%s514 + $0xd8] sm:$0xff] %v444
      %519 = vst [vmem:[%s514 + $0x120] sm:$0xfe] %v445
      %520 = vst [vmem:[%s514 + $0x168] sm:$0xff] %v447
      %521 = vst [vmem:[%s514 + $0x1b0] sm:$0xfe] %v448
      %522 = vst [vmem:[%s514 + $0x1f8] sm:$0xff] %v450
      %523 = vst [vmem:[%s514 + $0x240] sm:$0xfe] %v451
      %524 = vst [vmem:[%s514 + $0x288] sm:$0xff] %v453
      %525 = vst [vmem:[%s514 + $0x2d0] sm:$0xfe] %v454
      %526 = vst [vmem:[%s514 + $0x318] sm:$0xff] %v456
      %527 = vst [vmem:[%s514 + $0x360] sm:$0xfe] %v457
      %528 = vst [vmem:[%s514 + $0x3a8] sm:$0xff] %v459
      %529 = vst [vmem:[%s514 + $0x3f0] sm:$0xfe] %v460
      %530 = vst [vmem:[%s514 + $0x438] sm:$0xff] %v462
      %531 = vst [vmem:[%s514 + $0x480] sm:$0xfe] %v463
      %532 = vst [vmem:[%s514 + $0x4c8] sm:$0xff] %v465
      %533 = vst [vmem:[%s514 + $0x510] sm:$0xfe] %v466
      %534 = vst [vmem:[%s514 + $0x558] sm:$0xff] %v468
      %535 = vst [vmem:[%s514 + $0x5a0] sm:$0xfe] %v469
      %536 = vst [vmem:[%s514 + $0x5e8] sm:$0xff] %v471
      %537 = vst [vmem:[%s514 + $0x630] sm:$0xfe] %v472
      %538 = vst [vmem:[%s514 + $0x678] sm:$0xff] %v474
      %539 = vst [vmem:[%s514 + $0x6c0] sm:$0xfe] %v475
      %540 = vst [vmem:[%s514 + $0x708] sm:$0xff] %v477
      %541 = vst [vmem:[%s514 + $0x750] sm:$0xfe] %v478
      %542 = vst [vmem:[%s514 + $0x798] sm:$0xff] %v480
      %543 = vst [vmem:[%s514 + $0x7e0] sm:$0xfe] %v481
      %544 = vst [vmem:[%s514 + $0x828] sm:$0xff] %v483
      %545 = vst [vmem:[%s514 + $0x8] sm:$0xff] %v376
      %546 = vst [vmem:[%s514 + $0x50] sm:$0xff] %v377
      %547 = vst [vmem:[%s514 + $0x98] sm:$0xff] %v378
      %548 = vst [vmem:[%s514 + $0xe0] sm:$0xff] %v379
      %549 = vst [vmem:[%s514 + $0x128] sm:$0xff] %v380
      %550 = vst [vmem:[%s514 + $0x170] sm:$0xff] %v381
      %551 = vst [vmem:[%s514 + $0x1b8] sm:$0xff] %v382
      %552 = vst [vmem:[%s514 + $0x200] sm:$0xff] %v383
      %553 = vst [vmem:[%s514 + $0x248] sm:$0xff] %v384
      %554 = vst [vmem:[%s514 + $0x290] sm:$0xff] %v385
      %555 = vst [vmem:[%s514 + $0x2d8] sm:$0xff] %v386
      %556 = vst [vmem:[%s514 + $0x320] sm:$0xff] %v387
      %557 = vst [vmem:[%s514 + $0x368] sm:$0xff] %v388
      %558 = vst [vmem:[%s514 + $0x3b0] sm:$0xff] %v389
      %559 = vst [vmem:[%s514 + $0x3f8] sm:$0xff] %v390
      %560 = vst [vmem:[%s514 + $0x440] sm:$0xff] %v391
      %561 = vst [vmem:[%s514 + $0x488] sm:$0xff] %v392
      %562 = vst [vmem:[%s514 + $0x4d0] sm:$0xff] %v393
      %563 = vst [vmem:[%s514 + $0x518] sm:$0xff] %v394
      %564 = vst [vmem:[%s514 + $0x560] sm:$0xff] %v395
      %565 = vst [vmem:[%s514 + $0x5a8] sm:$0xff] %v396
      %566 = vst [vmem:[%s514 + $0x5f0] sm:$0xff] %v397
      %567 = vst [vmem:[%s514 + $0x638] sm:$0xff] %v398
      %568 = vst [vmem:[%s514 + $0x680] sm:$0xff] %v399
      %569 = vst [vmem:[%s514 + $0x6c8] sm:$0xff] %v400
      %570 = vst [vmem:[%s514 + $0x710] sm:$0xff] %v401
      %571 = vst [vmem:[%s514 + $0x758] sm:$0xff] %v402
      %572 = vst [vmem:[%s514 + $0x7a0] sm:$0xff] %v403
      %573 = vst [vmem:[%s514 + $0x7e8] sm:$0xff] %v404
      %574 = vst [vmem:[%s514 + $0x830] sm:$0xff] %v405
      %vm575 = vcmask 1046528
      %v576 = vrot.slane %v376, 1
      %v577 = vrot.slane %v377, 1
      %v578 = vsel %vm575, %v576, %v577
      %v579 = vrot.slane %v378, 1
      %v580 = vrot.slane %v379, 1
      %v581 = vsel %vm575, %v579, %v580
      %v582 = vrot.slane %v380, 1
      %v583 = vrot.slane %v381, 1
      %v584 = vsel %vm575, %v582, %v583
      %v585 = vrot.slane %v382, 1
      %v586 = vrot.slane %v383, 1
      %v587 = vsel %vm575, %v585, %v586
      %v588 = vrot.slane %v384, 1
      %v589 = vrot.slane %v385, 1
      %v590 = vsel %vm575, %v588, %v589
      %v591 = vrot.slane %v386, 1
      %v592 = vrot.slane %v387, 1
      %v593 = vsel %vm575, %v591, %v592
      %v594 = vrot.slane %v388, 1
      %v595 = vrot.slane %v389, 1
      %v596 = vsel %vm575, %v594, %v595
      %v597 = vrot.slane %v390, 1
      %v598 = vrot.slane %v391, 1
      %v599 = vsel %vm575, %v597, %v598
      %v600 = vrot.slane %v392, 1
      %v601 = vrot.slane %v393, 1
      %v602 = vsel %vm575, %v600, %v601
      %v603 = vrot.slane %v394, 1
      %v604 = vrot.slane %v395, 1
      %v605 = vsel %vm575, %v603, %v604
      %v606 = vrot.slane %v396, 1
      %v607 = vrot.slane %v397, 1
      %v608 = vsel %vm575, %v606, %v607
      %v609 = vrot.slane %v398, 1
      %v610 = vrot.slane %v399, 1
      %v611 = vsel %vm575, %v609, %v610
      %v612 = vrot.slane %v400, 1
      %v613 = vrot.slane %v401, 1
      %v614 = vsel %vm575, %v612, %v613
      %v615 = vrot.slane %v402, 1
      %v616 = vrot.slane %v403, 1
      %v617 = vsel %vm575, %v615, %v616
      %v618 = vrot.slane %v404, 1
      %v619 = vrot.slane %v405, 1
      %v620 = vsel %vm575, %v618, %v619
      %651 = vst [vmem:[%s514 + $0x10] sm:$0xff] %v578
      %652 = vst [vmem:[%s514 + $0x58] sm:$0x7f] %v577
      %653 = vst [vmem:[%s514 + $0xa0] sm:$0xff] %v581
      %654 = vst [vmem:[%s514 + $0xe8] sm:$0x7f] %v580
      %655 = vst [vmem:[%s514 + $0x130] sm:$0xff] %v584
      %656 = vst [vmem:[%s514 + $0x178] sm:$0x7f] %v583
      %657 = vst [vmem:[%s514 + $0x1c0] sm:$0xff] %v587
      %658 = vst [vmem:[%s514 + $0x208] sm:$0x7f] %v586
      %659 = vst [vmem:[%s514 + $0x250] sm:$0xff] %v590
      %660 = vst [vmem:[%s514 + $0x298] sm:$0x7f] %v589
      %661 = vst [vmem:[%s514 + $0x2e0] sm:$0xff] %v593
      %662 = vst [vmem:[%s514 + $0x328] sm:$0x7f] %v592
      %663 = vst [vmem:[%s514 + $0x370] sm:$0xff] %v596
      %664 = vst [vmem:[%s514 + $0x3b8] sm:$0x7f] %v595
      %665 = vst [vmem:[%s514 + $0x400] sm:$0xff] %v599
      %666 = vst [vmem:[%s514 + $0x448] sm:$0x7f] %v598
      %667 = vst [vmem:[%s514 + $0x490] sm:$0xff] %v602
      %668 = vst [vmem:[%s514 + $0x4d8] sm:$0x7f] %v601
      %669 = vst [vmem:[%s514 + $0x520] sm:$0xff] %v605
      %670 = vst [vmem:[%s514 + $0x568] sm:$0x7f] %v604
      %671 = vst [vmem:[%s514 + $0x5b0] sm:$0xff] %v608
      %672 = vst [vmem:[%s514 + $0x5f8] sm:$0x7f] %v607
      %673 = vst [vmem:[%s514 + $0x640] sm:$0xff] %v611
      %674 = vst [vmem:[%s514 + $0x688] sm:$0x7f] %v610
      %675 = vst [vmem:[%s514 + $0x6d0] sm:$0xff] %v614
      %676 = vst [vmem:[%s514 + $0x718] sm:$0x7f] %v613
      %677 = vst [vmem:[%s514 + $0x760] sm:$0xff] %v617
      %678 = vst [vmem:[%s514 + $0x7a8] sm:$0x7f] %v616
      %679 = vst [vmem:[%s514 + $0x7f0] sm:$0xff] %v620
      %680 = vst [vmem:[%s514 + $0x838] sm:$0x7f] %v619
      %v683 = vrot.slane %v406, 7
      %v684 = vrot.slane %v407, 7
      %v685 = vsel %vm438, %v683, %v684
      %688 = vst [vmem:[#allocation2 + $0x18] sm:$0xfe] %v439
      %689 = vst [vmem:[#allocation2 + $0x60] sm:$0xff] %v441
      %690 = vst [vmem:[#allocation2 + $0xa8] sm:$0xfe] %v442
      %691 = vst [vmem:[#allocation2 + $0xf0] sm:$0xff] %v444
      %692 = vst [vmem:[#allocation2 + $0x138] sm:$0xfe] %v445
      %693 = vst [vmem:[#allocation2 + $0x180] sm:$0xff] %v447
      %694 = vst [vmem:[#allocation2 + $0x1c8] sm:$0xfe] %v448
      %695 = vst [vmem:[#allocation2 + $0x210] sm:$0xff] %v450
      %696 = vst [vmem:[#allocation2 + $0x258] sm:$0xfe] %v451
      %697 = vst [vmem:[#allocation2 + $0x2a0] sm:$0xff] %v453
      %698 = vst [vmem:[#allocation2 + $0x2e8] sm:$0xfe] %v454
      %699 = vst [vmem:[#allocation2 + $0x330] sm:$0xff] %v456
      %700 = vst [vmem:[#allocation2 + $0x378] sm:$0xfe] %v457
      %701 = vst [vmem:[#allocation2 + $0x3c0] sm:$0xff] %v459
      %702 = vst [vmem:[#allocation2 + $0x408] sm:$0xfe] %v460
      %703 = vst [vmem:[#allocation2 + $0x450] sm:$0xff] %v462
      %704 = vst [vmem:[#allocation2 + $0x498] sm:$0xfe] %v463
      %705 = vst [vmem:[#allocation2 + $0x4e0] sm:$0xff] %v465
      %706 = vst [vmem:[#allocation2 + $0x528] sm:$0xfe] %v466
      %707 = vst [vmem:[#allocation2 + $0x570] sm:$0xff] %v468
      %708 = vst [vmem:[#allocation2 + $0x5b8] sm:$0xfe] %v469
      %709 = vst [vmem:[#allocation2 + $0x600] sm:$0xff] %v471
      %710 = vst [vmem:[#allocation2 + $0x648] sm:$0xfe] %v472
      %711 = vst [vmem:[#allocation2 + $0x690] sm:$0xff] %v474
      %712 = vst [vmem:[#allocation2 + $0x6d8] sm:$0xfe] %v475
      %713 = vst [vmem:[#allocation2 + $0x720] sm:$0xff] %v477
      %714 = vst [vmem:[#allocation2 + $0x768] sm:$0xfe] %v478
      %715 = vst [vmem:[#allocation2 + $0x7b0] sm:$0xff] %v480
      %716 = vst [vmem:[#allocation2 + $0x7f8] sm:$0xfe] %v481
      %717 = vst [vmem:[#allocation2 + $0x840] sm:$0xff] %v483
      %718 = vst [vmem:[#allocation2 + $0x888] sm:$0xfe] %v683
      %719 = vst [vmem:[#allocation2 + $0x8d0] sm:$0xff] %v685
      %720 = vst [vmem:[#allocation2 + $0x20] sm:$0xff] %v376
      %721 = vst [vmem:[#allocation2 + $0x68] sm:$0xff] %v377
      %722 = vst [vmem:[#allocation2 + $0xb0] sm:$0xff] %v378
      %723 = vst [vmem:[#allocation2 + $0xf8] sm:$0xff] %v379
      %724 = vst [vmem:[#allocation2 + $0x140] sm:$0xff] %v380
      %725 = vst [vmem:[#allocation2 + $0x188] sm:$0xff] %v381
      %726 = vst [vmem:[#allocation2 + $0x1d0] sm:$0xff] %v382
      %727 = vst [vmem:[#allocation2 + $0x218] sm:$0xff] %v383
      %728 = vst [vmem:[#allocation2 + $0x260] sm:$0xff] %v384
      %729 = vst [vmem:[#allocation2 + $0x2a8] sm:$0xff] %v385
      %730 = vst [vmem:[#allocation2 + $0x2f0] sm:$0xff] %v386
      %731 = vst [vmem:[#allocation2 + $0x338] sm:$0xff] %v387
      %732 = vst [vmem:[#allocation2 + $0x380] sm:$0xff] %v388
      %733 = vst [vmem:[#allocation2 + $0x3c8] sm:$0xff] %v389
      %734 = vst [vmem:[#allocation2 + $0x410] sm:$0xff] %v390
      %735 = vst [vmem:[#allocation2 + $0x458] sm:$0xff] %v391
      %736 = vst [vmem:[#allocation2 + $0x4a0] sm:$0xff] %v392
      %737 = vst [vmem:[#allocation2 + $0x4e8] sm:$0xff] %v393
      %738 = vst [vmem:[#allocation2 + $0x530] sm:$0xff] %v394
      %739 = vst [vmem:[#allocation2 + $0x578] sm:$0xff] %v395
      %740 = vst [vmem:[#allocation2 + $0x5c0] sm:$0xff] %v396
      %741 = vst [vmem:[#allocation2 + $0x608] sm:$0xff] %v397
      %742 = vst [vmem:[#allocation2 + $0x650] sm:$0xff] %v398
      %743 = vst [vmem:[#allocation2 + $0x698] sm:$0xff] %v399
      %744 = vst [vmem:[#allocation2 + $0x6e0] sm:$0xff] %v400
      %745 = vst [vmem:[#allocation2 + $0x728] sm:$0xff] %v401
      %746 = vst [vmem:[#allocation2 + $0x770] sm:$0xff] %v402
      %747 = vst [vmem:[#allocation2 + $0x7b8] sm:$0xff] %v403
      %748 = vst [vmem:[#allocation2 + $0x800] sm:$0xff] %v404
      %749 = vst [vmem:[#allocation2 + $0x848] sm:$0xff] %v405
      %750 = vst [vmem:[#allocation2 + $0x890] sm:$0xff] %v406
      %751 = vst [vmem:[#allocation2 + $0x8d8] sm:$0xff] %v407
      %v752 = vrot.slane %v406, 1
      %v753 = vrot.slane %v407, 1
      %v754 = vsel %vm575, %v752, %v753
      %757 = vst [vmem:[#allocation2 + $0x28] sm:$0xff] %v578
      %758 = vst [vmem:[#allocation2 + $0x70] sm:$0x7f] %v577
      %759 = vst [vmem:[#allocation2 + $0xb8] sm:$0xff] %v581
      %760 = vst [vmem:[#allocation2 + $0x100] sm:$0x7f] %v580
      %761 = vst [vmem:[#allocation2 + $0x148] sm:$0xff] %v584
      %762 = vst [vmem:[#allocation2 + $0x190] sm:$0x7f] %v583
      %763 = vst [vmem:[#allocation2 + $0x1d8] sm:$0xff] %v587
      %764 = vst [vmem:[#allocation2 + $0x220] sm:$0x7f] %v586
      %765 = vst [vmem:[#allocation2 + $0x268] sm:$0xff] %v590
      %766 = vst [vmem:[#allocation2 + $0x2b0] sm:$0x7f] %v589
      %767 = vst [vmem:[#allocation2 + $0x2f8] sm:$0xff] %v593
      %768 = vst [vmem:[#allocation2 + $0x340] sm:$0x7f] %v592
      %769 = vst [vmem:[#allocation2 + $0x388] sm:$0xff] %v596
      %770 = vst [vmem:[#allocation2 + $0x3d0] sm:$0x7f] %v595
      %771 = vst [vmem:[#allocation2 + $0x418] sm:$0xff] %v599
      %772 = vst [vmem:[#allocation2 + $0x460] sm:$0x7f] %v598
      %773 = vst [vmem:[#allocation2 + $0x4a8] sm:$0xff] %v602
      %774 = vst [vmem:[#allocation2 + $0x4f0] sm:$0x7f] %v601
      %775 = vst [vmem:[#allocation2 + $0x538] sm:$0xff] %v605
      %776 = vst [vmem:[#allocation2 + $0x580] sm:$0x7f] %v604
      %777 = vst [vmem:[#allocation2 + $0x5c8] sm:$0xff] %v608
      %778 = vst [vmem:[#allocation2 + $0x610] sm:$0x7f] %v607
      %779 = vst [vmem:[#allocation2 + $0x658] sm:$0xff] %v611
      %780 = vst [vmem:[#allocation2 + $0x6a0] sm:$0x7f] %v610
      %781 = vst [vmem:[#allocation2 + $0x6e8] sm:$0xff] %v614
      %782 = vst [vmem:[#allocation2 + $0x730] sm:$0x7f] %v613
      %783 = vst [vmem:[#allocation2 + $0x778] sm:$0xff] %v617
      %784 = vst [vmem:[#allocation2 + $0x7c0] sm:$0x7f] %v616
      %785 = vst [vmem:[#allocation2 + $0x808] sm:$0xff] %v620
      %786 = vst [vmem:[#allocation2 + $0x850] sm:$0x7f] %v619
      %787 = vst [vmem:[#allocation2 + $0x898] sm:$0xff] %v754
      %788 = vst [vmem:[#allocation2 + $0x8e0] sm:$0x7f] %v753
      %789 = vst [vmem:[#allocation2 + $0x30] sm:$0xfe] %v442
      %790 = vst [vmem:[#allocation2 + $0x78] sm:$0xff] %v444
      %791 = vst [vmem:[#allocation2 + $0xc0] sm:$0xfe] %v445
      %792 = vst [vmem:[#allocation2 + $0x108] sm:$0xff] %v447
      %793 = vst [vmem:[#allocation2 + $0x150] sm:$0xfe] %v448
      %794 = vst [vmem:[#allocation2 + $0x198] sm:$0xff] %v450
      %795 = vst [vmem:[#allocation2 + $0x1e0] sm:$0xfe] %v451
      %796 = vst [vmem:[#allocation2 + $0x228] sm:$0xff] %v453
      %797 = vst [vmem:[#allocation2 + $0x270] sm:$0xfe] %v454
      %798 = vst [vmem:[#allocation2 + $0x2b8] sm:$0xff] %v456
      %799 = vst [vmem:[#allocation2 + $0x300] sm:$0xfe] %v457
      %800 = vst [vmem:[#allocation2 + $0x348] sm:$0xff] %v459
      %801 = vst [vmem:[#allocation2 + $0x390] sm:$0xfe] %v460
      %802 = vst [vmem:[#allocation2 + $0x3d8] sm:$0xff] %v462
      %803 = vst [vmem:[#allocation2 + $0x420] sm:$0xfe] %v463
      %804 = vst [vmem:[#allocation2 + $0x468] sm:$0xff] %v465
      %805 = vst [vmem:[#allocation2 + $0x4b0] sm:$0xfe] %v466
      %806 = vst [vmem:[#allocation2 + $0x4f8] sm:$0xff] %v468
      %807 = vst [vmem:[#allocation2 + $0x540] sm:$0xfe] %v469
      %808 = vst [vmem:[#allocation2 + $0x588] sm:$0xff] %v471
      %809 = vst [vmem:[#allocation2 + $0x5d0] sm:$0xfe] %v472
      %810 = vst [vmem:[#allocation2 + $0x618] sm:$0xff] %v474
      %811 = vst [vmem:[#allocation2 + $0x660] sm:$0xfe] %v475
      %812 = vst [vmem:[#allocation2 + $0x6a8] sm:$0xff] %v477
      %813 = vst [vmem:[#allocation2 + $0x6f0] sm:$0xfe] %v478
      %814 = vst [vmem:[#allocation2 + $0x738] sm:$0xff] %v480
      %815 = vst [vmem:[#allocation2 + $0x780] sm:$0xfe] %v481
      %816 = vst [vmem:[#allocation2 + $0x7c8] sm:$0xff] %v483
      %817 = vst [vmem:[#allocation2 + $0x810] sm:$0xfe] %v683
      %818 = vst [vmem:[#allocation2 + $0x858] sm:$0xff] %v685
      %819 = vst [vmem:[#allocation2 + $0x38] sm:$0xff] %v378
      %820 = vst [vmem:[#allocation2 + $0x80] sm:$0xff] %v379
      %821 = vst [vmem:[#allocation2 + $0xc8] sm:$0xff] %v380
      %822 = vst [vmem:[#allocation2 + $0x110] sm:$0xff] %v381
      %823 = vst [vmem:[#allocation2 + $0x158] sm:$0xff] %v382
      %824 = vst [vmem:[#allocation2 + $0x1a0] sm:$0xff] %v383
      %825 = vst [vmem:[#allocation2 + $0x1e8] sm:$0xff] %v384
      %826 = vst [vmem:[#allocation2 + $0x230] sm:$0xff] %v385
      %827 = vst [vmem:[#allocation2 + $0x278] sm:$0xff] %v386
      %828 = vst [vmem:[#allocation2 + $0x2c0] sm:$0xff] %v387
      %829 = vst [vmem:[#allocation2 + $0x308] sm:$0xff] %v388
      %830 = vst [vmem:[#allocation2 + $0x350] sm:$0xff] %v389
      %831 = vst [vmem:[#allocation2 + $0x398] sm:$0xff] %v390
      %832 = vst [vmem:[#allocation2 + $0x3e0] sm:$0xff] %v391
      %833 = vst [vmem:[#allocation2 + $0x428] sm:$0xff] %v392
      %834 = vst [vmem:[#allocation2 + $0x470] sm:$0xff] %v393
      %835 = vst [vmem:[#allocation2 + $0x4b8] sm:$0xff] %v394
      %836 = vst [vmem:[#allocation2 + $0x500] sm:$0xff] %v395
      %837 = vst [vmem:[#allocation2 + $0x548] sm:$0xff] %v396
      %838 = vst [vmem:[#allocation2 + $0x590] sm:$0xff] %v397
      %839 = vst [vmem:[#allocation2 + $0x5d8] sm:$0xff] %v398
      %840 = vst [vmem:[#allocation2 + $0x620] sm:$0xff] %v399
      %841 = vst [vmem:[#allocation2 + $0x668] sm:$0xff] %v400
      %842 = vst [vmem:[#allocation2 + $0x6b0] sm:$0xff] %v401
      %843 = vst [vmem:[#allocation2 + $0x6f8] sm:$0xff] %v402
      %844 = vst [vmem:[#allocation2 + $0x740] sm:$0xff] %v403
      %845 = vst [vmem:[#allocation2 + $0x788] sm:$0xff] %v404
      %846 = vst [vmem:[#allocation2 + $0x7d0] sm:$0xff] %v405
      %847 = vst [vmem:[#allocation2 + $0x818] sm:$0xff] %v406
      %848 = vst [vmem:[#allocation2 + $0x860] sm:$0xff] %v407
      %849 = vst [vmem:[#allocation2 + $0x40] sm:$0xff] %v581
      %850 = vst [vmem:[#allocation2 + $0x88] sm:$0x7f] %v580
      %851 = vst [vmem:[#allocation2 + $0xd0] sm:$0xff] %v584
      %852 = vst [vmem:[#allocation2 + $0x118] sm:$0x7f] %v583
      %853 = vst [vmem:[#allocation2 + $0x160] sm:$0xff] %v587
      %854 = vst [vmem:[#allocation2 + $0x1a8] sm:$0x7f] %v586
      %855 = vst [vmem:[#allocation2 + $0x1f0] sm:$0xff] %v590
      %856 = vst [vmem:[#allocation2 + $0x238] sm:$0x7f] %v589
      %857 = vst [vmem:[#allocation2 + $0x280] sm:$0xff] %v593
      %858 = vst [vmem:[#allocation2 + $0x2c8] sm:$0x7f] %v592
      %859 = vst [vmem:[#allocation2 + $0x310] sm:$0xff] %v596
      %860 = vst [vmem:[#allocation2 + $0x358] sm:$0x7f] %v595
      %861 = vst [vmem:[#allocation2 + $0x3a0] sm:$0xff] %v599
      %862 = vst [vmem:[#allocation2 + $0x3e8] sm:$0x7f] %v598
      %863 = vst [vmem:[#allocation2 + $0x430] sm:$0xff] %v602
      %864 = vst [vmem:[#allocation2 + $0x478] sm:$0x7f] %v601
      %865 = vst [vmem:[#allocation2 + $0x4c0] sm:$0xff] %v605
      %866 = vst [vmem:[#allocation2 + $0x508] sm:$0x7f] %v604
      %867 = vst [vmem:[#allocation2 + $0x550] sm:$0xff] %v608
      %868 = vst [vmem:[#allocation2 + $0x598] sm:$0x7f] %v607
      %869 = vst [vmem:[#allocation2 + $0x5e0] sm:$0xff] %v611
      %870 = vst [vmem:[#allocation2 + $0x628] sm:$0x7f] %v610
      %871 = vst [vmem:[#allocation2 + $0x670] sm:$0xff] %v614
      %872 = vst [vmem:[#allocation2 + $0x6b8] sm:$0x7f] %v613
      %873 = vst [vmem:[#allocation2 + $0x700] sm:$0xff] %v617
      %874 = vst [vmem:[#allocation2 + $0x748] sm:$0x7f] %v616
      %875 = vst [vmem:[#allocation2 + $0x790] sm:$0xff] %v620
      %876 = vst [vmem:[#allocation2 + $0x7d8] sm:$0x7f] %v619
      %877 = vst [vmem:[#allocation2 + $0x820] sm:$0xff] %v754
      %878 = vst [vmem:[#allocation2 + $0x868] sm:$0x7f] %v753
      %v879 = vld [vmem:[#allocation2] sm:$0xff]
      %v880 = vld [vmem:[#allocation2 + $0x8] sm:$0xff]
      %v881 = vld [vmem:[#allocation2 + $0x10] sm:$0xff]
      %v882 = vld [vmem:[#allocation2 + $0x18] sm:$0xff]
      %v883 = vld [vmem:[#allocation2 + $0x20] sm:$0xff]
      %v884 = vld [vmem:[#allocation2 + $0x28] sm:$0xff]
      %v885 = vld [vmem:[#allocation2 + $0x30] sm:$0xff]
      %v886 = vld [vmem:[#allocation2 + $0x38] sm:$0xff]
      %v887 = vld [vmem:[#allocation2 + $0x40] sm:$0xff]
      %v888 = vld [vmem:[#allocation2 + $0x48] sm:$0xff]
      %v889 = vld [vmem:[#allocation2 + $0x50] sm:$0xff]
      %v890 = vld [vmem:[#allocation2 + $0x58] sm:$0xff]
      %v891 = vld [vmem:[#allocation2 + $0x60] sm:$0xff]
      %v892 = vld [vmem:[#allocation2 + $0x68] sm:$0xff]
      %v893 = vld [vmem:[#allocation2 + $0x70] sm:$0xff]
      %v894 = vld [vmem:[#allocation2 + $0x78] sm:$0xff]
      %v895 = vld [vmem:[#allocation2 + $0x80] sm:$0xff]
      %v896 = vld [vmem:[#allocation2 + $0x88] sm:$0xff]
      %v897 = vld [vmem:[#allocation2 + $0x90] sm:$0xff]
      %v898 = vld [vmem:[#allocation2 + $0x98] sm:$0xff]
      %v899 = vld [vmem:[#allocation2 + $0xa0] sm:$0xff]
      %v900 = vld [vmem:[#allocation2 + $0xa8] sm:$0xff]
      %v901 = vld [vmem:[#allocation2 + $0xb0] sm:$0xff]
      %v902 = vld [vmem:[#allocation2 + $0xb8] sm:$0xff]
      %v903 = vld [vmem:[#allocation2 + $0xc0] sm:$0xff]
      %v904 = vld [vmem:[#allocation2 + $0xc8] sm:$0xff]
      %v905 = vld [vmem:[#allocation2 + $0xd0] sm:$0xff]
      %v906 = vld [vmem:[#allocation2 + $0xd8] sm:$0xff]
      %v907 = vld [vmem:[#allocation2 + $0xe0] sm:$0xff]
      %v908 = vld [vmem:[#allocation2 + $0xe8] sm:$0xff]
      %v909 = vld [vmem:[#allocation2 + $0xf0] sm:$0xff]
      %v910 = vld [vmem:[#allocation2 + $0xf8] sm:$0xff]
      %v911 = vld [vmem:[#allocation2 + $0x100] sm:$0xff]
      %v912 = vld [vmem:[#allocation2 + $0x108] sm:$0xff]
      %v913 = vld [vmem:[#allocation2 + $0x110] sm:$0xff]
      %v914 = vld [vmem:[#allocation2 + $0x118] sm:$0xff]
      %v915 = vld [vmem:[#allocation2 + $0x120] sm:$0xff]
      %v916 = vld [vmem:[#allocation2 + $0x128] sm:$0xff]
      %v917 = vld [vmem:[#allocation2 + $0x130] sm:$0xff]
      %v918 = vld [vmem:[#allocation2 + $0x138] sm:$0xff]
      %v919 = vld [vmem:[#allocation2 + $0x140] sm:$0xff]
      %v920 = vld [vmem:[#allocation2 + $0x148] sm:$0xff]
      %v921 = vld [vmem:[#allocation2 + $0x150] sm:$0xff]
      %v922 = vld [vmem:[#allocation2 + $0x158] sm:$0xff]
      %v923 = vld [vmem:[#allocation2 + $0x160] sm:$0xff]
      %v924 = vld [vmem:[#allocation2 + $0x168] sm:$0xff]
      %v925 = vld [vmem:[#allocation2 + $0x170] sm:$0xff]
      %v926 = vld [vmem:[#allocation2 + $0x178] sm:$0xff]
      %v927 = vld [vmem:[#allocation2 + $0x180] sm:$0xff]
      %v928 = vld [vmem:[#allocation2 + $0x188] sm:$0xff]
      %v929 = vld [vmem:[#allocation2 + $0x190] sm:$0xff]
      %v930 = vld [vmem:[#allocation2 + $0x198] sm:$0xff]
      %v931 = vld [vmem:[#allocation2 + $0x1a0] sm:$0xff]
      %v932 = vld [vmem:[#allocation2 + $0x1a8] sm:$0xff]
      %v933 = vld [vmem:[#allocation2 + $0x1b0] sm:$0xff]
      %v934 = vld [vmem:[#allocation2 + $0x1b8] sm:$0xff]
      %v935 = vld [vmem:[#allocation2 + $0x1c0] sm:$0xff]
      %v936 = vld [vmem:[#allocation2 + $0x1c8] sm:$0xff]
      %v937 = vld [vmem:[#allocation2 + $0x1d0] sm:$0xff]
      %v938 = vld [vmem:[#allocation2 + $0x1d8] sm:$0xff]
      %v939 = vld [vmem:[#allocation2 + $0x1e0] sm:$0xff]
      %v940 = vld [vmem:[#allocation2 + $0x1e8] sm:$0xff]
      %v941 = vld [vmem:[#allocation2 + $0x1f0] sm:$0xff]
      %v942 = vld [vmem:[#allocation2 + $0x1f8] sm:$0xff]
      %v943 = vld [vmem:[#allocation2 + $0x200] sm:$0xff]
      %v944 = vld [vmem:[#allocation2 + $0x208] sm:$0xff]
      %v945 = vld [vmem:[#allocation2 + $0x210] sm:$0xff]
      %v946 = vld [vmem:[#allocation2 + $0x218] sm:$0xff]
      %v947 = vld [vmem:[#allocation2 + $0x220] sm:$0xff]
      %v948 = vld [vmem:[#allocation2 + $0x228] sm:$0xff]
      %v949 = vld [vmem:[#allocation2 + $0x230] sm:$0xff]
      %v950 = vld [vmem:[#allocation2 + $0x238] sm:$0xff]
      %v951 = vld [vmem:[#allocation2 + $0x240] sm:$0xff]
      %v952 = vld [vmem:[#allocation2 + $0x248] sm:$0xff]
      %v953 = vld [vmem:[#allocation2 + $0x250] sm:$0xff]
      %v954 = vld [vmem:[#allocation2 + $0x258] sm:$0xff]
      %v955 = vld [vmem:[#allocation2 + $0x260] sm:$0xff]
      %v956 = vld [vmem:[#allocation2 + $0x268] sm:$0xff]
      %v957 = vld [vmem:[#allocation2 + $0x270] sm:$0xff]
      %v958 = vld [vmem:[#allocation2 + $0x278] sm:$0xff]
      %v959 = vld [vmem:[#allocation2 + $0x280] sm:$0xff]
      %v960 = vld [vmem:[#allocation2 + $0x288] sm:$0xff]
      %v961 = vld [vmem:[#allocation2 + $0x290] sm:$0xff]
      %v962 = vld [vmem:[#allocation2 + $0x298] sm:$0xff]
      %v963 = vld [vmem:[#allocation2 + $0x2a0] sm:$0xff]
      %v964 = vld [vmem:[#allocation2 + $0x2a8] sm:$0xff]
      %v965 = vld [vmem:[#allocation2 + $0x2b0] sm:$0xff]
      %v966 = vld [vmem:[#allocation2 + $0x2b8] sm:$0xff]
      %v967 = vld [vmem:[#allocation2 + $0x2c0] sm:$0xff]
      %v968 = vld [vmem:[#allocation2 + $0x2c8] sm:$0xff]
      %v969 = vld [vmem:[#allocation2 + $0x2d0] sm:$0xff]
      %v970 = vld [vmem:[#allocation2 + $0x2d8] sm:$0xff]
      %v971 = vld [vmem:[#allocation2 + $0x2e0] sm:$0xff]
      %v972 = vld [vmem:[#allocation2 + $0x2e8] sm:$0xff]
      %v973 = vld [vmem:[#allocation2 + $0x2f0] sm:$0xff]
      %v974 = vld [vmem:[#allocation2 + $0x2f8] sm:$0xff]
      %v975 = vld [vmem:[#allocation2 + $0x300] sm:$0xff]
      %v976 = vld [vmem:[#allocation2 + $0x308] sm:$0xff]
      %v977 = vld [vmem:[#allocation2 + $0x310] sm:$0xff]
      %v978 = vld [vmem:[#allocation2 + $0x318] sm:$0xff]
      %v979 = vld [vmem:[#allocation2 + $0x320] sm:$0xff]
      %v980 = vld [vmem:[#allocation2 + $0x328] sm:$0xff]
      %v981 = vld [vmem:[#allocation2 + $0x330] sm:$0xff]
      %v982 = vld [vmem:[#allocation2 + $0x338] sm:$0xff]
      %v983 = vld [vmem:[#allocation2 + $0x340] sm:$0xff]
      %v984 = vld [vmem:[#allocation2 + $0x348] sm:$0xff]
      %v985 = vld [vmem:[#allocation2 + $0x350] sm:$0xff]
      %v986 = vld [vmem:[#allocation2 + $0x358] sm:$0xff]
      %v987 = vld [vmem:[#allocation2 + $0x360] sm:$0xff]
      %v988 = vld [vmem:[#allocation2 + $0x368] sm:$0xff]
      %v989 = vld [vmem:[#allocation2 + $0x370] sm:$0xff]
      %v990 = vld [vmem:[#allocation2 + $0x378] sm:$0xff]
      %v991 = vld [vmem:[#allocation2 + $0x380] sm:$0xff]
      %v992 = vld [vmem:[#allocation2 + $0x388] sm:$0xff]
      %v993 = vld [vmem:[#allocation2 + $0x390] sm:$0xff]
      %v994 = vld [vmem:[#allocation2 + $0x398] sm:$0xff]
      %v995 = vld [vmem:[#allocation2 + $0x3a0] sm:$0xff]
      %v996 = vld [vmem:[#allocation2 + $0x3a8] sm:$0xff]
      %v997 = vld [vmem:[#allocation2 + $0x3b0] sm:$0xff]
      %v998 = vld [vmem:[#allocation2 + $0x3b8] sm:$0xff]
      %v999 = vld [vmem:[#allocation2 + $0x3c0] sm:$0xff]
      %v1000 = vld [vmem:[#allocation2 + $0x3c8] sm:$0xff]
      %v1001 = vld [vmem:[#allocation2 + $0x3d0] sm:$0xff]
      %v1002 = vld [vmem:[#allocation2 + $0x3d8] sm:$0xff]
      %v1003 = vld [vmem:[#allocation2 + $0x3e0] sm:$0xff]
      %v1004 = vld [vmem:[#allocation2 + $0x3e8] sm:$0xff]
      %v1005 = vld [vmem:[#allocation2 + $0x3f0] sm:$0xff]
      %v1006 = vld [vmem:[#allocation2 + $0x3f8] sm:$0xff]
      %v1007 = vld [vmem:[#allocation2 + $0x400] sm:$0xff]
      %v1008 = vld [vmem:[#allocation2 + $0x408] sm:$0xff]
      %v1009 = vld [vmem:[#allocation2 + $0x410] sm:$0xff]
      %v1010 = vld [vmem:[#allocation2 + $0x418] sm:$0xff]
      %v1011 = vld [vmem:[#allocation2 + $0x420] sm:$0xff]
      %v1012 = vld [vmem:[#allocation2 + $0x428] sm:$0xff]
      %v1013 = vld [vmem:[#allocation2 + $0x430] sm:$0xff]
      %v1014 = vld [vmem:[#allocation2 + $0x438] sm:$0xff]
      %v1015 = vld [vmem:[#allocation2 + $0x440] sm:$0xff]
      %v1016 = vld [vmem:[#allocation2 + $0x448] sm:$0xff]
      %v1017 = vld [vmem:[#allocation2 + $0x450] sm:$0xff]
      %v1018 = vld [vmem:[#allocation2 + $0x458] sm:$0xff]
      %v1019 = vld [vmem:[#allocation2 + $0x460] sm:$0xff]
      %v1020 = vld [vmem:[#allocation2 + $0x468] sm:$0xff]
      %v1021 = vld [vmem:[#allocation2 + $0x470] sm:$0xff]
      %v1022 = vld [vmem:[#allocation2 + $0x478] sm:$0xff]
      %v1023 = vld [vmem:[#allocation2 + $0x480] sm:$0xff]
      %v1024 = vld [vmem:[#allocation2 + $0x488] sm:$0xff]
      %v1025 = vld [vmem:[#allocation2 + $0x490] sm:$0xff]
      %v1026 = vld [vmem:[#allocation2 + $0x498] sm:$0xff]
      %v1027 = vld [vmem:[#allocation2 + $0x4a0] sm:$0xff]
      %v1028 = vld [vmem:[#allocation2 + $0x4a8] sm:$0xff]
      %v1029 = vld [vmem:[#allocation2 + $0x4b0] sm:$0xff]
      %v1030 = vld [vmem:[#allocation2 + $0x4b8] sm:$0xff]
      %v1031 = vld [vmem:[#allocation2 + $0x4c0] sm:$0xff]
      %v1032 = vld [vmem:[#allocation2 + $0x4c8] sm:$0xff]
      %v1033 = vld [vmem:[#allocation2 + $0x4d0] sm:$0xff]
      %v1034 = vld [vmem:[#allocation2 + $0x4d8] sm:$0xff]
      %v1035 = vld [vmem:[#allocation2 + $0x4e0] sm:$0xff]
      %v1036 = vld [vmem:[#allocation2 + $0x4e8] sm:$0xff]
      %v1037 = vld [vmem:[#allocation2 + $0x4f0] sm:$0xff]
      %v1038 = vld [vmem:[#allocation2 + $0x4f8] sm:$0xff]
      %v1039 = vld [vmem:[#allocation2 + $0x500] sm:$0xff]
      %v1040 = vld [vmem:[#allocation2 + $0x508] sm:$0xff]
      %v1041 = vld [vmem:[#allocation2 + $0x510] sm:$0xff]
      %v1042 = vld [vmem:[#allocation2 + $0x518] sm:$0xff]
      %v1043 = vld [vmem:[#allocation2 + $0x520] sm:$0xff]
      %v1044 = vld [vmem:[#allocation2 + $0x528] sm:$0xff]
      %v1045 = vld [vmem:[#allocation2 + $0x530] sm:$0xff]
      %v1046 = vld [vmem:[#allocation2 + $0x538] sm:$0xff]
      %v1047 = vld [vmem:[#allocation2 + $0x540] sm:$0xff]
      %v1048 = vld [vmem:[#allocation2 + $0x548] sm:$0xff]
      %v1049 = vld [vmem:[#allocation2 + $0x550] sm:$0xff]
      %v1050 = vld [vmem:[#allocation2 + $0x558] sm:$0xff]
      %v1051 = vld [vmem:[#allocation2 + $0x560] sm:$0xff]
      %v1052 = vld [vmem:[#allocation2 + $0x568] sm:$0xff]
      %v1053 = vld [vmem:[#allocation2 + $0x570] sm:$0xff]
      %v1054 = vld [vmem:[#allocation2 + $0x578] sm:$0xff]
      %v1055 = vld [vmem:[#allocation2 + $0x580] sm:$0xff]
      %v1056 = vld [vmem:[#allocation2 + $0x588] sm:$0xff]
      %v1057 = vld [vmem:[#allocation2 + $0x590] sm:$0xff]
      %v1058 = vld [vmem:[#allocation2 + $0x598] sm:$0xff]
      %v1059 = vld [vmem:[#allocation2 + $0x5a0] sm:$0xff]
      %v1060 = vld [vmem:[#allocation2 + $0x5a8] sm:$0xff]
      %v1061 = vld [vmem:[#allocation2 + $0x5b0] sm:$0xff]
      %v1062 = vld [vmem:[#allocation2 + $0x5b8] sm:$0xff]
      %v1063 = vld [vmem:[#allocation2 + $0x5c0] sm:$0xff]
      %v1064 = vld [vmem:[#allocation2 + $0x5c8] sm:$0xff]
      %v1065 = vld [vmem:[#allocation2 + $0x5d0] sm:$0xff]
      %v1066 = vld [vmem:[#allocation2 + $0x5d8] sm:$0xff]
      %v1067 = vld [vmem:[#allocation2 + $0x5e0] sm:$0xff]
      %v1068 = vld [vmem:[#allocation2 + $0x5e8] sm:$0xff]
      %v1069 = vld [vmem:[#allocation2 + $0x5f0] sm:$0xff]
      %v1070 = vld [vmem:[#allocation2 + $0x5f8] sm:$0xff]
      %v1071 = vld [vmem:[#allocation2 + $0x600] sm:$0xff]
      %v1072 = vld [vmem:[#allocation2 + $0x608] sm:$0xff]
      %v1073 = vld [vmem:[#allocation2 + $0x610] sm:$0xff]
      %v1074 = vld [vmem:[#allocation2 + $0x618] sm:$0xff]
      %v1075 = vld [vmem:[#allocation2 + $0x620] sm:$0xff]
      %v1076 = vld [vmem:[#allocation2 + $0x628] sm:$0xff]
      %v1077 = vld [vmem:[#allocation2 + $0x630] sm:$0xff]
      %v1078 = vld [vmem:[#allocation2 + $0x638] sm:$0xff]
      %v1079 = vld [vmem:[#allocation2 + $0x640] sm:$0xff]
      %v1080 = vld [vmem:[#allocation2 + $0x648] sm:$0xff]
      %v1081 = vld [vmem:[#allocation2 + $0x650] sm:$0xff]
      %v1082 = vld [vmem:[#allocation2 + $0x658] sm:$0xff]
      %v1083 = vld [vmem:[#allocation2 + $0x660] sm:$0xff]
      %v1084 = vld [vmem:[#allocation2 + $0x668] sm:$0xff]
      %v1085 = vld [vmem:[#allocation2 + $0x670] sm:$0xff]
      %v1086 = vld [vmem:[#allocation2 + $0x678] sm:$0xff]
      %v1087 = vld [vmem:[#allocation2 + $0x680] sm:$0xff]
      %v1088 = vld [vmem:[#allocation2 + $0x688] sm:$0xff]
      %v1089 = vld [vmem:[#allocation2 + $0x690] sm:$0xff]
      %v1090 = vld [vmem:[#allocation2 + $0x698] sm:$0xff]
      %v1091 = vld [vmem:[#allocation2 + $0x6a0] sm:$0xff]
      %v1092 = vld [vmem:[#allocation2 + $0x6a8] sm:$0xff]
      %v1093 = vld [vmem:[#allocation2 + $0x6b0] sm:$0xff]
      %v1094 = vld [vmem:[#allocation2 + $0x6b8] sm:$0xff]
      %v1095 = vld [vmem:[#allocation2 + $0x6c0] sm:$0xff]
      %v1096 = vld [vmem:[#allocation2 + $0x6c8] sm:$0xff]
      %v1097 = vld [vmem:[#allocation2 + $0x6d0] sm:$0xff]
      %v1098 = vld [vmem:[#allocation2 + $0x6d8] sm:$0xff]
      %v1099 = vld [vmem:[#allocation2 + $0x6e0] sm:$0xff]
      %v1100 = vld [vmem:[#allocation2 + $0x6e8] sm:$0xff]
      %v1101 = vld [vmem:[#allocation2 + $0x6f0] sm:$0xff]
      %v1102 = vld [vmem:[#allocation2 + $0x6f8] sm:$0xff]
      %v1103 = vld [vmem:[#allocation2 + $0x700] sm:$0xff]
      %v1104 = vld [vmem:[#allocation2 + $0x708] sm:$0xff]
      %v1105 = vld [vmem:[#allocation2 + $0x710] sm:$0xff]
      %v1106 = vld [vmem:[#allocation2 + $0x718] sm:$0xff]
      %v1107 = vld [vmem:[#allocation2 + $0x720] sm:$0xff]
      %v1108 = vld [vmem:[#allocation2 + $0x728] sm:$0xff]
      %v1109 = vld [vmem:[#allocation2 + $0x730] sm:$0xff]
      %v1110 = vld [vmem:[#allocation2 + $0x738] sm:$0xff]
      %v1111 = vld [vmem:[#allocation2 + $0x740] sm:$0xff]
      %v1112 = vld [vmem:[#allocation2 + $0x748] sm:$0xff]
      %v1113 = vld [vmem:[#allocation2 + $0x750] sm:$0xff]
      %v1114 = vld [vmem:[#allocation2 + $0x758] sm:$0xff]
      %v1115 = vld [vmem:[#allocation2 + $0x760] sm:$0xff]
      %v1116 = vld [vmem:[#allocation2 + $0x768] sm:$0xff]
      %v1117 = vld [vmem:[#allocation2 + $0x770] sm:$0xff]
      %v1118 = vld [vmem:[#allocation2 + $0x778] sm:$0xff]
      %v1119 = vld [vmem:[#allocation2 + $0x780] sm:$0xff]
      %v1120 = vld [vmem:[#allocation2 + $0x788] sm:$0xff]
      %v1121 = vld [vmem:[#allocation2 + $0x790] sm:$0xff]
      %v1122 = vld [vmem:[#allocation2 + $0x798] sm:$0xff]
      %v1123 = vld [vmem:[#allocation2 + $0x7a0] sm:$0xff]
      %v1124 = vld [vmem:[#allocation2 + $0x7a8] sm:$0xff]
      %v1125 = vld [vmem:[#allocation2 + $0x7b0] sm:$0xff]
      %v1126 = vld [vmem:[#allocation2 + $0x7b8] sm:$0xff]
      %v1127 = vld [vmem:[#allocation2 + $0x7c0] sm:$0xff]
      %v1128 = vld [vmem:[#allocation2 + $0x7c8] sm:$0xff]
      %v1129 = vld [vmem:[#allocation2 + $0x7d0] sm:$0xff]
      %v1130 = vld [vmem:[#allocation2 + $0x7d8] sm:$0xff]
      %v1131 = vld [vmem:[#allocation2 + $0x7e0] sm:$0xff]
      %v1132 = vld [vmem:[#allocation2 + $0x7e8] sm:$0xff]
      %v1133 = vld [vmem:[#allocation2 + $0x7f0] sm:$0xff]
      %v1134 = vld [vmem:[#allocation2 + $0x7f8] sm:$0xff]
      %v1135 = vld [vmem:[#allocation2 + $0x800] sm:$0xff]
      %v1136 = vld [vmem:[#allocation2 + $0x808] sm:$0xff]
      %v1137 = vld [vmem:[#allocation2 + $0x810] sm:$0xff]
      %v1138 = vld [vmem:[#allocation2 + $0x818] sm:$0xff]
      %v1139 = vld [vmem:[#allocation2 + $0x820] sm:$0xff]
      %v1140 = vld [vmem:[#allocation2 + $0x828] sm:$0xff]
      %v1141 = vld [vmem:[#allocation2 + $0x830] sm:$0xff]
      %v1142 = vld [vmem:[#allocation2 + $0x838] sm:$0xff]
      %v1143 = vld [vmem:[#allocation2 + $0x840] sm:$0xff]
      %v1144 = vld [vmem:[#allocation2 + $0x848] sm:$0xff]
      %v1145 = vld [vmem:[#allocation2 + $0x850] sm:$0xff]
      %v1146 = vld [vmem:[#allocation2 + $0x858] sm:$0xff]
      %v1147 = vld [vmem:[#allocation2 + $0x860] sm:$0xff]
      %v1148 = vld [vmem:[#allocation2 + $0x868] sm:$0xff]
      %v1149 = vld [vmem:[#allocation2 + $0x870] sm:$0xff]
      %v1150 = vld [vmem:[#allocation2 + $0x878] sm:$0xff]
      %v1151 = vld [vmem:[#allocation2 + $0x880] sm:$0xff]
      %v1152 = vld [vmem:[#allocation2 + $0x888] sm:$0xff]
      %v1153 = vld [vmem:[#allocation2 + $0x890] sm:$0xff]
      %v1154 = vld [vmem:[#allocation2 + $0x898] sm:$0xff]
      %v1155 = vld [vmem:[#allocation2 + $0x8a0] sm:$0xff]
      %v1156 = vld [vmem:[#allocation2 + $0x8a8] sm:$0xff]
      %v1157 = vld [vmem:[#allocation2 + $0x8b0] sm:$0xff]
      %v1158 = vld [vmem:[#allocation2 + $0x8b8] sm:$0xff]
      %v1159 = vld [vmem:[#allocation2 + $0x8c0] sm:$0xff]
      %v1160 = vld [vmem:[#allocation2 + $0x8c8] sm:$0xff]
      %v1161 = vld [vmem:[#allocation2 + $0x8d0] sm:$0xff]
      %v1162 = vld [vmem:[#allocation2 + $0x8d8] sm:$0xff]
      %v1163 = vld [vmem:[#allocation2 + $0x8e0] sm:$0xff]
      %v1164 = vld [vmem:[#allocation2 + $0x8e8] sm:$0xff]
      %v1165 = vld [vmem:[#allocation2 + $0x8f0] sm:$0xff]
      %v1166 = vld [vmem:[#allocation2 + $0x8f8] sm:$0xff]
      %v1167 = vld [vmem:[%s1] sm:$0xff]
      %v1168 = vld [vmem:[%s1 + $0x8] sm:$0xff]
      %v1169 = vld [vmem:[%s1 + $0x10] sm:$0xff]
      %v1170 = vld [vmem:[%s1 + $0x18] sm:$0xff]
      %v1171 = vld [vmem:[%s1 + $0x20] sm:$0xff]
      %v1172 = vld [vmem:[%s1 + $0x28] sm:$0xff]
      %v1173 = vld [vmem:[%s1 + $0x30] sm:$0xff]
      %v1174 = vld [vmem:[%s1 + $0x38] sm:$0xff]
      %v1175 = vld [vmem:[%s1 + $0x40] sm:$0xff]
      %v1176 = vld [vmem:[%s1 + $0x48] sm:$0xff]
      %v1177 = vld [vmem:[%s1 + $0x50] sm:$0xff]
      %v1178 = vld [vmem:[%s1 + $0x58] sm:$0xff]
      %v1179 = vld [vmem:[%s1 + $0x60] sm:$0xff]
      %v1180 = vld [vmem:[%s1 + $0x68] sm:$0xff]
      %v1181 = vld [vmem:[%s1 + $0x70] sm:$0xff]
      %v1182 = vld [vmem:[%s1 + $0x78] sm:$0xff]
      %v1183 = vld [vmem:[%s1 + $0x80] sm:$0xff]
      %v1184 = vld [vmem:[%s1 + $0x88] sm:$0xff]
      %v1185 = vld [vmem:[%s1 + $0x90] sm:$0xff]
      %v1186 = vld [vmem:[%s1 + $0x98] sm:$0xff]
      %v1187 = vld [vmem:[%s1 + $0xa0] sm:$0xff]
      %v1188 = vld [vmem:[%s1 + $0xa8] sm:$0xff]
      %v1189 = vld [vmem:[%s1 + $0xb0] sm:$0xff]
      %v1190 = vld [vmem:[%s1 + $0xb8] sm:$0xff]
      %v1191 = vld [vmem:[%s1 + $0xc0] sm:$0xff]
      %v1192 = vld [vmem:[%s1 + $0xc8] sm:$0xff]
      %v1193 = vld [vmem:[%s1 + $0xd0] sm:$0xff]
      %v1194 = vld [vmem:[%s1 + $0xd8] sm:$0xff]
      %v1195 = vld [vmem:[%s1 + $0xe0] sm:$0xff]
      %v1196 = vld [vmem:[%s1 + $0xe8] sm:$0xff]
      %v1197 = vld [vmem:[%s1 + $0xf0] sm:$0xff]
      %v1198 = vld [vmem:[%s1 + $0xf8] sm:$0xff]
      %v1199 = vld [vmem:[%s1 + $0x100] sm:$0xff]
      %v1200 = vld [vmem:[%s1 + $0x108] sm:$0xff]
      %v1201 = vld [vmem:[%s1 + $0x110] sm:$0xff]
      %v1202 = vld [vmem:[%s1 + $0x118] sm:$0xff]
      %v1203 = vld [vmem:[%s1 + $0x120] sm:$0xff]
      %v1204 = vld [vmem:[%s1 + $0x128] sm:$0xff]
      %v1205 = vld [vmem:[%s1 + $0x130] sm:$0xff]
      %v1206 = vld [vmem:[%s1 + $0x138] sm:$0xff]
      %v1207 = vld [vmem:[%s1 + $0x140] sm:$0xff]
      %v1208 = vld [vmem:[%s1 + $0x148] sm:$0xff]
      %v1209 = vld [vmem:[%s1 + $0x150] sm:$0xff]
      %v1210 = vld [vmem:[%s1 + $0x158] sm:$0xff]
      %v1211 = vld [vmem:[%s1 + $0x160] sm:$0xff]
      %v1212 = vld [vmem:[%s1 + $0x168] sm:$0xff]
      %v1213 = vld [vmem:[%s1 + $0x170] sm:$0xff]
      %v1214 = vld [vmem:[%s1 + $0x178] sm:$0xff]
      %v1215 = vld [vmem:[%s1 + $0x180] sm:$0xff]
      %v1216 = vld [vmem:[%s1 + $0x188] sm:$0xff]
      %v1217 = vld [vmem:[%s1 + $0x190] sm:$0xff]
      %v1218 = vld [vmem:[%s1 + $0x198] sm:$0xff]
      %v1219 = vld [vmem:[%s1 + $0x1a0] sm:$0xff]
      %v1220 = vld [vmem:[%s1 + $0x1a8] sm:$0xff]
      %v1221 = vld [vmem:[%s1 + $0x1b0] sm:$0xff]
      %v1222 = vld [vmem:[%s1 + $0x1b8] sm:$0xff]
      %v1223 = vld [vmem:[%s1 + $0x1c0] sm:$0xff]
      %v1224 = vld [vmem:[%s1 + $0x1c8] sm:$0xff]
      %v1225 = vld [vmem:[%s1 + $0x1d0] sm:$0xff]
      %v1226 = vld [vmem:[%s1 + $0x1d8] sm:$0xff]
      %v1227 = vld [vmem:[%s1 + $0x1e0] sm:$0xff]
      %v1228 = vld [vmem:[%s1 + $0x1e8] sm:$0xff]
      %v1229 = vld [vmem:[%s1 + $0x1f0] sm:$0xff]
      %v1230 = vld [vmem:[%s1 + $0x1f8] sm:$0xff]
      %v1231 = vld [vmem:[%s1 + $0x200] sm:$0xff]
      %v1232 = vld [vmem:[%s1 + $0x208] sm:$0xff]
      %v1233 = vld [vmem:[%s1 + $0x210] sm:$0xff]
      %v1234 = vld [vmem:[%s1 + $0x218] sm:$0xff]
      %v1235 = vld [vmem:[%s1 + $0x220] sm:$0xff]
      %v1236 = vld [vmem:[%s1 + $0x228] sm:$0xff]
      %v1237 = vld [vmem:[%s1 + $0x230] sm:$0xff]
      %v1238 = vld [vmem:[%s1 + $0x238] sm:$0xff]
      %v1239 = vld [vmem:[%s1 + $0x240] sm:$0xff]
      %v1240 = vld [vmem:[%s1 + $0x248] sm:$0xff]
      %v1241 = vld [vmem:[%s1 + $0x250] sm:$0xff]
      %v1242 = vld [vmem:[%s1 + $0x258] sm:$0xff]
      %v1243 = vld [vmem:[%s1 + $0x260] sm:$0xff]
      %v1244 = vld [vmem:[%s1 + $0x268] sm:$0xff]
      %v1245 = vld [vmem:[%s1 + $0x270] sm:$0xff]
      %v1246 = vld [vmem:[%s1 + $0x278] sm:$0xff]
      %v1247 = vld [vmem:[%s1 + $0x280] sm:$0xff]
      %v1248 = vld [vmem:[%s1 + $0x288] sm:$0xff]
      %v1249 = vld [vmem:[%s1 + $0x290] sm:$0xff]
      %v1250 = vld [vmem:[%s1 + $0x298] sm:$0xff]
      %v1251 = vld [vmem:[%s1 + $0x2a0] sm:$0xff]
      %v1252 = vld [vmem:[%s1 + $0x2a8] sm:$0xff]
      %v1253 = vld [vmem:[%s1 + $0x2b0] sm:$0xff]
      %v1254 = vld [vmem:[%s1 + $0x2b8] sm:$0xff]
      %v1255 = vld [vmem:[%s1 + $0x2c0] sm:$0xff]
      %v1256 = vld [vmem:[%s1 + $0x2c8] sm:$0xff]
      %v1257 = vld [vmem:[%s1 + $0x2d0] sm:$0xff]
      %v1258 = vld [vmem:[%s1 + $0x2d8] sm:$0xff]
      %v1259 = vld [vmem:[%s1 + $0x2e0] sm:$0xff]
      %v1260 = vld [vmem:[%s1 + $0x2e8] sm:$0xff]
      %v1261 = vld [vmem:[%s1 + $0x2f0] sm:$0xff]
      %v1262 = vld [vmem:[%s1 + $0x2f8] sm:$0xff]
      %v1263 = vld [vmem:[%s1 + $0x300] sm:$0xff]
      %v1264 = vld [vmem:[%s1 + $0x308] sm:$0xff]
      %v1265 = vld [vmem:[%s1 + $0x310] sm:$0xff]
      %v1266 = vld [vmem:[%s1 + $0x318] sm:$0xff]
      %v1267 = vld [vmem:[%s1 + $0x320] sm:$0xff]
      %v1268 = vld [vmem:[%s1 + $0x328] sm:$0xff]
      %v1269 = vld [vmem:[%s1 + $0x330] sm:$0xff]
      %v1270 = vld [vmem:[%s1 + $0x338] sm:$0xff]
      %v1271 = vld [vmem:[%s1 + $0x340] sm:$0xff]
      %v1272 = vld [vmem:[%s1 + $0x348] sm:$0xff]
      %v1273 = vld [vmem:[%s1 + $0x350] sm:$0xff]
      %v1274 = vld [vmem:[%s1 + $0x358] sm:$0xff]
      %v1275 = vld [vmem:[%s1 + $0x360] sm:$0xff]
      %v1276 = vld [vmem:[%s1 + $0x368] sm:$0xff]
      %v1277 = vld [vmem:[%s1 + $0x370] sm:$0xff]
      %v1278 = vld [vmem:[%s1 + $0x378] sm:$0xff]
      %v1279 = vld [vmem:[%s1 + $0x380] sm:$0xff]
      %v1280 = vld [vmem:[%s1 + $0x388] sm:$0xff]
      %v1281 = vld [vmem:[%s1 + $0x390] sm:$0xff]
      %v1282 = vld [vmem:[%s1 + $0x398] sm:$0xff]
      %v1283 = vld [vmem:[%s1 + $0x3a0] sm:$0xff]
      %v1284 = vld [vmem:[%s1 + $0x3a8] sm:$0xff]
      %v1285 = vld [vmem:[%s1 + $0x3b0] sm:$0xff]
      %v1286 = vld [vmem:[%s1 + $0x3b8] sm:$0xff]
      %v1287 = vld [vmem:[%s1 + $0x3c0] sm:$0xff]
      %v1288 = vld [vmem:[%s1 + $0x3c8] sm:$0xff]
      %v1289 = vld [vmem:[%s1 + $0x3d0] sm:$0xff]
      %v1290 = vld [vmem:[%s1 + $0x3d8] sm:$0xff]
      %v1291 = vld [vmem:[%s1 + $0x3e0] sm:$0xff]
      %v1292 = vld [vmem:[%s1 + $0x3e8] sm:$0xff]
      %v1293 = vld [vmem:[%s1 + $0x3f0] sm:$0xff]
      %v1294 = vld [vmem:[%s1 + $0x3f8] sm:$0xff]
      %v1295 = vld [vmem:[%s1 + $0x400] sm:$0xff]
      %v1296 = vld [vmem:[%s1 + $0x408] sm:$0xff]
      %v1297 = vld [vmem:[%s1 + $0x410] sm:$0xff]
      %v1298 = vld [vmem:[%s1 + $0x418] sm:$0xff]
      %v1299 = vld [vmem:[%s1 + $0x420] sm:$0xff]
      %v1300 = vld [vmem:[%s1 + $0x428] sm:$0xff]
      %v1301 = vld [vmem:[%s1 + $0x430] sm:$0xff]
      %v1302 = vld [vmem:[%s1 + $0x438] sm:$0xff]
      %v1303 = vld [vmem:[%s1 + $0x440] sm:$0xff]
      %v1304 = vld [vmem:[%s1 + $0x448] sm:$0xff]
      %v1305 = vld [vmem:[%s1 + $0x450] sm:$0xff]
      %v1306 = vld [vmem:[%s1 + $0x458] sm:$0xff]
      %v1307 = vld [vmem:[%s1 + $0x460] sm:$0xff]
      %v1308 = vld [vmem:[%s1 + $0x468] sm:$0xff]
      %v1309 = vld [vmem:[%s1 + $0x470] sm:$0xff]
      %v1310 = vld [vmem:[%s1 + $0x478] sm:$0xff]
      %1311 = vmatprep.subr.mxu0 0.0
      %1312 = vmatpush1.msra.mxu0 %v1182
      %1313 = vmatprep.subr.mxu0 0.0
      %1314 = vmatpush1.msra.mxu0 %v1181
      %1315 = vmatprep.subr.mxu0 0.0
      %1316 = vmatpush1.msra.mxu0 %v1180
      %1317 = vmatprep.subr.mxu0 0.0
      %1318 = vmatpush1.msra.mxu0 %v1179
      %1319 = vmatprep.subr.mxu0 0.0
      %1320 = vmatpush1.msra.mxu0 %v1178
      %1321 = vmatprep.subr.mxu0 0.0
      %1322 = vmatpush1.msra.mxu0 %v1177
      %1323 = vmatprep.subr.mxu0 0.0
      %1324 = vmatpush1.msra.mxu0 %v1176
      %1325 = vmatprep.subr.mxu0 0.0
      %1326 = vmatpush1.msra.mxu0 %v1175
      %1327 = vmatprep.subr.mxu0 0.0
      %1328 = vmatpush1.msra.mxu0 %v1174
      %1329 = vmatprep.subr.mxu0 0.0
      %1330 = vmatpush1.msra.mxu0 %v1173
      %1331 = vmatprep.subr.mxu0 0.0
      %1332 = vmatpush1.msra.mxu0 %v1172
      %1333 = vmatprep.subr.mxu0 0.0
      %1334 = vmatpush1.msra.mxu0 %v1171
      %1335 = vmatprep.subr.mxu0 0.0
      %1336 = vmatpush1.msra.mxu0 %v1170
      %1337 = vmatprep.subr.mxu0 0.0
      %1338 = vmatpush1.msra.mxu0 %v1169
      %1339 = vmatprep.subr.mxu0 0.0
      %1340 = vmatpush1.msra.mxu0 %v1168
      %1341 = vmatprep.subr.mxu0 0.0
      %1342 = vmatpush1.msra.mxu0 %v1167
      %1343 = vmatprep.subr.mxu0 0.0
      %1344 = vmatpush2.msra.mxu0 %v1198
      %1345 = vmatprep.subr.mxu0 0.0
      %1346 = vmatpush2.msra.mxu0 %v1197
      %1347 = vmatprep.subr.mxu0 0.0
      %1348 = vmatpush2.msra.mxu0 %v1196
      %1349 = vmatprep.subr.mxu0 0.0
      %1350 = vmatpush2.msra.mxu0 %v1195
      %1351 = vmatprep.subr.mxu0 0.0
      %1352 = vmatpush2.msra.mxu0 %v1194
      %1353 = vmatprep.subr.mxu0 0.0
      %1354 = vmatpush2.msra.mxu0 %v1193
      %1355 = vmatprep.subr.mxu0 0.0
      %1356 = vmatpush2.msra.mxu0 %v1192
      %1357 = vmatprep.subr.mxu0 0.0
      %1358 = vmatpush2.msra.mxu0 %v1191
      %1359 = vmatprep.subr.mxu0 0.0
      %1360 = vmatpush2.msra.mxu0 %v1190
      %1361 = vmatprep.subr.mxu0 0.0
      %1362 = vmatpush2.msra.mxu0 %v1189
      %1363 = vmatprep.subr.mxu0 0.0
      %1364 = vmatpush2.msra.mxu0 %v1188
      %1365 = vmatprep.subr.mxu0 0.0
      %1366 = vmatpush2.msra.mxu0 %v1187
      %1367 = vmatprep.subr.mxu0 0.0
      %1368 = vmatpush2.msra.mxu0 %v1186
      %1369 = vmatprep.subr.mxu0 0.0
      %1370 = vmatpush2.msra.mxu0 %v1185
      %1371 = vmatprep.subr.mxu0 0.0
      %1372 = vmatpush2.msra.mxu0 %v1184
      %1373 = vmatprep.subr.mxu0 0.0
      %1374 = vmatpush2.msra.mxu0 %v1183
      %1375 = vmatprep.mubr.f32.mxu0 %v880
      %1376 = vmatmul.mubr.f32.gmra.mxu0 %v879
      %v1377 = vpop.f32.mrf.mxu0
      %v1378 = vadd.f32 0.0, %v1377
      %v1379 = vpop.f32.mrf.mxu0
      %1380 = vmatprep.mubr.f32.mxu0 %v889
      %1381 = vmatmul.mubr.f32.gmra.mxu0 %v888
      %v1382 = vpop.f32.mrf.mxu0
      %v1383 = vadd.f32 0.0, %v1382
      %v1384 = vpop.f32.mrf.mxu0
      %1385 = vmatprep.mubr.f32.mxu0 %v898
      %1386 = vmatmul.mubr.f32.gmra.mxu0 %v897
      %v1387 = vpop.f32.mrf.mxu0
      %v1388 = vadd.f32 0.0, %v1387
      %v1389 = vpop.f32.mrf.mxu0
      %1390 = vmatprep.mubr.f32.mxu0 %v907
      %1391 = vmatmul.mubr.f32.gmra.mxu0 %v906
      %v1392 = vpop.f32.mrf.mxu0
      %v1393 = vadd.f32 0.0, %v1392
      %v1394 = vpop.f32.mrf.mxu0
      %1395 = vmatprep.mubr.f32.mxu0 %v916
      %1396 = vmatmul.mubr.f32.gmra.mxu0 %v915
      %v1397 = vpop.f32.mrf.mxu0
      %v1398 = vadd.f32 0.0, %v1397
      %v1399 = vpop.f32.mrf.mxu0
      %1400 = vmatprep.mubr.f32.mxu0 %v925
      %1401 = vmatmul.mubr.f32.gmra.mxu0 %v924
      %v1402 = vpop.f32.mrf.mxu0
      %v1403 = vadd.f32 0.0, %v1402
      %v1404 = vpop.f32.mrf.mxu0
      %1405 = vmatprep.mubr.f32.mxu0 %v934
      %1406 = vmatmul.mubr.f32.gmra.mxu0 %v933
      %v1407 = vpop.f32.mrf.mxu0
      %v1408 = vadd.f32 0.0, %v1407
      %v1409 = vpop.f32.mrf.mxu0
      %1410 = vmatprep.mubr.f32.mxu0 %v943
      %1411 = vmatmul.mubr.f32.gmra.mxu0 %v942
      %v1412 = vpop.f32.mrf.mxu0
      %v1413 = vadd.f32 0.0, %v1412
      %v1414 = vpop.f32.mrf.mxu0
      %1415 = vmatprep.mubr.f32.mxu0 %v952
      %1416 = vmatmul.mubr.f32.gmra.mxu0 %v951
      %v1417 = vpop.f32.mrf.mxu0
      %v1418 = vadd.f32 0.0, %v1417
      %v1419 = vpop.f32.mrf.mxu0
      %1420 = vmatprep.mubr.f32.mxu0 %v961
      %1421 = vmatmul.mubr.f32.gmra.mxu0 %v960
      %v1422 = vpop.f32.mrf.mxu0
      %v1423 = vadd.f32 0.0, %v1422
      %v1424 = vpop.f32.mrf.mxu0
      %1425 = vmatprep.mubr.f32.mxu0 %v970
      %1426 = vmatmul.mubr.f32.gmra.mxu0 %v969
      %v1427 = vpop.f32.mrf.mxu0
      %v1428 = vadd.f32 0.0, %v1427
      %v1429 = vpop.f32.mrf.mxu0
      %1430 = vmatprep.mubr.f32.mxu0 %v979
      %1431 = vmatmul.mubr.f32.gmra.mxu0 %v978
      %v1432 = vpop.f32.mrf.mxu0
      %v1433 = vadd.f32 0.0, %v1432
      %v1434 = vpop.f32.mrf.mxu0
      %1435 = vmatprep.mubr.f32.mxu0 %v988
      %1436 = vmatmul.mubr.f32.gmra.mxu0 %v987
      %v1437 = vpop.f32.mrf.mxu0
      %v1438 = vadd.f32 0.0, %v1437
      %v1439 = vpop.f32.mrf.mxu0
      %1440 = vmatprep.mubr.f32.mxu0 %v997
      %1441 = vmatmul.mubr.f32.gmra.mxu0 %v996
      %v1442 = vpop.f32.mrf.mxu0
      %v1443 = vadd.f32 0.0, %v1442
      %v1444 = vpop.f32.mrf.mxu0
      %1445 = vmatprep.mubr.f32.mxu0 %v1006
      %1446 = vmatmul.mubr.f32.gmra.mxu0 %v1005
      %v1447 = vpop.f32.mrf.mxu0
      %v1448 = vadd.f32 0.0, %v1447
      %v1449 = vpop.f32.mrf.mxu0
      %1450 = vmatprep.mubr.f32.mxu0 %v1015
      %1451 = vmatmul.mubr.f32.gmra.mxu0 %v1014
      %v1452 = vpop.f32.mrf.mxu0
      %v1453 = vadd.f32 0.0, %v1452
      %v1454 = vpop.f32.mrf.mxu0
      %1455 = vmatprep.mubr.f32.mxu0 %v1024
      %1456 = vmatmul.mubr.f32.gmra.mxu0 %v1023
      %v1457 = vpop.f32.mrf.mxu0
      %v1458 = vadd.f32 0.0, %v1457
      %v1459 = vpop.f32.mrf.mxu0
      %1460 = vmatprep.mubr.f32.mxu0 %v1033
      %1461 = vmatmul.mubr.f32.gmra.mxu0 %v1032
      %v1462 = vpop.f32.mrf.mxu0
      %v1463 = vadd.f32 0.0, %v1462
      %v1464 = vpop.f32.mrf.mxu0
      %1465 = vmatprep.mubr.f32.mxu0 %v1042
      %1466 = vmatmul.mubr.f32.gmra.mxu0 %v1041
      %v1467 = vpop.f32.mrf.mxu0
      %v1468 = vadd.f32 0.0, %v1467
      %v1469 = vpop.f32.mrf.mxu0
      %1470 = vmatprep.mubr.f32.mxu0 %v1051
      %1471 = vmatmul.mubr.f32.gmra.mxu0 %v1050
      %v1472 = vpop.f32.mrf.mxu0
      %v1473 = vadd.f32 0.0, %v1472
      %v1474 = vpop.f32.mrf.mxu0
      %1475 = vmatprep.mubr.f32.mxu0 %v1060
      %1476 = vmatmul.mubr.f32.gmra.mxu0 %v1059
      %v1477 = vpop.f32.mrf.mxu0
      %v1478 = vadd.f32 0.0, %v1477
      %v1479 = vpop.f32.mrf.mxu0
      %1480 = vmatprep.mubr.f32.mxu0 %v1069
      %1481 = vmatmul.mubr.f32.gmra.mxu0 %v1068
      %v1482 = vpop.f32.mrf.mxu0
      %v1483 = vadd.f32 0.0, %v1482
      %v1484 = vpop.f32.mrf.mxu0
      %1485 = vmatprep.mubr.f32.mxu0 %v1078
      %1486 = vmatmul.mubr.f32.gmra.mxu0 %v1077
      %v1487 = vpop.f32.mrf.mxu0
      %v1488 = vadd.f32 0.0, %v1487
      %v1489 = vpop.f32.mrf.mxu0
      %1490 = vmatprep.mubr.f32.mxu0 %v1087
      %1491 = vmatmul.mubr.f32.gmra.mxu0 %v1086
      %v1492 = vpop.f32.mrf.mxu0
      %v1493 = vadd.f32 0.0, %v1492
      %v1494 = vpop.f32.mrf.mxu0
      %1495 = vmatprep.mubr.f32.mxu0 %v1096
      %1496 = vmatmul.mubr.f32.gmra.mxu0 %v1095
      %v1497 = vpop.f32.mrf.mxu0
      %v1498 = vadd.f32 0.0, %v1497
      %v1499 = vpop.f32.mrf.mxu0
      %1500 = vmatprep.mubr.f32.mxu0 %v1105
      %1501 = vmatmul.mubr.f32.gmra.mxu0 %v1104
      %v1502 = vpop.f32.mrf.mxu0
      %v1503 = vadd.f32 0.0, %v1502
      %v1504 = vpop.f32.mrf.mxu0
      %1505 = vmatprep.mubr.f32.mxu0 %v1114
      %1506 = vmatmul.mubr.f32.gmra.mxu0 %v1113
      %v1507 = vpop.f32.mrf.mxu0
      %v1508 = vadd.f32 0.0, %v1507
      %v1509 = vpop.f32.mrf.mxu0
      %1510 = vmatprep.mubr.f32.mxu0 %v1123
      %1511 = vmatmul.mubr.f32.gmra.mxu0 %v1122
      %v1512 = vpop.f32.mrf.mxu0
      %v1513 = vadd.f32 0.0, %v1512
      %v1514 = vpop.f32.mrf.mxu0
      %1515 = vmatprep.mubr.f32.mxu0 %v1132
      %1516 = vmatmul.mubr.f32.gmra.mxu0 %v1131
      %v1517 = vpop.f32.mrf.mxu0
      %v1518 = vadd.f32 0.0, %v1517
      %v1519 = vpop.f32.mrf.mxu0
      %1520 = vmatprep.mubr.f32.mxu0 %v1141
      %1521 = vmatmul.mubr.f32.gmra.mxu0 %v1140
      %v1522 = vpop.f32.mrf.mxu0
      %v1523 = vadd.f32 0.0, %v1522
      %v1524 = vpop.f32.mrf.mxu0
      %1525 = vmatprep.mubr.f32.mxu0 %v1150
      %1526 = vmatmul.mubr.f32.gmra.mxu0 %v1149
      %v1527 = vpop.f32.mrf.mxu0
      %v1528 = vadd.f32 0.0, %v1527
      %v1529 = vpop.f32.mrf.mxu0
      %1530 = vmatprep.mubr.f32.mxu0 %v1159
      %1531 = vmatmul.mubr.f32.gmra.mxu0 %v1158
      %v1532 = vpop.f32.mrf.mxu0
      %v1533 = vadd.f32 0.0, %v1532
      %v1534 = vpop.f32.mrf.mxu0
      %1535 = vdwg.mxu0
      %1536 = vmatprep.subr.mxu0 0.0
      %1537 = vmatpush1.msra.mxu0 %v1214
      %1538 = vmatprep.subr.mxu0 0.0
      %1539 = vmatpush1.msra.mxu0 %v1213
      %1540 = vmatprep.subr.mxu0 0.0
      %1541 = vmatpush1.msra.mxu0 %v1212
      %1542 = vmatprep.subr.mxu0 0.0
      %1543 = vmatpush1.msra.mxu0 %v1211
      %1544 = vmatprep.subr.mxu0 0.0
      %1545 = vmatpush1.msra.mxu0 %v1210
      %1546 = vmatprep.subr.mxu0 0.0
      %1547 = vmatpush1.msra.mxu0 %v1209
      %1548 = vmatprep.subr.mxu0 0.0
      %1549 = vmatpush1.msra.mxu0 %v1208
      %1550 = vmatprep.subr.mxu0 0.0
      %1551 = vmatpush1.msra.mxu0 %v1207
      %1552 = vmatprep.subr.mxu0 0.0
      %1553 = vmatpush1.msra.mxu0 %v1206
      %1554 = vmatprep.subr.mxu0 0.0
      %1555 = vmatpush1.msra.mxu0 %v1205
      %1556 = vmatprep.subr.mxu0 0.0
      %1557 = vmatpush1.msra.mxu0 %v1204
      %1558 = vmatprep.subr.mxu0 0.0
      %1559 = vmatpush1.msra.mxu0 %v1203
      %1560 = vmatprep.subr.mxu0 0.0
      %1561 = vmatpush1.msra.mxu0 %v1202
      %1562 = vmatprep.subr.mxu0 0.0
      %1563 = vmatpush1.msra.mxu0 %v1201
      %1564 = vmatprep.subr.mxu0 0.0
      %1565 = vmatpush1.msra.mxu0 %v1200
      %1566 = vmatprep.subr.mxu0 0.0
      %1567 = vmatpush1.msra.mxu0 %v1199
      %1568 = vmatprep.subr.mxu0 0.0
      %1569 = vmatpush2.msra.mxu0 %v1230
      %1570 = vmatprep.subr.mxu0 0.0
      %1571 = vmatpush2.msra.mxu0 %v1229
      %1572 = vmatprep.subr.mxu0 0.0
      %1573 = vmatpush2.msra.mxu0 %v1228
      %1574 = vmatprep.subr.mxu0 0.0
      %1575 = vmatpush2.msra.mxu0 %v1227
      %1576 = vmatprep.subr.mxu0 0.0
      %1577 = vmatpush2.msra.mxu0 %v1226
      %1578 = vmatprep.subr.mxu0 0.0
      %1579 = vmatpush2.msra.mxu0 %v1225
      %1580 = vmatprep.subr.mxu0 0.0
      %1581 = vmatpush2.msra.mxu0 %v1224
      %1582 = vmatprep.subr.mxu0 0.0
      %1583 = vmatpush2.msra.mxu0 %v1223
      %1584 = vmatprep.subr.mxu0 0.0
      %1585 = vmatpush2.msra.mxu0 %v1222
      %1586 = vmatprep.subr.mxu0 0.0
      %1587 = vmatpush2.msra.mxu0 %v1221
      %1588 = vmatprep.subr.mxu0 0.0
      %1589 = vmatpush2.msra.mxu0 %v1220
      %1590 = vmatprep.subr.mxu0 0.0
      %1591 = vmatpush2.msra.mxu0 %v1219
      %1592 = vmatprep.subr.mxu0 0.0
      %1593 = vmatpush2.msra.mxu0 %v1218
      %1594 = vmatprep.subr.mxu0 0.0
      %1595 = vmatpush2.msra.mxu0 %v1217
      %1596 = vmatprep.subr.mxu0 0.0
      %1597 = vmatpush2.msra.mxu0 %v1216
      %1598 = vmatprep.subr.mxu0 0.0
      %1599 = vmatpush2.msra.mxu0 %v1215
      %1600 = vmatprep.mubr.f32.mxu0 %v882
      %1601 = vmatmul.mubr.f32.gmra.mxu0 %v881
      %v1602 = vpop.f32.mrf.mxu0
      %v1603 = vadd.f32 %v1378, %v1602
      %v1604 = vpop.f32.mrf.mxu0
      %1605 = vmatprep.mubr.f32.mxu0 %v891
      %1606 = vmatmul.mubr.f32.gmra.mxu0 %v890
      %v1607 = vpop.f32.mrf.mxu0
      %v1608 = vadd.f32 %v1383, %v1607
      %v1609 = vpop.f32.mrf.mxu0
      %1610 = vmatprep.mubr.f32.mxu0 %v900
      %1611 = vmatmul.mubr.f32.gmra.mxu0 %v899
      %v1612 = vpop.f32.mrf.mxu0
      %v1613 = vadd.f32 %v1388, %v1612
      %v1614 = vpop.f32.mrf.mxu0
      %1615 = vmatprep.mubr.f32.mxu0 %v909
      %1616 = vmatmul.mubr.f32.gmra.mxu0 %v908
      %v1617 = vpop.f32.mrf.mxu0
      %v1618 = vadd.f32 %v1393, %v1617
      %v1619 = vpop.f32.mrf.mxu0
      %1620 = vmatprep.mubr.f32.mxu0 %v918
      %1621 = vmatmul.mubr.f32.gmra.mxu0 %v917
      %v1622 = vpop.f32.mrf.mxu0
      %v1623 = vadd.f32 %v1398, %v1622
      %v1624 = vpop.f32.mrf.mxu0
      %1625 = vmatprep.mubr.f32.mxu0 %v927
      %1626 = vmatmul.mubr.f32.gmra.mxu0 %v926
      %v1627 = vpop.f32.mrf.mxu0
      %v1628 = vadd.f32 %v1403, %v1627
      %v1629 = vpop.f32.mrf.mxu0
      %1630 = vmatprep.mubr.f32.mxu0 %v936
      %1631 = vmatmul.mubr.f32.gmra.mxu0 %v935
      %v1632 = vpop.f32.mrf.mxu0
      %v1633 = vadd.f32 %v1408, %v1632
      %v1634 = vpop.f32.mrf.mxu0
      %1635 = vmatprep.mubr.f32.mxu0 %v945
      %1636 = vmatmul.mubr.f32.gmra.mxu0 %v944
      %v1637 = vpop.f32.mrf.mxu0
      %v1638 = vadd.f32 %v1413, %v1637
      %v1639 = vpop.f32.mrf.mxu0
      %1640 = vmatprep.mubr.f32.mxu0 %v954
      %1641 = vmatmul.mubr.f32.gmra.mxu0 %v953
      %v1642 = vpop.f32.mrf.mxu0
      %v1643 = vadd.f32 %v1418, %v1642
      %v1644 = vpop.f32.mrf.mxu0
      %1645 = vmatprep.mubr.f32.mxu0 %v963
      %1646 = vmatmul.mubr.f32.gmra.mxu0 %v962
      %v1647 = vpop.f32.mrf.mxu0
      %v1648 = vadd.f32 %v1423, %v1647
      %v1649 = vpop.f32.mrf.mxu0
      %1650 = vmatprep.mubr.f32.mxu0 %v972
      %1651 = vmatmul.mubr.f32.gmra.mxu0 %v971
      %v1652 = vpop.f32.mrf.mxu0
      %v1653 = vadd.f32 %v1428, %v1652
      %v1654 = vpop.f32.mrf.mxu0
      %1655 = vmatprep.mubr.f32.mxu0 %v981
      %1656 = vmatmul.mubr.f32.gmra.mxu0 %v980
      %v1657 = vpop.f32.mrf.mxu0
      %v1658 = vadd.f32 %v1433, %v1657
      %v1659 = vpop.f32.mrf.mxu0
      %1660 = vmatprep.mubr.f32.mxu0 %v990
      %1661 = vmatmul.mubr.f32.gmra.mxu0 %v989
      %v1662 = vpop.f32.mrf.mxu0
      %v1663 = vadd.f32 %v1438, %v1662
      %v1664 = vpop.f32.mrf.mxu0
      %1665 = vmatprep.mubr.f32.mxu0 %v999
      %1666 = vmatmul.mubr.f32.gmra.mxu0 %v998
      %v1667 = vpop.f32.mrf.mxu0
      %v1668 = vadd.f32 %v1443, %v1667
      %v1669 = vpop.f32.mrf.mxu0
      %1670 = vmatprep.mubr.f32.mxu0 %v1008
      %1671 = vmatmul.mubr.f32.gmra.mxu0 %v1007
      %v1672 = vpop.f32.mrf.mxu0
      %v1673 = vadd.f32 %v1448, %v1672
      %v1674 = vpop.f32.mrf.mxu0
      %1675 = vmatprep.mubr.f32.mxu0 %v1017
      %1676 = vmatmul.mubr.f32.gmra.mxu0 %v1016
      %v1677 = vpop.f32.mrf.mxu0
      %v1678 = vadd.f32 %v1453, %v1677
      %v1679 = vpop.f32.mrf.mxu0
      %1680 = vmatprep.mubr.f32.mxu0 %v1026
      %1681 = vmatmul.mubr.f32.gmra.mxu0 %v1025
      %v1682 = vpop.f32.mrf.mxu0
      %v1683 = vadd.f32 %v1458, %v1682
      %v1684 = vpop.f32.mrf.mxu0
      %1685 = vmatprep.mubr.f32.mxu0 %v1035
      %1686 = vmatmul.mubr.f32.gmra.mxu0 %v1034
      %v1687 = vpop.f32.mrf.mxu0
      %v1688 = vadd.f32 %v1463, %v1687
      %v1689 = vpop.f32.mrf.mxu0
      %1690 = vmatprep.mubr.f32.mxu0 %v1044
      %1691 = vmatmul.mubr.f32.gmra.mxu0 %v1043
      %v1692 = vpop.f32.mrf.mxu0
      %v1693 = vadd.f32 %v1468, %v1692
      %v1694 = vpop.f32.mrf.mxu0
      %1695 = vmatprep.mubr.f32.mxu0 %v1053
      %1696 = vmatmul.mubr.f32.gmra.mxu0 %v1052
      %v1697 = vpop.f32.mrf.mxu0
      %v1698 = vadd.f32 %v1473, %v1697
      %v1699 = vpop.f32.mrf.mxu0
      %1700 = vmatprep.mubr.f32.mxu0 %v1062
      %1701 = vmatmul.mubr.f32.gmra.mxu0 %v1061
      %v1702 = vpop.f32.mrf.mxu0
      %v1703 = vadd.f32 %v1478, %v1702
      %v1704 = vpop.f32.mrf.mxu0
      %1705 = vmatprep.mubr.f32.mxu0 %v1071
      %1706 = vmatmul.mubr.f32.gmra.mxu0 %v1070
      %v1707 = vpop.f32.mrf.mxu0
      %v1708 = vadd.f32 %v1483, %v1707
      %v1709 = vpop.f32.mrf.mxu0
      %1710 = vmatprep.mubr.f32.mxu0 %v1080
      %1711 = vmatmul.mubr.f32.gmra.mxu0 %v1079
      %v1712 = vpop.f32.mrf.mxu0
      %v1713 = vadd.f32 %v1488, %v1712
      %v1714 = vpop.f32.mrf.mxu0
      %1715 = vmatprep.mubr.f32.mxu0 %v1089
      %1716 = vmatmul.mubr.f32.gmra.mxu0 %v1088
      %v1717 = vpop.f32.mrf.mxu0
      %v1718 = vadd.f32 %v1493, %v1717
      %v1719 = vpop.f32.mrf.mxu0
      %1720 = vmatprep.mubr.f32.mxu0 %v1098
      %1721 = vmatmul.mubr.f32.gmra.mxu0 %v1097
      %v1722 = vpop.f32.mrf.mxu0
      %v1723 = vadd.f32 %v1498, %v1722
      %v1724 = vpop.f32.mrf.mxu0
      %1725 = vmatprep.mubr.f32.mxu0 %v1107
      %1726 = vmatmul.mubr.f32.gmra.mxu0 %v1106
      %v1727 = vpop.f32.mrf.mxu0
      %v1728 = vadd.f32 %v1503, %v1727
      %v1729 = vpop.f32.mrf.mxu0
      %1730 = vmatprep.mubr.f32.mxu0 %v1116
      %1731 = vmatmul.mubr.f32.gmra.mxu0 %v1115
      %v1732 = vpop.f32.mrf.mxu0
      %v1733 = vadd.f32 %v1508, %v1732
      %v1734 = vpop.f32.mrf.mxu0
      %1735 = vmatprep.mubr.f32.mxu0 %v1125
      %1736 = vmatmul.mubr.f32.gmra.mxu0 %v1124
      %v1737 = vpop.f32.mrf.mxu0
      %v1738 = vadd.f32 %v1513, %v1737
      %v1739 = vpop.f32.mrf.mxu0
      %1740 = vmatprep.mubr.f32.mxu0 %v1134
      %1741 = vmatmul.mubr.f32.gmra.mxu0 %v1133
      %v1742 = vpop.f32.mrf.mxu0
      %v1743 = vadd.f32 %v1518, %v1742
      %v1744 = vpop.f32.mrf.mxu0
      %1745 = vmatprep.mubr.f32.mxu0 %v1143
      %1746 = vmatmul.mubr.f32.gmra.mxu0 %v1142
      %v1747 = vpop.f32.mrf.mxu0
      %v1748 = vadd.f32 %v1523, %v1747
      %v1749 = vpop.f32.mrf.mxu0
      %1750 = vmatprep.mubr.f32.mxu0 %v1152
      %1751 = vmatmul.mubr.f32.gmra.mxu0 %v1151
      %v1752 = vpop.f32.mrf.mxu0
      %v1753 = vadd.f32 %v1528, %v1752
      %v1754 = vpop.f32.mrf.mxu0
      %1755 = vmatprep.mubr.f32.mxu0 %v1161
      %1756 = vmatmul.mubr.f32.gmra.mxu0 %v1160
      %v1757 = vpop.f32.mrf.mxu0
      %v1758 = vadd.f32 %v1533, %v1757
      %v1759 = vpop.f32.mrf.mxu0
      %1760 = vdwg.mxu0
      %1761 = vmatprep.subr.mxu0 0.0
      %1762 = vmatpush1.msra.mxu0 %v1246
      %1763 = vmatprep.subr.mxu0 0.0
      %1764 = vmatpush1.msra.mxu0 %v1245
      %1765 = vmatprep.subr.mxu0 0.0
      %1766 = vmatpush1.msra.mxu0 %v1244
      %1767 = vmatprep.subr.mxu0 0.0
      %1768 = vmatpush1.msra.mxu0 %v1243
      %1769 = vmatprep.subr.mxu0 0.0
      %1770 = vmatpush1.msra.mxu0 %v1242
      %1771 = vmatprep.subr.mxu0 0.0
      %1772 = vmatpush1.msra.mxu0 %v1241
      %1773 = vmatprep.subr.mxu0 0.0
      %1774 = vmatpush1.msra.mxu0 %v1240
      %1775 = vmatprep.subr.mxu0 0.0
      %1776 = vmatpush1.msra.mxu0 %v1239
      %1777 = vmatprep.subr.mxu0 0.0
      %1778 = vmatpush1.msra.mxu0 %v1238
      %1779 = vmatprep.subr.mxu0 0.0
      %1780 = vmatpush1.msra.mxu0 %v1237
      %1781 = vmatprep.subr.mxu0 0.0
      %1782 = vmatpush1.msra.mxu0 %v1236
      %1783 = vmatprep.subr.mxu0 0.0
      %1784 = vmatpush1.msra.mxu0 %v1235
      %1785 = vmatprep.subr.mxu0 0.0
      %1786 = vmatpush1.msra.mxu0 %v1234
      %1787 = vmatprep.subr.mxu0 0.0
      %1788 = vmatpush1.msra.mxu0 %v1233
      %1789 = vmatprep.subr.mxu0 0.0
      %1790 = vmatpush1.msra.mxu0 %v1232
      %1791 = vmatprep.subr.mxu0 0.0
      %1792 = vmatpush1.msra.mxu0 %v1231
      %1793 = vmatprep.subr.mxu0 0.0
      %1794 = vmatpush2.msra.mxu0 %v1262
      %1795 = vmatprep.subr.mxu0 0.0
      %1796 = vmatpush2.msra.mxu0 %v1261
      %1797 = vmatprep.subr.mxu0 0.0
      %1798 = vmatpush2.msra.mxu0 %v1260
      %1799 = vmatprep.subr.mxu0 0.0
      %1800 = vmatpush2.msra.mxu0 %v1259
      %1801 = vmatprep.subr.mxu0 0.0
      %1802 = vmatpush2.msra.mxu0 %v1258
      %1803 = vmatprep.subr.mxu0 0.0
      %1804 = vmatpush2.msra.mxu0 %v1257
      %1805 = vmatprep.subr.mxu0 0.0
      %1806 = vmatpush2.msra.mxu0 %v1256
      %1807 = vmatprep.subr.mxu0 0.0
      %1808 = vmatpush2.msra.mxu0 %v1255
      %1809 = vmatprep.subr.mxu0 0.0
      %1810 = vmatpush2.msra.mxu0 %v1254
      %1811 = vmatprep.subr.mxu0 0.0
      %1812 = vmatpush2.msra.mxu0 %v1253
      %1813 = vmatprep.subr.mxu0 0.0
      %1814 = vmatpush2.msra.mxu0 %v1252
      %1815 = vmatprep.subr.mxu0 0.0
      %1816 = vmatpush2.msra.mxu0 %v1251
      %1817 = vmatprep.subr.mxu0 0.0
      %1818 = vmatpush2.msra.mxu0 %v1250
      %1819 = vmatprep.subr.mxu0 0.0
      %1820 = vmatpush2.msra.mxu0 %v1249
      %1821 = vmatprep.subr.mxu0 0.0
      %1822 = vmatpush2.msra.mxu0 %v1248
      %1823 = vmatprep.subr.mxu0 0.0
      %1824 = vmatpush2.msra.mxu0 %v1247
      %1825 = vmatprep.mubr.f32.mxu0 %v884
      %1826 = vmatmul.mubr.f32.gmra.mxu0 %v883
      %v1827 = vpop.f32.mrf.mxu0
      %v1828 = vadd.f32 %v1603, %v1827
      %v1829 = vpop.f32.mrf.mxu0
      %1830 = vmatprep.mubr.f32.mxu0 %v893
      %1831 = vmatmul.mubr.f32.gmra.mxu0 %v892
      %v1832 = vpop.f32.mrf.mxu0
      %v1833 = vadd.f32 %v1608, %v1832
      %v1834 = vpop.f32.mrf.mxu0
      %1835 = vmatprep.mubr.f32.mxu0 %v902
      %1836 = vmatmul.mubr.f32.gmra.mxu0 %v901
      %v1837 = vpop.f32.mrf.mxu0
      %v1838 = vadd.f32 %v1613, %v1837
      %v1839 = vpop.f32.mrf.mxu0
      %1840 = vmatprep.mubr.f32.mxu0 %v911
      %1841 = vmatmul.mubr.f32.gmra.mxu0 %v910
      %v1842 = vpop.f32.mrf.mxu0
      %v1843 = vadd.f32 %v1618, %v1842
      %v1844 = vpop.f32.mrf.mxu0
      %1845 = vmatprep.mubr.f32.mxu0 %v920
      %1846 = vmatmul.mubr.f32.gmra.mxu0 %v919
      %v1847 = vpop.f32.mrf.mxu0
      %v1848 = vadd.f32 %v1623, %v1847
      %v1849 = vpop.f32.mrf.mxu0
      %1850 = vmatprep.mubr.f32.mxu0 %v929
      %1851 = vmatmul.mubr.f32.gmra.mxu0 %v928
      %v1852 = vpop.f32.mrf.mxu0
      %v1853 = vadd.f32 %v1628, %v1852
      %v1854 = vpop.f32.mrf.mxu0
      %1855 = vmatprep.mubr.f32.mxu0 %v938
      %1856 = vmatmul.mubr.f32.gmra.mxu0 %v937
      %v1857 = vpop.f32.mrf.mxu0
      %v1858 = vadd.f32 %v1633, %v1857
      %v1859 = vpop.f32.mrf.mxu0
      %1860 = vmatprep.mubr.f32.mxu0 %v947
      %1861 = vmatmul.mubr.f32.gmra.mxu0 %v946
      %v1862 = vpop.f32.mrf.mxu0
      %v1863 = vadd.f32 %v1638, %v1862
      %v1864 = vpop.f32.mrf.mxu0
      %1865 = vmatprep.mubr.f32.mxu0 %v956
      %1866 = vmatmul.mubr.f32.gmra.mxu0 %v955
      %v1867 = vpop.f32.mrf.mxu0
      %v1868 = vadd.f32 %v1643, %v1867
      %v1869 = vpop.f32.mrf.mxu0
      %1870 = vmatprep.mubr.f32.mxu0 %v965
      %1871 = vmatmul.mubr.f32.gmra.mxu0 %v964
      %v1872 = vpop.f32.mrf.mxu0
      %v1873 = vadd.f32 %v1648, %v1872
      %v1874 = vpop.f32.mrf.mxu0
      %1875 = vmatprep.mubr.f32.mxu0 %v974
      %1876 = vmatmul.mubr.f32.gmra.mxu0 %v973
      %v1877 = vpop.f32.mrf.mxu0
      %v1878 = vadd.f32 %v1653, %v1877
      %v1879 = vpop.f32.mrf.mxu0
      %1880 = vmatprep.mubr.f32.mxu0 %v983
      %1881 = vmatmul.mubr.f32.gmra.mxu0 %v982
      %v1882 = vpop.f32.mrf.mxu0
      %v1883 = vadd.f32 %v1658, %v1882
      %v1884 = vpop.f32.mrf.mxu0
      %1885 = vmatprep.mubr.f32.mxu0 %v992
      %1886 = vmatmul.mubr.f32.gmra.mxu0 %v991
      %v1887 = vpop.f32.mrf.mxu0
      %v1888 = vadd.f32 %v1663, %v1887
      %v1889 = vpop.f32.mrf.mxu0
      %1890 = vmatprep.mubr.f32.mxu0 %v1001
      %1891 = vmatmul.mubr.f32.gmra.mxu0 %v1000
      %v1892 = vpop.f32.mrf.mxu0
      %v1893 = vadd.f32 %v1668, %v1892
      %v1894 = vpop.f32.mrf.mxu0
      %1895 = vmatprep.mubr.f32.mxu0 %v1010
      %1896 = vmatmul.mubr.f32.gmra.mxu0 %v1009
      %v1897 = vpop.f32.mrf.mxu0
      %v1898 = vadd.f32 %v1673, %v1897
      %v1899 = vpop.f32.mrf.mxu0
      %1900 = vmatprep.mubr.f32.mxu0 %v1019
      %1901 = vmatmul.mubr.f32.gmra.mxu0 %v1018
      %v1902 = vpop.f32.mrf.mxu0
      %v1903 = vadd.f32 %v1678, %v1902
      %v1904 = vpop.f32.mrf.mxu0
      %1905 = vmatprep.mubr.f32.mxu0 %v1028
      %1906 = vmatmul.mubr.f32.gmra.mxu0 %v1027
      %v1907 = vpop.f32.mrf.mxu0
      %v1908 = vadd.f32 %v1683, %v1907
      %v1909 = vpop.f32.mrf.mxu0
      %1910 = vmatprep.mubr.f32.mxu0 %v1037
      %1911 = vmatmul.mubr.f32.gmra.mxu0 %v1036
      %v1912 = vpop.f32.mrf.mxu0
      %v1913 = vadd.f32 %v1688, %v1912
      %v1914 = vpop.f32.mrf.mxu0
      %1915 = vmatprep.mubr.f32.mxu0 %v1046
      %1916 = vmatmul.mubr.f32.gmra.mxu0 %v1045
      %v1917 = vpop.f32.mrf.mxu0
      %v1918 = vadd.f32 %v1693, %v1917
      %v1919 = vpop.f32.mrf.mxu0
      %1920 = vmatprep.mubr.f32.mxu0 %v1055
      %1921 = vmatmul.mubr.f32.gmra.mxu0 %v1054
      %v1922 = vpop.f32.mrf.mxu0
      %v1923 = vadd.f32 %v1698, %v1922
      %v1924 = vpop.f32.mrf.mxu0
      %1925 = vmatprep.mubr.f32.mxu0 %v1064
      %1926 = vmatmul.mubr.f32.gmra.mxu0 %v1063
      %v1927 = vpop.f32.mrf.mxu0
      %v1928 = vadd.f32 %v1703, %v1927
      %v1929 = vpop.f32.mrf.mxu0
      %1930 = vmatprep.mubr.f32.mxu0 %v1073
      %1931 = vmatmul.mubr.f32.gmra.mxu0 %v1072
      %v1932 = vpop.f32.mrf.mxu0
      %v1933 = vadd.f32 %v1708, %v1932
      %v1934 = vpop.f32.mrf.mxu0
      %1935 = vmatprep.mubr.f32.mxu0 %v1082
      %1936 = vmatmul.mubr.f32.gmra.mxu0 %v1081
      %v1937 = vpop.f32.mrf.mxu0
      %v1938 = vadd.f32 %v1713, %v1937
      %v1939 = vpop.f32.mrf.mxu0
      %1940 = vmatprep.mubr.f32.mxu0 %v1091
      %1941 = vmatmul.mubr.f32.gmra.mxu0 %v1090
      %v1942 = vpop.f32.mrf.mxu0
      %v1943 = vadd.f32 %v1718, %v1942
      %v1944 = vpop.f32.mrf.mxu0
      %1945 = vmatprep.mubr.f32.mxu0 %v1100
      %1946 = vmatmul.mubr.f32.gmra.mxu0 %v1099
      %v1947 = vpop.f32.mrf.mxu0
      %v1948 = vadd.f32 %v1723, %v1947
      %v1949 = vpop.f32.mrf.mxu0
      %1950 = vmatprep.mubr.f32.mxu0 %v1109
      %1951 = vmatmul.mubr.f32.gmra.mxu0 %v1108
      %v1952 = vpop.f32.mrf.mxu0
      %v1953 = vadd.f32 %v1728, %v1952
      %v1954 = vpop.f32.mrf.mxu0
      %1955 = vmatprep.mubr.f32.mxu0 %v1118
      %1956 = vmatmul.mubr.f32.gmra.mxu0 %v1117
      %v1957 = vpop.f32.mrf.mxu0
      %v1958 = vadd.f32 %v1733, %v1957
      %v1959 = vpop.f32.mrf.mxu0
      %1960 = vmatprep.mubr.f32.mxu0 %v1127
      %1961 = vmatmul.mubr.f32.gmra.mxu0 %v1126
      %v1962 = vpop.f32.mrf.mxu0
      %v1963 = vadd.f32 %v1738, %v1962
      %v1964 = vpop.f32.mrf.mxu0
      %1965 = vmatprep.mubr.f32.mxu0 %v1136
      %1966 = vmatmul.mubr.f32.gmra.mxu0 %v1135
      %v1967 = vpop.f32.mrf.mxu0
      %v1968 = vadd.f32 %v1743, %v1967
      %v1969 = vpop.f32.mrf.mxu0
      %1970 = vmatprep.mubr.f32.mxu0 %v1145
      %1971 = vmatmul.mubr.f32.gmra.mxu0 %v1144
      %v1972 = vpop.f32.mrf.mxu0
      %v1973 = vadd.f32 %v1748, %v1972
      %v1974 = vpop.f32.mrf.mxu0
      %1975 = vmatprep.mubr.f32.mxu0 %v1154
      %1976 = vmatmul.mubr.f32.gmra.mxu0 %v1153
      %v1977 = vpop.f32.mrf.mxu0
      %v1978 = vadd.f32 %v1753, %v1977
      %v1979 = vpop.f32.mrf.mxu0
      %1980 = vmatprep.mubr.f32.mxu0 %v1163
      %1981 = vmatmul.mubr.f32.gmra.mxu0 %v1162
      %v1982 = vpop.f32.mrf.mxu0
      %v1983 = vadd.f32 %v1758, %v1982
      %v1984 = vpop.f32.mrf.mxu0
      %1985 = vdwg.mxu0
      %1986 = vmatprep.subr.mxu0 0.0
      %1987 = vmatpush1.msra.mxu0 %v1278
      %1988 = vmatprep.subr.mxu0 0.0
      %1989 = vmatpush1.msra.mxu0 %v1277
      %1990 = vmatprep.subr.mxu0 0.0
      %1991 = vmatpush1.msra.mxu0 %v1276
      %1992 = vmatprep.subr.mxu0 0.0
      %1993 = vmatpush1.msra.mxu0 %v1275
      %1994 = vmatprep.subr.mxu0 0.0
      %1995 = vmatpush1.msra.mxu0 %v1274
      %1996 = vmatprep.subr.mxu0 0.0
      %1997 = vmatpush1.msra.mxu0 %v1273
      %1998 = vmatprep.subr.mxu0 0.0
      %1999 = vmatpush1.msra.mxu0 %v1272
      %2000 = vmatprep.subr.mxu0 0.0
      %2001 = vmatpush1.msra.mxu0 %v1271
      %2002 = vmatprep.subr.mxu0 0.0
      %2003 = vmatpush1.msra.mxu0 %v1270
      %2004 = vmatprep.subr.mxu0 0.0
      %2005 = vmatpush1.msra.mxu0 %v1269
      %2006 = vmatprep.subr.mxu0 0.0
      %2007 = vmatpush1.msra.mxu0 %v1268
      %2008 = vmatprep.subr.mxu0 0.0
      %2009 = vmatpush1.msra.mxu0 %v1267
      %2010 = vmatprep.subr.mxu0 0.0
      %2011 = vmatpush1.msra.mxu0 %v1266
      %2012 = vmatprep.subr.mxu0 0.0
      %2013 = vmatpush1.msra.mxu0 %v1265
      %2014 = vmatprep.subr.mxu0 0.0
      %2015 = vmatpush1.msra.mxu0 %v1264
      %2016 = vmatprep.subr.mxu0 0.0
      %2017 = vmatpush1.msra.mxu0 %v1263
      %2018 = vmatprep.subr.mxu0 0.0
      %2019 = vmatpush2.msra.mxu0 %v1294
      %2020 = vmatprep.subr.mxu0 0.0
      %2021 = vmatpush2.msra.mxu0 %v1293
      %2022 = vmatprep.subr.mxu0 0.0
      %2023 = vmatpush2.msra.mxu0 %v1292
      %2024 = vmatprep.subr.mxu0 0.0
      %2025 = vmatpush2.msra.mxu0 %v1291
      %2026 = vmatprep.subr.mxu0 0.0
      %2027 = vmatpush2.msra.mxu0 %v1290
      %2028 = vmatprep.subr.mxu0 0.0
      %2029 = vmatpush2.msra.mxu0 %v1289
      %2030 = vmatprep.subr.mxu0 0.0
      %2031 = vmatpush2.msra.mxu0 %v1288
      %2032 = vmatprep.subr.mxu0 0.0
      %2033 = vmatpush2.msra.mxu0 %v1287
      %2034 = vmatprep.subr.mxu0 0.0
      %2035 = vmatpush2.msra.mxu0 %v1286
      %2036 = vmatprep.subr.mxu0 0.0
      %2037 = vmatpush2.msra.mxu0 %v1285
      %2038 = vmatprep.subr.mxu0 0.0
      %2039 = vmatpush2.msra.mxu0 %v1284
      %2040 = vmatprep.subr.mxu0 0.0
      %2041 = vmatpush2.msra.mxu0 %v1283
      %2042 = vmatprep.subr.mxu0 0.0
      %2043 = vmatpush2.msra.mxu0 %v1282
      %2044 = vmatprep.subr.mxu0 0.0
      %2045 = vmatpush2.msra.mxu0 %v1281
      %2046 = vmatprep.subr.mxu0 0.0
      %2047 = vmatpush2.msra.mxu0 %v1280
      %2048 = vmatprep.subr.mxu0 0.0
      %2049 = vmatpush2.msra.mxu0 %v1279
      %2050 = vmatprep.mubr.f32.mxu0 %v886
      %2051 = vmatmul.mubr.f32.gmra.mxu0 %v885
      %v2052 = vpop.f32.mrf.mxu0
      %v2053 = vadd.f32 %v1828, %v2052
      %v2054 = vpop.f32.mrf.mxu0
      %2055 = vmatprep.mubr.f32.mxu0 %v895
      %2056 = vmatmul.mubr.f32.gmra.mxu0 %v894
      %v2057 = vpop.f32.mrf.mxu0
      %v2058 = vadd.f32 %v1833, %v2057
      %v2059 = vpop.f32.mrf.mxu0
      %2060 = vmatprep.mubr.f32.mxu0 %v904
      %2061 = vmatmul.mubr.f32.gmra.mxu0 %v903
      %v2062 = vpop.f32.mrf.mxu0
      %v2063 = vadd.f32 %v1838, %v2062
      %v2064 = vpop.f32.mrf.mxu0
      %2065 = vmatprep.mubr.f32.mxu0 %v913
      %2066 = vmatmul.mubr.f32.gmra.mxu0 %v912
      %v2067 = vpop.f32.mrf.mxu0
      %v2068 = vadd.f32 %v1843, %v2067
      %v2069 = vpop.f32.mrf.mxu0
      %2070 = vmatprep.mubr.f32.mxu0 %v922
      %2071 = vmatmul.mubr.f32.gmra.mxu0 %v921
      %v2072 = vpop.f32.mrf.mxu0
      %v2073 = vadd.f32 %v1848, %v2072
      %v2074 = vpop.f32.mrf.mxu0
      %2075 = vmatprep.mubr.f32.mxu0 %v931
      %2076 = vmatmul.mubr.f32.gmra.mxu0 %v930
      %v2077 = vpop.f32.mrf.mxu0
      %v2078 = vadd.f32 %v1853, %v2077
      %v2079 = vpop.f32.mrf.mxu0
      %2080 = vmatprep.mubr.f32.mxu0 %v940
      %2081 = vmatmul.mubr.f32.gmra.mxu0 %v939
      %v2082 = vpop.f32.mrf.mxu0
      %v2083 = vadd.f32 %v1858, %v2082
      %v2084 = vpop.f32.mrf.mxu0
      %2085 = vmatprep.mubr.f32.mxu0 %v949
      %2086 = vmatmul.mubr.f32.gmra.mxu0 %v948
      %v2087 = vpop.f32.mrf.mxu0
      %v2088 = vadd.f32 %v1863, %v2087
      %v2089 = vpop.f32.mrf.mxu0
      %2090 = vmatprep.mubr.f32.mxu0 %v958
      %2091 = vmatmul.mubr.f32.gmra.mxu0 %v957
      %v2092 = vpop.f32.mrf.mxu0
      %v2093 = vadd.f32 %v1868, %v2092
      %v2094 = vpop.f32.mrf.mxu0
      %2095 = vmatprep.mubr.f32.mxu0 %v967
      %2096 = vmatmul.mubr.f32.gmra.mxu0 %v966
      %v2097 = vpop.f32.mrf.mxu0
      %v2098 = vadd.f32 %v1873, %v2097
      %v2099 = vpop.f32.mrf.mxu0
      %2100 = vmatprep.mubr.f32.mxu0 %v976
      %2101 = vmatmul.mubr.f32.gmra.mxu0 %v975
      %v2102 = vpop.f32.mrf.mxu0
      %v2103 = vadd.f32 %v1878, %v2102
      %v2104 = vpop.f32.mrf.mxu0
      %2105 = vmatprep.mubr.f32.mxu0 %v985
      %2106 = vmatmul.mubr.f32.gmra.mxu0 %v984
      %v2107 = vpop.f32.mrf.mxu0
      %v2108 = vadd.f32 %v1883, %v2107
      %v2109 = vpop.f32.mrf.mxu0
      %2110 = vmatprep.mubr.f32.mxu0 %v994
      %2111 = vmatmul.mubr.f32.gmra.mxu0 %v993
      %v2112 = vpop.f32.mrf.mxu0
      %v2113 = vadd.f32 %v1888, %v2112
      %v2114 = vpop.f32.mrf.mxu0
      %2115 = vmatprep.mubr.f32.mxu0 %v1003
      %2116 = vmatmul.mubr.f32.gmra.mxu0 %v1002
      %v2117 = vpop.f32.mrf.mxu0
      %v2118 = vadd.f32 %v1893, %v2117
      %v2119 = vpop.f32.mrf.mxu0
      %2120 = vmatprep.mubr.f32.mxu0 %v1012
      %2121 = vmatmul.mubr.f32.gmra.mxu0 %v1011
      %v2122 = vpop.f32.mrf.mxu0
      %v2123 = vadd.f32 %v1898, %v2122
      %v2124 = vpop.f32.mrf.mxu0
      %2125 = vmatprep.mubr.f32.mxu0 %v1021
      %2126 = vmatmul.mubr.f32.gmra.mxu0 %v1020
      %v2127 = vpop.f32.mrf.mxu0
      %v2128 = vadd.f32 %v1903, %v2127
      %v2129 = vpop.f32.mrf.mxu0
      %2130 = vmatprep.mubr.f32.mxu0 %v1030
      %2131 = vmatmul.mubr.f32.gmra.mxu0 %v1029
      %v2132 = vpop.f32.mrf.mxu0
      %v2133 = vadd.f32 %v1908, %v2132
      %v2134 = vpop.f32.mrf.mxu0
      %2135 = vmatprep.mubr.f32.mxu0 %v1039
      %2136 = vmatmul.mubr.f32.gmra.mxu0 %v1038
      %v2137 = vpop.f32.mrf.mxu0
      %v2138 = vadd.f32 %v1913, %v2137
      %v2139 = vpop.f32.mrf.mxu0
      %2140 = vmatprep.mubr.f32.mxu0 %v1048
      %2141 = vmatmul.mubr.f32.gmra.mxu0 %v1047
      %v2142 = vpop.f32.mrf.mxu0
      %v2143 = vadd.f32 %v1918, %v2142
      %v2144 = vpop.f32.mrf.mxu0
      %2145 = vmatprep.mubr.f32.mxu0 %v1057
      %2146 = vmatmul.mubr.f32.gmra.mxu0 %v1056
      %v2147 = vpop.f32.mrf.mxu0
      %v2148 = vadd.f32 %v1923, %v2147
      %v2149 = vpop.f32.mrf.mxu0
      %2150 = vmatprep.mubr.f32.mxu0 %v1066
      %2151 = vmatmul.mubr.f32.gmra.mxu0 %v1065
      %v2152 = vpop.f32.mrf.mxu0
      %v2153 = vadd.f32 %v1928, %v2152
      %v2154 = vpop.f32.mrf.mxu0
      %2155 = vmatprep.mubr.f32.mxu0 %v1075
      %2156 = vmatmul.mubr.f32.gmra.mxu0 %v1074
      %v2157 = vpop.f32.mrf.mxu0
      %v2158 = vadd.f32 %v1933, %v2157
      %v2159 = vpop.f32.mrf.mxu0
      %2160 = vmatprep.mubr.f32.mxu0 %v1084
      %2161 = vmatmul.mubr.f32.gmra.mxu0 %v1083
      %v2162 = vpop.f32.mrf.mxu0
      %v2163 = vadd.f32 %v1938, %v2162
      %v2164 = vpop.f32.mrf.mxu0
      %2165 = vmatprep.mubr.f32.mxu0 %v1093
      %2166 = vmatmul.mubr.f32.gmra.mxu0 %v1092
      %v2167 = vpop.f32.mrf.mxu0
      %v2168 = vadd.f32 %v1943, %v2167
      %v2169 = vpop.f32.mrf.mxu0
      %2170 = vmatprep.mubr.f32.mxu0 %v1102
      %2171 = vmatmul.mubr.f32.gmra.mxu0 %v1101
      %v2172 = vpop.f32.mrf.mxu0
      %v2173 = vadd.f32 %v1948, %v2172
      %v2174 = vpop.f32.mrf.mxu0
      %2175 = vmatprep.mubr.f32.mxu0 %v1111
      %2176 = vmatmul.mubr.f32.gmra.mxu0 %v1110
      %v2177 = vpop.f32.mrf.mxu0
      %v2178 = vadd.f32 %v1953, %v2177
      %v2179 = vpop.f32.mrf.mxu0
      %2180 = vmatprep.mubr.f32.mxu0 %v1120
      %2181 = vmatmul.mubr.f32.gmra.mxu0 %v1119
      %v2182 = vpop.f32.mrf.mxu0
      %v2183 = vadd.f32 %v1958, %v2182
      %v2184 = vpop.f32.mrf.mxu0
      %2185 = vmatprep.mubr.f32.mxu0 %v1129
      %2186 = vmatmul.mubr.f32.gmra.mxu0 %v1128
      %v2187 = vpop.f32.mrf.mxu0
      %v2188 = vadd.f32 %v1963, %v2187
      %v2189 = vpop.f32.mrf.mxu0
      %2190 = vmatprep.mubr.f32.mxu0 %v1138
      %2191 = vmatmul.mubr.f32.gmra.mxu0 %v1137
      %v2192 = vpop.f32.mrf.mxu0
      %v2193 = vadd.f32 %v1968, %v2192
      %v2194 = vpop.f32.mrf.mxu0
      %2195 = vmatprep.mubr.f32.mxu0 %v1147
      %2196 = vmatmul.mubr.f32.gmra.mxu0 %v1146
      %v2197 = vpop.f32.mrf.mxu0
      %v2198 = vadd.f32 %v1973, %v2197
      %v2199 = vpop.f32.mrf.mxu0
      %2200 = vmatprep.mubr.f32.mxu0 %v1156
      %2201 = vmatmul.mubr.f32.gmra.mxu0 %v1155
      %v2202 = vpop.f32.mrf.mxu0
      %v2203 = vadd.f32 %v1978, %v2202
      %v2204 = vpop.f32.mrf.mxu0
      %2205 = vmatprep.mubr.f32.mxu0 %v1165
      %2206 = vmatmul.mubr.f32.gmra.mxu0 %v1164
      %v2207 = vpop.f32.mrf.mxu0
      %v2208 = vadd.f32 %v1983, %v2207
      %v2209 = vpop.f32.mrf.mxu0
      %2210 = vdwg.mxu0
      %2211 = vmatprep.subr.mxu0 0.0
      %2212 = vmatpush1.msra.mxu0 %v1310
      %2213 = vmatprep.subr.mxu0 0.0
      %2214 = vmatpush1.msra.mxu0 %v1309
      %2215 = vmatprep.subr.mxu0 0.0
      %2216 = vmatpush1.msra.mxu0 %v1308
      %2217 = vmatprep.subr.mxu0 0.0
      %2218 = vmatpush1.msra.mxu0 %v1307
      %2219 = vmatprep.subr.mxu0 0.0
      %2220 = vmatpush1.msra.mxu0 %v1306
      %2221 = vmatprep.subr.mxu0 0.0
      %2222 = vmatpush1.msra.mxu0 %v1305
      %2223 = vmatprep.subr.mxu0 0.0
      %2224 = vmatpush1.msra.mxu0 %v1304
      %2225 = vmatprep.subr.mxu0 0.0
      %2226 = vmatpush1.msra.mxu0 %v1303
      %2227 = vmatprep.subr.mxu0 0.0
      %2228 = vmatpush1.msra.mxu0 %v1302
      %2229 = vmatprep.subr.mxu0 0.0
      %2230 = vmatpush1.msra.mxu0 %v1301
      %2231 = vmatprep.subr.mxu0 0.0
      %2232 = vmatpush1.msra.mxu0 %v1300
      %2233 = vmatprep.subr.mxu0 0.0
      %2234 = vmatpush1.msra.mxu0 %v1299
      %2235 = vmatprep.subr.mxu0 0.0
      %2236 = vmatpush1.msra.mxu0 %v1298
      %2237 = vmatprep.subr.mxu0 0.0
      %2238 = vmatpush1.msra.mxu0 %v1297
      %2239 = vmatprep.subr.mxu0 0.0
      %2240 = vmatpush1.msra.mxu0 %v1296
      %2241 = vmatprep.subr.mxu0 0.0
      %2242 = vmatpush1.msra.mxu0 %v1295
      %2243 = vmatprep.subr.mxu0 0.0
      %2244 = vmatpush2.msra.mxu0 0.0
      %2245 = vmatprep.subr.mxu0 0.0
      %2246 = vmatpush2.msra.mxu0 0.0
      %2247 = vmatprep.subr.mxu0 0.0
      %2248 = vmatpush2.msra.mxu0 0.0
      %2249 = vmatprep.subr.mxu0 0.0
      %2250 = vmatpush2.msra.mxu0 0.0
      %2251 = vmatprep.subr.mxu0 0.0
      %2252 = vmatpush2.msra.mxu0 0.0
      %2253 = vmatprep.subr.mxu0 0.0
      %2254 = vmatpush2.msra.mxu0 0.0
      %2255 = vmatprep.subr.mxu0 0.0
      %2256 = vmatpush2.msra.mxu0 0.0
      %2257 = vmatprep.subr.mxu0 0.0
      %2258 = vmatpush2.msra.mxu0 0.0
      %2259 = vmatprep.subr.mxu0 0.0
      %2260 = vmatpush2.msra.mxu0 0.0
      %2261 = vmatprep.subr.mxu0 0.0
      %2262 = vmatpush2.msra.mxu0 0.0
      %2263 = vmatprep.subr.mxu0 0.0
      %2264 = vmatpush2.msra.mxu0 0.0
      %2265 = vmatprep.subr.mxu0 0.0
      %2266 = vmatpush2.msra.mxu0 0.0
      %2267 = vmatprep.subr.mxu0 0.0
      %2268 = vmatpush2.msra.mxu0 0.0
      %2269 = vmatprep.subr.mxu0 0.0
      %2270 = vmatpush2.msra.mxu0 0.0
      %2271 = vmatprep.subr.mxu0 0.0
      %2272 = vmatpush2.msra.mxu0 0.0
      %2273 = vmatprep.subr.mxu0 0.0
      %2274 = vmatpush2.msra.mxu0 0.0
      %2275 = vmatprep.mubr.f32.mxu0 0.0
      %2276 = vmatmul.mubr.f32.gmra.mxu0 %v887
      %v2277 = vpop.f32.mrf.mxu0
      %v2278 = vadd.f32 %v2053, %v2277
      %v2279 = vpop.f32.mrf.mxu0
      %2280 = vmatprep.mubr.f32.mxu0 0.0
      %2281 = vmatmul.mubr.f32.gmra.mxu0 %v896
      %v2282 = vpop.f32.mrf.mxu0
      %v2283 = vadd.f32 %v2058, %v2282
      %v2284 = vpop.f32.mrf.mxu0
      %2285 = vmatprep.mubr.f32.mxu0 0.0
      %2286 = vmatmul.mubr.f32.gmra.mxu0 %v905
      %v2287 = vpop.f32.mrf.mxu0
      %v2288 = vadd.f32 %v2063, %v2287
      %v2289 = vpop.f32.mrf.mxu0
      %2290 = vmatprep.mubr.f32.mxu0 0.0
      %2291 = vmatmul.mubr.f32.gmra.mxu0 %v914
      %v2292 = vpop.f32.mrf.mxu0
      %v2293 = vadd.f32 %v2068, %v2292
      %v2294 = vpop.f32.mrf.mxu0
      %2295 = vmatprep.mubr.f32.mxu0 0.0
      %2296 = vmatmul.mubr.f32.gmra.mxu0 %v923
      %v2297 = vpop.f32.mrf.mxu0
      %v2298 = vadd.f32 %v2073, %v2297
      %v2299 = vpop.f32.mrf.mxu0
      %2300 = vmatprep.mubr.f32.mxu0 0.0
      %2301 = vmatmul.mubr.f32.gmra.mxu0 %v932
      %v2302 = vpop.f32.mrf.mxu0
      %v2303 = vadd.f32 %v2078, %v2302
      %v2304 = vpop.f32.mrf.mxu0
      %2305 = vmatprep.mubr.f32.mxu0 0.0
      %2306 = vmatmul.mubr.f32.gmra.mxu0 %v941
      %v2307 = vpop.f32.mrf.mxu0
      %v2308 = vadd.f32 %v2083, %v2307
      %v2309 = vpop.f32.mrf.mxu0
      %2310 = vmatprep.mubr.f32.mxu0 0.0
      %2311 = vmatmul.mubr.f32.gmra.mxu0 %v950
      %v2312 = vpop.f32.mrf.mxu0
      %v2313 = vadd.f32 %v2088, %v2312
      %v2314 = vpop.f32.mrf.mxu0
      %2315 = vmatprep.mubr.f32.mxu0 0.0
      %2316 = vmatmul.mubr.f32.gmra.mxu0 %v959
      %v2317 = vpop.f32.mrf.mxu0
      %v2318 = vadd.f32 %v2093, %v2317
      %v2319 = vpop.f32.mrf.mxu0
      %2320 = vmatprep.mubr.f32.mxu0 0.0
      %2321 = vmatmul.mubr.f32.gmra.mxu0 %v968
      %v2322 = vpop.f32.mrf.mxu0
      %v2323 = vadd.f32 %v2098, %v2322
      %v2324 = vpop.f32.mrf.mxu0
      %2325 = vmatprep.mubr.f32.mxu0 0.0
      %2326 = vmatmul.mubr.f32.gmra.mxu0 %v977
      %v2327 = vpop.f32.mrf.mxu0
      %v2328 = vadd.f32 %v2103, %v2327
      %v2329 = vpop.f32.mrf.mxu0
      %2330 = vmatprep.mubr.f32.mxu0 0.0
      %2331 = vmatmul.mubr.f32.gmra.mxu0 %v986
      %v2332 = vpop.f32.mrf.mxu0
      %v2333 = vadd.f32 %v2108, %v2332
      %v2334 = vpop.f32.mrf.mxu0
      %2335 = vmatprep.mubr.f32.mxu0 0.0
      %2336 = vmatmul.mubr.f32.gmra.mxu0 %v995
      %v2337 = vpop.f32.mrf.mxu0
      %v2338 = vadd.f32 %v2113, %v2337
      %v2339 = vpop.f32.mrf.mxu0
      %2340 = vmatprep.mubr.f32.mxu0 0.0
      %2341 = vmatmul.mubr.f32.gmra.mxu0 %v1004
      %v2342 = vpop.f32.mrf.mxu0
      %v2343 = vadd.f32 %v2118, %v2342
      %v2344 = vpop.f32.mrf.mxu0
      %2345 = vmatprep.mubr.f32.mxu0 0.0
      %2346 = vmatmul.mubr.f32.gmra.mxu0 %v1013
      %v2347 = vpop.f32.mrf.mxu0
      %v2348 = vadd.f32 %v2123, %v2347
      %v2349 = vpop.f32.mrf.mxu0
      %2350 = vmatprep.mubr.f32.mxu0 0.0
      %2351 = vmatmul.mubr.f32.gmra.mxu0 %v1022
      %v2352 = vpop.f32.mrf.mxu0
      %v2353 = vadd.f32 %v2128, %v2352
      %v2354 = vpop.f32.mrf.mxu0
      %2355 = vmatprep.mubr.f32.mxu0 0.0
      %2356 = vmatmul.mubr.f32.gmra.mxu0 %v1031
      %v2357 = vpop.f32.mrf.mxu0
      %v2358 = vadd.f32 %v2133, %v2357
      %v2359 = vpop.f32.mrf.mxu0
      %2360 = vmatprep.mubr.f32.mxu0 0.0
      %2361 = vmatmul.mubr.f32.gmra.mxu0 %v1040
      %v2362 = vpop.f32.mrf.mxu0
      %v2363 = vadd.f32 %v2138, %v2362
      %v2364 = vpop.f32.mrf.mxu0
      %2365 = vmatprep.mubr.f32.mxu0 0.0
      %2366 = vmatmul.mubr.f32.gmra.mxu0 %v1049
      %v2367 = vpop.f32.mrf.mxu0
      %v2368 = vadd.f32 %v2143, %v2367
      %v2369 = vpop.f32.mrf.mxu0
      %2370 = vmatprep.mubr.f32.mxu0 0.0
      %2371 = vmatmul.mubr.f32.gmra.mxu0 %v1058
      %v2372 = vpop.f32.mrf.mxu0
      %v2373 = vadd.f32 %v2148, %v2372
      %v2374 = vpop.f32.mrf.mxu0
      %2375 = vmatprep.mubr.f32.mxu0 0.0
      %2376 = vmatmul.mubr.f32.gmra.mxu0 %v1067
      %v2377 = vpop.f32.mrf.mxu0
      %v2378 = vadd.f32 %v2153, %v2377
      %v2379 = vpop.f32.mrf.mxu0
      %2380 = vmatprep.mubr.f32.mxu0 0.0
      %2381 = vmatmul.mubr.f32.gmra.mxu0 %v1076
      %v2382 = vpop.f32.mrf.mxu0
      %v2383 = vadd.f32 %v2158, %v2382
      %v2384 = vpop.f32.mrf.mxu0
      %2385 = vmatprep.mubr.f32.mxu0 0.0
      %2386 = vmatmul.mubr.f32.gmra.mxu0 %v1085
      %v2387 = vpop.f32.mrf.mxu0
      %v2388 = vadd.f32 %v2163, %v2387
      %v2389 = vpop.f32.mrf.mxu0
      %2390 = vmatprep.mubr.f32.mxu0 0.0
      %2391 = vmatmul.mubr.f32.gmra.mxu0 %v1094
      %v2392 = vpop.f32.mrf.mxu0
      %v2393 = vadd.f32 %v2168, %v2392
      %v2394 = vpop.f32.mrf.mxu0
      %2395 = vmatprep.mubr.f32.mxu0 0.0
      %2396 = vmatmul.mubr.f32.gmra.mxu0 %v1103
      %v2397 = vpop.f32.mrf.mxu0
      %v2398 = vadd.f32 %v2173, %v2397
      %v2399 = vpop.f32.mrf.mxu0
      %2400 = vmatprep.mubr.f32.mxu0 0.0
      %2401 = vmatmul.mubr.f32.gmra.mxu0 %v1112
      %v2402 = vpop.f32.mrf.mxu0
      %v2403 = vadd.f32 %v2178, %v2402
      %v2404 = vpop.f32.mrf.mxu0
      %2405 = vmatprep.mubr.f32.mxu0 0.0
      %2406 = vmatmul.mubr.f32.gmra.mxu0 %v1121
      %v2407 = vpop.f32.mrf.mxu0
      %v2408 = vadd.f32 %v2183, %v2407
      %v2409 = vpop.f32.mrf.mxu0
      %2410 = vmatprep.mubr.f32.mxu0 0.0
      %2411 = vmatmul.mubr.f32.gmra.mxu0 %v1130
      %v2412 = vpop.f32.mrf.mxu0
      %v2413 = vadd.f32 %v2188, %v2412
      %v2414 = vpop.f32.mrf.mxu0
      %2415 = vmatprep.mubr.f32.mxu0 0.0
      %2416 = vmatmul.mubr.f32.gmra.mxu0 %v1139
      %v2417 = vpop.f32.mrf.mxu0
      %v2418 = vadd.f32 %v2193, %v2417
      %v2419 = vpop.f32.mrf.mxu0
      %2420 = vmatprep.mubr.f32.mxu0 0.0
      %2421 = vmatmul.mubr.f32.gmra.mxu0 %v1148
      %v2422 = vpop.f32.mrf.mxu0
      %v2423 = vadd.f32 %v2198, %v2422
      %v2424 = vpop.f32.mrf.mxu0
      %2425 = vmatprep.mubr.f32.mxu0 0.0
      %2426 = vmatmul.mubr.f32.gmra.mxu0 %v1157
      %v2427 = vpop.f32.mrf.mxu0
      %v2428 = vadd.f32 %v2203, %v2427
      %v2429 = vpop.f32.mrf.mxu0
      %2430 = vmatprep.mubr.f32.mxu0 0.0
      %2431 = vmatmul.mubr.f32.gmra.mxu0 %v1166
      %v2432 = vpop.f32.mrf.mxu0
      %v2433 = vadd.f32 %v2208, %v2432
      %v2434 = vpop.f32.mrf.mxu0
      %2435 = vdwg.mxu0
      %v2436 = vmax.f32 %v2278, 0.0
      %v2437 = vmax.f32 %v2283, 0.0
      %v2438 = vmax.f32 %v2288, 0.0
      %v2439 = vmax.f32 %v2293, 0.0
      %v2440 = vmax.f32 %v2298, 0.0
      %v2441 = vmax.f32 %v2303, 0.0
      %v2442 = vmax.f32 %v2308, 0.0
      %v2443 = vmax.f32 %v2313, 0.0
      %v2444 = vmax.f32 %v2318, 0.0
      %v2445 = vmax.f32 %v2323, 0.0
      %v2446 = vmax.f32 %v2328, 0.0
      %v2447 = vmax.f32 %v2333, 0.0
      %v2448 = vmax.f32 %v2338, 0.0
      %v2449 = vmax.f32 %v2343, 0.0
      %v2450 = vmax.f32 %v2348, 0.0
      %v2451 = vmax.f32 %v2353, 0.0
      %v2452 = vmax.f32 %v2358, 0.0
      %v2453 = vmax.f32 %v2363, 0.0
      %v2454 = vmax.f32 %v2368, 0.0
      %v2455 = vmax.f32 %v2373, 0.0
      %v2456 = vmax.f32 %v2378, 0.0
      %v2457 = vmax.f32 %v2383, 0.0
      %v2458 = vmax.f32 %v2388, 0.0
      %v2459 = vmax.f32 %v2393, 0.0
      %v2460 = vmax.f32 %v2398, 0.0
      %v2461 = vmax.f32 %v2403, 0.0
      %v2462 = vmax.f32 %v2408, 0.0
      %v2463 = vmax.f32 %v2413, 0.0
      %v2464 = vmax.f32 %v2418, 0.0
      %v2465 = vmax.f32 %v2423, 0.0
      %v2466 = vmax.f32 %v2428, 0.0
      %v2467 = vmax.f32 %v2433, 0.0
      %v2468 = vld [vmem:[%s2] sm:$0xff]
      %v2469 = vld [vmem:[%s2 + $0x8] sm:$0xff]
      %v2470 = vld [vmem:[%s2 + $0x10] sm:$0xff]
      %v2471 = vld [vmem:[%s2 + $0x18] sm:$0xff]
      %v2472 = vld [vmem:[%s2 + $0x20] sm:$0xff]
      %v2473 = vld [vmem:[%s2 + $0x28] sm:$0xff]
      %v2474 = vld [vmem:[%s2 + $0x30] sm:$0xff]
      %v2475 = vld [vmem:[%s2 + $0x38] sm:$0xff]
      %v2476 = vld [vmem:[%s2 + $0x40] sm:$0xff]
      %v2477 = vld [vmem:[%s2 + $0x48] sm:$0xff]
      %v2478 = vld [vmem:[%s2 + $0x50] sm:$0xff]
      %v2479 = vld [vmem:[%s2 + $0x58] sm:$0xff]
      %v2480 = vld [vmem:[%s2 + $0x60] sm:$0xff]
      %v2481 = vld [vmem:[%s2 + $0x68] sm:$0xff]
      %v2482 = vld [vmem:[%s2 + $0x70] sm:$0xff]
      %v2483 = vld [vmem:[%s2 + $0x78] sm:$0xff]
      %2484 = vmatprep.subr.mxu0 0.0
      %2485 = vmatpush1.msra.mxu0 %v2483
      %2486 = vmatprep.subr.mxu0 0.0
      %2487 = vmatpush1.msra.mxu0 %v2482
      %2488 = vmatprep.subr.mxu0 0.0
      %2489 = vmatpush1.msra.mxu0 %v2481
      %2490 = vmatprep.subr.mxu0 0.0
      %2491 = vmatpush1.msra.mxu0 %v2480
      %2492 = vmatprep.subr.mxu0 0.0
      %2493 = vmatpush1.msra.mxu0 %v2479
      %2494 = vmatprep.subr.mxu0 0.0
      %2495 = vmatpush1.msra.mxu0 %v2478
      %2496 = vmatprep.subr.mxu0 0.0
      %2497 = vmatpush1.msra.mxu0 %v2477
      %2498 = vmatprep.subr.mxu0 0.0
      %2499 = vmatpush1.msra.mxu0 %v2476
      %2500 = vmatprep.subr.mxu0 0.0
      %2501 = vmatpush1.msra.mxu0 %v2475
      %2502 = vmatprep.subr.mxu0 0.0
      %2503 = vmatpush1.msra.mxu0 %v2474
      %2504 = vmatprep.subr.mxu0 0.0
      %2505 = vmatpush1.msra.mxu0 %v2473
      %2506 = vmatprep.subr.mxu0 0.0
      %2507 = vmatpush1.msra.mxu0 %v2472
      %2508 = vmatprep.subr.mxu0 0.0
      %2509 = vmatpush1.msra.mxu0 %v2471
      %2510 = vmatprep.subr.mxu0 0.0
      %2511 = vmatpush1.msra.mxu0 %v2470
      %2512 = vmatprep.subr.mxu0 0.0
      %2513 = vmatpush1.msra.mxu0 %v2469
      %2514 = vmatprep.subr.mxu0 0.0
      %2515 = vmatpush1.msra.mxu0 %v2468
      %2516 = vmatprep.subr.mxu0 0.0
      %2517 = vmatpush2.msra.mxu0 0.0
      %2518 = vmatprep.subr.mxu0 0.0
      %2519 = vmatpush2.msra.mxu0 0.0
      %2520 = vmatprep.subr.mxu0 0.0
      %2521 = vmatpush2.msra.mxu0 0.0
      %2522 = vmatprep.subr.mxu0 0.0
      %2523 = vmatpush2.msra.mxu0 0.0
      %2524 = vmatprep.subr.mxu0 0.0
      %2525 = vmatpush2.msra.mxu0 0.0
      %2526 = vmatprep.subr.mxu0 0.0
      %2527 = vmatpush2.msra.mxu0 0.0
      %2528 = vmatprep.subr.mxu0 0.0
      %2529 = vmatpush2.msra.mxu0 0.0
      %2530 = vmatprep.subr.mxu0 0.0
      %2531 = vmatpush2.msra.mxu0 0.0
      %2532 = vmatprep.subr.mxu0 0.0
      %2533 = vmatpush2.msra.mxu0 0.0
      %2534 = vmatprep.subr.mxu0 0.0
      %2535 = vmatpush2.msra.mxu0 0.0
      %2536 = vmatprep.subr.mxu0 0.0
      %2537 = vmatpush2.msra.mxu0 0.0
      %2538 = vmatprep.subr.mxu0 0.0
      %2539 = vmatpush2.msra.mxu0 0.0
      %2540 = vmatprep.subr.mxu0 0.0
      %2541 = vmatpush2.msra.mxu0 0.0
      %2542 = vmatprep.subr.mxu0 0.0
      %2543 = vmatpush2.msra.mxu0 0.0
      %2544 = vmatprep.subr.mxu0 0.0
      %2545 = vmatpush2.msra.mxu0 0.0
      %2546 = vmatprep.subr.mxu0 0.0
      %2547 = vmatpush2.msra.mxu0 0.0
      %2548 = vmatprep.mubr.f32.mxu0 0.0
      %2549 = vmatmul.mubr.f32.gmra.mxu0 %v2436
      %v2550 = vpop.f32.mrf.mxu0
      %v2551 = vadd.f32 0.0, %v2550
      %v2552 = vpop.f32.mrf.mxu0
      %2553 = vmatprep.mubr.f32.mxu0 0.0
      %2554 = vmatmul.mubr.f32.gmra.mxu0 %v2437
      %v2555 = vpop.f32.mrf.mxu0
      %v2556 = vadd.f32 0.0, %v2555
      %v2557 = vpop.f32.mrf.mxu0
      %2558 = vmatprep.mubr.f32.mxu0 0.0
      %2559 = vmatmul.mubr.f32.gmra.mxu0 %v2438
      %v2560 = vpop.f32.mrf.mxu0
      %v2561 = vadd.f32 0.0, %v2560
      %v2562 = vpop.f32.mrf.mxu0
      %2563 = vmatprep.mubr.f32.mxu0 0.0
      %2564 = vmatmul.mubr.f32.gmra.mxu0 %v2439
      %v2565 = vpop.f32.mrf.mxu0
      %v2566 = vadd.f32 0.0, %v2565
      %v2567 = vpop.f32.mrf.mxu0
      %2568 = vmatprep.mubr.f32.mxu0 0.0
      %2569 = vmatmul.mubr.f32.gmra.mxu0 %v2440
      %v2570 = vpop.f32.mrf.mxu0
      %v2571 = vadd.f32 0.0, %v2570
      %v2572 = vpop.f32.mrf.mxu0
      %2573 = vmatprep.mubr.f32.mxu0 0.0
      %2574 = vmatmul.mubr.f32.gmra.mxu0 %v2441
      %v2575 = vpop.f32.mrf.mxu0
      %v2576 = vadd.f32 0.0, %v2575
      %v2577 = vpop.f32.mrf.mxu0
      %2578 = vmatprep.mubr.f32.mxu0 0.0
      %2579 = vmatmul.mubr.f32.gmra.mxu0 %v2442
      %v2580 = vpop.f32.mrf.mxu0
      %v2581 = vadd.f32 0.0, %v2580
      %v2582 = vpop.f32.mrf.mxu0
      %2583 = vmatprep.mubr.f32.mxu0 0.0
      %2584 = vmatmul.mubr.f32.gmra.mxu0 %v2443
      %v2585 = vpop.f32.mrf.mxu0
      %v2586 = vadd.f32 0.0, %v2585
      %v2587 = vpop.f32.mrf.mxu0
      %2588 = vmatprep.mubr.f32.mxu0 0.0
      %2589 = vmatmul.mubr.f32.gmra.mxu0 %v2444
      %v2590 = vpop.f32.mrf.mxu0
      %v2591 = vadd.f32 0.0, %v2590
      %v2592 = vpop.f32.mrf.mxu0
      %2593 = vmatprep.mubr.f32.mxu0 0.0
      %2594 = vmatmul.mubr.f32.gmra.mxu0 %v2445
      %v2595 = vpop.f32.mrf.mxu0
      %v2596 = vadd.f32 0.0, %v2595
      %v2597 = vpop.f32.mrf.mxu0
      %2598 = vmatprep.mubr.f32.mxu0 0.0
      %2599 = vmatmul.mubr.f32.gmra.mxu0 %v2446
      %v2600 = vpop.f32.mrf.mxu0
      %v2601 = vadd.f32 0.0, %v2600
      %v2602 = vpop.f32.mrf.mxu0
      %2603 = vmatprep.mubr.f32.mxu0 0.0
      %2604 = vmatmul.mubr.f32.gmra.mxu0 %v2447
      %v2605 = vpop.f32.mrf.mxu0
      %v2606 = vadd.f32 0.0, %v2605
      %v2607 = vpop.f32.mrf.mxu0
      %2608 = vmatprep.mubr.f32.mxu0 0.0
      %2609 = vmatmul.mubr.f32.gmra.mxu0 %v2448
      %v2610 = vpop.f32.mrf.mxu0
      %v2611 = vadd.f32 0.0, %v2610
      %v2612 = vpop.f32.mrf.mxu0
      %2613 = vmatprep.mubr.f32.mxu0 0.0
      %2614 = vmatmul.mubr.f32.gmra.mxu0 %v2449
      %v2615 = vpop.f32.mrf.mxu0
      %v2616 = vadd.f32 0.0, %v2615
      %v2617 = vpop.f32.mrf.mxu0
      %2618 = vmatprep.mubr.f32.mxu0 0.0
      %2619 = vmatmul.mubr.f32.gmra.mxu0 %v2450
      %v2620 = vpop.f32.mrf.mxu0
      %v2621 = vadd.f32 0.0, %v2620
      %v2622 = vpop.f32.mrf.mxu0
      %2623 = vmatprep.mubr.f32.mxu0 0.0
      %2624 = vmatmul.mubr.f32.gmra.mxu0 %v2451
      %v2625 = vpop.f32.mrf.mxu0
      %v2626 = vadd.f32 0.0, %v2625
      %v2627 = vpop.f32.mrf.mxu0
      %2628 = vmatprep.mubr.f32.mxu0 0.0
      %2629 = vmatmul.mubr.f32.gmra.mxu0 %v2452
      %v2630 = vpop.f32.mrf.mxu0
      %v2631 = vadd.f32 0.0, %v2630
      %v2632 = vpop.f32.mrf.mxu0
      %2633 = vmatprep.mubr.f32.mxu0 0.0
      %2634 = vmatmul.mubr.f32.gmra.mxu0 %v2453
      %v2635 = vpop.f32.mrf.mxu0
      %v2636 = vadd.f32 0.0, %v2635
      %v2637 = vpop.f32.mrf.mxu0
      %2638 = vmatprep.mubr.f32.mxu0 0.0
      %2639 = vmatmul.mubr.f32.gmra.mxu0 %v2454
      %v2640 = vpop.f32.mrf.mxu0
      %v2641 = vadd.f32 0.0, %v2640
      %v2642 = vpop.f32.mrf.mxu0
      %2643 = vmatprep.mubr.f32.mxu0 0.0
      %2644 = vmatmul.mubr.f32.gmra.mxu0 %v2455
      %v2645 = vpop.f32.mrf.mxu0
      %v2646 = vadd.f32 0.0, %v2645
      %v2647 = vpop.f32.mrf.mxu0
      %2648 = vmatprep.mubr.f32.mxu0 0.0
      %2649 = vmatmul.mubr.f32.gmra.mxu0 %v2456
      %v2650 = vpop.f32.mrf.mxu0
      %v2651 = vadd.f32 0.0, %v2650
      %v2652 = vpop.f32.mrf.mxu0
      %2653 = vmatprep.mubr.f32.mxu0 0.0
      %2654 = vmatmul.mubr.f32.gmra.mxu0 %v2457
      %v2655 = vpop.f32.mrf.mxu0
      %v2656 = vadd.f32 0.0, %v2655
      %v2657 = vpop.f32.mrf.mxu0
      %2658 = vmatprep.mubr.f32.mxu0 0.0
      %2659 = vmatmul.mubr.f32.gmra.mxu0 %v2458
      %v2660 = vpop.f32.mrf.mxu0
      %v2661 = vadd.f32 0.0, %v2660
      %v2662 = vpop.f32.mrf.mxu0
      %2663 = vmatprep.mubr.f32.mxu0 0.0
      %2664 = vmatmul.mubr.f32.gmra.mxu0 %v2459
      %v2665 = vpop.f32.mrf.mxu0
      %v2666 = vadd.f32 0.0, %v2665
      %v2667 = vpop.f32.mrf.mxu0
      %2668 = vmatprep.mubr.f32.mxu0 0.0
      %2669 = vmatmul.mubr.f32.gmra.mxu0 %v2460
      %v2670 = vpop.f32.mrf.mxu0
      %v2671 = vadd.f32 0.0, %v2670
      %v2672 = vpop.f32.mrf.mxu0
      %2673 = vmatprep.mubr.f32.mxu0 0.0
      %2674 = vmatmul.mubr.f32.gmra.mxu0 %v2461
      %v2675 = vpop.f32.mrf.mxu0
      %v2676 = vadd.f32 0.0, %v2675
      %v2677 = vpop.f32.mrf.mxu0
      %2678 = vmatprep.mubr.f32.mxu0 0.0
      %2679 = vmatmul.mubr.f32.gmra.mxu0 %v2462
      %v2680 = vpop.f32.mrf.mxu0
      %v2681 = vadd.f32 0.0, %v2680
      %v2682 = vpop.f32.mrf.mxu0
      %2683 = vmatprep.mubr.f32.mxu0 0.0
      %2684 = vmatmul.mubr.f32.gmra.mxu0 %v2463
      %v2685 = vpop.f32.mrf.mxu0
      %v2686 = vadd.f32 0.0, %v2685
      %v2687 = vpop.f32.mrf.mxu0
      %2688 = vmatprep.mubr.f32.mxu0 0.0
      %2689 = vmatmul.mubr.f32.gmra.mxu0 %v2464
      %v2690 = vpop.f32.mrf.mxu0
      %v2691 = vadd.f32 0.0, %v2690
      %v2692 = vpop.f32.mrf.mxu0
      %2693 = vmatprep.mubr.f32.mxu0 0.0
      %2694 = vmatmul.mubr.f32.gmra.mxu0 %v2465
      %v2695 = vpop.f32.mrf.mxu0
      %v2696 = vadd.f32 0.0, %v2695
      %v2697 = vpop.f32.mrf.mxu0
      %2698 = vmatprep.mubr.f32.mxu0 0.0
      %2699 = vmatmul.mubr.f32.gmra.mxu0 %v2466
      %v2700 = vpop.f32.mrf.mxu0
      %v2701 = vadd.f32 0.0, %v2700
      %v2702 = vpop.f32.mrf.mxu0
      %2703 = vmatprep.mubr.f32.mxu0 0.0
      %2704 = vmatmul.mubr.f32.gmra.mxu0 %v2467
      %v2705 = vpop.f32.mrf.mxu0
      %v2706 = vadd.f32 0.0, %v2705
      %v2707 = vpop.f32.mrf.mxu0
      %2708 = vdwg.mxu0
      %v2709 = vld [vmem:[%s170] sm:$0xff]
      %v2710 = vld [vmem:[%s170 + $0x8] sm:$0xff]
      %v2711 = vld [vmem:[%s170 + $0x10] sm:$0xff]
      %v2712 = vld [vmem:[%s170 + $0x18] sm:$0xff]
      %v2713 = vld [vmem:[%s170 + $0x20] sm:$0xff]
      %v2714 = vld [vmem:[%s170 + $0x28] sm:$0xff]
      %v2715 = vld [vmem:[%s170 + $0x30] sm:$0xff]
      %v2716 = vld [vmem:[%s170 + $0x38] sm:$0xff]
      %v2717 = vld [vmem:[%s170 + $0x40] sm:$0xff]
      %v2718 = vld [vmem:[%s170 + $0x48] sm:$0xff]
      %v2719 = vld [vmem:[%s170 + $0x50] sm:$0xff]
      %v2720 = vld [vmem:[%s170 + $0x58] sm:$0xff]
      %v2721 = vld [vmem:[%s170 + $0x60] sm:$0xff]
      %v2722 = vld [vmem:[%s170 + $0x68] sm:$0xff]
      %v2723 = vld [vmem:[%s170 + $0x70] sm:$0xff]
      %v2724 = vld [vmem:[%s170 + $0x78] sm:$0xff]
      %v2725 = vld [vmem:[%s170 + $0x80] sm:$0xff]
      %v2726 = vld [vmem:[%s170 + $0x88] sm:$0xff]
      %v2727 = vld [vmem:[%s170 + $0x90] sm:$0xff]
      %v2728 = vld [vmem:[%s170 + $0x98] sm:$0xff]
      %v2729 = vld [vmem:[%s170 + $0xa0] sm:$0xff]
      %v2730 = vld [vmem:[%s170 + $0xa8] sm:$0xff]
      %v2731 = vld [vmem:[%s170 + $0xb0] sm:$0xff]
      %v2732 = vld [vmem:[%s170 + $0xb8] sm:$0xff]
      %v2733 = vld [vmem:[%s170 + $0xc0] sm:$0xff]
      %v2734 = vld [vmem:[%s170 + $0xc8] sm:$0xff]
      %v2735 = vld [vmem:[%s170 + $0xd0] sm:$0xff]
      %v2736 = vld [vmem:[%s170 + $0xd8] sm:$0xff]
      %v2737 = vld [vmem:[%s170 + $0xe0] sm:$0xff]
      %v2738 = vld [vmem:[%s170 + $0xe8] sm:$0xff]
      %v2739 = vld [vmem:[%s170 + $0xf0] sm:$0xff]
      %v2740 = vld [vmem:[%s170 + $0xf8] sm:$0xff]
      %v2741 = vadd.f32 %v2709, %v2551
      %v2742 = vadd.f32 %v2710, %v2556
      %v2743 = vadd.f32 %v2711, %v2561
      %v2744 = vadd.f32 %v2712, %v2566
      %v2745 = vadd.f32 %v2713, %v2571
      %v2746 = vadd.f32 %v2714, %v2576
      %v2747 = vadd.f32 %v2715, %v2581
      %v2748 = vadd.f32 %v2716, %v2586
      %v2749 = vadd.f32 %v2717, %v2591
      %v2750 = vadd.f32 %v2718, %v2596
      %v2751 = vadd.f32 %v2719, %v2601
      %v2752 = vadd.f32 %v2720, %v2606
      %v2753 = vadd.f32 %v2721, %v2611
      %v2754 = vadd.f32 %v2722, %v2616
      %v2755 = vadd.f32 %v2723, %v2621
      %v2756 = vadd.f32 %v2724, %v2626
      %v2757 = vadd.f32 %v2725, %v2631
      %v2758 = vadd.f32 %v2726, %v2636
      %v2759 = vadd.f32 %v2727, %v2641
      %v2760 = vadd.f32 %v2728, %v2646
      %v2761 = vadd.f32 %v2729, %v2651
      %v2762 = vadd.f32 %v2730, %v2656
      %v2763 = vadd.f32 %v2731, %v2661
      %v2764 = vadd.f32 %v2732, %v2666
      %v2765 = vadd.f32 %v2733, %v2671
      %v2766 = vadd.f32 %v2734, %v2676
      %v2767 = vadd.f32 %v2735, %v2681
      %v2768 = vadd.f32 %v2736, %v2686
      %v2769 = vadd.f32 %v2737, %v2691
      %v2770 = vadd.f32 %v2738, %v2696
      %v2771 = vadd.f32 %v2739, %v2701
      %v2772 = vadd.f32 %v2740, %v2706
      %2773 = vst [vmem:[%s170] sm:$0xff] %v2741
      %2774 = vst [vmem:[%s170 + $0x8] sm:$0xff] %v2742
      %2775 = vst [vmem:[%s170 + $0x10] sm:$0xff] %v2743
      %2776 = vst [vmem:[%s170 + $0x18] sm:$0xff] %v2744
      %2777 = vst [vmem:[%s170 + $0x20] sm:$0xff] %v2745
      %2778 = vst [vmem:[%s170 + $0x28] sm:$0xff] %v2746
      %2779 = vst [vmem:[%s170 + $0x30] sm:$0xff] %v2747
      %2780 = vst [vmem:[%s170 + $0x38] sm:$0xff] %v2748
      %2781 = vst [vmem:[%s170 + $0x40] sm:$0xff] %v2749
      %2782 = vst [vmem:[%s170 + $0x48] sm:$0xff] %v2750
      %2783 = vst [vmem:[%s170 + $0x50] sm:$0xff] %v2751
      %2784 = vst [vmem:[%s170 + $0x58] sm:$0xff] %v2752
      %2785 = vst [vmem:[%s170 + $0x60] sm:$0xff] %v2753
      %2786 = vst [vmem:[%s170 + $0x68] sm:$0xff] %v2754
      %2787 = vst [vmem:[%s170 + $0x70] sm:$0xff] %v2755
      %2788 = vst [vmem:[%s170 + $0x78] sm:$0xff] %v2756
      %2789 = vst [vmem:[%s170 + $0x80] sm:$0xff] %v2757
      %2790 = vst [vmem:[%s170 + $0x88] sm:$0xff] %v2758
      %2791 = vst [vmem:[%s170 + $0x90] sm:$0xff] %v2759
      %2792 = vst [vmem:[%s170 + $0x98] sm:$0xff] %v2760
      %2793 = vst [vmem:[%s170 + $0xa0] sm:$0xff] %v2761
      %2794 = vst [vmem:[%s170 + $0xa8] sm:$0xff] %v2762
      %2795 = vst [vmem:[%s170 + $0xb0] sm:$0xff] %v2763
      %2796 = vst [vmem:[%s170 + $0xb8] sm:$0xff] %v2764
      %2797 = vst [vmem:[%s170 + $0xc0] sm:$0xff] %v2765
      %2798 = vst [vmem:[%s170 + $0xc8] sm:$0xff] %v2766
      %2799 = vst [vmem:[%s170 + $0xd0] sm:$0xff] %v2767
      %2800 = vst [vmem:[%s170 + $0xd8] sm:$0xff] %v2768
      %2801 = vst [vmem:[%s170 + $0xe0] sm:$0xff] %v2769
      %2802 = vst [vmem:[%s170 + $0xe8] sm:$0xff] %v2770
      %2803 = vst [vmem:[%s170 + $0xf0] sm:$0xff] %v2771
      %2804 = vst [vmem:[%s170 + $0xf8] sm:$0xff] %v2772
      %v2805 = vld [vmem:[%s170] sm:$0xff]
      %v2806 = vld [vmem:[%s170 + $0x8] sm:$0xff]
      %v2807 = vld [vmem:[%s170 + $0x10] sm:$0xff]
      %v2808 = vld [vmem:[%s170 + $0x18] sm:$0xff]
      %v2809 = vld [vmem:[%s170 + $0x20] sm:$0xff]
      %v2810 = vld [vmem:[%s170 + $0x28] sm:$0xff]
      %v2811 = vld [vmem:[%s170 + $0x30] sm:$0xff]
      %v2812 = vld [vmem:[%s170 + $0x38] sm:$0xff]
      %v2813 = vld [vmem:[%s170 + $0x40] sm:$0xff]
      %v2814 = vld [vmem:[%s170 + $0x48] sm:$0xff]
      %v2815 = vld [vmem:[%s170 + $0x50] sm:$0xff]
      %v2816 = vld [vmem:[%s170 + $0x58] sm:$0xff]
      %v2817 = vld [vmem:[%s170 + $0x60] sm:$0xff]
      %v2818 = vld [vmem:[%s170 + $0x68] sm:$0xff]
      %v2819 = vld [vmem:[%s170 + $0x70] sm:$0xff]
      %v2820 = vld [vmem:[%s170 + $0x78] sm:$0xff]
      %v2821 = vld [vmem:[%s170 + $0x80] sm:$0xff]
      %v2822 = vld [vmem:[%s170 + $0x88] sm:$0xff]
      %v2823 = vld [vmem:[%s170 + $0x90] sm:$0xff]
      %v2824 = vld [vmem:[%s170 + $0x98] sm:$0xff]
      %v2825 = vld [vmem:[%s170 + $0xa0] sm:$0xff]
      %v2826 = vld [vmem:[%s170 + $0xa8] sm:$0xff]
      %v2827 = vld [vmem:[%s170 + $0xb0] sm:$0xff]
      %v2828 = vld [vmem:[%s170 + $0xb8] sm:$0xff]
      %v2829 = vld [vmem:[%s170 + $0xc0] sm:$0xff]
      %v2830 = vld [vmem:[%s170 + $0xc8] sm:$0xff]
      %v2831 = vld [vmem:[%s170 + $0xd0] sm:$0xff]
      %v2832 = vld [vmem:[%s170 + $0xd8] sm:$0xff]
      %v2833 = vld [vmem:[%s170 + $0xe0] sm:$0xff]
      %v2834 = vld [vmem:[%s170 + $0xe8] sm:$0xff]
      %v2835 = vld [vmem:[%s170 + $0xf0] sm:$0xff]
      %v2836 = vld [vmem:[%s170 + $0xf8] sm:$0xff]
      %v2837 = vmax.f32 %v2805, 0.0
      %v2838 = vmax.f32 %v2806, 0.0
      %v2839 = vmax.f32 %v2807, 0.0
      %v2840 = vmax.f32 %v2808, 0.0
      %v2841 = vmax.f32 %v2809, 0.0
      %v2842 = vmax.f32 %v2810, 0.0
      %v2843 = vmax.f32 %v2811, 0.0
      %v2844 = vmax.f32 %v2812, 0.0
      %v2845 = vmax.f32 %v2813, 0.0
      %v2846 = vmax.f32 %v2814, 0.0
      %v2847 = vmax.f32 %v2815, 0.0
      %v2848 = vmax.f32 %v2816, 0.0
      %v2849 = vmax.f32 %v2817, 0.0
      %v2850 = vmax.f32 %v2818, 0.0
      %v2851 = vmax.f32 %v2819, 0.0
      %v2852 = vmax.f32 %v2820, 0.0
      %v2853 = vmax.f32 %v2821, 0.0
      %v2854 = vmax.f32 %v2822, 0.0
      %v2855 = vmax.f32 %v2823, 0.0
      %v2856 = vmax.f32 %v2824, 0.0
      %v2857 = vmax.f32 %v2825, 0.0
      %v2858 = vmax.f32 %v2826, 0.0
      %v2859 = vmax.f32 %v2827, 0.0
      %v2860 = vmax.f32 %v2828, 0.0
      %v2861 = vmax.f32 %v2829, 0.0
      %v2862 = vmax.f32 %v2830, 0.0
      %v2863 = vmax.f32 %v2831, 0.0
      %v2864 = vmax.f32 %v2832, 0.0
      %v2865 = vmax.f32 %v2833, 0.0
      %v2866 = vmax.f32 %v2834, 0.0
      %v2867 = vmax.f32 %v2835, 0.0
      %v2868 = vmax.f32 %v2836, 0.0
      %v2899 = vrot.slane %v2837, 7
      %v2900 = vrot.slane %v2838, 7
      %v2901 = vsel %vm438, %v2899, %v2900
      %v2902 = vrot.slane %v2839, 7
      %v2903 = vrot.slane %v2840, 7
      %v2904 = vsel %vm438, %v2902, %v2903
      %v2905 = vrot.slane %v2841, 7
      %v2906 = vrot.slane %v2842, 7
      %v2907 = vsel %vm438, %v2905, %v2906
      %v2908 = vrot.slane %v2843, 7
      %v2909 = vrot.slane %v2844, 7
      %v2910 = vsel %vm438, %v2908, %v2909
      %v2911 = vrot.slane %v2845, 7
      %v2912 = vrot.slane %v2846, 7
      %v2913 = vsel %vm438, %v2911, %v2912
      %v2914 = vrot.slane %v2847, 7
      %v2915 = vrot.slane %v2848, 7
      %v2916 = vsel %vm438, %v2914, %v2915
      %v2917 = vrot.slane %v2849, 7
      %v2918 = vrot.slane %v2850, 7
      %v2919 = vsel %vm438, %v2917, %v2918
      %v2920 = vrot.slane %v2851, 7
      %v2921 = vrot.slane %v2852, 7
      %v2922 = vsel %vm438, %v2920, %v2921
      %v2923 = vrot.slane %v2853, 7
      %v2924 = vrot.slane %v2854, 7
      %v2925 = vsel %vm438, %v2923, %v2924
      %v2926 = vrot.slane %v2855, 7
      %v2927 = vrot.slane %v2856, 7
      %v2928 = vsel %vm438, %v2926, %v2927
      %v2929 = vrot.slane %v2857, 7
      %v2930 = vrot.slane %v2858, 7
      %v2931 = vsel %vm438, %v2929, %v2930
      %v2932 = vrot.slane %v2859, 7
      %v2933 = vrot.slane %v2860, 7
      %v2934 = vsel %vm438, %v2932, %v2933
      %v2935 = vrot.slane %v2861, 7
      %v2936 = vrot.slane %v2862, 7
      %v2937 = vsel %vm438, %v2935, %v2936
      %v2938 = vrot.slane %v2863, 7
      %v2939 = vrot.slane %v2864, 7
      %v2940 = vsel %vm438, %v2938, %v2939
      %v2941 = vrot.slane %v2865, 7
      %v2942 = vrot.slane %v2866, 7
      %v2943 = vsel %vm438, %v2941, %v2942
      %2974 = vst [vmem:[%s514] sm:$0xfe] %v2899
      %2975 = vst [vmem:[%s514 + $0x48] sm:$0xff] %v2901
      %2976 = vst [vmem:[%s514 + $0x90] sm:$0xfe] %v2902
      %2977 = vst [vmem:[%s514 + $0xd8] sm:$0xff] %v2904
      %2978 = vst [vmem:[%s514 + $0x120] sm:$0xfe] %v2905
      %2979 = vst [vmem:[%s514 + $0x168] sm:$0xff] %v2907
      %2980 = vst [vmem:[%s514 + $0x1b0] sm:$0xfe] %v2908
      %2981 = vst [vmem:[%s514 + $0x1f8] sm:$0xff] %v2910
      %2982 = vst [vmem:[%s514 + $0x240] sm:$0xfe] %v2911
      %2983 = vst [vmem:[%s514 + $0x288] sm:$0xff] %v2913
      %2984 = vst [vmem:[%s514 + $0x2d0] sm:$0xfe] %v2914
      %2985 = vst [vmem:[%s514 + $0x318] sm:$0xff] %v2916
      %2986 = vst [vmem:[%s514 + $0x360] sm:$0xfe] %v2917
      %2987 = vst [vmem:[%s514 + $0x3a8] sm:$0xff] %v2919
      %2988 = vst [vmem:[%s514 + $0x3f0] sm:$0xfe] %v2920
      %2989 = vst [vmem:[%s514 + $0x438] sm:$0xff] %v2922
      %2990 = vst [vmem:[%s514 + $0x480] sm:$0xfe] %v2923
      %2991 = vst [vmem:[%s514 + $0x4c8] sm:$0xff] %v2925
      %2992 = vst [vmem:[%s514 + $0x510] sm:$0xfe] %v2926
      %2993 = vst [vmem:[%s514 + $0x558] sm:$0xff] %v2928
      %2994 = vst [vmem:[%s514 + $0x5a0] sm:$0xfe] %v2929
      %2995 = vst [vmem:[%s514 + $0x5e8] sm:$0xff] %v2931
      %2996 = vst [vmem:[%s514 + $0x630] sm:$0xfe] %v2932
      %2997 = vst [vmem:[%s514 + $0x678] sm:$0xff] %v2934
      %2998 = vst [vmem:[%s514 + $0x6c0] sm:$0xfe] %v2935
      %2999 = vst [vmem:[%s514 + $0x708] sm:$0xff] %v2937
      %3000 = vst [vmem:[%s514 + $0x750] sm:$0xfe] %v2938
      %3001 = vst [vmem:[%s514 + $0x798] sm:$0xff] %v2940
      %3002 = vst [vmem:[%s514 + $0x7e0] sm:$0xfe] %v2941
      %3003 = vst [vmem:[%s514 + $0x828] sm:$0xff] %v2943
      %3004 = vst [vmem:[%s514 + $0x8] sm:$0xff] %v2837
      %3005 = vst [vmem:[%s514 + $0x50] sm:$0xff] %v2838
      %3006 = vst [vmem:[%s514 + $0x98] sm:$0xff] %v2839
      %3007 = vst [vmem:[%s514 + $0xe0] sm:$0xff] %v2840
      %3008 = vst [vmem:[%s514 + $0x128] sm:$0xff] %v2841
      %3009 = vst [vmem:[%s514 + $0x170] sm:$0xff] %v2842
      %3010 = vst [vmem:[%s514 + $0x1b8] sm:$0xff] %v2843
      %3011 = vst [vmem:[%s514 + $0x200] sm:$0xff] %v2844
      %3012 = vst [vmem:[%s514 + $0x248] sm:$0xff] %v2845
      %3013 = vst [vmem:[%s514 + $0x290] sm:$0xff] %v2846
      %3014 = vst [vmem:[%s514 + $0x2d8] sm:$0xff] %v2847
      %3015 = vst [vmem:[%s514 + $0x320] sm:$0xff] %v2848
      %3016 = vst [vmem:[%s514 + $0x368] sm:$0xff] %v2849
      %3017 = vst [vmem:[%s514 + $0x3b0] sm:$0xff] %v2850
      %3018 = vst [vmem:[%s514 + $0x3f8] sm:$0xff] %v2851
      %3019 = vst [vmem:[%s514 + $0x440] sm:$0xff] %v2852
      %3020 = vst [vmem:[%s514 + $0x488] sm:$0xff] %v2853
      %3021 = vst [vmem:[%s514 + $0x4d0] sm:$0xff] %v2854
      %3022 = vst [vmem:[%s514 + $0x518] sm:$0xff] %v2855
      %3023 = vst [vmem:[%s514 + $0x560] sm:$0xff] %v2856
      %3024 = vst [vmem:[%s514 + $0x5a8] sm:$0xff] %v2857
      %3025 = vst [vmem:[%s514 + $0x5f0] sm:$0xff] %v2858
      %3026 = vst [vmem:[%s514 + $0x638] sm:$0xff] %v2859
      %3027 = vst [vmem:[%s514 + $0x680] sm:$0xff] %v2860
      %3028 = vst [vmem:[%s514 + $0x6c8] sm:$0xff] %v2861
      %3029 = vst [vmem:[%s514 + $0x710] sm:$0xff] %v2862
      %3030 = vst [vmem:[%s514 + $0x758] sm:$0xff] %v2863
      %3031 = vst [vmem:[%s514 + $0x7a0] sm:$0xff] %v2864
      %3032 = vst [vmem:[%s514 + $0x7e8] sm:$0xff] %v2865
      %3033 = vst [vmem:[%s514 + $0x830] sm:$0xff] %v2866
      %v3034 = vrot.slane %v2837, 1
      %v3035 = vrot.slane %v2838, 1
      %v3036 = vsel %vm575, %v3034, %v3035
      %v3037 = vrot.slane %v2839, 1
      %v3038 = vrot.slane %v2840, 1
      %v3039 = vsel %vm575, %v3037, %v3038
      %v3040 = vrot.slane %v2841, 1
      %v3041 = vrot.slane %v2842, 1
      %v3042 = vsel %vm575, %v3040, %v3041
      %v3043 = vrot.slane %v2843, 1
      %v3044 = vrot.slane %v2844, 1
      %v3045 = vsel %vm575, %v3043, %v3044
      %v3046 = vrot.slane %v2845, 1
      %v3047 = vrot.slane %v2846, 1
      %v3048 = vsel %vm575, %v3046, %v3047
      %v3049 = vrot.slane %v2847, 1
      %v3050 = vrot.slane %v2848, 1
      %v3051 = vsel %vm575, %v3049, %v3050
      %v3052 = vrot.slane %v2849, 1
      %v3053 = vrot.slane %v2850, 1
      %v3054 = vsel %vm575, %v3052, %v3053
      %v3055 = vrot.slane %v2851, 1
      %v3056 = vrot.slane %v2852, 1
      %v3057 = vsel %vm575, %v3055, %v3056
      %v3058 = vrot.slane %v2853, 1
      %v3059 = vrot.slane %v2854, 1
      %v3060 = vsel %vm575, %v3058, %v3059
      %v3061 = vrot.slane %v2855, 1
      %v3062 = vrot.slane %v2856, 1
      %v3063 = vsel %vm575, %v3061, %v3062
      %v3064 = vrot.slane %v2857, 1
      %v3065 = vrot.slane %v2858, 1
      %v3066 = vsel %vm575, %v3064, %v3065
      %v3067 = vrot.slane %v2859, 1
      %v3068 = vrot.slane %v2860, 1
      %v3069 = vsel %vm575, %v3067, %v3068
      %v3070 = vrot.slane %v2861, 1
      %v3071 = vrot.slane %v2862, 1
      %v3072 = vsel %vm575, %v3070, %v3071
      %v3073 = vrot.slane %v2863, 1
      %v3074 = vrot.slane %v2864, 1
      %v3075 = vsel %vm575, %v3073, %v3074
      %v3076 = vrot.slane %v2865, 1
      %v3077 = vrot.slane %v2866, 1
      %v3078 = vsel %vm575, %v3076, %v3077
      %3109 = vst [vmem:[%s514 + $0x10] sm:$0xff] %v3036
      %3110 = vst [vmem:[%s514 + $0x58] sm:$0x7f] %v3035
      %3111 = vst [vmem:[%s514 + $0xa0] sm:$0xff] %v3039
      %3112 = vst [vmem:[%s514 + $0xe8] sm:$0x7f] %v3038
      %3113 = vst [vmem:[%s514 + $0x130] sm:$0xff] %v3042
      %3114 = vst [vmem:[%s514 + $0x178] sm:$0x7f] %v3041
      %3115 = vst [vmem:[%s514 + $0x1c0] sm:$0xff] %v3045
      %3116 = vst [vmem:[%s514 + $0x208] sm:$0x7f] %v3044
      %3117 = vst [vmem:[%s514 + $0x250] sm:$0xff] %v3048
      %3118 = vst [vmem:[%s514 + $0x298] sm:$0x7f] %v3047
      %3119 = vst [vmem:[%s514 + $0x2e0] sm:$0xff] %v3051
      %3120 = vst [vmem:[%s514 + $0x328] sm:$0x7f] %v3050
      %3121 = vst [vmem:[%s514 + $0x370] sm:$0xff] %v3054
      %3122 = vst [vmem:[%s514 + $0x3b8] sm:$0x7f] %v3053
      %3123 = vst [vmem:[%s514 + $0x400] sm:$0xff] %v3057
      %3124 = vst [vmem:[%s514 + $0x448] sm:$0x7f] %v3056
      %3125 = vst [vmem:[%s514 + $0x490] sm:$0xff] %v3060
      %3126 = vst [vmem:[%s514 + $0x4d8] sm:$0x7f] %v3059
      %3127 = vst [vmem:[%s514 + $0x520] sm:$0xff] %v3063
      %3128 = vst [vmem:[%s514 + $0x568] sm:$0x7f] %v3062
      %3129 = vst [vmem:[%s514 + $0x5b0] sm:$0xff] %v3066
      %3130 = vst [vmem:[%s514 + $0x5f8] sm:$0x7f] %v3065
      %3131 = vst [vmem:[%s514 + $0x640] sm:$0xff] %v3069
      %3132 = vst [vmem:[%s514 + $0x688] sm:$0x7f] %v3068
      %3133 = vst [vmem:[%s514 + $0x6d0] sm:$0xff] %v3072
      %3134 = vst [vmem:[%s514 + $0x718] sm:$0x7f] %v3071
      %3135 = vst [vmem:[%s514 + $0x760] sm:$0xff] %v3075
      %3136 = vst [vmem:[%s514 + $0x7a8] sm:$0x7f] %v3074
      %3137 = vst [vmem:[%s514 + $0x7f0] sm:$0xff] %v3078
      %3138 = vst [vmem:[%s514 + $0x838] sm:$0x7f] %v3077
      %v3141 = vrot.slane %v2867, 7
      %v3142 = vrot.slane %v2868, 7
      %v3143 = vsel %vm438, %v3141, %v3142
      %3146 = vst [vmem:[#allocation2 + $0x18] sm:$0xfe] %v2899
      %3147 = vst [vmem:[#allocation2 + $0x60] sm:$0xff] %v2901
      %3148 = vst [vmem:[#allocation2 + $0xa8] sm:$0xfe] %v2902
      %3149 = vst [vmem:[#allocation2 + $0xf0] sm:$0xff] %v2904
      %3150 = vst [vmem:[#allocation2 + $0x138] sm:$0xfe] %v2905
      %3151 = vst [vmem:[#allocation2 + $0x180] sm:$0xff] %v2907
      %3152 = vst [vmem:[#allocation2 + $0x1c8] sm:$0xfe] %v2908
      %3153 = vst [vmem:[#allocation2 + $0x210] sm:$0xff] %v2910
      %3154 = vst [vmem:[#allocation2 + $0x258] sm:$0xfe] %v2911
      %3155 = vst [vmem:[#allocation2 + $0x2a0] sm:$0xff] %v2913
      %3156 = vst [vmem:[#allocation2 + $0x2e8] sm:$0xfe] %v2914
      %3157 = vst [vmem:[#allocation2 + $0x330] sm:$0xff] %v2916
      %3158 = vst [vmem:[#allocation2 + $0x378] sm:$0xfe] %v2917
      %3159 = vst [vmem:[#allocation2 + $0x3c0] sm:$0xff] %v2919
      %3160 = vst [vmem:[#allocation2 + $0x408] sm:$0xfe] %v2920
      %3161 = vst [vmem:[#allocation2 + $0x450] sm:$0xff] %v2922
      %3162 = vst [vmem:[#allocation2 + $0x498] sm:$0xfe] %v2923
      %3163 = vst [vmem:[#allocation2 + $0x4e0] sm:$0xff] %v2925
      %3164 = vst [vmem:[#allocation2 + $0x528] sm:$0xfe] %v2926
      %3165 = vst [vmem:[#allocation2 + $0x570] sm:$0xff] %v2928
      %3166 = vst [vmem:[#allocation2 + $0x5b8] sm:$0xfe] %v2929
      %3167 = vst [vmem:[#allocation2 + $0x600] sm:$0xff] %v2931
      %3168 = vst [vmem:[#allocation2 + $0x648] sm:$0xfe] %v2932
      %3169 = vst [vmem:[#allocation2 + $0x690] sm:$0xff] %v2934
      %3170 = vst [vmem:[#allocation2 + $0x6d8] sm:$0xfe] %v2935
      %3171 = vst [vmem:[#allocation2 + $0x720] sm:$0xff] %v2937
      %3172 = vst [vmem:[#allocation2 + $0x768] sm:$0xfe] %v2938
      %3173 = vst [vmem:[#allocation2 + $0x7b0] sm:$0xff] %v2940
      %3174 = vst [vmem:[#allocation2 + $0x7f8] sm:$0xfe] %v2941
      %3175 = vst [vmem:[#allocation2 + $0x840] sm:$0xff] %v2943
      %3176 = vst [vmem:[#allocation2 + $0x888] sm:$0xfe] %v3141
      %3177 = vst [vmem:[#allocation2 + $0x8d0] sm:$0xff] %v3143
      %3178 = vst [vmem:[#allocation2 + $0x20] sm:$0xff] %v2837
      %3179 = vst [vmem:[#allocation2 + $0x68] sm:$0xff] %v2838
      %3180 = vst [vmem:[#allocation2 + $0xb0] sm:$0xff] %v2839
      %3181 = vst [vmem:[#allocation2 + $0xf8] sm:$0xff] %v2840
      %3182 = vst [vmem:[#allocation2 + $0x140] sm:$0xff] %v2841
      %3183 = vst [vmem:[#allocation2 + $0x188] sm:$0xff] %v2842
      %3184 = vst [vmem:[#allocation2 + $0x1d0] sm:$0xff] %v2843
      %3185 = vst [vmem:[#allocation2 + $0x218] sm:$0xff] %v2844
      %3186 = vst [vmem:[#allocation2 + $0x260] sm:$0xff] %v2845
      %3187 = vst [vmem:[#allocation2 + $0x2a8] sm:$0xff] %v2846
      %3188 = vst [vmem:[#allocation2 + $0x2f0] sm:$0xff] %v2847
      %3189 = vst [vmem:[#allocation2 + $0x338] sm:$0xff] %v2848
      %3190 = vst [vmem:[#allocation2 + $0x380] sm:$0xff] %v2849
      %3191 = vst [vmem:[#allocation2 + $0x3c8] sm:$0xff] %v2850
      %3192 = vst [vmem:[#allocation2 + $0x410] sm:$0xff] %v2851
      %3193 = vst [vmem:[#allocation2 + $0x458] sm:$0xff] %v2852
      %3194 = vst [vmem:[#allocation2 + $0x4a0] sm:$0xff] %v2853
      %3195 = vst [vmem:[#allocation2 + $0x4e8] sm:$0xff] %v2854
      %3196 = vst [vmem:[#allocation2 + $0x530] sm:$0xff] %v2855
      %3197 = vst [vmem:[#allocation2 + $0x578] sm:$0xff] %v2856
      %3198 = vst [vmem:[#allocation2 + $0x5c0] sm:$0xff] %v2857
      %3199 = vst [vmem:[#allocation2 + $0x608] sm:$0xff] %v2858
      %3200 = vst [vmem:[#allocation2 + $0x650] sm:$0xff] %v2859
      %3201 = vst [vmem:[#allocation2 + $0x698] sm:$0xff] %v2860
      %3202 = vst [vmem:[#allocation2 + $0x6e0] sm:$0xff] %v2861
      %3203 = vst [vmem:[#allocation2 + $0x728] sm:$0xff] %v2862
      %3204 = vst [vmem:[#allocation2 + $0x770] sm:$0xff] %v2863
      %3205 = vst [vmem:[#allocation2 + $0x7b8] sm:$0xff] %v2864
      %3206 = vst [vmem:[#allocation2 + $0x800] sm:$0xff] %v2865
      %3207 = vst [vmem:[#allocation2 + $0x848] sm:$0xff] %v2866
      %3208 = vst [vmem:[#allocation2 + $0x890] sm:$0xff] %v2867
      %3209 = vst [vmem:[#allocation2 + $0x8d8] sm:$0xff] %v2868
      %v3210 = vrot.slane %v2867, 1
      %v3211 = vrot.slane %v2868, 1
      %v3212 = vsel %vm575, %v3210, %v3211
      %3215 = vst [vmem:[#allocation2 + $0x28] sm:$0xff] %v3036
      %3216 = vst [vmem:[#allocation2 + $0x70] sm:$0x7f] %v3035
      %3217 = vst [vmem:[#allocation2 + $0xb8] sm:$0xff] %v3039
      %3218 = vst [vmem:[#allocation2 + $0x100] sm:$0x7f] %v3038
      %3219 = vst [vmem:[#allocation2 + $0x148] sm:$0xff] %v3042
      %3220 = vst [vmem:[#allocation2 + $0x190] sm:$0x7f] %v3041
      %3221 = vst [vmem:[#allocation2 + $0x1d8] sm:$0xff] %v3045
      %3222 = vst [vmem:[#allocation2 + $0x220] sm:$0x7f] %v3044
      %3223 = vst [vmem:[#allocation2 + $0x268] sm:$0xff] %v3048
      %3224 = vst [vmem:[#allocation2 + $0x2b0] sm:$0x7f] %v3047
      %3225 = vst [vmem:[#allocation2 + $0x2f8] sm:$0xff] %v3051
      %3226 = vst [vmem:[#allocation2 + $0x340] sm:$0x7f] %v3050
      %3227 = vst [vmem:[#allocation2 + $0x388] sm:$0xff] %v3054
      %3228 = vst [vmem:[#allocation2 + $0x3d0] sm:$0x7f] %v3053
      %3229 = vst [vmem:[#allocation2 + $0x418] sm:$0xff] %v3057
      %3230 = vst [vmem:[#allocation2 + $0x460] sm:$0x7f] %v3056
      %3231 = vst [vmem:[#allocation2 + $0x4a8] sm:$0xff] %v3060
      %3232 = vst [vmem:[#allocation2 + $0x4f0] sm:$0x7f] %v3059
      %3233 = vst [vmem:[#allocation2 + $0x538] sm:$0xff] %v3063
      %3234 = vst [vmem:[#allocation2 + $0x580] sm:$0x7f] %v3062
      %3235 = vst [vmem:[#allocation2 + $0x5c8] sm:$0xff] %v3066
      %3236 = vst [vmem:[#allocation2 + $0x610] sm:$0x7f] %v3065
      %3237 = vst [vmem:[#allocation2 + $0x658] sm:$0xff] %v3069
      %3238 = vst [vmem:[#allocation2 + $0x6a0] sm:$0x7f] %v3068
      %3239 = vst [vmem:[#allocation2 + $0x6e8] sm:$0xff] %v3072
      %3240 = vst [vmem:[#allocation2 + $0x730] sm:$0x7f] %v3071
      %3241 = vst [vmem:[#allocation2 + $0x778] sm:$0xff] %v3075
      %3242 = vst [vmem:[#allocation2 + $0x7c0] sm:$0x7f] %v3074
      %3243 = vst [vmem:[#allocation2 + $0x808] sm:$0xff] %v3078
      %3244 = vst [vmem:[#allocation2 + $0x850] sm:$0x7f] %v3077
      %3245 = vst [vmem:[#allocation2 + $0x898] sm:$0xff] %v3212
      %3246 = vst [vmem:[#allocation2 + $0x8e0] sm:$0x7f] %v3211
      %3247 = vst [vmem:[#allocation2 + $0x30] sm:$0xfe] %v2902
      %3248 = vst [vmem:[#allocation2 + $0x78] sm:$0xff] %v2904
      %3249 = vst [vmem:[#allocation2 + $0xc0] sm:$0xfe] %v2905
      %3250 = vst [vmem:[#allocation2 + $0x108] sm:$0xff] %v2907
      %3251 = vst [vmem:[#allocation2 + $0x150] sm:$0xfe] %v2908
      %3252 = vst [vmem:[#allocation2 + $0x198] sm:$0xff] %v2910
      %3253 = vst [vmem:[#allocation2 + $0x1e0] sm:$0xfe] %v2911
      %3254 = vst [vmem:[#allocation2 + $0x228] sm:$0xff] %v2913
      %3255 = vst [vmem:[#allocation2 + $0x270] sm:$0xfe] %v2914
      %3256 = vst [vmem:[#allocation2 + $0x2b8] sm:$0xff] %v2916
      %3257 = vst [vmem:[#allocation2 + $0x300] sm:$0xfe] %v2917
      %3258 = vst [vmem:[#allocation2 + $0x348] sm:$0xff] %v2919
      %3259 = vst [vmem:[#allocation2 + $0x390] sm:$0xfe] %v2920
      %3260 = vst [vmem:[#allocation2 + $0x3d8] sm:$0xff] %v2922
      %3261 = vst [vmem:[#allocation2 + $0x420] sm:$0xfe] %v2923
      %3262 = vst [vmem:[#allocation2 + $0x468] sm:$0xff] %v2925
      %3263 = vst [vmem:[#allocation2 + $0x4b0] sm:$0xfe] %v2926
      %3264 = vst [vmem:[#allocation2 + $0x4f8] sm:$0xff] %v2928
      %3265 = vst [vmem:[#allocation2 + $0x540] sm:$0xfe] %v2929
      %3266 = vst [vmem:[#allocation2 + $0x588] sm:$0xff] %v2931
      %3267 = vst [vmem:[#allocation2 + $0x5d0] sm:$0xfe] %v2932
      %3268 = vst [vmem:[#allocation2 + $0x618] sm:$0xff] %v2934
      %3269 = vst [vmem:[#allocation2 + $0x660] sm:$0xfe] %v2935
      %3270 = vst [vmem:[#allocation2 + $0x6a8] sm:$0xff] %v2937
      %3271 = vst [vmem:[#allocation2 + $0x6f0] sm:$0xfe] %v2938
      %3272 = vst [vmem:[#allocation2 + $0x738] sm:$0xff] %v2940
      %3273 = vst [vmem:[#allocation2 + $0x780] sm:$0xfe] %v2941
      %3274 = vst [vmem:[#allocation2 + $0x7c8] sm:$0xff] %v2943
      %3275 = vst [vmem:[#allocation2 + $0x810] sm:$0xfe] %v3141
      %3276 = vst [vmem:[#allocation2 + $0x858] sm:$0xff] %v3143
      %3277 = vst [vmem:[#allocation2 + $0x38] sm:$0xff] %v2839
      %3278 = vst [vmem:[#allocation2 + $0x80] sm:$0xff] %v2840
      %3279 = vst [vmem:[#allocation2 + $0xc8] sm:$0xff] %v2841
      %3280 = vst [vmem:[#allocation2 + $0x110] sm:$0xff] %v2842
      %3281 = vst [vmem:[#allocation2 + $0x158] sm:$0xff] %v2843
      %3282 = vst [vmem:[#allocation2 + $0x1a0] sm:$0xff] %v2844
      %3283 = vst [vmem:[#allocation2 + $0x1e8] sm:$0xff] %v2845
      %3284 = vst [vmem:[#allocation2 + $0x230] sm:$0xff] %v2846
      %3285 = vst [vmem:[#allocation2 + $0x278] sm:$0xff] %v2847
      %3286 = vst [vmem:[#allocation2 + $0x2c0] sm:$0xff] %v2848
      %3287 = vst [vmem:[#allocation2 + $0x308] sm:$0xff] %v2849
      %3288 = vst [vmem:[#allocation2 + $0x350] sm:$0xff] %v2850
      %3289 = vst [vmem:[#allocation2 + $0x398] sm:$0xff] %v2851
      %3290 = vst [vmem:[#allocation2 + $0x3e0] sm:$0xff] %v2852
      %3291 = vst [vmem:[#allocation2 + $0x428] sm:$0xff] %v2853
      %3292 = vst [vmem:[#allocation2 + $0x470] sm:$0xff] %v2854
      %3293 = vst [vmem:[#allocation2 + $0x4b8] sm:$0xff] %v2855
      %3294 = vst [vmem:[#allocation2 + $0x500] sm:$0xff] %v2856
      %3295 = vst [vmem:[#allocation2 + $0x548] sm:$0xff] %v2857
      %3296 = vst [vmem:[#allocation2 + $0x590] sm:$0xff] %v2858
      %3297 = vst [vmem:[#allocation2 + $0x5d8] sm:$0xff] %v2859
      %3298 = vst [vmem:[#allocation2 + $0x620] sm:$0xff] %v2860
      %3299 = vst [vmem:[#allocation2 + $0x668] sm:$0xff] %v2861
      %3300 = vst [vmem:[#allocation2 + $0x6b0] sm:$0xff] %v2862
      %3301 = vst [vmem:[#allocation2 + $0x6f8] sm:$0xff] %v2863
      %3302 = vst [vmem:[#allocation2 + $0x740] sm:$0xff] %v2864
      %3303 = vst [vmem:[#allocation2 + $0x788] sm:$0xff] %v2865
      %3304 = vst [vmem:[#allocation2 + $0x7d0] sm:$0xff] %v2866
      %3305 = vst [vmem:[#allocation2 + $0x818] sm:$0xff] %v2867
      %3306 = vst [vmem:[#allocation2 + $0x860] sm:$0xff] %v2868
      %3307 = vst [vmem:[#allocation2 + $0x40] sm:$0xff] %v3039
      %3308 = vst [vmem:[#allocation2 + $0x88] sm:$0x7f] %v3038
      %3309 = vst [vmem:[#allocation2 + $0xd0] sm:$0xff] %v3042
      %3310 = vst [vmem:[#allocation2 + $0x118] sm:$0x7f] %v3041
      %3311 = vst [vmem:[#allocation2 + $0x160] sm:$0xff] %v3045
      %3312 = vst [vmem:[#allocation2 + $0x1a8] sm:$0x7f] %v3044
      %3313 = vst [vmem:[#allocation2 + $0x1f0] sm:$0xff] %v3048
      %3314 = vst [vmem:[#allocation2 + $0x238] sm:$0x7f] %v3047
      %3315 = vst [vmem:[#allocation2 + $0x280] sm:$0xff] %v3051
      %3316 = vst [vmem:[#allocation2 + $0x2c8] sm:$0x7f] %v3050
      %3317 = vst [vmem:[#allocation2 + $0x310] sm:$0xff] %v3054
      %3318 = vst [vmem:[#allocation2 + $0x358] sm:$0x7f] %v3053
      %3319 = vst [vmem:[#allocation2 + $0x3a0] sm:$0xff] %v3057
      %3320 = vst [vmem:[#allocation2 + $0x3e8] sm:$0x7f] %v3056
      %3321 = vst [vmem:[#allocation2 + $0x430] sm:$0xff] %v3060
      %3322 = vst [vmem:[#allocation2 + $0x478] sm:$0x7f] %v3059
      %3323 = vst [vmem:[#allocation2 + $0x4c0] sm:$0xff] %v3063
      %3324 = vst [vmem:[#allocation2 + $0x508] sm:$0x7f] %v3062
      %3325 = vst [vmem:[#allocation2 + $0x550] sm:$0xff] %v3066
      %3326 = vst [vmem:[#allocation2 + $0x598] sm:$0x7f] %v3065
      %3327 = vst [vmem:[#allocation2 + $0x5e0] sm:$0xff] %v3069
      %3328 = vst [vmem:[#allocation2 + $0x628] sm:$0x7f] %v3068
      %3329 = vst [vmem:[#allocation2 + $0x670] sm:$0xff] %v3072
      %3330 = vst [vmem:[#allocation2 + $0x6b8] sm:$0x7f] %v3071
      %3331 = vst [vmem:[#allocation2 + $0x700] sm:$0xff] %v3075
      %3332 = vst [vmem:[#allocation2 + $0x748] sm:$0x7f] %v3074
      %3333 = vst [vmem:[#allocation2 + $0x790] sm:$0xff] %v3078
      %3334 = vst [vmem:[#allocation2 + $0x7d8] sm:$0x7f] %v3077
      %3335 = vst [vmem:[#allocation2 + $0x820] sm:$0xff] %v3212
      %3336 = vst [vmem:[#allocation2 + $0x868] sm:$0x7f] %v3211
      %v3337 = vld [vmem:[#allocation2] sm:$0xff]
      %v3338 = vld [vmem:[#allocation2 + $0x8] sm:$0xff]
      %v3339 = vld [vmem:[#allocation2 + $0x10] sm:$0xff]
      %v3340 = vld [vmem:[#allocation2 + $0x18] sm:$0xff]
      %v3341 = vld [vmem:[#allocation2 + $0x20] sm:$0xff]
      %v3342 = vld [vmem:[#allocation2 + $0x28] sm:$0xff]
      %v3343 = vld [vmem:[#allocation2 + $0x30] sm:$0xff]
      %v3344 = vld [vmem:[#allocation2 + $0x38] sm:$0xff]
      %v3345 = vld [vmem:[#allocation2 + $0x40] sm:$0xff]
      %v3346 = vld [vmem:[#allocation2 + $0x48] sm:$0xff]
      %v3347 = vld [vmem:[#allocation2 + $0x50] sm:$0xff]
      %v3348 = vld [vmem:[#allocation2 + $0x58] sm:$0xff]
      %v3349 = vld [vmem:[#allocation2 + $0x60] sm:$0xff]
      %v3350 = vld [vmem:[#allocation2 + $0x68] sm:$0xff]
      %v3351 = vld [vmem:[#allocation2 + $0x70] sm:$0xff]
      %v3352 = vld [vmem:[#allocation2 + $0x78] sm:$0xff]
      %v3353 = vld [vmem:[#allocation2 + $0x80] sm:$0xff]
      %v3354 = vld [vmem:[#allocation2 + $0x88] sm:$0xff]
      %v3355 = vld [vmem:[#allocation2 + $0x90] sm:$0xff]
      %v3356 = vld [vmem:[#allocation2 + $0x98] sm:$0xff]
      %v3357 = vld [vmem:[#allocation2 + $0xa0] sm:$0xff]
      %v3358 = vld [vmem:[#allocation2 + $0xa8] sm:$0xff]
      %v3359 = vld [vmem:[#allocation2 + $0xb0] sm:$0xff]
      %v3360 = vld [vmem:[#allocation2 + $0xb8] sm:$0xff]
      %v3361 = vld [vmem:[#allocation2 + $0xc0] sm:$0xff]
      %v3362 = vld [vmem:[#allocation2 + $0xc8] sm:$0xff]
      %v3363 = vld [vmem:[#allocation2 + $0xd0] sm:$0xff]
      %v3364 = vld [vmem:[#allocation2 + $0xd8] sm:$0xff]
      %v3365 = vld [vmem:[#allocation2 + $0xe0] sm:$0xff]
      %v3366 = vld [vmem:[#allocation2 + $0xe8] sm:$0xff]
      %v3367 = vld [vmem:[#allocation2 + $0xf0] sm:$0xff]
      %v3368 = vld [vmem:[#allocation2 + $0xf8] sm:$0xff]
      %v3369 = vld [vmem:[#allocation2 + $0x100] sm:$0xff]
      %v3370 = vld [vmem:[#allocation2 + $0x108] sm:$0xff]
      %v3371 = vld [vmem:[#allocation2 + $0x110] sm:$0xff]
      %v3372 = vld [vmem:[#allocation2 + $0x118] sm:$0xff]
      %v3373 = vld [vmem:[#allocation2 + $0x120] sm:$0xff]
      %v3374 = vld [vmem:[#allocation2 + $0x128] sm:$0xff]
      %v3375 = vld [vmem:[#allocation2 + $0x130] sm:$0xff]
      %v3376 = vld [vmem:[#allocation2 + $0x138] sm:$0xff]
      %v3377 = vld [vmem:[#allocation2 + $0x140] sm:$0xff]
      %v3378 = vld [vmem:[#allocation2 + $0x148] sm:$0xff]
      %v3379 = vld [vmem:[#allocation2 + $0x150] sm:$0xff]
      %v3380 = vld [vmem:[#allocation2 + $0x158] sm:$0xff]
      %v3381 = vld [vmem:[#allocation2 + $0x160] sm:$0xff]
      %v3382 = vld [vmem:[#allocation2 + $0x168] sm:$0xff]
      %v3383 = vld [vmem:[#allocation2 + $0x170] sm:$0xff]
      %v3384 = vld [vmem:[#allocation2 + $0x178] sm:$0xff]
      %v3385 = vld [vmem:[#allocation2 + $0x180] sm:$0xff]
      %v3386 = vld [vmem:[#allocation2 + $0x188] sm:$0xff]
      %v3387 = vld [vmem:[#allocation2 + $0x190] sm:$0xff]
      %v3388 = vld [vmem:[#allocation2 + $0x198] sm:$0xff]
      %v3389 = vld [vmem:[#allocation2 + $0x1a0] sm:$0xff]
      %v3390 = vld [vmem:[#allocation2 + $0x1a8] sm:$0xff]
      %v3391 = vld [vmem:[#allocation2 + $0x1b0] sm:$0xff]
      %v3392 = vld [vmem:[#allocation2 + $0x1b8] sm:$0xff]
      %v3393 = vld [vmem:[#allocation2 + $0x1c0] sm:$0xff]
      %v3394 = vld [vmem:[#allocation2 + $0x1c8] sm:$0xff]
      %v3395 = vld [vmem:[#allocation2 + $0x1d0] sm:$0xff]
      %v3396 = vld [vmem:[#allocation2 + $0x1d8] sm:$0xff]
      %v3397 = vld [vmem:[#allocation2 + $0x1e0] sm:$0xff]
      %v3398 = vld [vmem:[#allocation2 + $0x1e8] sm:$0xff]
      %v3399 = vld [vmem:[#allocation2 + $0x1f0] sm:$0xff]
      %v3400 = vld [vmem:[#allocation2 + $0x1f8] sm:$0xff]
      %v3401 = vld [vmem:[#allocation2 + $0x200] sm:$0xff]
      %v3402 = vld [vmem:[#allocation2 + $0x208] sm:$0xff]
      %v3403 = vld [vmem:[#allocation2 + $0x210] sm:$0xff]
      %v3404 = vld [vmem:[#allocation2 + $0x218] sm:$0xff]
      %v3405 = vld [vmem:[#allocation2 + $0x220] sm:$0xff]
      %v3406 = vld [vmem:[#allocation2 + $0x228] sm:$0xff]
      %v3407 = vld [vmem:[#allocation2 + $0x230] sm:$0xff]
      %v3408 = vld [vmem:[#allocation2 + $0x238] sm:$0xff]
      %v3409 = vld [vmem:[#allocation2 + $0x240] sm:$0xff]
      %v3410 = vld [vmem:[#allocation2 + $0x248] sm:$0xff]
      %v3411 = vld [vmem:[#allocation2 + $0x250] sm:$0xff]
      %v3412 = vld [vmem:[#allocation2 + $0x258] sm:$0xff]
      %v3413 = vld [vmem:[#allocation2 + $0x260] sm:$0xff]
      %v3414 = vld [vmem:[#allocation2 + $0x268] sm:$0xff]
      %v3415 = vld [vmem:[#allocation2 + $0x270] sm:$0xff]
      %v3416 = vld [vmem:[#allocation2 + $0x278] sm:$0xff]
      %v3417 = vld [vmem:[#allocation2 + $0x280] sm:$0xff]
      %v3418 = vld [vmem:[#allocation2 + $0x288] sm:$0xff]
      %v3419 = vld [vmem:[#allocation2 + $0x290] sm:$0xff]
      %v3420 = vld [vmem:[#allocation2 + $0x298] sm:$0xff]
      %v3421 = vld [vmem:[#allocation2 + $0x2a0] sm:$0xff]
      %v3422 = vld [vmem:[#allocation2 + $0x2a8] sm:$0xff]
      %v3423 = vld [vmem:[#allocation2 + $0x2b0] sm:$0xff]
      %v3424 = vld [vmem:[#allocation2 + $0x2b8] sm:$0xff]
      %v3425 = vld [vmem:[#allocation2 + $0x2c0] sm:$0xff]
      %v3426 = vld [vmem:[#allocation2 + $0x2c8] sm:$0xff]
      %v3427 = vld [vmem:[#allocation2 + $0x2d0] sm:$0xff]
      %v3428 = vld [vmem:[#allocation2 + $0x2d8] sm:$0xff]
      %v3429 = vld [vmem:[#allocation2 + $0x2e0] sm:$0xff]
      %v3430 = vld [vmem:[#allocation2 + $0x2e8] sm:$0xff]
      %v3431 = vld [vmem:[#allocation2 + $0x2f0] sm:$0xff]
      %v3432 = vld [vmem:[#allocation2 + $0x2f8] sm:$0xff]
      %v3433 = vld [vmem:[#allocation2 + $0x300] sm:$0xff]
      %v3434 = vld [vmem:[#allocation2 + $0x308] sm:$0xff]
      %v3435 = vld [vmem:[#allocation2 + $0x310] sm:$0xff]
      %v3436 = vld [vmem:[#allocation2 + $0x318] sm:$0xff]
      %v3437 = vld [vmem:[#allocation2 + $0x320] sm:$0xff]
      %v3438 = vld [vmem:[#allocation2 + $0x328] sm:$0xff]
      %v3439 = vld [vmem:[#allocation2 + $0x330] sm:$0xff]
      %v3440 = vld [vmem:[#allocation2 + $0x338] sm:$0xff]
      %v3441 = vld [vmem:[#allocation2 + $0x340] sm:$0xff]
      %v3442 = vld [vmem:[#allocation2 + $0x348] sm:$0xff]
      %v3443 = vld [vmem:[#allocation2 + $0x350] sm:$0xff]
      %v3444 = vld [vmem:[#allocation2 + $0x358] sm:$0xff]
      %v3445 = vld [vmem:[#allocation2 + $0x360] sm:$0xff]
      %v3446 = vld [vmem:[#allocation2 + $0x368] sm:$0xff]
      %v3447 = vld [vmem:[#allocation2 + $0x370] sm:$0xff]
      %v3448 = vld [vmem:[#allocation2 + $0x378] sm:$0xff]
      %v3449 = vld [vmem:[#allocation2 + $0x380] sm:$0xff]
      %v3450 = vld [vmem:[#allocation2 + $0x388] sm:$0xff]
      %v3451 = vld [vmem:[#allocation2 + $0x390] sm:$0xff]
      %v3452 = vld [vmem:[#allocation2 + $0x398] sm:$0xff]
      %v3453 = vld [vmem:[#allocation2 + $0x3a0] sm:$0xff]
      %v3454 = vld [vmem:[#allocation2 + $0x3a8] sm:$0xff]
      %v3455 = vld [vmem:[#allocation2 + $0x3b0] sm:$0xff]
      %v3456 = vld [vmem:[#allocation2 + $0x3b8] sm:$0xff]
      %v3457 = vld [vmem:[#allocation2 + $0x3c0] sm:$0xff]
      %v3458 = vld [vmem:[#allocation2 + $0x3c8] sm:$0xff]
      %v3459 = vld [vmem:[#allocation2 + $0x3d0] sm:$0xff]
      %v3460 = vld [vmem:[#allocation2 + $0x3d8] sm:$0xff]
      %v3461 = vld [vmem:[#allocation2 + $0x3e0] sm:$0xff]
      %v3462 = vld [vmem:[#allocation2 + $0x3e8] sm:$0xff]
      %v3463 = vld [vmem:[#allocation2 + $0x3f0] sm:$0xff]
      %v3464 = vld [vmem:[#allocation2 + $0x3f8] sm:$0xff]
      %v3465 = vld [vmem:[#allocation2 + $0x400] sm:$0xff]
      %v3466 = vld [vmem:[#allocation2 + $0x408] sm:$0xff]
      %v3467 = vld [vmem:[#allocation2 + $0x410] sm:$0xff]
      %v3468 = vld [vmem:[#allocation2 + $0x418] sm:$0xff]
      %v3469 = vld [vmem:[#allocation2 + $0x420] sm:$0xff]
      %v3470 = vld [vmem:[#allocation2 + $0x428] sm:$0xff]
      %v3471 = vld [vmem:[#allocation2 + $0x430] sm:$0xff]
      %v3472 = vld [vmem:[#allocation2 + $0x438] sm:$0xff]
      %v3473 = vld [vmem:[#allocation2 + $0x440] sm:$0xff]
      %v3474 = vld [vmem:[#allocation2 + $0x448] sm:$0xff]
      %v3475 = vld [vmem:[#allocation2 + $0x450] sm:$0xff]
      %v3476 = vld [vmem:[#allocation2 + $0x458] sm:$0xff]
      %v3477 = vld [vmem:[#allocation2 + $0x460] sm:$0xff]
      %v3478 = vld [vmem:[#allocation2 + $0x468] sm:$0xff]
      %v3479 = vld [vmem:[#allocation2 + $0x470] sm:$0xff]
      %v3480 = vld [vmem:[#allocation2 + $0x478] sm:$0xff]
      %v3481 = vld [vmem:[#allocation2 + $0x480] sm:$0xff]
      %v3482 = vld [vmem:[#allocation2 + $0x488] sm:$0xff]
      %v3483 = vld [vmem:[#allocation2 + $0x490] sm:$0xff]
      %v3484 = vld [vmem:[#allocation2 + $0x498] sm:$0xff]
      %v3485 = vld [vmem:[#allocation2 + $0x4a0] sm:$0xff]
      %v3486 = vld [vmem:[#allocation2 + $0x4a8] sm:$0xff]
      %v3487 = vld [vmem:[#allocation2 + $0x4b0] sm:$0xff]
      %v3488 = vld [vmem:[#allocation2 + $0x4b8] sm:$0xff]
      %v3489 = vld [vmem:[#allocation2 + $0x4c0] sm:$0xff]
      %v3490 = vld [vmem:[#allocation2 + $0x4c8] sm:$0xff]
      %v3491 = vld [vmem:[#allocation2 + $0x4d0] sm:$0xff]
      %v3492 = vld [vmem:[#allocation2 + $0x4d8] sm:$0xff]
      %v3493 = vld [vmem:[#allocation2 + $0x4e0] sm:$0xff]
      %v3494 = vld [vmem:[#allocation2 + $0x4e8] sm:$0xff]
      %v3495 = vld [vmem:[#allocation2 + $0x4f0] sm:$0xff]
      %v3496 = vld [vmem:[#allocation2 + $0x4f8] sm:$0xff]
      %v3497 = vld [vmem:[#allocation2 + $0x500] sm:$0xff]
      %v3498 = vld [vmem:[#allocation2 + $0x508] sm:$0xff]
      %v3499 = vld [vmem:[#allocation2 + $0x510] sm:$0xff]
      %v3500 = vld [vmem:[#allocation2 + $0x518] sm:$0xff]
      %v3501 = vld [vmem:[#allocation2 + $0x520] sm:$0xff]
      %v3502 = vld [vmem:[#allocation2 + $0x528] sm:$0xff]
      %v3503 = vld [vmem:[#allocation2 + $0x530] sm:$0xff]
      %v3504 = vld [vmem:[#allocation2 + $0x538] sm:$0xff]
      %v3505 = vld [vmem:[#allocation2 + $0x540] sm:$0xff]
      %v3506 = vld [vmem:[#allocation2 + $0x548] sm:$0xff]
      %v3507 = vld [vmem:[#allocation2 + $0x550] sm:$0xff]
      %v3508 = vld [vmem:[#allocation2 + $0x558] sm:$0xff]
      %v3509 = vld [vmem:[#allocation2 + $0x560] sm:$0xff]
      %v3510 = vld [vmem:[#allocation2 + $0x568] sm:$0xff]
      %v3511 = vld [vmem:[#allocation2 + $0x570] sm:$0xff]
      %v3512 = vld [vmem:[#allocation2 + $0x578] sm:$0xff]
      %v3513 = vld [vmem:[#allocation2 + $0x580] sm:$0xff]
      %v3514 = vld [vmem:[#allocation2 + $0x588] sm:$0xff]
      %v3515 = vld [vmem:[#allocation2 + $0x590] sm:$0xff]
      %v3516 = vld [vmem:[#allocation2 + $0x598] sm:$0xff]
      %v3517 = vld [vmem:[#allocation2 + $0x5a0] sm:$0xff]
      %v3518 = vld [vmem:[#allocation2 + $0x5a8] sm:$0xff]
      %v3519 = vld [vmem:[#allocation2 + $0x5b0] sm:$0xff]
      %v3520 = vld [vmem:[#allocation2 + $0x5b8] sm:$0xff]
      %v3521 = vld [vmem:[#allocation2 + $0x5c0] sm:$0xff]
      %v3522 = vld [vmem:[#allocation2 + $0x5c8] sm:$0xff]
      %v3523 = vld [vmem:[#allocation2 + $0x5d0] sm:$0xff]
      %v3524 = vld [vmem:[#allocation2 + $0x5d8] sm:$0xff]
      %v3525 = vld [vmem:[#allocation2 + $0x5e0] sm:$0xff]
      %v3526 = vld [vmem:[#allocation2 + $0x5e8] sm:$0xff]
      %v3527 = vld [vmem:[#allocation2 + $0x5f0] sm:$0xff]
      %v3528 = vld [vmem:[#allocation2 + $0x5f8] sm:$0xff]
      %v3529 = vld [vmem:[#allocation2 + $0x600] sm:$0xff]
      %v3530 = vld [vmem:[#allocation2 + $0x608] sm:$0xff]
      %v3531 = vld [vmem:[#allocation2 + $0x610] sm:$0xff]
      %v3532 = vld [vmem:[#allocation2 + $0x618] sm:$0xff]
      %v3533 = vld [vmem:[#allocation2 + $0x620] sm:$0xff]
      %v3534 = vld [vmem:[#allocation2 + $0x628] sm:$0xff]
      %v3535 = vld [vmem:[#allocation2 + $0x630] sm:$0xff]
      %v3536 = vld [vmem:[#allocation2 + $0x638] sm:$0xff]
      %v3537 = vld [vmem:[#allocation2 + $0x640] sm:$0xff]
      %v3538 = vld [vmem:[#allocation2 + $0x648] sm:$0xff]
      %v3539 = vld [vmem:[#allocation2 + $0x650] sm:$0xff]
      %v3540 = vld [vmem:[#allocation2 + $0x658] sm:$0xff]
      %v3541 = vld [vmem:[#allocation2 + $0x660] sm:$0xff]
      %v3542 = vld [vmem:[#allocation2 + $0x668] sm:$0xff]
      %v3543 = vld [vmem:[#allocation2 + $0x670] sm:$0xff]
      %v3544 = vld [vmem:[#allocation2 + $0x678] sm:$0xff]
      %v3545 = vld [vmem:[#allocation2 + $0x680] sm:$0xff]
      %v3546 = vld [vmem:[#allocation2 + $0x688] sm:$0xff]
      %v3547 = vld [vmem:[#allocation2 + $0x690] sm:$0xff]
      %v3548 = vld [vmem:[#allocation2 + $0x698] sm:$0xff]
      %v3549 = vld [vmem:[#allocation2 + $0x6a0] sm:$0xff]
      %v3550 = vld [vmem:[#allocation2 + $0x6a8] sm:$0xff]
      %v3551 = vld [vmem:[#allocation2 + $0x6b0] sm:$0xff]
      %v3552 = vld [vmem:[#allocation2 + $0x6b8] sm:$0xff]
      %v3553 = vld [vmem:[#allocation2 + $0x6c0] sm:$0xff]
      %v3554 = vld [vmem:[#allocation2 + $0x6c8] sm:$0xff]
      %v3555 = vld [vmem:[#allocation2 + $0x6d0] sm:$0xff]
      %v3556 = vld [vmem:[#allocation2 + $0x6d8] sm:$0xff]
      %v3557 = vld [vmem:[#allocation2 + $0x6e0] sm:$0xff]
      %v3558 = vld [vmem:[#allocation2 + $0x6e8] sm:$0xff]
      %v3559 = vld [vmem:[#allocation2 + $0x6f0] sm:$0xff]
      %v3560 = vld [vmem:[#allocation2 + $0x6f8] sm:$0xff]
      %v3561 = vld [vmem:[#allocation2 + $0x700] sm:$0xff]
      %v3562 = vld [vmem:[#allocation2 + $0x708] sm:$0xff]
      %v3563 = vld [vmem:[#allocation2 + $0x710] sm:$0xff]
      %v3564 = vld [vmem:[#allocation2 + $0x718] sm:$0xff]
      %v3565 = vld [vmem:[#allocation2 + $0x720] sm:$0xff]
      %v3566 = vld [vmem:[#allocation2 + $0x728] sm:$0xff]
      %v3567 = vld [vmem:[#allocation2 + $0x730] sm:$0xff]
      %v3568 = vld [vmem:[#allocation2 + $0x738] sm:$0xff]
      %v3569 = vld [vmem:[#allocation2 + $0x740] sm:$0xff]
      %v3570 = vld [vmem:[#allocation2 + $0x748] sm:$0xff]
      %v3571 = vld [vmem:[#allocation2 + $0x750] sm:$0xff]
      %v3572 = vld [vmem:[#allocation2 + $0x758] sm:$0xff]
      %v3573 = vld [vmem:[#allocation2 + $0x760] sm:$0xff]
      %v3574 = vld [vmem:[#allocation2 + $0x768] sm:$0xff]
      %v3575 = vld [vmem:[#allocation2 + $0x770] sm:$0xff]
      %v3576 = vld [vmem:[#allocation2 + $0x778] sm:$0xff]
      %v3577 = vld [vmem:[#allocation2 + $0x780] sm:$0xff]
      %v3578 = vld [vmem:[#allocation2 + $0x788] sm:$0xff]
      %v3579 = vld [vmem:[#allocation2 + $0x790] sm:$0xff]
      %v3580 = vld [vmem:[#allocation2 + $0x798] sm:$0xff]
      %v3581 = vld [vmem:[#allocation2 + $0x7a0] sm:$0xff]
      %v3582 = vld [vmem:[#allocation2 + $0x7a8] sm:$0xff]
      %v3583 = vld [vmem:[#allocation2 + $0x7b0] sm:$0xff]
      %v3584 = vld [vmem:[#allocation2 + $0x7b8] sm:$0xff]
      %v3585 = vld [vmem:[#allocation2 + $0x7c0] sm:$0xff]
      %v3586 = vld [vmem:[#allocation2 + $0x7c8] sm:$0xff]
      %v3587 = vld [vmem:[#allocation2 + $0x7d0] sm:$0xff]
      %v3588 = vld [vmem:[#allocation2 + $0x7d8] sm:$0xff]
      %v3589 = vld [vmem:[#allocation2 + $0x7e0] sm:$0xff]
      %v3590 = vld [vmem:[#allocation2 + $0x7e8] sm:$0xff]
      %v3591 = vld [vmem:[#allocation2 + $0x7f0] sm:$0xff]
      %v3592 = vld [vmem:[#allocation2 + $0x7f8] sm:$0xff]
      %v3593 = vld [vmem:[#allocation2 + $0x800] sm:$0xff]
      %v3594 = vld [vmem:[#allocation2 + $0x808] sm:$0xff]
      %v3595 = vld [vmem:[#allocation2 + $0x810] sm:$0xff]
      %v3596 = vld [vmem:[#allocation2 + $0x818] sm:$0xff]
      %v3597 = vld [vmem:[#allocation2 + $0x820] sm:$0xff]
      %v3598 = vld [vmem:[#allocation2 + $0x828] sm:$0xff]
      %v3599 = vld [vmem:[#allocation2 + $0x830] sm:$0xff]
      %v3600 = vld [vmem:[#allocation2 + $0x838] sm:$0xff]
      %v3601 = vld [vmem:[#allocation2 + $0x840] sm:$0xff]
      %v3602 = vld [vmem:[#allocation2 + $0x848] sm:$0xff]
      %v3603 = vld [vmem:[#allocation2 + $0x850] sm:$0xff]
      %v3604 = vld [vmem:[#allocation2 + $0x858] sm:$0xff]
      %v3605 = vld [vmem:[#allocation2 + $0x860] sm:$0xff]
      %v3606 = vld [vmem:[#allocation2 + $0x868] sm:$0xff]
      %v3607 = vld [vmem:[#allocation2 + $0x870] sm:$0xff]
      %v3608 = vld [vmem:[#allocation2 + $0x878] sm:$0xff]
      %v3609 = vld [vmem:[#allocation2 + $0x880] sm:$0xff]
      %v3610 = vld [vmem:[#allocation2 + $0x888] sm:$0xff]
      %v3611 = vld [vmem:[#allocation2 + $0x890] sm:$0xff]
      %v3612 = vld [vmem:[#allocation2 + $0x898] sm:$0xff]
      %v3613 = vld [vmem:[#allocation2 + $0x8a0] sm:$0xff]
      %v3614 = vld [vmem:[#allocation2 + $0x8a8] sm:$0xff]
      %v3615 = vld [vmem:[#allocation2 + $0x8b0] sm:$0xff]
      %v3616 = vld [vmem:[#allocation2 + $0x8b8] sm:$0xff]
      %v3617 = vld [vmem:[#allocation2 + $0x8c0] sm:$0xff]
      %v3618 = vld [vmem:[#allocation2 + $0x8c8] sm:$0xff]
      %v3619 = vld [vmem:[#allocation2 + $0x8d0] sm:$0xff]
      %v3620 = vld [vmem:[#allocation2 + $0x8d8] sm:$0xff]
      %v3621 = vld [vmem:[#allocation2 + $0x8e0] sm:$0xff]
      %v3622 = vld [vmem:[#allocation2 + $0x8e8] sm:$0xff]
      %v3623 = vld [vmem:[#allocation2 + $0x8f0] sm:$0xff]
      %v3624 = vld [vmem:[#allocation2 + $0x8f8] sm:$0xff]
      %v3625 = vld [vmem:[%s1] sm:$0xff]
      %v3626 = vld [vmem:[%s1 + $0x8] sm:$0xff]
      %v3627 = vld [vmem:[%s1 + $0x10] sm:$0xff]
      %v3628 = vld [vmem:[%s1 + $0x18] sm:$0xff]
      %v3629 = vld [vmem:[%s1 + $0x20] sm:$0xff]
      %v3630 = vld [vmem:[%s1 + $0x28] sm:$0xff]
      %v3631 = vld [vmem:[%s1 + $0x30] sm:$0xff]
      %v3632 = vld [vmem:[%s1 + $0x38] sm:$0xff]
      %v3633 = vld [vmem:[%s1 + $0x40] sm:$0xff]
      %v3634 = vld [vmem:[%s1 + $0x48] sm:$0xff]
      %v3635 = vld [vmem:[%s1 + $0x50] sm:$0xff]
      %v3636 = vld [vmem:[%s1 + $0x58] sm:$0xff]
      %v3637 = vld [vmem:[%s1 + $0x60] sm:$0xff]
      %v3638 = vld [vmem:[%s1 + $0x68] sm:$0xff]
      %v3639 = vld [vmem:[%s1 + $0x70] sm:$0xff]
      %v3640 = vld [vmem:[%s1 + $0x78] sm:$0xff]
      %v3641 = vld [vmem:[%s1 + $0x80] sm:$0xff]
      %v3642 = vld [vmem:[%s1 + $0x88] sm:$0xff]
      %v3643 = vld [vmem:[%s1 + $0x90] sm:$0xff]
      %v3644 = vld [vmem:[%s1 + $0x98] sm:$0xff]
      %v3645 = vld [vmem:[%s1 + $0xa0] sm:$0xff]
      %v3646 = vld [vmem:[%s1 + $0xa8] sm:$0xff]
      %v3647 = vld [vmem:[%s1 + $0xb0] sm:$0xff]
      %v3648 = vld [vmem:[%s1 + $0xb8] sm:$0xff]
      %v3649 = vld [vmem:[%s1 + $0xc0] sm:$0xff]
      %v3650 = vld [vmem:[%s1 + $0xc8] sm:$0xff]
      %v3651 = vld [vmem:[%s1 + $0xd0] sm:$0xff]
      %v3652 = vld [vmem:[%s1 + $0xd8] sm:$0xff]
      %v3653 = vld [vmem:[%s1 + $0xe0] sm:$0xff]
      %v3654 = vld [vmem:[%s1 + $0xe8] sm:$0xff]
      %v3655 = vld [vmem:[%s1 + $0xf0] sm:$0xff]
      %v3656 = vld [vmem:[%s1 + $0xf8] sm:$0xff]
      %v3657 = vld [vmem:[%s1 + $0x100] sm:$0xff]
      %v3658 = vld [vmem:[%s1 + $0x108] sm:$0xff]
      %v3659 = vld [vmem:[%s1 + $0x110] sm:$0xff]
      %v3660 = vld [vmem:[%s1 + $0x118] sm:$0xff]
      %v3661 = vld [vmem:[%s1 + $0x120] sm:$0xff]
      %v3662 = vld [vmem:[%s1 + $0x128] sm:$0xff]
      %v3663 = vld [vmem:[%s1 + $0x130] sm:$0xff]
      %v3664 = vld [vmem:[%s1 + $0x138] sm:$0xff]
      %v3665 = vld [vmem:[%s1 + $0x140] sm:$0xff]
      %v3666 = vld [vmem:[%s1 + $0x148] sm:$0xff]
      %v3667 = vld [vmem:[%s1 + $0x150] sm:$0xff]
      %v3668 = vld [vmem:[%s1 + $0x158] sm:$0xff]
      %v3669 = vld [vmem:[%s1 + $0x160] sm:$0xff]
      %v3670 = vld [vmem:[%s1 + $0x168] sm:$0xff]
      %v3671 = vld [vmem:[%s1 + $0x170] sm:$0xff]
      %v3672 = vld [vmem:[%s1 + $0x178] sm:$0xff]
      %v3673 = vld [vmem:[%s1 + $0x180] sm:$0xff]
      %v3674 = vld [vmem:[%s1 + $0x188] sm:$0xff]
      %v3675 = vld [vmem:[%s1 + $0x190] sm:$0xff]
      %v3676 = vld [vmem:[%s1 + $0x198] sm:$0xff]
      %v3677 = vld [vmem:[%s1 + $0x1a0] sm:$0xff]
      %v3678 = vld [vmem:[%s1 + $0x1a8] sm:$0xff]
      %v3679 = vld [vmem:[%s1 + $0x1b0] sm:$0xff]
      %v3680 = vld [vmem:[%s1 + $0x1b8] sm:$0xff]
      %v3681 = vld [vmem:[%s1 + $0x1c0] sm:$0xff]
      %v3682 = vld [vmem:[%s1 + $0x1c8] sm:$0xff]
      %v3683 = vld [vmem:[%s1 + $0x1d0] sm:$0xff]
      %v3684 = vld [vmem:[%s1 + $0x1d8] sm:$0xff]
      %v3685 = vld [vmem:[%s1 + $0x1e0] sm:$0xff]
      %v3686 = vld [vmem:[%s1 + $0x1e8] sm:$0xff]
      %v3687 = vld [vmem:[%s1 + $0x1f0] sm:$0xff]
      %v3688 = vld [vmem:[%s1 + $0x1f8] sm:$0xff]
      %v3689 = vld [vmem:[%s1 + $0x200] sm:$0xff]
      %v3690 = vld [vmem:[%s1 + $0x208] sm:$0xff]
      %v3691 = vld [vmem:[%s1 + $0x210] sm:$0xff]
      %v3692 = vld [vmem:[%s1 + $0x218] sm:$0xff]
      %v3693 = vld [vmem:[%s1 + $0x220] sm:$0xff]
      %v3694 = vld [vmem:[%s1 + $0x228] sm:$0xff]
      %v3695 = vld [vmem:[%s1 + $0x230] sm:$0xff]
      %v3696 = vld [vmem:[%s1 + $0x238] sm:$0xff]
      %v3697 = vld [vmem:[%s1 + $0x240] sm:$0xff]
      %v3698 = vld [vmem:[%s1 + $0x248] sm:$0xff]
      %v3699 = vld [vmem:[%s1 + $0x250] sm:$0xff]
      %v3700 = vld [vmem:[%s1 + $0x258] sm:$0xff]
      %v3701 = vld [vmem:[%s1 + $0x260] sm:$0xff]
      %v3702 = vld [vmem:[%s1 + $0x268] sm:$0xff]
      %v3703 = vld [vmem:[%s1 + $0x270] sm:$0xff]
      %v3704 = vld [vmem:[%s1 + $0x278] sm:$0xff]
      %v3705 = vld [vmem:[%s1 + $0x280] sm:$0xff]
      %v3706 = vld [vmem:[%s1 + $0x288] sm:$0xff]
      %v3707 = vld [vmem:[%s1 + $0x290] sm:$0xff]
      %v3708 = vld [vmem:[%s1 + $0x298] sm:$0xff]
      %v3709 = vld [vmem:[%s1 + $0x2a0] sm:$0xff]
      %v3710 = vld [vmem:[%s1 + $0x2a8] sm:$0xff]
      %v3711 = vld [vmem:[%s1 + $0x2b0] sm:$0xff]
      %v3712 = vld [vmem:[%s1 + $0x2b8] sm:$0xff]
      %v3713 = vld [vmem:[%s1 + $0x2c0] sm:$0xff]
      %v3714 = vld [vmem:[%s1 + $0x2c8] sm:$0xff]
      %v3715 = vld [vmem:[%s1 + $0x2d0] sm:$0xff]
      %v3716 = vld [vmem:[%s1 + $0x2d8] sm:$0xff]
      %v3717 = vld [vmem:[%s1 + $0x2e0] sm:$0xff]
      %v3718 = vld [vmem:[%s1 + $0x2e8] sm:$0xff]
      %v3719 = vld [vmem:[%s1 + $0x2f0] sm:$0xff]
      %v3720 = vld [vmem:[%s1 + $0x2f8] sm:$0xff]
      %v3721 = vld [vmem:[%s1 + $0x300] sm:$0xff]
      %v3722 = vld [vmem:[%s1 + $0x308] sm:$0xff]
      %v3723 = vld [vmem:[%s1 + $0x310] sm:$0xff]
      %v3724 = vld [vmem:[%s1 + $0x318] sm:$0xff]
      %v3725 = vld [vmem:[%s1 + $0x320] sm:$0xff]
      %v3726 = vld [vmem:[%s1 + $0x328] sm:$0xff]
      %v3727 = vld [vmem:[%s1 + $0x330] sm:$0xff]
      %v3728 = vld [vmem:[%s1 + $0x338] sm:$0xff]
      %v3729 = vld [vmem:[%s1 + $0x340] sm:$0xff]
      %v3730 = vld [vmem:[%s1 + $0x348] sm:$0xff]
      %v3731 = vld [vmem:[%s1 + $0x350] sm:$0xff]
      %v3732 = vld [vmem:[%s1 + $0x358] sm:$0xff]
      %v3733 = vld [vmem:[%s1 + $0x360] sm:$0xff]
      %v3734 = vld [vmem:[%s1 + $0x368] sm:$0xff]
      %v3735 = vld [vmem:[%s1 + $0x370] sm:$0xff]
      %v3736 = vld [vmem:[%s1 + $0x378] sm:$0xff]
      %v3737 = vld [vmem:[%s1 + $0x380] sm:$0xff]
      %v3738 = vld [vmem:[%s1 + $0x388] sm:$0xff]
      %v3739 = vld [vmem:[%s1 + $0x390] sm:$0xff]
      %v3740 = vld [vmem:[%s1 + $0x398] sm:$0xff]
      %v3741 = vld [vmem:[%s1 + $0x3a0] sm:$0xff]
      %v3742 = vld [vmem:[%s1 + $0x3a8] sm:$0xff]
      %v3743 = vld [vmem:[%s1 + $0x3b0] sm:$0xff]
      %v3744 = vld [vmem:[%s1 + $0x3b8] sm:$0xff]
      %v3745 = vld [vmem:[%s1 + $0x3c0] sm:$0xff]
      %v3746 = vld [vmem:[%s1 + $0x3c8] sm:$0xff]
      %v3747 = vld [vmem:[%s1 + $0x3d0] sm:$0xff]
      %v3748 = vld [vmem:[%s1 + $0x3d8] sm:$0xff]
      %v3749 = vld [vmem:[%s1 + $0x3e0] sm:$0xff]
      %v3750 = vld [vmem:[%s1 + $0x3e8] sm:$0xff]
      %v3751 = vld [vmem:[%s1 + $0x3f0] sm:$0xff]
      %v3752 = vld [vmem:[%s1 + $0x3f8] sm:$0xff]
      %v3753 = vld [vmem:[%s1 + $0x400] sm:$0xff]
      %v3754 = vld [vmem:[%s1 + $0x408] sm:$0xff]
      %v3755 = vld [vmem:[%s1 + $0x410] sm:$0xff]
      %v3756 = vld [vmem:[%s1 + $0x418] sm:$0xff]
      %v3757 = vld [vmem:[%s1 + $0x420] sm:$0xff]
      %v3758 = vld [vmem:[%s1 + $0x428] sm:$0xff]
      %v3759 = vld [vmem:[%s1 + $0x430] sm:$0xff]
      %v3760 = vld [vmem:[%s1 + $0x438] sm:$0xff]
      %v3761 = vld [vmem:[%s1 + $0x440] sm:$0xff]
      %v3762 = vld [vmem:[%s1 + $0x448] sm:$0xff]
      %v3763 = vld [vmem:[%s1 + $0x450] sm:$0xff]
      %v3764 = vld [vmem:[%s1 + $0x458] sm:$0xff]
      %v3765 = vld [vmem:[%s1 + $0x460] sm:$0xff]
      %v3766 = vld [vmem:[%s1 + $0x468] sm:$0xff]
      %v3767 = vld [vmem:[%s1 + $0x470] sm:$0xff]
      %v3768 = vld [vmem:[%s1 + $0x478] sm:$0xff]
      %3769 = vmatprep.subr.mxu0 0.0
      %3770 = vmatpush1.msra.mxu0 %v3640
      %3771 = vmatprep.subr.mxu0 0.0
      %3772 = vmatpush1.msra.mxu0 %v3639
      %3773 = vmatprep.subr.mxu0 0.0
      %3774 = vmatpush1.msra.mxu0 %v3638
      %3775 = vmatprep.subr.mxu0 0.0
      %3776 = vmatpush1.msra.mxu0 %v3637
      %3777 = vmatprep.subr.mxu0 0.0
      %3778 = vmatpush1.msra.mxu0 %v3636
      %3779 = vmatprep.subr.mxu0 0.0
      %3780 = vmatpush1.msra.mxu0 %v3635
      %3781 = vmatprep.subr.mxu0 0.0
      %3782 = vmatpush1.msra.mxu0 %v3634
      %3783 = vmatprep.subr.mxu0 0.0
      %3784 = vmatpush1.msra.mxu0 %v3633
      %3785 = vmatprep.subr.mxu0 0.0
      %3786 = vmatpush1.msra.mxu0 %v3632
      %3787 = vmatprep.subr.mxu0 0.0
      %3788 = vmatpush1.msra.mxu0 %v3631
      %3789 = vmatprep.subr.mxu0 0.0
      %3790 = vmatpush1.msra.mxu0 %v3630
      %3791 = vmatprep.subr.mxu0 0.0
      %3792 = vmatpush1.msra.mxu0 %v3629
      %3793 = vmatprep.subr.mxu0 0.0
      %3794 = vmatpush1.msra.mxu0 %v3628
      %3795 = vmatprep.subr.mxu0 0.0
      %3796 = vmatpush1.msra.mxu0 %v3627
      %3797 = vmatprep.subr.mxu0 0.0
      %3798 = vmatpush1.msra.mxu0 %v3626
      %3799 = vmatprep.subr.mxu0 0.0
      %3800 = vmatpush1.msra.mxu0 %v3625
      %3801 = vmatprep.subr.mxu0 0.0
      %3802 = vmatpush2.msra.mxu0 %v3656
      %3803 = vmatprep.subr.mxu0 0.0
      %3804 = vmatpush2.msra.mxu0 %v3655
      %3805 = vmatprep.subr.mxu0 0.0
      %3806 = vmatpush2.msra.mxu0 %v3654
      %3807 = vmatprep.subr.mxu0 0.0
      %3808 = vmatpush2.msra.mxu0 %v3653
      %3809 = vmatprep.subr.mxu0 0.0
      %3810 = vmatpush2.msra.mxu0 %v3652
      %3811 = vmatprep.subr.mxu0 0.0
      %3812 = vmatpush2.msra.mxu0 %v3651
      %3813 = vmatprep.subr.mxu0 0.0
      %3814 = vmatpush2.msra.mxu0 %v3650
      %3815 = vmatprep.subr.mxu0 0.0
      %3816 = vmatpush2.msra.mxu0 %v3649
      %3817 = vmatprep.subr.mxu0 0.0
      %3818 = vmatpush2.msra.mxu0 %v3648
      %3819 = vmatprep.subr.mxu0 0.0
      %3820 = vmatpush2.msra.mxu0 %v3647
      %3821 = vmatprep.subr.mxu0 0.0
      %3822 = vmatpush2.msra.mxu0 %v3646
      %3823 = vmatprep.subr.mxu0 0.0
      %3824 = vmatpush2.msra.mxu0 %v3645
      %3825 = vmatprep.subr.mxu0 0.0
      %3826 = vmatpush2.msra.mxu0 %v3644
      %3827 = vmatprep.subr.mxu0 0.0
      %3828 = vmatpush2.msra.mxu0 %v3643
      %3829 = vmatprep.subr.mxu0 0.0
      %3830 = vmatpush2.msra.mxu0 %v3642
      %3831 = vmatprep.subr.mxu0 0.0
      %3832 = vmatpush2.msra.mxu0 %v3641
      %3833 = vmatprep.mubr.f32.mxu0 %v3338
      %3834 = vmatmul.mubr.f32.gmra.mxu0 %v3337
      %v3835 = vpop.f32.mrf.mxu0
      %v3836 = vadd.f32 0.0, %v3835
      %v3837 = vpop.f32.mrf.mxu0
      %3838 = vmatprep.mubr.f32.mxu0 %v3347
      %3839 = vmatmul.mubr.f32.gmra.mxu0 %v3346
      %v3840 = vpop.f32.mrf.mxu0
      %v3841 = vadd.f32 0.0, %v3840
      %v3842 = vpop.f32.mrf.mxu0
      %3843 = vmatprep.mubr.f32.mxu0 %v3356
      %3844 = vmatmul.mubr.f32.gmra.mxu0 %v3355
      %v3845 = vpop.f32.mrf.mxu0
      %v3846 = vadd.f32 0.0, %v3845
      %v3847 = vpop.f32.mrf.mxu0
      %3848 = vmatprep.mubr.f32.mxu0 %v3365
      %3849 = vmatmul.mubr.f32.gmra.mxu0 %v3364
      %v3850 = vpop.f32.mrf.mxu0
      %v3851 = vadd.f32 0.0, %v3850
      %v3852 = vpop.f32.mrf.mxu0
      %3853 = vmatprep.mubr.f32.mxu0 %v3374
      %3854 = vmatmul.mubr.f32.gmra.mxu0 %v3373
      %v3855 = vpop.f32.mrf.mxu0
      %v3856 = vadd.f32 0.0, %v3855
      %v3857 = vpop.f32.mrf.mxu0
      %3858 = vmatprep.mubr.f32.mxu0 %v3383
      %3859 = vmatmul.mubr.f32.gmra.mxu0 %v3382
      %v3860 = vpop.f32.mrf.mxu0
      %v3861 = vadd.f32 0.0, %v3860
      %v3862 = vpop.f32.mrf.mxu0
      %3863 = vmatprep.mubr.f32.mxu0 %v3392
      %3864 = vmatmul.mubr.f32.gmra.mxu0 %v3391
      %v3865 = vpop.f32.mrf.mxu0
      %v3866 = vadd.f32 0.0, %v3865
      %v3867 = vpop.f32.mrf.mxu0
      %3868 = vmatprep.mubr.f32.mxu0 %v3401
      %3869 = vmatmul.mubr.f32.gmra.mxu0 %v3400
      %v3870 = vpop.f32.mrf.mxu0
      %v3871 = vadd.f32 0.0, %v3870
      %v3872 = vpop.f32.mrf.mxu0
      %3873 = vmatprep.mubr.f32.mxu0 %v3410
      %3874 = vmatmul.mubr.f32.gmra.mxu0 %v3409
      %v3875 = vpop.f32.mrf.mxu0
      %v3876 = vadd.f32 0.0, %v3875
      %v3877 = vpop.f32.mrf.mxu0
      %3878 = vmatprep.mubr.f32.mxu0 %v3419
      %3879 = vmatmul.mubr.f32.gmra.mxu0 %v3418
      %v3880 = vpop.f32.mrf.mxu0
      %v3881 = vadd.f32 0.0, %v3880
      %v3882 = vpop.f32.mrf.mxu0
      %3883 = vmatprep.mubr.f32.mxu0 %v3428
      %3884 = vmatmul.mubr.f32.gmra.mxu0 %v3427
      %v3885 = vpop.f32.mrf.mxu0
      %v3886 = vadd.f32 0.0, %v3885
      %v3887 = vpop.f32.mrf.mxu0
      %3888 = vmatprep.mubr.f32.mxu0 %v3437
      %3889 = vmatmul.mubr.f32.gmra.mxu0 %v3436
      %v3890 = vpop.f32.mrf.mxu0
      %v3891 = vadd.f32 0.0, %v3890
      %v3892 = vpop.f32.mrf.mxu0
      %3893 = vmatprep.mubr.f32.mxu0 %v3446
      %3894 = vmatmul.mubr.f32.gmra.mxu0 %v3445
      %v3895 = vpop.f32.mrf.mxu0
      %v3896 = vadd.f32 0.0, %v3895
      %v3897 = vpop.f32.mrf.mxu0
      %3898 = vmatprep.mubr.f32.mxu0 %v3455
      %3899 = vmatmul.mubr.f32.gmra.mxu0 %v3454
      %v3900 = vpop.f32.mrf.mxu0
      %v3901 = vadd.f32 0.0, %v3900
      %v3902 = vpop.f32.mrf.mxu0
      %3903 = vmatprep.mubr.f32.mxu0 %v3464
      %3904 = vmatmul.mubr.f32.gmra.mxu0 %v3463
      %v3905 = vpop.f32.mrf.mxu0
      %v3906 = vadd.f32 0.0, %v3905
      %v3907 = vpop.f32.mrf.mxu0
      %3908 = vmatprep.mubr.f32.mxu0 %v3473
      %3909 = vmatmul.mubr.f32.gmra.mxu0 %v3472
      %v3910 = vpop.f32.mrf.mxu0
      %v3911 = vadd.f32 0.0, %v3910
      %v3912 = vpop.f32.mrf.mxu0
      %3913 = vmatprep.mubr.f32.mxu0 %v3482
      %3914 = vmatmul.mubr.f32.gmra.mxu0 %v3481
      %v3915 = vpop.f32.mrf.mxu0
      %v3916 = vadd.f32 0.0, %v3915
      %v3917 = vpop.f32.mrf.mxu0
      %3918 = vmatprep.mubr.f32.mxu0 %v3491
      %3919 = vmatmul.mubr.f32.gmra.mxu0 %v3490
      %v3920 = vpop.f32.mrf.mxu0
      %v3921 = vadd.f32 0.0, %v3920
      %v3922 = vpop.f32.mrf.mxu0
      %3923 = vmatprep.mubr.f32.mxu0 %v3500
      %3924 = vmatmul.mubr.f32.gmra.mxu0 %v3499
      %v3925 = vpop.f32.mrf.mxu0
      %v3926 = vadd.f32 0.0, %v3925
      %v3927 = vpop.f32.mrf.mxu0
      %3928 = vmatprep.mubr.f32.mxu0 %v3509
      %3929 = vmatmul.mubr.f32.gmra.mxu0 %v3508
      %v3930 = vpop.f32.mrf.mxu0
      %v3931 = vadd.f32 0.0, %v3930
      %v3932 = vpop.f32.mrf.mxu0
      %3933 = vmatprep.mubr.f32.mxu0 %v3518
      %3934 = vmatmul.mubr.f32.gmra.mxu0 %v3517
      %v3935 = vpop.f32.mrf.mxu0
      %v3936 = vadd.f32 0.0, %v3935
      %v3937 = vpop.f32.mrf.mxu0
      %3938 = vmatprep.mubr.f32.mxu0 %v3527
      %3939 = vmatmul.mubr.f32.gmra.mxu0 %v3526
      %v3940 = vpop.f32.mrf.mxu0
      %v3941 = vadd.f32 0.0, %v3940
      %v3942 = vpop.f32.mrf.mxu0
      %3943 = vmatprep.mubr.f32.mxu0 %v3536
      %3944 = vmatmul.mubr.f32.gmra.mxu0 %v3535
      %v3945 = vpop.f32.mrf.mxu0
      %v3946 = vadd.f32 0.0, %v3945
      %v3947 = vpop.f32.mrf.mxu0
      %3948 = vmatprep.mubr.f32.mxu0 %v3545
      %3949 = vmatmul.mubr.f32.gmra.mxu0 %v3544
      %v3950 = vpop.f32.mrf.mxu0
      %v3951 = vadd.f32 0.0, %v3950
      %v3952 = vpop.f32.mrf.mxu0
      %3953 = vmatprep.mubr.f32.mxu0 %v3554
      %3954 = vmatmul.mubr.f32.gmra.mxu0 %v3553
      %v3955 = vpop.f32.mrf.mxu0
      %v3956 = vadd.f32 0.0, %v3955
      %v3957 = vpop.f32.mrf.mxu0
      %3958 = vmatprep.mubr.f32.mxu0 %v3563
      %3959 = vmatmul.mubr.f32.gmra.mxu0 %v3562
      %v3960 = vpop.f32.mrf.mxu0
      %v3961 = vadd.f32 0.0, %v3960
      %v3962 = vpop.f32.mrf.mxu0
      %3963 = vmatprep.mubr.f32.mxu0 %v3572
      %3964 = vmatmul.mubr.f32.gmra.mxu0 %v3571
      %v3965 = vpop.f32.mrf.mxu0
      %v3966 = vadd.f32 0.0, %v3965
      %v3967 = vpop.f32.mrf.mxu0
      %3968 = vmatprep.mubr.f32.mxu0 %v3581
      %3969 = vmatmul.mubr.f32.gmra.mxu0 %v3580
      %v3970 = vpop.f32.mrf.mxu0
      %v3971 = vadd.f32 0.0, %v3970
      %v3972 = vpop.f32.mrf.mxu0
      %3973 = vmatprep.mubr.f32.mxu0 %v3590
      %3974 = vmatmul.mubr.f32.gmra.mxu0 %v3589
      %v3975 = vpop.f32.mrf.mxu0
      %v3976 = vadd.f32 0.0, %v3975
      %v3977 = vpop.f32.mrf.mxu0
      %3978 = vmatprep.mubr.f32.mxu0 %v3599
      %3979 = vmatmul.mubr.f32.gmra.mxu0 %v3598
      %v3980 = vpop.f32.mrf.mxu0
      %v3981 = vadd.f32 0.0, %v3980
      %v3982 = vpop.f32.mrf.mxu0
      %3983 = vmatprep.mubr.f32.mxu0 %v3608
      %3984 = vmatmul.mubr.f32.gmra.mxu0 %v3607
      %v3985 = vpop.f32.mrf.mxu0
      %v3986 = vadd.f32 0.0, %v3985
      %v3987 = vpop.f32.mrf.mxu0
      %3988 = vmatprep.mubr.f32.mxu0 %v3617
      %3989 = vmatmul.mubr.f32.gmra.mxu0 %v3616
      %v3990 = vpop.f32.mrf.mxu0
      %v3991 = vadd.f32 0.0, %v3990
      %v3992 = vpop.f32.mrf.mxu0
      %3993 = vdwg.mxu0
      %3994 = vmatprep.subr.mxu0 0.0
      %3995 = vmatpush1.msra.mxu0 %v3672
      %3996 = vmatprep.subr.mxu0 0.0
      %3997 = vmatpush1.msra.mxu0 %v3671
      %3998 = vmatprep.subr.mxu0 0.0
      %3999 = vmatpush1.msra.mxu0 %v3670
      %4000 = vmatprep.subr.mxu0 0.0
      %4001 = vmatpush1.msra.mxu0 %v3669
      %4002 = vmatprep.subr.mxu0 0.0
      %4003 = vmatpush1.msra.mxu0 %v3668
      %4004 = vmatprep.subr.mxu0 0.0
      %4005 = vmatpush1.msra.mxu0 %v3667
      %4006 = vmatprep.subr.mxu0 0.0
      %4007 = vmatpush1.msra.mxu0 %v3666
      %4008 = vmatprep.subr.mxu0 0.0
      %4009 = vmatpush1.msra.mxu0 %v3665
      %4010 = vmatprep.subr.mxu0 0.0
      %4011 = vmatpush1.msra.mxu0 %v3664
      %4012 = vmatprep.subr.mxu0 0.0
      %4013 = vmatpush1.msra.mxu0 %v3663
      %4014 = vmatprep.subr.mxu0 0.0
      %4015 = vmatpush1.msra.mxu0 %v3662
      %4016 = vmatprep.subr.mxu0 0.0
      %4017 = vmatpush1.msra.mxu0 %v3661
      %4018 = vmatprep.subr.mxu0 0.0
      %4019 = vmatpush1.msra.mxu0 %v3660
      %4020 = vmatprep.subr.mxu0 0.0
      %4021 = vmatpush1.msra.mxu0 %v3659
      %4022 = vmatprep.subr.mxu0 0.0
      %4023 = vmatpush1.msra.mxu0 %v3658
      %4024 = vmatprep.subr.mxu0 0.0
      %4025 = vmatpush1.msra.mxu0 %v3657
      %4026 = vmatprep.subr.mxu0 0.0
      %4027 = vmatpush2.msra.mxu0 %v3688
      %4028 = vmatprep.subr.mxu0 0.0
      %4029 = vmatpush2.msra.mxu0 %v3687
      %4030 = vmatprep.subr.mxu0 0.0
      %4031 = vmatpush2.msra.mxu0 %v3686
      %4032 = vmatprep.subr.mxu0 0.0
      %4033 = vmatpush2.msra.mxu0 %v3685
      %4034 = vmatprep.subr.mxu0 0.0
      %4035 = vmatpush2.msra.mxu0 %v3684
      %4036 = vmatprep.subr.mxu0 0.0
      %4037 = vmatpush2.msra.mxu0 %v3683
      %4038 = vmatprep.subr.mxu0 0.0
      %4039 = vmatpush2.msra.mxu0 %v3682
      %4040 = vmatprep.subr.mxu0 0.0
      %4041 = vmatpush2.msra.mxu0 %v3681
      %4042 = vmatprep.subr.mxu0 0.0
      %4043 = vmatpush2.msra.mxu0 %v3680
      %4044 = vmatprep.subr.mxu0 0.0
      %4045 = vmatpush2.msra.mxu0 %v3679
      %4046 = vmatprep.subr.mxu0 0.0
      %4047 = vmatpush2.msra.mxu0 %v3678
      %4048 = vmatprep.subr.mxu0 0.0
      %4049 = vmatpush2.msra.mxu0 %v3677
      %4050 = vmatprep.subr.mxu0 0.0
      %4051 = vmatpush2.msra.mxu0 %v3676
      %4052 = vmatprep.subr.mxu0 0.0
      %4053 = vmatpush2.msra.mxu0 %v3675
      %4054 = vmatprep.subr.mxu0 0.0
      %4055 = vmatpush2.msra.mxu0 %v3674
      %4056 = vmatprep.subr.mxu0 0.0
      %4057 = vmatpush2.msra.mxu0 %v3673
      %4058 = vmatprep.mubr.f32.mxu0 %v3340
      %4059 = vmatmul.mubr.f32.gmra.mxu0 %v3339
      %v4060 = vpop.f32.mrf.mxu0
      %v4061 = vadd.f32 %v3836, %v4060
      %v4062 = vpop.f32.mrf.mxu0
      %4063 = vmatprep.mubr.f32.mxu0 %v3349
      %4064 = vmatmul.mubr.f32.gmra.mxu0 %v3348
      %v4065 = vpop.f32.mrf.mxu0
      %v4066 = vadd.f32 %v3841, %v4065
      %v4067 = vpop.f32.mrf.mxu0
      %4068 = vmatprep.mubr.f32.mxu0 %v3358
      %4069 = vmatmul.mubr.f32.gmra.mxu0 %v3357
      %v4070 = vpop.f32.mrf.mxu0
      %v4071 = vadd.f32 %v3846, %v4070
      %v4072 = vpop.f32.mrf.mxu0
      %4073 = vmatprep.mubr.f32.mxu0 %v3367
      %4074 = vmatmul.mubr.f32.gmra.mxu0 %v3366
      %v4075 = vpop.f32.mrf.mxu0
      %v4076 = vadd.f32 %v3851, %v4075
      %v4077 = vpop.f32.mrf.mxu0
      %4078 = vmatprep.mubr.f32.mxu0 %v3376
      %4079 = vmatmul.mubr.f32.gmra.mxu0 %v3375
      %v4080 = vpop.f32.mrf.mxu0
      %v4081 = vadd.f32 %v3856, %v4080
      %v4082 = vpop.f32.mrf.mxu0
      %4083 = vmatprep.mubr.f32.mxu0 %v3385
      %4084 = vmatmul.mubr.f32.gmra.mxu0 %v3384
      %v4085 = vpop.f32.mrf.mxu0
      %v4086 = vadd.f32 %v3861, %v4085
      %v4087 = vpop.f32.mrf.mxu0
      %4088 = vmatprep.mubr.f32.mxu0 %v3394
      %4089 = vmatmul.mubr.f32.gmra.mxu0 %v3393
      %v4090 = vpop.f32.mrf.mxu0
      %v4091 = vadd.f32 %v3866, %v4090
      %v4092 = vpop.f32.mrf.mxu0
      %4093 = vmatprep.mubr.f32.mxu0 %v3403
      %4094 = vmatmul.mubr.f32.gmra.mxu0 %v3402
      %v4095 = vpop.f32.mrf.mxu0
      %v4096 = vadd.f32 %v3871, %v4095
      %v4097 = vpop.f32.mrf.mxu0
      %4098 = vmatprep.mubr.f32.mxu0 %v3412
      %4099 = vmatmul.mubr.f32.gmra.mxu0 %v3411
      %v4100 = vpop.f32.mrf.mxu0
      %v4101 = vadd.f32 %v3876, %v4100
      %v4102 = vpop.f32.mrf.mxu0
      %4103 = vmatprep.mubr.f32.mxu0 %v3421
      %4104 = vmatmul.mubr.f32.gmra.mxu0 %v3420
      %v4105 = vpop.f32.mrf.mxu0
      %v4106 = vadd.f32 %v3881, %v4105
      %v4107 = vpop.f32.mrf.mxu0
      %4108 = vmatprep.mubr.f32.mxu0 %v3430
      %4109 = vmatmul.mubr.f32.gmra.mxu0 %v3429
      %v4110 = vpop.f32.mrf.mxu0
      %v4111 = vadd.f32 %v3886, %v4110
      %v4112 = vpop.f32.mrf.mxu0
      %4113 = vmatprep.mubr.f32.mxu0 %v3439
      %4114 = vmatmul.mubr.f32.gmra.mxu0 %v3438
      %v4115 = vpop.f32.mrf.mxu0
      %v4116 = vadd.f32 %v3891, %v4115
      %v4117 = vpop.f32.mrf.mxu0
      %4118 = vmatprep.mubr.f32.mxu0 %v3448
      %4119 = vmatmul.mubr.f32.gmra.mxu0 %v3447
      %v4120 = vpop.f32.mrf.mxu0
      %v4121 = vadd.f32 %v3896, %v4120
      %v4122 = vpop.f32.mrf.mxu0
      %4123 = vmatprep.mubr.f32.mxu0 %v3457
      %4124 = vmatmul.mubr.f32.gmra.mxu0 %v3456
      %v4125 = vpop.f32.mrf.mxu0
      %v4126 = vadd.f32 %v3901, %v4125
      %v4127 = vpop.f32.mrf.mxu0
      %4128 = vmatprep.mubr.f32.mxu0 %v3466
      %4129 = vmatmul.mubr.f32.gmra.mxu0 %v3465
      %v4130 = vpop.f32.mrf.mxu0
      %v4131 = vadd.f32 %v3906, %v4130
      %v4132 = vpop.f32.mrf.mxu0
      %4133 = vmatprep.mubr.f32.mxu0 %v3475
      %4134 = vmatmul.mubr.f32.gmra.mxu0 %v3474
      %v4135 = vpop.f32.mrf.mxu0
      %v4136 = vadd.f32 %v3911, %v4135
      %v4137 = vpop.f32.mrf.mxu0
      %4138 = vmatprep.mubr.f32.mxu0 %v3484
      %4139 = vmatmul.mubr.f32.gmra.mxu0 %v3483
      %v4140 = vpop.f32.mrf.mxu0
      %v4141 = vadd.f32 %v3916, %v4140
      %v4142 = vpop.f32.mrf.mxu0
      %4143 = vmatprep.mubr.f32.mxu0 %v3493
      %4144 = vmatmul.mubr.f32.gmra.mxu0 %v3492
      %v4145 = vpop.f32.mrf.mxu0
      %v4146 = vadd.f32 %v3921, %v4145
      %v4147 = vpop.f32.mrf.mxu0
      %4148 = vmatprep.mubr.f32.mxu0 %v3502
      %4149 = vmatmul.mubr.f32.gmra.mxu0 %v3501
      %v4150 = vpop.f32.mrf.mxu0
      %v4151 = vadd.f32 %v3926, %v4150
      %v4152 = vpop.f32.mrf.mxu0
      %4153 = vmatprep.mubr.f32.mxu0 %v3511
      %4154 = vmatmul.mubr.f32.gmra.mxu0 %v3510
      %v4155 = vpop.f32.mrf.mxu0
      %v4156 = vadd.f32 %v3931, %v4155
      %v4157 = vpop.f32.mrf.mxu0
      %4158 = vmatprep.mubr.f32.mxu0 %v3520
      %4159 = vmatmul.mubr.f32.gmra.mxu0 %v3519
      %v4160 = vpop.f32.mrf.mxu0
      %v4161 = vadd.f32 %v3936, %v4160
      %v4162 = vpop.f32.mrf.mxu0
      %4163 = vmatprep.mubr.f32.mxu0 %v3529
      %4164 = vmatmul.mubr.f32.gmra.mxu0 %v3528
      %v4165 = vpop.f32.mrf.mxu0
      %v4166 = vadd.f32 %v3941, %v4165
      %v4167 = vpop.f32.mrf.mxu0
      %4168 = vmatprep.mubr.f32.mxu0 %v3538
      %4169 = vmatmul.mubr.f32.gmra.mxu0 %v3537
      %v4170 = vpop.f32.mrf.mxu0
      %v4171 = vadd.f32 %v3946, %v4170
      %v4172 = vpop.f32.mrf.mxu0
      %4173 = vmatprep.mubr.f32.mxu0 %v3547
      %4174 = vmatmul.mubr.f32.gmra.mxu0 %v3546
      %v4175 = vpop.f32.mrf.mxu0
      %v4176 = vadd.f32 %v3951, %v4175
      %v4177 = vpop.f32.mrf.mxu0
      %4178 = vmatprep.mubr.f32.mxu0 %v3556
      %4179 = vmatmul.mubr.f32.gmra.mxu0 %v3555
      %v4180 = vpop.f32.mrf.mxu0
      %v4181 = vadd.f32 %v3956, %v4180
      %v4182 = vpop.f32.mrf.mxu0
      %4183 = vmatprep.mubr.f32.mxu0 %v3565
      %4184 = vmatmul.mubr.f32.gmra.mxu0 %v3564
      %v4185 = vpop.f32.mrf.mxu0
      %v4186 = vadd.f32 %v3961, %v4185
      %v4187 = vpop.f32.mrf.mxu0
      %4188 = vmatprep.mubr.f32.mxu0 %v3574
      %4189 = vmatmul.mubr.f32.gmra.mxu0 %v3573
      %v4190 = vpop.f32.mrf.mxu0
      %v4191 = vadd.f32 %v3966, %v4190
      %v4192 = vpop.f32.mrf.mxu0
      %4193 = vmatprep.mubr.f32.mxu0 %v3583
      %4194 = vmatmul.mubr.f32.gmra.mxu0 %v3582
      %v4195 = vpop.f32.mrf.mxu0
      %v4196 = vadd.f32 %v3971, %v4195
      %v4197 = vpop.f32.mrf.mxu0
      %4198 = vmatprep.mubr.f32.mxu0 %v3592
      %4199 = vmatmul.mubr.f32.gmra.mxu0 %v3591
      %v4200 = vpop.f32.mrf.mxu0
      %v4201 = vadd.f32 %v3976, %v4200
      %v4202 = vpop.f32.mrf.mxu0
      %4203 = vmatprep.mubr.f32.mxu0 %v3601
      %4204 = vmatmul.mubr.f32.gmra.mxu0 %v3600
      %v4205 = vpop.f32.mrf.mxu0
      %v4206 = vadd.f32 %v3981, %v4205
      %v4207 = vpop.f32.mrf.mxu0
      %4208 = vmatprep.mubr.f32.mxu0 %v3610
      %4209 = vmatmul.mubr.f32.gmra.mxu0 %v3609
      %v4210 = vpop.f32.mrf.mxu0
      %v4211 = vadd.f32 %v3986, %v4210
      %v4212 = vpop.f32.mrf.mxu0
      %4213 = vmatprep.mubr.f32.mxu0 %v3619
      %4214 = vmatmul.mubr.f32.gmra.mxu0 %v3618
      %v4215 = vpop.f32.mrf.mxu0
      %v4216 = vadd.f32 %v3991, %v4215
      %v4217 = vpop.f32.mrf.mxu0
      %4218 = vdwg.mxu0
      %4219 = vmatprep.subr.mxu0 0.0
      %4220 = vmatpush1.msra.mxu0 %v3704
      %4221 = vmatprep.subr.mxu0 0.0
      %4222 = vmatpush1.msra.mxu0 %v3703
      %4223 = vmatprep.subr.mxu0 0.0
      %4224 = vmatpush1.msra.mxu0 %v3702
      %4225 = vmatprep.subr.mxu0 0.0
      %4226 = vmatpush1.msra.mxu0 %v3701
      %4227 = vmatprep.subr.mxu0 0.0
      %4228 = vmatpush1.msra.mxu0 %v3700
      %4229 = vmatprep.subr.mxu0 0.0
      %4230 = vmatpush1.msra.mxu0 %v3699
      %4231 = vmatprep.subr.mxu0 0.0
      %4232 = vmatpush1.msra.mxu0 %v3698
      %4233 = vmatprep.subr.mxu0 0.0
      %4234 = vmatpush1.msra.mxu0 %v3697
      %4235 = vmatprep.subr.mxu0 0.0
      %4236 = vmatpush1.msra.mxu0 %v3696
      %4237 = vmatprep.subr.mxu0 0.0
      %4238 = vmatpush1.msra.mxu0 %v3695
      %4239 = vmatprep.subr.mxu0 0.0
      %4240 = vmatpush1.msra.mxu0 %v3694
      %4241 = vmatprep.subr.mxu0 0.0
      %4242 = vmatpush1.msra.mxu0 %v3693
      %4243 = vmatprep.subr.mxu0 0.0
      %4244 = vmatpush1.msra.mxu0 %v3692
      %4245 = vmatprep.subr.mxu0 0.0
      %4246 = vmatpush1.msra.mxu0 %v3691
      %4247 = vmatprep.subr.mxu0 0.0
      %4248 = vmatpush1.msra.mxu0 %v3690
      %4249 = vmatprep.subr.mxu0 0.0
      %4250 = vmatpush1.msra.mxu0 %v3689
      %4251 = vmatprep.subr.mxu0 0.0
      %4252 = vmatpush2.msra.mxu0 %v3720
      %4253 = vmatprep.subr.mxu0 0.0
      %4254 = vmatpush2.msra.mxu0 %v3719
      %4255 = vmatprep.subr.mxu0 0.0
      %4256 = vmatpush2.msra.mxu0 %v3718
      %4257 = vmatprep.subr.mxu0 0.0
      %4258 = vmatpush2.msra.mxu0 %v3717
      %4259 = vmatprep.subr.mxu0 0.0
      %4260 = vmatpush2.msra.mxu0 %v3716
      %4261 = vmatprep.subr.mxu0 0.0
      %4262 = vmatpush2.msra.mxu0 %v3715
      %4263 = vmatprep.subr.mxu0 0.0
      %4264 = vmatpush2.msra.mxu0 %v3714
      %4265 = vmatprep.subr.mxu0 0.0
      %4266 = vmatpush2.msra.mxu0 %v3713
      %4267 = vmatprep.subr.mxu0 0.0
      %4268 = vmatpush2.msra.mxu0 %v3712
      %4269 = vmatprep.subr.mxu0 0.0
      %4270 = vmatpush2.msra.mxu0 %v3711
      %4271 = vmatprep.subr.mxu0 0.0
      %4272 = vmatpush2.msra.mxu0 %v3710
      %4273 = vmatprep.subr.mxu0 0.0
      %4274 = vmatpush2.msra.mxu0 %v3709
      %4275 = vmatprep.subr.mxu0 0.0
      %4276 = vmatpush2.msra.mxu0 %v3708
      %4277 = vmatprep.subr.mxu0 0.0
      %4278 = vmatpush2.msra.mxu0 %v3707
      %4279 = vmatprep.subr.mxu0 0.0
      %4280 = vmatpush2.msra.mxu0 %v3706
      %4281 = vmatprep.subr.mxu0 0.0
      %4282 = vmatpush2.msra.mxu0 %v3705
      %4283 = vmatprep.mubr.f32.mxu0 %v3342
      %4284 = vmatmul.mubr.f32.gmra.mxu0 %v3341
      %v4285 = vpop.f32.mrf.mxu0
      %v4286 = vadd.f32 %v4061, %v4285
      %v4287 = vpop.f32.mrf.mxu0
      %4288 = vmatprep.mubr.f32.mxu0 %v3351
      %4289 = vmatmul.mubr.f32.gmra.mxu0 %v3350
      %v4290 = vpop.f32.mrf.mxu0
      %v4291 = vadd.f32 %v4066, %v4290
      %v4292 = vpop.f32.mrf.mxu0
      %4293 = vmatprep.mubr.f32.mxu0 %v3360
      %4294 = vmatmul.mubr.f32.gmra.mxu0 %v3359
      %v4295 = vpop.f32.mrf.mxu0
      %v4296 = vadd.f32 %v4071, %v4295
      %v4297 = vpop.f32.mrf.mxu0
      %4298 = vmatprep.mubr.f32.mxu0 %v3369
      %4299 = vmatmul.mubr.f32.gmra.mxu0 %v3368
      %v4300 = vpop.f32.mrf.mxu0
      %v4301 = vadd.f32 %v4076, %v4300
      %v4302 = vpop.f32.mrf.mxu0
      %4303 = vmatprep.mubr.f32.mxu0 %v3378
      %4304 = vmatmul.mubr.f32.gmra.mxu0 %v3377
      %v4305 = vpop.f32.mrf.mxu0
      %v4306 = vadd.f32 %v4081, %v4305
      %v4307 = vpop.f32.mrf.mxu0
      %4308 = vmatprep.mubr.f32.mxu0 %v3387
      %4309 = vmatmul.mubr.f32.gmra.mxu0 %v3386
      %v4310 = vpop.f32.mrf.mxu0
      %v4311 = vadd.f32 %v4086, %v4310
      %v4312 = vpop.f32.mrf.mxu0
      %4313 = vmatprep.mubr.f32.mxu0 %v3396
      %4314 = vmatmul.mubr.f32.gmra.mxu0 %v3395
      %v4315 = vpop.f32.mrf.mxu0
      %v4316 = vadd.f32 %v4091, %v4315
      %v4317 = vpop.f32.mrf.mxu0
      %4318 = vmatprep.mubr.f32.mxu0 %v3405
      %4319 = vmatmul.mubr.f32.gmra.mxu0 %v3404
      %v4320 = vpop.f32.mrf.mxu0
      %v4321 = vadd.f32 %v4096, %v4320
      %v4322 = vpop.f32.mrf.mxu0
      %4323 = vmatprep.mubr.f32.mxu0 %v3414
      %4324 = vmatmul.mubr.f32.gmra.mxu0 %v3413
      %v4325 = vpop.f32.mrf.mxu0
      %v4326 = vadd.f32 %v4101, %v4325
      %v4327 = vpop.f32.mrf.mxu0
      %4328 = vmatprep.mubr.f32.mxu0 %v3423
      %4329 = vmatmul.mubr.f32.gmra.mxu0 %v3422
      %v4330 = vpop.f32.mrf.mxu0
      %v4331 = vadd.f32 %v4106, %v4330
      %v4332 = vpop.f32.mrf.mxu0
      %4333 = vmatprep.mubr.f32.mxu0 %v3432
      %4334 = vmatmul.mubr.f32.gmra.mxu0 %v3431
      %v4335 = vpop.f32.mrf.mxu0
      %v4336 = vadd.f32 %v4111, %v4335
      %v4337 = vpop.f32.mrf.mxu0
      %4338 = vmatprep.mubr.f32.mxu0 %v3441
      %4339 = vmatmul.mubr.f32.gmra.mxu0 %v3440
      %v4340 = vpop.f32.mrf.mxu0
      %v4341 = vadd.f32 %v4116, %v4340
      %v4342 = vpop.f32.mrf.mxu0
      %4343 = vmatprep.mubr.f32.mxu0 %v3450
      %4344 = vmatmul.mubr.f32.gmra.mxu0 %v3449
      %v4345 = vpop.f32.mrf.mxu0
      %v4346 = vadd.f32 %v4121, %v4345
      %v4347 = vpop.f32.mrf.mxu0
      %4348 = vmatprep.mubr.f32.mxu0 %v3459
      %4349 = vmatmul.mubr.f32.gmra.mxu0 %v3458
      %v4350 = vpop.f32.mrf.mxu0
      %v4351 = vadd.f32 %v4126, %v4350
      %v4352 = vpop.f32.mrf.mxu0
      %4353 = vmatprep.mubr.f32.mxu0 %v3468
      %4354 = vmatmul.mubr.f32.gmra.mxu0 %v3467
      %v4355 = vpop.f32.mrf.mxu0
      %v4356 = vadd.f32 %v4131, %v4355
      %v4357 = vpop.f32.mrf.mxu0
      %4358 = vmatprep.mubr.f32.mxu0 %v3477
      %4359 = vmatmul.mubr.f32.gmra.mxu0 %v3476
      %v4360 = vpop.f32.mrf.mxu0
      %v4361 = vadd.f32 %v4136, %v4360
      %v4362 = vpop.f32.mrf.mxu0
      %4363 = vmatprep.mubr.f32.mxu0 %v3486
      %4364 = vmatmul.mubr.f32.gmra.mxu0 %v3485
      %v4365 = vpop.f32.mrf.mxu0
      %v4366 = vadd.f32 %v4141, %v4365
      %v4367 = vpop.f32.mrf.mxu0
      %4368 = vmatprep.mubr.f32.mxu0 %v3495
      %4369 = vmatmul.mubr.f32.gmra.mxu0 %v3494
      %v4370 = vpop.f32.mrf.mxu0
      %v4371 = vadd.f32 %v4146, %v4370
      %v4372 = vpop.f32.mrf.mxu0
      %4373 = vmatprep.mubr.f32.mxu0 %v3504
      %4374 = vmatmul.mubr.f32.gmra.mxu0 %v3503
      %v4375 = vpop.f32.mrf.mxu0
      %v4376 = vadd.f32 %v4151, %v4375
      %v4377 = vpop.f32.mrf.mxu0
      %4378 = vmatprep.mubr.f32.mxu0 %v3513
      %4379 = vmatmul.mubr.f32.gmra.mxu0 %v3512
      %v4380 = vpop.f32.mrf.mxu0
      %v4381 = vadd.f32 %v4156, %v4380
      %v4382 = vpop.f32.mrf.mxu0
      %4383 = vmatprep.mubr.f32.mxu0 %v3522
      %4384 = vmatmul.mubr.f32.gmra.mxu0 %v3521
      %v4385 = vpop.f32.mrf.mxu0
      %v4386 = vadd.f32 %v4161, %v4385
      %v4387 = vpop.f32.mrf.mxu0
      %4388 = vmatprep.mubr.f32.mxu0 %v3531
      %4389 = vmatmul.mubr.f32.gmra.mxu0 %v3530
      %v4390 = vpop.f32.mrf.mxu0
      %v4391 = vadd.f32 %v4166, %v4390
      %v4392 = vpop.f32.mrf.mxu0
      %4393 = vmatprep.mubr.f32.mxu0 %v3540
      %4394 = vmatmul.mubr.f32.gmra.mxu0 %v3539
      %v4395 = vpop.f32.mrf.mxu0
      %v4396 = vadd.f32 %v4171, %v4395
      %v4397 = vpop.f32.mrf.mxu0
      %4398 = vmatprep.mubr.f32.mxu0 %v3549
      %4399 = vmatmul.mubr.f32.gmra.mxu0 %v3548
      %v4400 = vpop.f32.mrf.mxu0
      %v4401 = vadd.f32 %v4176, %v4400
      %v4402 = vpop.f32.mrf.mxu0
      %4403 = vmatprep.mubr.f32.mxu0 %v3558
      %4404 = vmatmul.mubr.f32.gmra.mxu0 %v3557
      %v4405 = vpop.f32.mrf.mxu0
      %v4406 = vadd.f32 %v4181, %v4405
      %v4407 = vpop.f32.mrf.mxu0
      %4408 = vmatprep.mubr.f32.mxu0 %v3567
      %4409 = vmatmul.mubr.f32.gmra.mxu0 %v3566
      %v4410 = vpop.f32.mrf.mxu0
      %v4411 = vadd.f32 %v4186, %v4410
      %v4412 = vpop.f32.mrf.mxu0
      %4413 = vmatprep.mubr.f32.mxu0 %v3576
      %4414 = vmatmul.mubr.f32.gmra.mxu0 %v3575
      %v4415 = vpop.f32.mrf.mxu0
      %v4416 = vadd.f32 %v4191, %v4415
      %v4417 = vpop.f32.mrf.mxu0
      %4418 = vmatprep.mubr.f32.mxu0 %v3585
      %4419 = vmatmul.mubr.f32.gmra.mxu0 %v3584
      %v4420 = vpop.f32.mrf.mxu0
      %v4421 = vadd.f32 %v4196, %v4420
      %v4422 = vpop.f32.mrf.mxu0
      %4423 = vmatprep.mubr.f32.mxu0 %v3594
      %4424 = vmatmul.mubr.f32.gmra.mxu0 %v3593
      %v4425 = vpop.f32.mrf.mxu0
      %v4426 = vadd.f32 %v4201, %v4425
      %v4427 = vpop.f32.mrf.mxu0
      %4428 = vmatprep.mubr.f32.mxu0 %v3603
      %4429 = vmatmul.mubr.f32.gmra.mxu0 %v3602
      %v4430 = vpop.f32.mrf.mxu0
      %v4431 = vadd.f32 %v4206, %v4430
      %v4432 = vpop.f32.mrf.mxu0
      %4433 = vmatprep.mubr.f32.mxu0 %v3612
      %4434 = vmatmul.mubr.f32.gmra.mxu0 %v3611
      %v4435 = vpop.f32.mrf.mxu0
      %v4436 = vadd.f32 %v4211, %v4435
      %v4437 = vpop.f32.mrf.mxu0
      %4438 = vmatprep.mubr.f32.mxu0 %v3621
      %4439 = vmatmul.mubr.f32.gmra.mxu0 %v3620
      %v4440 = vpop.f32.mrf.mxu0
      %v4441 = vadd.f32 %v4216, %v4440
      %v4442 = vpop.f32.mrf.mxu0
      %4443 = vdwg.mxu0
      %4444 = vmatprep.subr.mxu0 0.0
      %4445 = vmatpush1.msra.mxu0 %v3736
      %4446 = vmatprep.subr.mxu0 0.0
      %4447 = vmatpush1.msra.mxu0 %v3735
      %4448 = vmatprep.subr.mxu0 0.0
      %4449 = vmatpush1.msra.mxu0 %v3734
      %4450 = vmatprep.subr.mxu0 0.0
      %4451 = vmatpush1.msra.mxu0 %v3733
      %4452 = vmatprep.subr.mxu0 0.0
      %4453 = vmatpush1.msra.mxu0 %v3732
      %4454 = vmatprep.subr.mxu0 0.0
      %4455 = vmatpush1.msra.mxu0 %v3731
      %4456 = vmatprep.subr.mxu0 0.0
      %4457 = vmatpush1.msra.mxu0 %v3730
      %4458 = vmatprep.subr.mxu0 0.0
      %4459 = vmatpush1.msra.mxu0 %v3729
      %4460 = vmatprep.subr.mxu0 0.0
      %4461 = vmatpush1.msra.mxu0 %v3728
      %4462 = vmatprep.subr.mxu0 0.0
      %4463 = vmatpush1.msra.mxu0 %v3727
      %4464 = vmatprep.subr.mxu0 0.0
      %4465 = vmatpush1.msra.mxu0 %v3726
      %4466 = vmatprep.subr.mxu0 0.0
      %4467 = vmatpush1.msra.mxu0 %v3725
      %4468 = vmatprep.subr.mxu0 0.0
      %4469 = vmatpush1.msra.mxu0 %v3724
      %4470 = vmatprep.subr.mxu0 0.0
      %4471 = vmatpush1.msra.mxu0 %v3723
      %4472 = vmatprep.subr.mxu0 0.0
      %4473 = vmatpush1.msra.mxu0 %v3722
      %4474 = vmatprep.subr.mxu0 0.0
      %4475 = vmatpush1.msra.mxu0 %v3721
      %4476 = vmatprep.subr.mxu0 0.0
      %4477 = vmatpush2.msra.mxu0 %v3752
      %4478 = vmatprep.subr.mxu0 0.0
      %4479 = vmatpush2.msra.mxu0 %v3751
      %4480 = vmatprep.subr.mxu0 0.0
      %4481 = vmatpush2.msra.mxu0 %v3750
      %4482 = vmatprep.subr.mxu0 0.0
      %4483 = vmatpush2.msra.mxu0 %v3749
      %4484 = vmatprep.subr.mxu0 0.0
      %4485 = vmatpush2.msra.mxu0 %v3748
      %4486 = vmatprep.subr.mxu0 0.0
      %4487 = vmatpush2.msra.mxu0 %v3747
      %4488 = vmatprep.subr.mxu0 0.0
      %4489 = vmatpush2.msra.mxu0 %v3746
      %4490 = vmatprep.subr.mxu0 0.0
      %4491 = vmatpush2.msra.mxu0 %v3745
      %4492 = vmatprep.subr.mxu0 0.0
      %4493 = vmatpush2.msra.mxu0 %v3744
      %4494 = vmatprep.subr.mxu0 0.0
      %4495 = vmatpush2.msra.mxu0 %v3743
      %4496 = vmatprep.subr.mxu0 0.0
      %4497 = vmatpush2.msra.mxu0 %v3742
      %4498 = vmatprep.subr.mxu0 0.0
      %4499 = vmatpush2.msra.mxu0 %v3741
      %4500 = vmatprep.subr.mxu0 0.0
      %4501 = vmatpush2.msra.mxu0 %v3740
      %4502 = vmatprep.subr.mxu0 0.0
      %4503 = vmatpush2.msra.mxu0 %v3739
      %4504 = vmatprep.subr.mxu0 0.0
      %4505 = vmatpush2.msra.mxu0 %v3738
      %4506 = vmatprep.subr.mxu0 0.0
      %4507 = vmatpush2.msra.mxu0 %v3737
      %4508 = vmatprep.mubr.f32.mxu0 %v3344
      %4509 = vmatmul.mubr.f32.gmra.mxu0 %v3343
      %v4510 = vpop.f32.mrf.mxu0
      %v4511 = vadd.f32 %v4286, %v4510
      %v4512 = vpop.f32.mrf.mxu0
      %4513 = vmatprep.mubr.f32.mxu0 %v3353
      %4514 = vmatmul.mubr.f32.gmra.mxu0 %v3352
      %v4515 = vpop.f32.mrf.mxu0
      %v4516 = vadd.f32 %v4291, %v4515
      %v4517 = vpop.f32.mrf.mxu0
      %4518 = vmatprep.mubr.f32.mxu0 %v3362
      %4519 = vmatmul.mubr.f32.gmra.mxu0 %v3361
      %v4520 = vpop.f32.mrf.mxu0
      %v4521 = vadd.f32 %v4296, %v4520
      %v4522 = vpop.f32.mrf.mxu0
      %4523 = vmatprep.mubr.f32.mxu0 %v3371
      %4524 = vmatmul.mubr.f32.gmra.mxu0 %v3370
      %v4525 = vpop.f32.mrf.mxu0
      %v4526 = vadd.f32 %v4301, %v4525
      %v4527 = vpop.f32.mrf.mxu0
      %4528 = vmatprep.mubr.f32.mxu0 %v3380
      %4529 = vmatmul.mubr.f32.gmra.mxu0 %v3379
      %v4530 = vpop.f32.mrf.mxu0
      %v4531 = vadd.f32 %v4306, %v4530
      %v4532 = vpop.f32.mrf.mxu0
      %4533 = vmatprep.mubr.f32.mxu0 %v3389
      %4534 = vmatmul.mubr.f32.gmra.mxu0 %v3388
      %v4535 = vpop.f32.mrf.mxu0
      %v4536 = vadd.f32 %v4311, %v4535
      %v4537 = vpop.f32.mrf.mxu0
      %4538 = vmatprep.mubr.f32.mxu0 %v3398
      %4539 = vmatmul.mubr.f32.gmra.mxu0 %v3397
      %v4540 = vpop.f32.mrf.mxu0
      %v4541 = vadd.f32 %v4316, %v4540
      %v4542 = vpop.f32.mrf.mxu0
      %4543 = vmatprep.mubr.f32.mxu0 %v3407
      %4544 = vmatmul.mubr.f32.gmra.mxu0 %v3406
      %v4545 = vpop.f32.mrf.mxu0
      %v4546 = vadd.f32 %v4321, %v4545
      %v4547 = vpop.f32.mrf.mxu0
      %4548 = vmatprep.mubr.f32.mxu0 %v3416
      %4549 = vmatmul.mubr.f32.gmra.mxu0 %v3415
      %v4550 = vpop.f32.mrf.mxu0
      %v4551 = vadd.f32 %v4326, %v4550
      %v4552 = vpop.f32.mrf.mxu0
      %4553 = vmatprep.mubr.f32.mxu0 %v3425
      %4554 = vmatmul.mubr.f32.gmra.mxu0 %v3424
      %v4555 = vpop.f32.mrf.mxu0
      %v4556 = vadd.f32 %v4331, %v4555
      %v4557 = vpop.f32.mrf.mxu0
      %4558 = vmatprep.mubr.f32.mxu0 %v3434
      %4559 = vmatmul.mubr.f32.gmra.mxu0 %v3433
      %v4560 = vpop.f32.mrf.mxu0
      %v4561 = vadd.f32 %v4336, %v4560
      %v4562 = vpop.f32.mrf.mxu0
      %4563 = vmatprep.mubr.f32.mxu0 %v3443
      %4564 = vmatmul.mubr.f32.gmra.mxu0 %v3442
      %v4565 = vpop.f32.mrf.mxu0
      %v4566 = vadd.f32 %v4341, %v4565
      %v4567 = vpop.f32.mrf.mxu0
      %4568 = vmatprep.mubr.f32.mxu0 %v3452
      %4569 = vmatmul.mubr.f32.gmra.mxu0 %v3451
      %v4570 = vpop.f32.mrf.mxu0
      %v4571 = vadd.f32 %v4346, %v4570
      %v4572 = vpop.f32.mrf.mxu0
      %4573 = vmatprep.mubr.f32.mxu0 %v3461
      %4574 = vmatmul.mubr.f32.gmra.mxu0 %v3460
      %v4575 = vpop.f32.mrf.mxu0
      %v4576 = vadd.f32 %v4351, %v4575
      %v4577 = vpop.f32.mrf.mxu0
      %4578 = vmatprep.mubr.f32.mxu0 %v3470
      %4579 = vmatmul.mubr.f32.gmra.mxu0 %v3469
      %v4580 = vpop.f32.mrf.mxu0
      %v4581 = vadd.f32 %v4356, %v4580
      %v4582 = vpop.f32.mrf.mxu0
      %4583 = vmatprep.mubr.f32.mxu0 %v3479
      %4584 = vmatmul.mubr.f32.gmra.mxu0 %v3478
      %v4585 = vpop.f32.mrf.mxu0
      %v4586 = vadd.f32 %v4361, %v4585
      %v4587 = vpop.f32.mrf.mxu0
      %4588 = vmatprep.mubr.f32.mxu0 %v3488
      %4589 = vmatmul.mubr.f32.gmra.mxu0 %v3487
      %v4590 = vpop.f32.mrf.mxu0
      %v4591 = vadd.f32 %v4366, %v4590
      %v4592 = vpop.f32.mrf.mxu0
      %4593 = vmatprep.mubr.f32.mxu0 %v3497
      %4594 = vmatmul.mubr.f32.gmra.mxu0 %v3496
      %v4595 = vpop.f32.mrf.mxu0
      %v4596 = vadd.f32 %v4371, %v4595
      %v4597 = vpop.f32.mrf.mxu0
      %4598 = vmatprep.mubr.f32.mxu0 %v3506
      %4599 = vmatmul.mubr.f32.gmra.mxu0 %v3505
      %v4600 = vpop.f32.mrf.mxu0
      %v4601 = vadd.f32 %v4376, %v4600
      %v4602 = vpop.f32.mrf.mxu0
      %4603 = vmatprep.mubr.f32.mxu0 %v3515
      %4604 = vmatmul.mubr.f32.gmra.mxu0 %v3514
      %v4605 = vpop.f32.mrf.mxu0
      %v4606 = vadd.f32 %v4381, %v4605
      %v4607 = vpop.f32.mrf.mxu0
      %4608 = vmatprep.mubr.f32.mxu0 %v3524
      %4609 = vmatmul.mubr.f32.gmra.mxu0 %v3523
      %v4610 = vpop.f32.mrf.mxu0
      %v4611 = vadd.f32 %v4386, %v4610
      %v4612 = vpop.f32.mrf.mxu0
      %4613 = vmatprep.mubr.f32.mxu0 %v3533
      %4614 = vmatmul.mubr.f32.gmra.mxu0 %v3532
      %v4615 = vpop.f32.mrf.mxu0
      %v4616 = vadd.f32 %v4391, %v4615
      %v4617 = vpop.f32.mrf.mxu0
      %4618 = vmatprep.mubr.f32.mxu0 %v3542
      %4619 = vmatmul.mubr.f32.gmra.mxu0 %v3541
      %v4620 = vpop.f32.mrf.mxu0
      %v4621 = vadd.f32 %v4396, %v4620
      %v4622 = vpop.f32.mrf.mxu0
      %4623 = vmatprep.mubr.f32.mxu0 %v3551
      %4624 = vmatmul.mubr.f32.gmra.mxu0 %v3550
      %v4625 = vpop.f32.mrf.mxu0
      %v4626 = vadd.f32 %v4401, %v4625
      %v4627 = vpop.f32.mrf.mxu0
      %4628 = vmatprep.mubr.f32.mxu0 %v3560
      %4629 = vmatmul.mubr.f32.gmra.mxu0 %v3559
      %v4630 = vpop.f32.mrf.mxu0
      %v4631 = vadd.f32 %v4406, %v4630
      %v4632 = vpop.f32.mrf.mxu0
      %4633 = vmatprep.mubr.f32.mxu0 %v3569
      %4634 = vmatmul.mubr.f32.gmra.mxu0 %v3568
      %v4635 = vpop.f32.mrf.mxu0
      %v4636 = vadd.f32 %v4411, %v4635
      %v4637 = vpop.f32.mrf.mxu0
      %4638 = vmatprep.mubr.f32.mxu0 %v3578
      %4639 = vmatmul.mubr.f32.gmra.mxu0 %v3577
      %v4640 = vpop.f32.mrf.mxu0
      %v4641 = vadd.f32 %v4416, %v4640
      %v4642 = vpop.f32.mrf.mxu0
      %4643 = vmatprep.mubr.f32.mxu0 %v3587
      %4644 = vmatmul.mubr.f32.gmra.mxu0 %v3586
      %v4645 = vpop.f32.mrf.mxu0
      %v4646 = vadd.f32 %v4421, %v4645
      %v4647 = vpop.f32.mrf.mxu0
      %4648 = vmatprep.mubr.f32.mxu0 %v3596
      %4649 = vmatmul.mubr.f32.gmra.mxu0 %v3595
      %v4650 = vpop.f32.mrf.mxu0
      %v4651 = vadd.f32 %v4426, %v4650
      %v4652 = vpop.f32.mrf.mxu0
      %4653 = vmatprep.mubr.f32.mxu0 %v3605
      %4654 = vmatmul.mubr.f32.gmra.mxu0 %v3604
      %v4655 = vpop.f32.mrf.mxu0
      %v4656 = vadd.f32 %v4431, %v4655
      %v4657 = vpop.f32.mrf.mxu0
      %4658 = vmatprep.mubr.f32.mxu0 %v3614
      %4659 = vmatmul.mubr.f32.gmra.mxu0 %v3613
      %v4660 = vpop.f32.mrf.mxu0
      %v4661 = vadd.f32 %v4436, %v4660
      %v4662 = vpop.f32.mrf.mxu0
      %4663 = vmatprep.mubr.f32.mxu0 %v3623
      %4664 = vmatmul.mubr.f32.gmra.mxu0 %v3622
      %v4665 = vpop.f32.mrf.mxu0
      %v4666 = vadd.f32 %v4441, %v4665
      %v4667 = vpop.f32.mrf.mxu0
      %4668 = vdwg.mxu0
      %4669 = vmatprep.subr.mxu0 0.0
      %4670 = vmatpush1.msra.mxu0 %v3768
      %4671 = vmatprep.subr.mxu0 0.0
      %4672 = vmatpush1.msra.mxu0 %v3767
      %4673 = vmatprep.subr.mxu0 0.0
      %4674 = vmatpush1.msra.mxu0 %v3766
      %4675 = vmatprep.subr.mxu0 0.0
      %4676 = vmatpush1.msra.mxu0 %v3765
      %4677 = vmatprep.subr.mxu0 0.0
      %4678 = vmatpush1.msra.mxu0 %v3764
      %4679 = vmatprep.subr.mxu0 0.0
      %4680 = vmatpush1.msra.mxu0 %v3763
      %4681 = vmatprep.subr.mxu0 0.0
      %4682 = vmatpush1.msra.mxu0 %v3762
      %4683 = vmatprep.subr.mxu0 0.0
      %4684 = vmatpush1.msra.mxu0 %v3761
      %4685 = vmatprep.subr.mxu0 0.0
      %4686 = vmatpush1.msra.mxu0 %v3760
      %4687 = vmatprep.subr.mxu0 0.0
      %4688 = vmatpush1.msra.mxu0 %v3759
      %4689 = vmatprep.subr.mxu0 0.0
      %4690 = vmatpush1.msra.mxu0 %v3758
      %4691 = vmatprep.subr.mxu0 0.0
      %4692 = vmatpush1.msra.mxu0 %v3757
      %4693 = vmatprep.subr.mxu0 0.0
      %4694 = vmatpush1.msra.mxu0 %v3756
      %4695 = vmatprep.subr.mxu0 0.0
      %4696 = vmatpush1.msra.mxu0 %v3755
      %4697 = vmatprep.subr.mxu0 0.0
      %4698 = vmatpush1.msra.mxu0 %v3754
      %4699 = vmatprep.subr.mxu0 0.0
      %4700 = vmatpush1.msra.mxu0 %v3753
      %4701 = vmatprep.subr.mxu0 0.0
      %4702 = vmatpush2.msra.mxu0 0.0
      %4703 = vmatprep.subr.mxu0 0.0
      %4704 = vmatpush2.msra.mxu0 0.0
      %4705 = vmatprep.subr.mxu0 0.0
      %4706 = vmatpush2.msra.mxu0 0.0
      %4707 = vmatprep.subr.mxu0 0.0
      %4708 = vmatpush2.msra.mxu0 0.0
      %4709 = vmatprep.subr.mxu0 0.0
      %4710 = vmatpush2.msra.mxu0 0.0
      %4711 = vmatprep.subr.mxu0 0.0
      %4712 = vmatpush2.msra.mxu0 0.0
      %4713 = vmatprep.subr.mxu0 0.0
      %4714 = vmatpush2.msra.mxu0 0.0
      %4715 = vmatprep.subr.mxu0 0.0
      %4716 = vmatpush2.msra.mxu0 0.0
      %4717 = vmatprep.subr.mxu0 0.0
      %4718 = vmatpush2.msra.mxu0 0.0
      %4719 = vmatprep.subr.mxu0 0.0
      %4720 = vmatpush2.msra.mxu0 0.0
      %4721 = vmatprep.subr.mxu0 0.0
      %4722 = vmatpush2.msra.mxu0 0.0
      %4723 = vmatprep.subr.mxu0 0.0
      %4724 = vmatpush2.msra.mxu0 0.0
      %4725 = vmatprep.subr.mxu0 0.0
      %4726 = vmatpush2.msra.mxu0 0.0
      %4727 = vmatprep.subr.mxu0 0.0
      %4728 = vmatpush2.msra.mxu0 0.0
      %4729 = vmatprep.subr.mxu0 0.0
      %4730 = vmatpush2.msra.mxu0 0.0
      %4731 = vmatprep.subr.mxu0 0.0
      %4732 = vmatpush2.msra.mxu0 0.0
      %4733 = vmatprep.mubr.f32.mxu0 0.0
      %4734 = vmatmul.mubr.f32.gmra.mxu0 %v3345
      %v4735 = vpop.f32.mrf.mxu0
      %v4736 = vadd.f32 %v4511, %v4735
      %v4737 = vpop.f32.mrf.mxu0
      %4738 = vmatprep.mubr.f32.mxu0 0.0
      %4739 = vmatmul.mubr.f32.gmra.mxu0 %v3354
      %v4740 = vpop.f32.mrf.mxu0
      %v4741 = vadd.f32 %v4516, %v4740
      %v4742 = vpop.f32.mrf.mxu0
      %4743 = vmatprep.mubr.f32.mxu0 0.0
      %4744 = vmatmul.mubr.f32.gmra.mxu0 %v3363
      %v4745 = vpop.f32.mrf.mxu0
      %v4746 = vadd.f32 %v4521, %v4745
      %v4747 = vpop.f32.mrf.mxu0
      %4748 = vmatprep.mubr.f32.mxu0 0.0
      %4749 = vmatmul.mubr.f32.gmra.mxu0 %v3372
      %v4750 = vpop.f32.mrf.mxu0
      %v4751 = vadd.f32 %v4526, %v4750
      %v4752 = vpop.f32.mrf.mxu0
      %4753 = vmatprep.mubr.f32.mxu0 0.0
      %4754 = vmatmul.mubr.f32.gmra.mxu0 %v3381
      %v4755 = vpop.f32.mrf.mxu0
      %v4756 = vadd.f32 %v4531, %v4755
      %v4757 = vpop.f32.mrf.mxu0
      %4758 = vmatprep.mubr.f32.mxu0 0.0
      %4759 = vmatmul.mubr.f32.gmra.mxu0 %v3390
      %v4760 = vpop.f32.mrf.mxu0
      %v4761 = vadd.f32 %v4536, %v4760
      %v4762 = vpop.f32.mrf.mxu0
      %4763 = vmatprep.mubr.f32.mxu0 0.0
      %4764 = vmatmul.mubr.f32.gmra.mxu0 %v3399
      %v4765 = vpop.f32.mrf.mxu0
      %v4766 = vadd.f32 %v4541, %v4765
      %v4767 = vpop.f32.mrf.mxu0
      %4768 = vmatprep.mubr.f32.mxu0 0.0
      %4769 = vmatmul.mubr.f32.gmra.mxu0 %v3408
      %v4770 = vpop.f32.mrf.mxu0
      %v4771 = vadd.f32 %v4546, %v4770
      %v4772 = vpop.f32.mrf.mxu0
      %4773 = vmatprep.mubr.f32.mxu0 0.0
      %4774 = vmatmul.mubr.f32.gmra.mxu0 %v3417
      %v4775 = vpop.f32.mrf.mxu0
      %v4776 = vadd.f32 %v4551, %v4775
      %v4777 = vpop.f32.mrf.mxu0
      %4778 = vmatprep.mubr.f32.mxu0 0.0
      %4779 = vmatmul.mubr.f32.gmra.mxu0 %v3426
      %v4780 = vpop.f32.mrf.mxu0
      %v4781 = vadd.f32 %v4556, %v4780
      %v4782 = vpop.f32.mrf.mxu0
      %4783 = vmatprep.mubr.f32.mxu0 0.0
      %4784 = vmatmul.mubr.f32.gmra.mxu0 %v3435
      %v4785 = vpop.f32.mrf.mxu0
      %v4786 = vadd.f32 %v4561, %v4785
      %v4787 = vpop.f32.mrf.mxu0
      %4788 = vmatprep.mubr.f32.mxu0 0.0
      %4789 = vmatmul.mubr.f32.gmra.mxu0 %v3444
      %v4790 = vpop.f32.mrf.mxu0
      %v4791 = vadd.f32 %v4566, %v4790
      %v4792 = vpop.f32.mrf.mxu0
      %4793 = vmatprep.mubr.f32.mxu0 0.0
      %4794 = vmatmul.mubr.f32.gmra.mxu0 %v3453
      %v4795 = vpop.f32.mrf.mxu0
      %v4796 = vadd.f32 %v4571, %v4795
      %v4797 = vpop.f32.mrf.mxu0
      %4798 = vmatprep.mubr.f32.mxu0 0.0
      %4799 = vmatmul.mubr.f32.gmra.mxu0 %v3462
      %v4800 = vpop.f32.mrf.mxu0
      %v4801 = vadd.f32 %v4576, %v4800
      %v4802 = vpop.f32.mrf.mxu0
      %4803 = vmatprep.mubr.f32.mxu0 0.0
      %4804 = vmatmul.mubr.f32.gmra.mxu0 %v3471
      %v4805 = vpop.f32.mrf.mxu0
      %v4806 = vadd.f32 %v4581, %v4805
      %v4807 = vpop.f32.mrf.mxu0
      %4808 = vmatprep.mubr.f32.mxu0 0.0
      %4809 = vmatmul.mubr.f32.gmra.mxu0 %v3480
      %v4810 = vpop.f32.mrf.mxu0
      %v4811 = vadd.f32 %v4586, %v4810
      %v4812 = vpop.f32.mrf.mxu0
      %4813 = vmatprep.mubr.f32.mxu0 0.0
      %4814 = vmatmul.mubr.f32.gmra.mxu0 %v3489
      %v4815 = vpop.f32.mrf.mxu0
      %v4816 = vadd.f32 %v4591, %v4815
      %v4817 = vpop.f32.mrf.mxu0
      %4818 = vmatprep.mubr.f32.mxu0 0.0
      %4819 = vmatmul.mubr.f32.gmra.mxu0 %v3498
      %v4820 = vpop.f32.mrf.mxu0
      %v4821 = vadd.f32 %v4596, %v4820
      %v4822 = vpop.f32.mrf.mxu0
      %4823 = vmatprep.mubr.f32.mxu0 0.0
      %4824 = vmatmul.mubr.f32.gmra.mxu0 %v3507
      %v4825 = vpop.f32.mrf.mxu0
      %v4826 = vadd.f32 %v4601, %v4825
      %v4827 = vpop.f32.mrf.mxu0
      %4828 = vmatprep.mubr.f32.mxu0 0.0
      %4829 = vmatmul.mubr.f32.gmra.mxu0 %v3516
      %v4830 = vpop.f32.mrf.mxu0
      %v4831 = vadd.f32 %v4606, %v4830
      %v4832 = vpop.f32.mrf.mxu0
      %4833 = vmatprep.mubr.f32.mxu0 0.0
      %4834 = vmatmul.mubr.f32.gmra.mxu0 %v3525
      %v4835 = vpop.f32.mrf.mxu0
      %v4836 = vadd.f32 %v4611, %v4835
      %v4837 = vpop.f32.mrf.mxu0
      %4838 = vmatprep.mubr.f32.mxu0 0.0
      %4839 = vmatmul.mubr.f32.gmra.mxu0 %v3534
      %v4840 = vpop.f32.mrf.mxu0
      %v4841 = vadd.f32 %v4616, %v4840
      %v4842 = vpop.f32.mrf.mxu0
      %4843 = vmatprep.mubr.f32.mxu0 0.0
      %4844 = vmatmul.mubr.f32.gmra.mxu0 %v3543
      %v4845 = vpop.f32.mrf.mxu0
      %v4846 = vadd.f32 %v4621, %v4845
      %v4847 = vpop.f32.mrf.mxu0
      %4848 = vmatprep.mubr.f32.mxu0 0.0
      %4849 = vmatmul.mubr.f32.gmra.mxu0 %v3552
      %v4850 = vpop.f32.mrf.mxu0
      %v4851 = vadd.f32 %v4626, %v4850
      %v4852 = vpop.f32.mrf.mxu0
      %4853 = vmatprep.mubr.f32.mxu0 0.0
      %4854 = vmatmul.mubr.f32.gmra.mxu0 %v3561
      %v4855 = vpop.f32.mrf.mxu0
      %v4856 = vadd.f32 %v4631, %v4855
      %v4857 = vpop.f32.mrf.mxu0
      %4858 = vmatprep.mubr.f32.mxu0 0.0
      %4859 = vmatmul.mubr.f32.gmra.mxu0 %v3570
      %v4860 = vpop.f32.mrf.mxu0
      %v4861 = vadd.f32 %v4636, %v4860
      %v4862 = vpop.f32.mrf.mxu0
      %4863 = vmatprep.mubr.f32.mxu0 0.0
      %4864 = vmatmul.mubr.f32.gmra.mxu0 %v3579
      %v4865 = vpop.f32.mrf.mxu0
      %v4866 = vadd.f32 %v4641, %v4865
      %v4867 = vpop.f32.mrf.mxu0
      %4868 = vmatprep.mubr.f32.mxu0 0.0
      %4869 = vmatmul.mubr.f32.gmra.mxu0 %v3588
      %v4870 = vpop.f32.mrf.mxu0
      %v4871 = vadd.f32 %v4646, %v4870
      %v4872 = vpop.f32.mrf.mxu0
      %4873 = vmatprep.mubr.f32.mxu0 0.0
      %4874 = vmatmul.mubr.f32.gmra.mxu0 %v3597
      %v4875 = vpop.f32.mrf.mxu0
      %v4876 = vadd.f32 %v4651, %v4875
      %v4877 = vpop.f32.mrf.mxu0
      %4878 = vmatprep.mubr.f32.mxu0 0.0
      %4879 = vmatmul.mubr.f32.gmra.mxu0 %v3606
      %v4880 = vpop.f32.mrf.mxu0
      %v4881 = vadd.f32 %v4656, %v4880
      %v4882 = vpop.f32.mrf.mxu0
      %4883 = vmatprep.mubr.f32.mxu0 0.0
      %4884 = vmatmul.mubr.f32.gmra.mxu0 %v3615
      %v4885 = vpop.f32.mrf.mxu0
      %v4886 = vadd.f32 %v4661, %v4885
      %v4887 = vpop.f32.mrf.mxu0
      %4888 = vmatprep.mubr.f32.mxu0 0.0
      %4889 = vmatmul.mubr.f32.gmra.mxu0 %v3624
      %v4890 = vpop.f32.mrf.mxu0
      %v4891 = vadd.f32 %v4666, %v4890
      %v4892 = vpop.f32.mrf.mxu0
      %4893 = vdwg.mxu0
      %v4894 = vmax.f32 %v4736, 0.0
      %v4895 = vmax.f32 %v4741, 0.0
      %v4896 = vmax.f32 %v4746, 0.0
      %v4897 = vmax.f32 %v4751, 0.0
      %v4898 = vmax.f32 %v4756, 0.0
      %v4899 = vmax.f32 %v4761, 0.0
      %v4900 = vmax.f32 %v4766, 0.0
      %v4901 = vmax.f32 %v4771, 0.0
      %v4902 = vmax.f32 %v4776, 0.0
      %v4903 = vmax.f32 %v4781, 0.0
      %v4904 = vmax.f32 %v4786, 0.0
      %v4905 = vmax.f32 %v4791, 0.0
      %v4906 = vmax.f32 %v4796, 0.0
      %v4907 = vmax.f32 %v4801, 0.0
      %v4908 = vmax.f32 %v4806, 0.0
      %v4909 = vmax.f32 %v4811, 0.0
      %v4910 = vmax.f32 %v4816, 0.0
      %v4911 = vmax.f32 %v4821, 0.0
      %v4912 = vmax.f32 %v4826, 0.0
      %v4913 = vmax.f32 %v4831, 0.0
      %v4914 = vmax.f32 %v4836, 0.0
      %v4915 = vmax.f32 %v4841, 0.0
      %v4916 = vmax.f32 %v4846, 0.0
      %v4917 = vmax.f32 %v4851, 0.0
      %v4918 = vmax.f32 %v4856, 0.0
      %v4919 = vmax.f32 %v4861, 0.0
      %v4920 = vmax.f32 %v4866, 0.0
      %v4921 = vmax.f32 %v4871, 0.0
      %v4922 = vmax.f32 %v4876, 0.0
      %v4923 = vmax.f32 %v4881, 0.0
      %v4924 = vmax.f32 %v4886, 0.0
      %v4925 = vmax.f32 %v4891, 0.0
      %v4926 = vld [vmem:[%s2] sm:$0xff]
      %v4927 = vld [vmem:[%s2 + $0x8] sm:$0xff]
      %v4928 = vld [vmem:[%s2 + $0x10] sm:$0xff]
      %v4929 = vld [vmem:[%s2 + $0x18] sm:$0xff]
      %v4930 = vld [vmem:[%s2 + $0x20] sm:$0xff]
      %v4931 = vld [vmem:[%s2 + $0x28] sm:$0xff]
      %v4932 = vld [vmem:[%s2 + $0x30] sm:$0xff]
      %v4933 = vld [vmem:[%s2 + $0x38] sm:$0xff]
      %v4934 = vld [vmem:[%s2 + $0x40] sm:$0xff]
      %v4935 = vld [vmem:[%s2 + $0x48] sm:$0xff]
      %v4936 = vld [vmem:[%s2 + $0x50] sm:$0xff]
      %v4937 = vld [vmem:[%s2 + $0x58] sm:$0xff]
      %v4938 = vld [vmem:[%s2 + $0x60] sm:$0xff]
      %v4939 = vld [vmem:[%s2 + $0x68] sm:$0xff]
      %v4940 = vld [vmem:[%s2 + $0x70] sm:$0xff]
      %v4941 = vld [vmem:[%s2 + $0x78] sm:$0xff]
      %4942 = vmatprep.subr.mxu0 0.0
      %4943 = vmatpush1.msra.mxu0 %v4941
      %4944 = vmatprep.subr.mxu0 0.0
      %4945 = vmatpush1.msra.mxu0 %v4940
      %4946 = vmatprep.subr.mxu0 0.0
      %4947 = vmatpush1.msra.mxu0 %v4939
      %4948 = vmatprep.subr.mxu0 0.0
      %4949 = vmatpush1.msra.mxu0 %v4938
      %4950 = vmatprep.subr.mxu0 0.0
      %4951 = vmatpush1.msra.mxu0 %v4937
      %4952 = vmatprep.subr.mxu0 0.0
      %4953 = vmatpush1.msra.mxu0 %v4936
      %4954 = vmatprep.subr.mxu0 0.0
      %4955 = vmatpush1.msra.mxu0 %v4935
      %4956 = vmatprep.subr.mxu0 0.0
      %4957 = vmatpush1.msra.mxu0 %v4934
      %4958 = vmatprep.subr.mxu0 0.0
      %4959 = vmatpush1.msra.mxu0 %v4933
      %4960 = vmatprep.subr.mxu0 0.0
      %4961 = vmatpush1.msra.mxu0 %v4932
      %4962 = vmatprep.subr.mxu0 0.0
      %4963 = vmatpush1.msra.mxu0 %v4931
      %4964 = vmatprep.subr.mxu0 0.0
      %4965 = vmatpush1.msra.mxu0 %v4930
      %4966 = vmatprep.subr.mxu0 0.0
      %4967 = vmatpush1.msra.mxu0 %v4929
      %4968 = vmatprep.subr.mxu0 0.0
      %4969 = vmatpush1.msra.mxu0 %v4928
      %4970 = vmatprep.subr.mxu0 0.0
      %4971 = vmatpush1.msra.mxu0 %v4927
      %4972 = vmatprep.subr.mxu0 0.0
      %4973 = vmatpush1.msra.mxu0 %v4926
      %4974 = vmatprep.subr.mxu0 0.0
      %4975 = vmatpush2.msra.mxu0 0.0
      %4976 = vmatprep.subr.mxu0 0.0
      %4977 = vmatpush2.msra.mxu0 0.0
      %4978 = vmatprep.subr.mxu0 0.0
      %4979 = vmatpush2.msra.mxu0 0.0
      %4980 = vmatprep.subr.mxu0 0.0
      %4981 = vmatpush2.msra.mxu0 0.0
      %4982 = vmatprep.subr.mxu0 0.0
      %4983 = vmatpush2.msra.mxu0 0.0
      %4984 = vmatprep.subr.mxu0 0.0
      %4985 = vmatpush2.msra.mxu0 0.0
      %4986 = vmatprep.subr.mxu0 0.0
      %4987 = vmatpush2.msra.mxu0 0.0
      %4988 = vmatprep.subr.mxu0 0.0
      %4989 = vmatpush2.msra.mxu0 0.0
      %4990 = vmatprep.subr.mxu0 0.0
      %4991 = vmatpush2.msra.mxu0 0.0
      %4992 = vmatprep.subr.mxu0 0.0
      %4993 = vmatpush2.msra.mxu0 0.0
      %4994 = vmatprep.subr.mxu0 0.0
      %4995 = vmatpush2.msra.mxu0 0.0
      %4996 = vmatprep.subr.mxu0 0.0
      %4997 = vmatpush2.msra.mxu0 0.0
      %4998 = vmatprep.subr.mxu0 0.0
      %4999 = vmatpush2.msra.mxu0 0.0
      %5000 = vmatprep.subr.mxu0 0.0
      %5001 = vmatpush2.msra.mxu0 0.0
      %5002 = vmatprep.subr.mxu0 0.0
      %5003 = vmatpush2.msra.mxu0 0.0
      %5004 = vmatprep.subr.mxu0 0.0
      %5005 = vmatpush2.msra.mxu0 0.0
      %5006 = vmatprep.mubr.f32.mxu0 0.0
      %5007 = vmatmul.mubr.f32.gmra.mxu0 %v4894
      %v5008 = vpop.f32.mrf.mxu0
      %v5009 = vadd.f32 0.0, %v5008
      %v5010 = vpop.f32.mrf.mxu0
      %5011 = vmatprep.mubr.f32.mxu0 0.0
      %5012 = vmatmul.mubr.f32.gmra.mxu0 %v4895
      %v5013 = vpop.f32.mrf.mxu0
      %v5014 = vadd.f32 0.0, %v5013
      %v5015 = vpop.f32.mrf.mxu0
      %5016 = vmatprep.mubr.f32.mxu0 0.0
      %5017 = vmatmul.mubr.f32.gmra.mxu0 %v4896
      %v5018 = vpop.f32.mrf.mxu0
      %v5019 = vadd.f32 0.0, %v5018
      %v5020 = vpop.f32.mrf.mxu0
      %5021 = vmatprep.mubr.f32.mxu0 0.0
      %5022 = vmatmul.mubr.f32.gmra.mxu0 %v4897
      %v5023 = vpop.f32.mrf.mxu0
      %v5024 = vadd.f32 0.0, %v5023
      %v5025 = vpop.f32.mrf.mxu0
      %5026 = vmatprep.mubr.f32.mxu0 0.0
      %5027 = vmatmul.mubr.f32.gmra.mxu0 %v4898
      %v5028 = vpop.f32.mrf.mxu0
      %v5029 = vadd.f32 0.0, %v5028
      %v5030 = vpop.f32.mrf.mxu0
      %5031 = vmatprep.mubr.f32.mxu0 0.0
      %5032 = vmatmul.mubr.f32.gmra.mxu0 %v4899
      %v5033 = vpop.f32.mrf.mxu0
      %v5034 = vadd.f32 0.0, %v5033
      %v5035 = vpop.f32.mrf.mxu0
      %5036 = vmatprep.mubr.f32.mxu0 0.0
      %5037 = vmatmul.mubr.f32.gmra.mxu0 %v4900
      %v5038 = vpop.f32.mrf.mxu0
      %v5039 = vadd.f32 0.0, %v5038
      %v5040 = vpop.f32.mrf.mxu0
      %5041 = vmatprep.mubr.f32.mxu0 0.0
      %5042 = vmatmul.mubr.f32.gmra.mxu0 %v4901
      %v5043 = vpop.f32.mrf.mxu0
      %v5044 = vadd.f32 0.0, %v5043
      %v5045 = vpop.f32.mrf.mxu0
      %5046 = vmatprep.mubr.f32.mxu0 0.0
      %5047 = vmatmul.mubr.f32.gmra.mxu0 %v4902
      %v5048 = vpop.f32.mrf.mxu0
      %v5049 = vadd.f32 0.0, %v5048
      %v5050 = vpop.f32.mrf.mxu0
      %5051 = vmatprep.mubr.f32.mxu0 0.0
      %5052 = vmatmul.mubr.f32.gmra.mxu0 %v4903
      %v5053 = vpop.f32.mrf.mxu0
      %v5054 = vadd.f32 0.0, %v5053
      %v5055 = vpop.f32.mrf.mxu0
      %5056 = vmatprep.mubr.f32.mxu0 0.0
      %5057 = vmatmul.mubr.f32.gmra.mxu0 %v4904
      %v5058 = vpop.f32.mrf.mxu0
      %v5059 = vadd.f32 0.0, %v5058
      %v5060 = vpop.f32.mrf.mxu0
      %5061 = vmatprep.mubr.f32.mxu0 0.0
      %5062 = vmatmul.mubr.f32.gmra.mxu0 %v4905
      %v5063 = vpop.f32.mrf.mxu0
      %v5064 = vadd.f32 0.0, %v5063
      %v5065 = vpop.f32.mrf.mxu0
      %5066 = vmatprep.mubr.f32.mxu0 0.0
      %5067 = vmatmul.mubr.f32.gmra.mxu0 %v4906
      %v5068 = vpop.f32.mrf.mxu0
      %v5069 = vadd.f32 0.0, %v5068
      %v5070 = vpop.f32.mrf.mxu0
      %5071 = vmatprep.mubr.f32.mxu0 0.0
      %5072 = vmatmul.mubr.f32.gmra.mxu0 %v4907
      %v5073 = vpop.f32.mrf.mxu0
      %v5074 = vadd.f32 0.0, %v5073
      %v5075 = vpop.f32.mrf.mxu0
      %5076 = vmatprep.mubr.f32.mxu0 0.0
      %5077 = vmatmul.mubr.f32.gmra.mxu0 %v4908
      %v5078 = vpop.f32.mrf.mxu0
      %v5079 = vadd.f32 0.0, %v5078
      %v5080 = vpop.f32.mrf.mxu0
      %5081 = vmatprep.mubr.f32.mxu0 0.0
      %5082 = vmatmul.mubr.f32.gmra.mxu0 %v4909
      %v5083 = vpop.f32.mrf.mxu0
      %v5084 = vadd.f32 0.0, %v5083
      %v5085 = vpop.f32.mrf.mxu0
      %5086 = vmatprep.mubr.f32.mxu0 0.0
      %5087 = vmatmul.mubr.f32.gmra.mxu0 %v4910
      %v5088 = vpop.f32.mrf.mxu0
      %v5089 = vadd.f32 0.0, %v5088
      %v5090 = vpop.f32.mrf.mxu0
      %5091 = vmatprep.mubr.f32.mxu0 0.0
      %5092 = vmatmul.mubr.f32.gmra.mxu0 %v4911
      %v5093 = vpop.f32.mrf.mxu0
      %v5094 = vadd.f32 0.0, %v5093
      %v5095 = vpop.f32.mrf.mxu0
      %5096 = vmatprep.mubr.f32.mxu0 0.0
      %5097 = vmatmul.mubr.f32.gmra.mxu0 %v4912
      %v5098 = vpop.f32.mrf.mxu0
      %v5099 = vadd.f32 0.0, %v5098
      %v5100 = vpop.f32.mrf.mxu0
      %5101 = vmatprep.mubr.f32.mxu0 0.0
      %5102 = vmatmul.mubr.f32.gmra.mxu0 %v4913
      %v5103 = vpop.f32.mrf.mxu0
      %v5104 = vadd.f32 0.0, %v5103
      %v5105 = vpop.f32.mrf.mxu0
      %5106 = vmatprep.mubr.f32.mxu0 0.0
      %5107 = vmatmul.mubr.f32.gmra.mxu0 %v4914
      %v5108 = vpop.f32.mrf.mxu0
      %v5109 = vadd.f32 0.0, %v5108
      %v5110 = vpop.f32.mrf.mxu0
      %5111 = vmatprep.mubr.f32.mxu0 0.0
      %5112 = vmatmul.mubr.f32.gmra.mxu0 %v4915
      %v5113 = vpop.f32.mrf.mxu0
      %v5114 = vadd.f32 0.0, %v5113
      %v5115 = vpop.f32.mrf.mxu0
      %5116 = vmatprep.mubr.f32.mxu0 0.0
      %5117 = vmatmul.mubr.f32.gmra.mxu0 %v4916
      %v5118 = vpop.f32.mrf.mxu0
      %v5119 = vadd.f32 0.0, %v5118
      %v5120 = vpop.f32.mrf.mxu0
      %5121 = vmatprep.mubr.f32.mxu0 0.0
      %5122 = vmatmul.mubr.f32.gmra.mxu0 %v4917
      %v5123 = vpop.f32.mrf.mxu0
      %v5124 = vadd.f32 0.0, %v5123
      %v5125 = vpop.f32.mrf.mxu0
      %5126 = vmatprep.mubr.f32.mxu0 0.0
      %5127 = vmatmul.mubr.f32.gmra.mxu0 %v4918
      %v5128 = vpop.f32.mrf.mxu0
      %v5129 = vadd.f32 0.0, %v5128
      %v5130 = vpop.f32.mrf.mxu0
      %5131 = vmatprep.mubr.f32.mxu0 0.0
      %5132 = vmatmul.mubr.f32.gmra.mxu0 %v4919
      %v5133 = vpop.f32.mrf.mxu0
      %v5134 = vadd.f32 0.0, %v5133
      %v5135 = vpop.f32.mrf.mxu0
      %5136 = vmatprep.mubr.f32.mxu0 0.0
      %5137 = vmatmul.mubr.f32.gmra.mxu0 %v4920
      %v5138 = vpop.f32.mrf.mxu0
      %v5139 = vadd.f32 0.0, %v5138
      %v5140 = vpop.f32.mrf.mxu0
      %5141 = vmatprep.mubr.f32.mxu0 0.0
      %5142 = vmatmul.mubr.f32.gmra.mxu0 %v4921
      %v5143 = vpop.f32.mrf.mxu0
      %v5144 = vadd.f32 0.0, %v5143
      %v5145 = vpop.f32.mrf.mxu0
      %5146 = vmatprep.mubr.f32.mxu0 0.0
      %5147 = vmatmul.mubr.f32.gmra.mxu0 %v4922
      %v5148 = vpop.f32.mrf.mxu0
      %v5149 = vadd.f32 0.0, %v5148
      %v5150 = vpop.f32.mrf.mxu0
      %5151 = vmatprep.mubr.f32.mxu0 0.0
      %5152 = vmatmul.mubr.f32.gmra.mxu0 %v4923
      %v5153 = vpop.f32.mrf.mxu0
      %v5154 = vadd.f32 0.0, %v5153
      %v5155 = vpop.f32.mrf.mxu0
      %5156 = vmatprep.mubr.f32.mxu0 0.0
      %5157 = vmatmul.mubr.f32.gmra.mxu0 %v4924
      %v5158 = vpop.f32.mrf.mxu0
      %v5159 = vadd.f32 0.0, %v5158
      %v5160 = vpop.f32.mrf.mxu0
      %5161 = vmatprep.mubr.f32.mxu0 0.0
      %5162 = vmatmul.mubr.f32.gmra.mxu0 %v4925
      %v5163 = vpop.f32.mrf.mxu0
      %v5164 = vadd.f32 0.0, %v5163
      %v5165 = vpop.f32.mrf.mxu0
      %5166 = vdwg.mxu0
      %v5167 = vld [vmem:[%s170] sm:$0xff]
      %v5168 = vld [vmem:[%s170 + $0x8] sm:$0xff]
      %v5169 = vld [vmem:[%s170 + $0x10] sm:$0xff]
      %v5170 = vld [vmem:[%s170 + $0x18] sm:$0xff]
      %v5171 = vld [vmem:[%s170 + $0x20] sm:$0xff]
      %v5172 = vld [vmem:[%s170 + $0x28] sm:$0xff]
      %v5173 = vld [vmem:[%s170 + $0x30] sm:$0xff]
      %v5174 = vld [vmem:[%s170 + $0x38] sm:$0xff]
      %v5175 = vld [vmem:[%s170 + $0x40] sm:$0xff]
      %v5176 = vld [vmem:[%s170 + $0x48] sm:$0xff]
      %v5177 = vld [vmem:[%s170 + $0x50] sm:$0xff]
      %v5178 = vld [vmem:[%s170 + $0x58] sm:$0xff]
      %v5179 = vld [vmem:[%s170 + $0x60] sm:$0xff]
      %v5180 = vld [vmem:[%s170 + $0x68] sm:$0xff]
      %v5181 = vld [vmem:[%s170 + $0x70] sm:$0xff]
      %v5182 = vld [vmem:[%s170 + $0x78] sm:$0xff]
      %v5183 = vld [vmem:[%s170 + $0x80] sm:$0xff]
      %v5184 = vld [vmem:[%s170 + $0x88] sm:$0xff]
      %v5185 = vld [vmem:[%s170 + $0x90] sm:$0xff]
      %v5186 = vld [vmem:[%s170 + $0x98] sm:$0xff]
      %v5187 = vld [vmem:[%s170 + $0xa0] sm:$0xff]
      %v5188 = vld [vmem:[%s170 + $0xa8] sm:$0xff]
      %v5189 = vld [vmem:[%s170 + $0xb0] sm:$0xff]
      %v5190 = vld [vmem:[%s170 + $0xb8] sm:$0xff]
      %v5191 = vld [vmem:[%s170 + $0xc0] sm:$0xff]
      %v5192 = vld [vmem:[%s170 + $0xc8] sm:$0xff]
      %v5193 = vld [vmem:[%s170 + $0xd0] sm:$0xff]
      %v5194 = vld [vmem:[%s170 + $0xd8] sm:$0xff]
      %v5195 = vld [vmem:[%s170 + $0xe0] sm:$0xff]
      %v5196 = vld [vmem:[%s170 + $0xe8] sm:$0xff]
      %v5197 = vld [vmem:[%s170 + $0xf0] sm:$0xff]
      %v5198 = vld [vmem:[%s170 + $0xf8] sm:$0xff]
      %v5199 = vadd.f32 %v5167, %v5009
      %v5200 = vadd.f32 %v5168, %v5014
      %v5201 = vadd.f32 %v5169, %v5019
      %v5202 = vadd.f32 %v5170, %v5024
      %v5203 = vadd.f32 %v5171, %v5029
      %v5204 = vadd.f32 %v5172, %v5034
      %v5205 = vadd.f32 %v5173, %v5039
      %v5206 = vadd.f32 %v5174, %v5044
      %v5207 = vadd.f32 %v5175, %v5049
      %v5208 = vadd.f32 %v5176, %v5054
      %v5209 = vadd.f32 %v5177, %v5059
      %v5210 = vadd.f32 %v5178, %v5064
      %v5211 = vadd.f32 %v5179, %v5069
      %v5212 = vadd.f32 %v5180, %v5074
      %v5213 = vadd.f32 %v5181, %v5079
      %v5214 = vadd.f32 %v5182, %v5084
      %v5215 = vadd.f32 %v5183, %v5089
      %v5216 = vadd.f32 %v5184, %v5094
      %v5217 = vadd.f32 %v5185, %v5099
      %v5218 = vadd.f32 %v5186, %v5104
      %v5219 = vadd.f32 %v5187, %v5109
      %v5220 = vadd.f32 %v5188, %v5114
      %v5221 = vadd.f32 %v5189, %v5119
      %v5222 = vadd.f32 %v5190, %v5124
      %v5223 = vadd.f32 %v5191, %v5129
      %v5224 = vadd.f32 %v5192, %v5134
      %v5225 = vadd.f32 %v5193, %v5139
      %v5226 = vadd.f32 %v5194, %v5144
      %v5227 = vadd.f32 %v5195, %v5149
      %v5228 = vadd.f32 %v5196, %v5154
      %v5229 = vadd.f32 %v5197, %v5159
      %v5230 = vadd.f32 %v5198, %v5164
      %5231 = vst [vmem:[%s170] sm:$0xff] %v5199
      %5232 = vst [vmem:[%s170 + $0x8] sm:$0xff] %v5200
      %5233 = vst [vmem:[%s170 + $0x10] sm:$0xff] %v5201
      %5234 = vst [vmem:[%s170 + $0x18] sm:$0xff] %v5202
      %5235 = vst [vmem:[%s170 + $0x20] sm:$0xff] %v5203
      %5236 = vst [vmem:[%s170 + $0x28] sm:$0xff] %v5204
      %5237 = vst [vmem:[%s170 + $0x30] sm:$0xff] %v5205
      %5238 = vst [vmem:[%s170 + $0x38] sm:$0xff] %v5206
      %5239 = vst [vmem:[%s170 + $0x40] sm:$0xff] %v5207
      %5240 = vst [vmem:[%s170 + $0x48] sm:$0xff] %v5208
      %5241 = vst [vmem:[%s170 + $0x50] sm:$0xff] %v5209
      %5242 = vst [vmem:[%s170 + $0x58] sm:$0xff] %v5210
      %5243 = vst [vmem:[%s170 + $0x60] sm:$0xff] %v5211
      %5244 = vst [vmem:[%s170 + $0x68] sm:$0xff] %v5212
      %5245 = vst [vmem:[%s170 + $0x70] sm:$0xff] %v5213
      %5246 = vst [vmem:[%s170 + $0x78] sm:$0xff] %v5214
      %5247 = vst [vmem:[%s170 + $0x80] sm:$0xff] %v5215
      %5248 = vst [vmem:[%s170 + $0x88] sm:$0xff] %v5216
      %5249 = vst [vmem:[%s170 + $0x90] sm:$0xff] %v5217
      %5250 = vst [vmem:[%s170 + $0x98] sm:$0xff] %v5218
      %5251 = vst [vmem:[%s170 + $0xa0] sm:$0xff] %v5219
      %5252 = vst [vmem:[%s170 + $0xa8] sm:$0xff] %v5220
      %5253 = vst [vmem:[%s170 + $0xb0] sm:$0xff] %v5221
      %5254 = vst [vmem:[%s170 + $0xb8] sm:$0xff] %v5222
      %5255 = vst [vmem:[%s170 + $0xc0] sm:$0xff] %v5223
      %5256 = vst [vmem:[%s170 + $0xc8] sm:$0xff] %v5224
      %5257 = vst [vmem:[%s170 + $0xd0] sm:$0xff] %v5225
      %5258 = vst [vmem:[%s170 + $0xd8] sm:$0xff] %v5226
      %5259 = vst [vmem:[%s170 + $0xe0] sm:$0xff] %v5227
      %5260 = vst [vmem:[%s170 + $0xe8] sm:$0xff] %v5228
      %5261 = vst [vmem:[%s170 + $0xf0] sm:$0xff] %v5229
      %5262 = vst [vmem:[%s170 + $0xf8] sm:$0xff] %v5230
      %v5263 = vld [vmem:[%s170] sm:$0xff]
      %v5264 = vld [vmem:[%s170 + $0x8] sm:$0xff]
      %v5265 = vld [vmem:[%s170 + $0x10] sm:$0xff]
      %v5266 = vld [vmem:[%s170 + $0x18] sm:$0xff]
      %v5267 = vld [vmem:[%s170 + $0x20] sm:$0xff]
      %v5268 = vld [vmem:[%s170 + $0x28] sm:$0xff]
      %v5269 = vld [vmem:[%s170 + $0x30] sm:$0xff]
      %v5270 = vld [vmem:[%s170 + $0x38] sm:$0xff]
      %v5271 = vld [vmem:[%s170 + $0x40] sm:$0xff]
      %v5272 = vld [vmem:[%s170 + $0x48] sm:$0xff]
      %v5273 = vld [vmem:[%s170 + $0x50] sm:$0xff]
      %v5274 = vld [vmem:[%s170 + $0x58] sm:$0xff]
      %v5275 = vld [vmem:[%s170 + $0x60] sm:$0xff]
      %v5276 = vld [vmem:[%s170 + $0x68] sm:$0xff]
      %v5277 = vld [vmem:[%s170 + $0x70] sm:$0xff]
      %v5278 = vld [vmem:[%s170 + $0x78] sm:$0xff]
      %v5279 = vld [vmem:[%s170 + $0x80] sm:$0xff]
      %v5280 = vld [vmem:[%s170 + $0x88] sm:$0xff]
      %v5281 = vld [vmem:[%s170 + $0x90] sm:$0xff]
      %v5282 = vld [vmem:[%s170 + $0x98] sm:$0xff]
      %v5283 = vld [vmem:[%s170 + $0xa0] sm:$0xff]
      %v5284 = vld [vmem:[%s170 + $0xa8] sm:$0xff]
      %v5285 = vld [vmem:[%s170 + $0xb0] sm:$0xff]
      %v5286 = vld [vmem:[%s170 + $0xb8] sm:$0xff]
      %v5287 = vld [vmem:[%s170 + $0xc0] sm:$0xff]
      %v5288 = vld [vmem:[%s170 + $0xc8] sm:$0xff]
      %v5289 = vld [vmem:[%s170 + $0xd0] sm:$0xff]
      %v5290 = vld [vmem:[%s170 + $0xd8] sm:$0xff]
      %v5291 = vld [vmem:[%s170 + $0xe0] sm:$0xff]
      %v5292 = vld [vmem:[%s170 + $0xe8] sm:$0xff]
      %v5293 = vld [vmem:[%s170 + $0xf0] sm:$0xff]
      %v5294 = vld [vmem:[%s170 + $0xf8] sm:$0xff]
      %v5295 = vmax.f32 %v5263, 0.0
      %v5296 = vmax.f32 %v5264, 0.0
      %v5297 = vmax.f32 %v5265, 0.0
      %v5298 = vmax.f32 %v5266, 0.0
      %v5299 = vmax.f32 %v5267, 0.0
      %v5300 = vmax.f32 %v5268, 0.0
      %v5301 = vmax.f32 %v5269, 0.0
      %v5302 = vmax.f32 %v5270, 0.0
      %v5303 = vmax.f32 %v5271, 0.0
      %v5304 = vmax.f32 %v5272, 0.0
      %v5305 = vmax.f32 %v5273, 0.0
      %v5306 = vmax.f32 %v5274, 0.0
      %v5307 = vmax.f32 %v5275, 0.0
      %v5308 = vmax.f32 %v5276, 0.0
      %v5309 = vmax.f32 %v5277, 0.0
      %v5310 = vmax.f32 %v5278, 0.0
      %v5311 = vmax.f32 %v5279, 0.0
      %v5312 = vmax.f32 %v5280, 0.0
      %v5313 = vmax.f32 %v5281, 0.0
      %v5314 = vmax.f32 %v5282, 0.0
      %v5315 = vmax.f32 %v5283, 0.0
      %v5316 = vmax.f32 %v5284, 0.0
      %v5317 = vmax.f32 %v5285, 0.0
      %v5318 = vmax.f32 %v5286, 0.0
      %v5319 = vmax.f32 %v5287, 0.0
      %v5320 = vmax.f32 %v5288, 0.0
      %v5321 = vmax.f32 %v5289, 0.0
      %v5322 = vmax.f32 %v5290, 0.0
      %v5323 = vmax.f32 %v5291, 0.0
      %v5324 = vmax.f32 %v5292, 0.0
      %v5325 = vmax.f32 %v5293, 0.0
      %v5326 = vmax.f32 %v5294, 0.0
      %v5357 = vrot.slane %v5295, 7
      %v5358 = vrot.slane %v5296, 7
      %v5359 = vsel %vm438, %v5357, %v5358
      %v5360 = vrot.slane %v5297, 7
      %v5361 = vrot.slane %v5298, 7
      %v5362 = vsel %vm438, %v5360, %v5361
      %v5363 = vrot.slane %v5299, 7
      %v5364 = vrot.slane %v5300, 7
      %v5365 = vsel %vm438, %v5363, %v5364
      %v5366 = vrot.slane %v5301, 7
      %v5367 = vrot.slane %v5302, 7
      %v5368 = vsel %vm438, %v5366, %v5367
      %v5369 = vrot.slane %v5303, 7
      %v5370 = vrot.slane %v5304, 7
      %v5371 = vsel %vm438, %v5369, %v5370
      %v5372 = vrot.slane %v5305, 7
      %v5373 = vrot.slane %v5306, 7
      %v5374 = vsel %vm438, %v5372, %v5373
      %v5375 = vrot.slane %v5307, 7
      %v5376 = vrot.slane %v5308, 7
      %v5377 = vsel %vm438, %v5375, %v5376
      %v5378 = vrot.slane %v5309, 7
      %v5379 = vrot.slane %v5310, 7
      %v5380 = vsel %vm438, %v5378, %v5379
      %v5381 = vrot.slane %v5311, 7
      %v5382 = vrot.slane %v5312, 7
      %v5383 = vsel %vm438, %v5381, %v5382
      %v5384 = vrot.slane %v5313, 7
      %v5385 = vrot.slane %v5314, 7
      %v5386 = vsel %vm438, %v5384, %v5385
      %v5387 = vrot.slane %v5315, 7
      %v5388 = vrot.slane %v5316, 7
      %v5389 = vsel %vm438, %v5387, %v5388
      %v5390 = vrot.slane %v5317, 7
      %v5391 = vrot.slane %v5318, 7
      %v5392 = vsel %vm438, %v5390, %v5391
      %v5393 = vrot.slane %v5319, 7
      %v5394 = vrot.slane %v5320, 7
      %v5395 = vsel %vm438, %v5393, %v5394
      %v5396 = vrot.slane %v5321, 7
      %v5397 = vrot.slane %v5322, 7
      %v5398 = vsel %vm438, %v5396, %v5397
      %v5399 = vrot.slane %v5323, 7
      %v5400 = vrot.slane %v5324, 7
      %v5401 = vsel %vm438, %v5399, %v5400
      %5432 = vst [vmem:[%s514] sm:$0xfe] %v5357
      %5433 = vst [vmem:[%s514 + $0x48] sm:$0xff] %v5359
      %5434 = vst [vmem:[%s514 + $0x90] sm:$0xfe] %v5360
      %5435 = vst [vmem:[%s514 + $0xd8] sm:$0xff] %v5362
      %5436 = vst [vmem:[%s514 + $0x120] sm:$0xfe] %v5363
      %5437 = vst [vmem:[%s514 + $0x168] sm:$0xff] %v5365
      %5438 = vst [vmem:[%s514 + $0x1b0] sm:$0xfe] %v5366
      %5439 = vst [vmem:[%s514 + $0x1f8] sm:$0xff] %v5368
      %5440 = vst [vmem:[%s514 + $0x240] sm:$0xfe] %v5369
      %5441 = vst [vmem:[%s514 + $0x288] sm:$0xff] %v5371
      %5442 = vst [vmem:[%s514 + $0x2d0] sm:$0xfe] %v5372
      %5443 = vst [vmem:[%s514 + $0x318] sm:$0xff] %v5374
      %5444 = vst [vmem:[%s514 + $0x360] sm:$0xfe] %v5375
      %5445 = vst [vmem:[%s514 + $0x3a8] sm:$0xff] %v5377
      %5446 = vst [vmem:[%s514 + $0x3f0] sm:$0xfe] %v5378
      %5447 = vst [vmem:[%s514 + $0x438] sm:$0xff] %v5380
      %5448 = vst [vmem:[%s514 + $0x480] sm:$0xfe] %v5381
      %5449 = vst [vmem:[%s514 + $0x4c8] sm:$0xff] %v5383
      %5450 = vst [vmem:[%s514 + $0x510] sm:$0xfe] %v5384
      %5451 = vst [vmem:[%s514 + $0x558] sm:$0xff] %v5386
      %5452 = vst [vmem:[%s514 + $0x5a0] sm:$0xfe] %v5387
      %5453 = vst [vmem:[%s514 + $0x5e8] sm:$0xff] %v5389
      %5454 = vst [vmem:[%s514 + $0x630] sm:$0xfe] %v5390
      %5455 = vst [vmem:[%s514 + $0x678] sm:$0xff] %v5392
      %5456 = vst [vmem:[%s514 + $0x6c0] sm:$0xfe] %v5393
      %5457 = vst [vmem:[%s514 + $0x708] sm:$0xff] %v5395
      %5458 = vst [vmem:[%s514 + $0x750] sm:$0xfe] %v5396
      %5459 = vst [vmem:[%s514 + $0x798] sm:$0xff] %v5398
      %5460 = vst [vmem:[%s514 + $0x7e0] sm:$0xfe] %v5399
      %5461 = vst [vmem:[%s514 + $0x828] sm:$0xff] %v5401
      %5462 = vst [vmem:[%s514 + $0x8] sm:$0xff] %v5295
      %5463 = vst [vmem:[%s514 + $0x50] sm:$0xff] %v5296
      %5464 = vst [vmem:[%s514 + $0x98] sm:$0xff] %v5297
      %5465 = vst [vmem:[%s514 + $0xe0] sm:$0xff] %v5298
      %5466 = vst [vmem:[%s514 + $0x128] sm:$0xff] %v5299
      %5467 = vst [vmem:[%s514 + $0x170] sm:$0xff] %v5300
      %5468 = vst [vmem:[%s514 + $0x1b8] sm:$0xff] %v5301
      %5469 = vst [vmem:[%s514 + $0x200] sm:$0xff] %v5302
      %5470 = vst [vmem:[%s514 + $0x248] sm:$0xff] %v5303
      %5471 = vst [vmem:[%s514 + $0x290] sm:$0xff] %v5304
      %5472 = vst [vmem:[%s514 + $0x2d8] sm:$0xff] %v5305
      %5473 = vst [vmem:[%s514 + $0x320] sm:$0xff] %v5306
      %5474 = vst [vmem:[%s514 + $0x368] sm:$0xff] %v5307
      %5475 = vst [vmem:[%s514 + $0x3b0] sm:$0xff] %v5308
      %5476 = vst [vmem:[%s514 + $0x3f8] sm:$0xff] %v5309
      %5477 = vst [vmem:[%s514 + $0x440] sm:$0xff] %v5310
      %5478 = vst [vmem:[%s514 + $0x488] sm:$0xff] %v5311
      %5479 = vst [vmem:[%s514 + $0x4d0] sm:$0xff] %v5312
      %5480 = vst [vmem:[%s514 + $0x518] sm:$0xff] %v5313
      %5481 = vst [vmem:[%s514 + $0x560] sm:$0xff] %v5314
      %5482 = vst [vmem:[%s514 + $0x5a8] sm:$0xff] %v5315
      %5483 = vst [vmem:[%s514 + $0x5f0] sm:$0xff] %v5316
      %5484 = vst [vmem:[%s514 + $0x638] sm:$0xff] %v5317
      %5485 = vst [vmem:[%s514 + $0x680] sm:$0xff] %v5318
      %5486 = vst [vmem:[%s514 + $0x6c8] sm:$0xff] %v5319
      %5487 = vst [vmem:[%s514 + $0x710] sm:$0xff] %v5320
      %5488 = vst [vmem:[%s514 + $0x758] sm:$0xff] %v5321
      %5489 = vst [vmem:[%s514 + $0x7a0] sm:$0xff] %v5322
      %5490 = vst [vmem:[%s514 + $0x7e8] sm:$0xff] %v5323
      %5491 = vst [vmem:[%s514 + $0x830] sm:$0xff] %v5324
      %v5492 = vrot.slane %v5295, 1
      %v5493 = vrot.slane %v5296, 1
      %v5494 = vsel %vm575, %v5492, %v5493
      %v5495 = vrot.slane %v5297, 1
      %v5496 = vrot.slane %v5298, 1
      %v5497 = vsel %vm575, %v5495, %v5496
      %v5498 = vrot.slane %v5299, 1
      %v5499 = vrot.slane %v5300, 1
      %v5500 = vsel %vm575, %v5498, %v5499
      %v5501 = vrot.slane %v5301, 1
      %v5502 = vrot.slane %v5302, 1
      %v5503 = vsel %vm575, %v5501, %v5502
      %v5504 = vrot.slane %v5303, 1
      %v5505 = vrot.slane %v5304, 1
      %v5506 = vsel %vm575, %v5504, %v5505
      %v5507 = vrot.slane %v5305, 1
      %v5508 = vrot.slane %v5306, 1
      %v5509 = vsel %vm575, %v5507, %v5508
      %v5510 = vrot.slane %v5307, 1
      %v5511 = vrot.slane %v5308, 1
      %v5512 = vsel %vm575, %v5510, %v5511
      %v5513 = vrot.slane %v5309, 1
      %v5514 = vrot.slane %v5310, 1
      %v5515 = vsel %vm575, %v5513, %v5514
      %v5516 = vrot.slane %v5311, 1
      %v5517 = vrot.slane %v5312, 1
      %v5518 = vsel %vm575, %v5516, %v5517
      %v5519 = vrot.slane %v5313, 1
      %v5520 = vrot.slane %v5314, 1
      %v5521 = vsel %vm575, %v5519, %v5520
      %v5522 = vrot.slane %v5315, 1
      %v5523 = vrot.slane %v5316, 1
      %v5524 = vsel %vm575, %v5522, %v5523
      %v5525 = vrot.slane %v5317, 1
      %v5526 = vrot.slane %v5318, 1
      %v5527 = vsel %vm575, %v5525, %v5526
      %v5528 = vrot.slane %v5319, 1
      %v5529 = vrot.slane %v5320, 1
      %v5530 = vsel %vm575, %v5528, %v5529
      %v5531 = vrot.slane %v5321, 1
      %v5532 = vrot.slane %v5322, 1
      %v5533 = vsel %vm575, %v5531, %v5532
      %v5534 = vrot.slane %v5323, 1
      %v5535 = vrot.slane %v5324, 1
      %v5536 = vsel %vm575, %v5534, %v5535
      %5567 = vst [vmem:[%s514 + $0x10] sm:$0xff] %v5494
      %5568 = vst [vmem:[%s514 + $0x58] sm:$0x7f] %v5493
      %5569 = vst [vmem:[%s514 + $0xa0] sm:$0xff] %v5497
      %5570 = vst [vmem:[%s514 + $0xe8] sm:$0x7f] %v5496
      %5571 = vst [vmem:[%s514 + $0x130] sm:$0xff] %v5500
      %5572 = vst [vmem:[%s514 + $0x178] sm:$0x7f] %v5499
      %5573 = vst [vmem:[%s514 + $0x1c0] sm:$0xff] %v5503
      %5574 = vst [vmem:[%s514 + $0x208] sm:$0x7f] %v5502
      %5575 = vst [vmem:[%s514 + $0x250] sm:$0xff] %v5506
      %5576 = vst [vmem:[%s514 + $0x298] sm:$0x7f] %v5505
      %5577 = vst [vmem:[%s514 + $0x2e0] sm:$0xff] %v5509
      %5578 = vst [vmem:[%s514 + $0x328] sm:$0x7f] %v5508
      %5579 = vst [vmem:[%s514 + $0x370] sm:$0xff] %v5512
      %5580 = vst [vmem:[%s514 + $0x3b8] sm:$0x7f] %v5511
      %5581 = vst [vmem:[%s514 + $0x400] sm:$0xff] %v5515
      %5582 = vst [vmem:[%s514 + $0x448] sm:$0x7f] %v5514
      %5583 = vst [vmem:[%s514 + $0x490] sm:$0xff] %v5518
      %5584 = vst [vmem:[%s514 + $0x4d8] sm:$0x7f] %v5517
      %5585 = vst [vmem:[%s514 + $0x520] sm:$0xff] %v5521
      %5586 = vst [vmem:[%s514 + $0x568] sm:$0x7f] %v5520
      %5587 = vst [vmem:[%s514 + $0x5b0] sm:$0xff] %v5524
      %5588 = vst [vmem:[%s514 + $0x5f8] sm:$0x7f] %v5523
      %5589 = vst [vmem:[%s514 + $0x640] sm:$0xff] %v5527
      %5590 = vst [vmem:[%s514 + $0x688] sm:$0x7f] %v5526
      %5591 = vst [vmem:[%s514 + $0x6d0] sm:$0xff] %v5530
      %5592 = vst [vmem:[%s514 + $0x718] sm:$0x7f] %v5529
      %5593 = vst [vmem:[%s514 + $0x760] sm:$0xff] %v5533
      %5594 = vst [vmem:[%s514 + $0x7a8] sm:$0x7f] %v5532
      %5595 = vst [vmem:[%s514 + $0x7f0] sm:$0xff] %v5536
      %5596 = vst [vmem:[%s514 + $0x838] sm:$0x7f] %v5535
      %v5599 = vrot.slane %v5325, 7
      %v5600 = vrot.slane %v5326, 7
      %v5601 = vsel %vm438, %v5599, %v5600
      %5604 = vst [vmem:[#allocation2 + $0x18] sm:$0xfe] %v5357
      %5605 = vst [vmem:[#allocation2 + $0x60] sm:$0xff] %v5359
      %5606 = vst [vmem:[#allocation2 + $0xa8] sm:$0xfe] %v5360
      %5607 = vst [vmem:[#allocation2 + $0xf0] sm:$0xff] %v5362
      %5608 = vst [vmem:[#allocation2 + $0x138] sm:$0xfe] %v5363
      %5609 = vst [vmem:[#allocation2 + $0x180] sm:$0xff] %v5365
      %5610 = vst [vmem:[#allocation2 + $0x1c8] sm:$0xfe] %v5366
      %5611 = vst [vmem:[#allocation2 + $0x210] sm:$0xff] %v5368
      %5612 = vst [vmem:[#allocation2 + $0x258] sm:$0xfe] %v5369
      %5613 = vst [vmem:[#allocation2 + $0x2a0] sm:$0xff] %v5371
      %5614 = vst [vmem:[#allocation2 + $0x2e8] sm:$0xfe] %v5372
      %5615 = vst [vmem:[#allocation2 + $0x330] sm:$0xff] %v5374
      %5616 = vst [vmem:[#allocation2 + $0x378] sm:$0xfe] %v5375
      %5617 = vst [vmem:[#allocation2 + $0x3c0] sm:$0xff] %v5377
      %5618 = vst [vmem:[#allocation2 + $0x408] sm:$0xfe] %v5378
      %5619 = vst [vmem:[#allocation2 + $0x450] sm:$0xff] %v5380
      %5620 = vst [vmem:[#allocation2 + $0x498] sm:$0xfe] %v5381
      %5621 = vst [vmem:[#allocation2 + $0x4e0] sm:$0xff] %v5383
      %5622 = vst [vmem:[#allocation2 + $0x528] sm:$0xfe] %v5384
      %5623 = vst [vmem:[#allocation2 + $0x570] sm:$0xff] %v5386
      %5624 = vst [vmem:[#allocation2 + $0x5b8] sm:$0xfe] %v5387
      %5625 = vst [vmem:[#allocation2 + $0x600] sm:$0xff] %v5389
      %5626 = vst [vmem:[#allocation2 + $0x648] sm:$0xfe] %v5390
      %5627 = vst [vmem:[#allocation2 + $0x690] sm:$0xff] %v5392
      %5628 = vst [vmem:[#allocation2 + $0x6d8] sm:$0xfe] %v5393
      %5629 = vst [vmem:[#allocation2 + $0x720] sm:$0xff] %v5395
      %5630 = vst [vmem:[#allocation2 + $0x768] sm:$0xfe] %v5396
      %5631 = vst [vmem:[#allocation2 + $0x7b0] sm:$0xff] %v5398
      %5632 = vst [vmem:[#allocation2 + $0x7f8] sm:$0xfe] %v5399
      %5633 = vst [vmem:[#allocation2 + $0x840] sm:$0xff] %v5401
      %5634 = vst [vmem:[#allocation2 + $0x888] sm:$0xfe] %v5599
      %5635 = vst [vmem:[#allocation2 + $0x8d0] sm:$0xff] %v5601
      %5636 = vst [vmem:[#allocation2 + $0x20] sm:$0xff] %v5295
      %5637 = vst [vmem:[#allocation2 + $0x68] sm:$0xff] %v5296
      %5638 = vst [vmem:[#allocation2 + $0xb0] sm:$0xff] %v5297
      %5639 = vst [vmem:[#allocation2 + $0xf8] sm:$0xff] %v5298
      %5640 = vst [vmem:[#allocation2 + $0x140] sm:$0xff] %v5299
      %5641 = vst [vmem:[#allocation2 + $0x188] sm:$0xff] %v5300
      %5642 = vst [vmem:[#allocation2 + $0x1d0] sm:$0xff] %v5301
      %5643 = vst [vmem:[#allocation2 + $0x218] sm:$0xff] %v5302
      %5644 = vst [vmem:[#allocation2 + $0x260] sm:$0xff] %v5303
      %5645 = vst [vmem:[#allocation2 + $0x2a8] sm:$0xff] %v5304
      %5646 = vst [vmem:[#allocation2 + $0x2f0] sm:$0xff] %v5305
      %5647 = vst [vmem:[#allocation2 + $0x338] sm:$0xff] %v5306
      %5648 = vst [vmem:[#allocation2 + $0x380] sm:$0xff] %v5307
      %5649 = vst [vmem:[#allocation2 + $0x3c8] sm:$0xff] %v5308
      %5650 = vst [vmem:[#allocation2 + $0x410] sm:$0xff] %v5309
      %5651 = vst [vmem:[#allocation2 + $0x458] sm:$0xff] %v5310
      %5652 = vst [vmem:[#allocation2 + $0x4a0] sm:$0xff] %v5311
      %5653 = vst [vmem:[#allocation2 + $0x4e8] sm:$0xff] %v5312
      %5654 = vst [vmem:[#allocation2 + $0x530] sm:$0xff] %v5313
      %5655 = vst [vmem:[#allocation2 + $0x578] sm:$0xff] %v5314
      %5656 = vst [vmem:[#allocation2 + $0x5c0] sm:$0xff] %v5315
      %5657 = vst [vmem:[#allocation2 + $0x608] sm:$0xff] %v5316
      %5658 = vst [vmem:[#allocation2 + $0x650] sm:$0xff] %v5317
      %5659 = vst [vmem:[#allocation2 + $0x698] sm:$0xff] %v5318
      %5660 = vst [vmem:[#allocation2 + $0x6e0] sm:$0xff] %v5319
      %5661 = vst [vmem:[#allocation2 + $0x728] sm:$0xff] %v5320
      %5662 = vst [vmem:[#allocation2 + $0x770] sm:$0xff] %v5321
      %5663 = vst [vmem:[#allocation2 + $0x7b8] sm:$0xff] %v5322
      %5664 = vst [vmem:[#allocation2 + $0x800] sm:$0xff] %v5323
      %5665 = vst [vmem:[#allocation2 + $0x848] sm:$0xff] %v5324
      %5666 = vst [vmem:[#allocation2 + $0x890] sm:$0xff] %v5325
      %5667 = vst [vmem:[#allocation2 + $0x8d8] sm:$0xff] %v5326
      %v5668 = vrot.slane %v5325, 1
      %v5669 = vrot.slane %v5326, 1
      %v5670 = vsel %vm575, %v5668, %v5669
      %5673 = vst [vmem:[#allocation2 + $0x28] sm:$0xff] %v5494
      %5674 = vst [vmem:[#allocation2 + $0x70] sm:$0x7f] %v5493
      %5675 = vst [vmem:[#allocation2 + $0xb8] sm:$0xff] %v5497
      %5676 = vst [vmem:[#allocation2 + $0x100] sm:$0x7f] %v5496
      %5677 = vst [vmem:[#allocation2 + $0x148] sm:$0xff] %v5500
      %5678 = vst [vmem:[#allocation2 + $0x190] sm:$0x7f] %v5499
      %5679 = vst [vmem:[#allocation2 + $0x1d8] sm:$0xff] %v5503
      %5680 = vst [vmem:[#allocation2 + $0x220] sm:$0x7f] %v5502
      %5681 = vst [vmem:[#allocation2 + $0x268] sm:$0xff] %v5506
      %5682 = vst [vmem:[#allocation2 + $0x2b0] sm:$0x7f] %v5505
      %5683 = vst [vmem:[#allocation2 + $0x2f8] sm:$0xff] %v5509
      %5684 = vst [vmem:[#allocation2 + $0x340] sm:$0x7f] %v5508
      %5685 = vst [vmem:[#allocation2 + $0x388] sm:$0xff] %v5512
      %5686 = vst [vmem:[#allocation2 + $0x3d0] sm:$0x7f] %v5511
      %5687 = vst [vmem:[#allocation2 + $0x418] sm:$0xff] %v5515
      %5688 = vst [vmem:[#allocation2 + $0x460] sm:$0x7f] %v5514
      %5689 = vst [vmem:[#allocation2 + $0x4a8] sm:$0xff] %v5518
      %5690 = vst [vmem:[#allocation2 + $0x4f0] sm:$0x7f] %v5517
      %5691 = vst [vmem:[#allocation2 + $0x538] sm:$0xff] %v5521
      %5692 = vst [vmem:[#allocation2 + $0x580] sm:$0x7f] %v5520
      %5693 = vst [vmem:[#allocation2 + $0x5c8] sm:$0xff] %v5524
      %5694 = vst [vmem:[#allocation2 + $0x610] sm:$0x7f] %v5523
      %5695 = vst [vmem:[#allocation2 + $0x658] sm:$0xff] %v5527
      %5696 = vst [vmem:[#allocation2 + $0x6a0] sm:$0x7f] %v5526
      %5697 = vst [vmem:[#allocation2 + $0x6e8] sm:$0xff] %v5530
      %5698 = vst [vmem:[#allocation2 + $0x730] sm:$0x7f] %v5529
      %5699 = vst [vmem:[#allocation2 + $0x778] sm:$0xff] %v5533
      %5700 = vst [vmem:[#allocation2 + $0x7c0] sm:$0x7f] %v5532
      %5701 = vst [vmem:[#allocation2 + $0x808] sm:$0xff] %v5536
      %5702 = vst [vmem:[#allocation2 + $0x850] sm:$0x7f] %v5535
      %5703 = vst [vmem:[#allocation2 + $0x898] sm:$0xff] %v5670
      %5704 = vst [vmem:[#allocation2 + $0x8e0] sm:$0x7f] %v5669
      %5705 = vst [vmem:[#allocation2 + $0x30] sm:$0xfe] %v5360
      %5706 = vst [vmem:[#allocation2 + $0x78] sm:$0xff] %v5362
      %5707 = vst [vmem:[#allocation2 + $0xc0] sm:$0xfe] %v5363
      %5708 = vst [vmem:[#allocation2 + $0x108] sm:$0xff] %v5365
      %5709 = vst [vmem:[#allocation2 + $0x150] sm:$0xfe] %v5366
      %5710 = vst [vmem:[#allocation2 + $0x198] sm:$0xff] %v5368
      %5711 = vst [vmem:[#allocation2 + $0x1e0] sm:$0xfe] %v5369
      %5712 = vst [vmem:[#allocation2 + $0x228] sm:$0xff] %v5371
      %5713 = vst [vmem:[#allocation2 + $0x270] sm:$0xfe] %v5372
      %5714 = vst [vmem:[#allocation2 + $0x2b8] sm:$0xff] %v5374
      %5715 = vst [vmem:[#allocation2 + $0x300] sm:$0xfe] %v5375
      %5716 = vst [vmem:[#allocation2 + $0x348] sm:$0xff] %v5377
      %5717 = vst [vmem:[#allocation2 + $0x390] sm:$0xfe] %v5378
      %5718 = vst [vmem:[#allocation2 + $0x3d8] sm:$0xff] %v5380
      %5719 = vst [vmem:[#allocation2 + $0x420] sm:$0xfe] %v5381
      %5720 = vst [vmem:[#allocation2 + $0x468] sm:$0xff] %v5383
      %5721 = vst [vmem:[#allocation2 + $0x4b0] sm:$0xfe] %v5384
      %5722 = vst [vmem:[#allocation2 + $0x4f8] sm:$0xff] %v5386
      %5723 = vst [vmem:[#allocation2 + $0x540] sm:$0xfe] %v5387
      %5724 = vst [vmem:[#allocation2 + $0x588] sm:$0xff] %v5389
      %5725 = vst [vmem:[#allocation2 + $0x5d0] sm:$0xfe] %v5390
      %5726 = vst [vmem:[#allocation2 + $0x618] sm:$0xff] %v5392
      %5727 = vst [vmem:[#allocation2 + $0x660] sm:$0xfe] %v5393
      %5728 = vst [vmem:[#allocation2 + $0x6a8] sm:$0xff] %v5395
      %5729 = vst [vmem:[#allocation2 + $0x6f0] sm:$0xfe] %v5396
      %5730 = vst [vmem:[#allocation2 + $0x738] sm:$0xff] %v5398
      %5731 = vst [vmem:[#allocation2 + $0x780] sm:$0xfe] %v5399
      %5732 = vst [vmem:[#allocation2 + $0x7c8] sm:$0xff] %v5401
      %5733 = vst [vmem:[#allocation2 + $0x810] sm:$0xfe] %v5599
      %5734 = vst [vmem:[#allocation2 + $0x858] sm:$0xff] %v5601
      %5735 = vst [vmem:[#allocation2 + $0x38] sm:$0xff] %v5297
      %5736 = vst [vmem:[#allocation2 + $0x80] sm:$0xff] %v5298
      %5737 = vst [vmem:[#allocation2 + $0xc8] sm:$0xff] %v5299
      %5738 = vst [vmem:[#allocation2 + $0x110] sm:$0xff] %v5300
      %5739 = vst [vmem:[#allocation2 + $0x158] sm:$0xff] %v5301
      %5740 = vst [vmem:[#allocation2 + $0x1a0] sm:$0xff] %v5302
      %5741 = vst [vmem:[#allocation2 + $0x1e8] sm:$0xff] %v5303
      %5742 = vst [vmem:[#allocation2 + $0x230] sm:$0xff] %v5304
      %5743 = vst [vmem:[#allocation2 + $0x278] sm:$0xff] %v5305
      %5744 = vst [vmem:[#allocation2 + $0x2c0] sm:$0xff] %v5306
      %5745 = vst [vmem:[#allocation2 + $0x308] sm:$0xff] %v5307
      %5746 = vst [vmem:[#allocation2 + $0x350] sm:$0xff] %v5308
      %5747 = vst [vmem:[#allocation2 + $0x398] sm:$0xff] %v5309
      %5748 = vst [vmem:[#allocation2 + $0x3e0] sm:$0xff] %v5310
      %5749 = vst [vmem:[#allocation2 + $0x428] sm:$0xff] %v5311
      %5750 = vst [vmem:[#allocation2 + $0x470] sm:$0xff] %v5312
      %5751 = vst [vmem:[#allocation2 + $0x4b8] sm:$0xff] %v5313
      %5752 = vst [vmem:[#allocation2 + $0x500] sm:$0xff] %v5314
      %5753 = vst [vmem:[#allocation2 + $0x548] sm:$0xff] %v5315
      %5754 = vst [vmem:[#allocation2 + $0x590] sm:$0xff] %v5316
      %5755 = vst [vmem:[#allocation2 + $0x5d8] sm:$0xff] %v5317
      %5756 = vst [vmem:[#allocation2 + $0x620] sm:$0xff] %v5318
      %5757 = vst [vmem:[#allocation2 + $0x668] sm:$0xff] %v5319
      %5758 = vst [vmem:[#allocation2 + $0x6b0] sm:$0xff] %v5320
      %5759 = vst [vmem:[#allocation2 + $0x6f8] sm:$0xff] %v5321
      %5760 = vst [vmem:[#allocation2 + $0x740] sm:$0xff] %v5322
      %5761 = vst [vmem:[#allocation2 + $0x788] sm:$0xff] %v5323
      %5762 = vst [vmem:[#allocation2 + $0x7d0] sm:$0xff] %v5324
      %5763 = vst [vmem:[#allocation2 + $0x818] sm:$0xff] %v5325
      %5764 = vst [vmem:[#allocation2 + $0x860] sm:$0xff] %v5326
      %5765 = vst [vmem:[#allocation2 + $0x40] sm:$0xff] %v5497
      %5766 = vst [vmem:[#allocation2 + $0x88] sm:$0x7f] %v5496
      %5767 = vst [vmem:[#allocation2 + $0xd0] sm:$0xff] %v5500
      %5768 = vst [vmem:[#allocation2 + $0x118] sm:$0x7f] %v5499
      %5769 = vst [vmem:[#allocation2 + $0x160] sm:$0xff] %v5503
      %5770 = vst [vmem:[#allocation2 + $0x1a8] sm:$0x7f] %v5502
      %5771 = vst [vmem:[#allocation2 + $0x1f0] sm:$0xff] %v5506
      %5772 = vst [vmem:[#allocation2 + $0x238] sm:$0x7f] %v5505
      %5773 = vst [vmem:[#allocation2 + $0x280] sm:$0xff] %v5509
      %5774 = vst [vmem:[#allocation2 + $0x2c8] sm:$0x7f] %v5508
      %5775 = vst [vmem:[#allocation2 + $0x310] sm:$0xff] %v5512
      %5776 = vst [vmem:[#allocation2 + $0x358] sm:$0x7f] %v5511
      %5777 = vst [vmem:[#allocation2 + $0x3a0] sm:$0xff] %v5515
      %5778 = vst [vmem:[#allocation2 + $0x3e8] sm:$0x7f] %v5514
      %5779 = vst [vmem:[#allocation2 + $0x430] sm:$0xff] %v5518
      %5780 = vst [vmem:[#allocation2 + $0x478] sm:$0x7f] %v5517
      %5781 = vst [vmem:[#allocation2 + $0x4c0] sm:$0xff] %v5521
      %5782 = vst [vmem:[#allocation2 + $0x508] sm:$0x7f] %v5520
      %5783 = vst [vmem:[#allocation2 + $0x550] sm:$0xff] %v5524
      %5784 = vst [vmem:[#allocation2 + $0x598] sm:$0x7f] %v5523
      %5785 = vst [vmem:[#allocation2 + $0x5e0] sm:$0xff] %v5527
      %5786 = vst [vmem:[#allocation2 + $0x628] sm:$0x7f] %v5526
      %5787 = vst [vmem:[#allocation2 + $0x670] sm:$0xff] %v5530
      %5788 = vst [vmem:[#allocation2 + $0x6b8] sm:$0x7f] %v5529
      %5789 = vst [vmem:[#allocation2 + $0x700] sm:$0xff] %v5533
      %5790 = vst [vmem:[#allocation2 + $0x748] sm:$0x7f] %v5532
      %5791 = vst [vmem:[#allocation2 + $0x790] sm:$0xff] %v5536
      %5792 = vst [vmem:[#allocation2 + $0x7d8] sm:$0x7f] %v5535
      %5793 = vst [vmem:[#allocation2 + $0x820] sm:$0xff] %v5670
      %5794 = vst [vmem:[#allocation2 + $0x868] sm:$0x7f] %v5669
      %v5795 = vld [vmem:[#allocation2] sm:$0xff]
      %v5796 = vld [vmem:[#allocation2 + $0x8] sm:$0xff]
      %v5797 = vld [vmem:[#allocation2 + $0x10] sm:$0xff]
      %v5798 = vld [vmem:[#allocation2 + $0x18] sm:$0xff]
      %v5799 = vld [vmem:[#allocation2 + $0x20] sm:$0xff]
      %v5800 = vld [vmem:[#allocation2 + $0x28] sm:$0xff]
      %v5801 = vld [vmem:[#allocation2 + $0x30] sm:$0xff]
      %v5802 = vld [vmem:[#allocation2 + $0x38] sm:$0xff]
      %v5803 = vld [vmem:[#allocation2 + $0x40] sm:$0xff]
      %v5804 = vld [vmem:[#allocation2 + $0x48] sm:$0xff]
      %v5805 = vld [vmem:[#allocation2 + $0x50] sm:$0xff]
      %v5806 = vld [vmem:[#allocation2 + $0x58] sm:$0xff]
      %v5807 = vld [vmem:[#allocation2 + $0x60] sm:$0xff]
      %v5808 = vld [vmem:[#allocation2 + $0x68] sm:$0xff]
      %v5809 = vld [vmem:[#allocation2 + $0x70] sm:$0xff]
      %v5810 = vld [vmem:[#allocation2 + $0x78] sm:$0xff]
      %v5811 = vld [vmem:[#allocation2 + $0x80] sm:$0xff]
      %v5812 = vld [vmem:[#allocation2 + $0x88] sm:$0xff]
      %v5813 = vld [vmem:[#allocation2 + $0x90] sm:$0xff]
      %v5814 = vld [vmem:[#allocation2 + $0x98] sm:$0xff]
      %v5815 = vld [vmem:[#allocation2 + $0xa0] sm:$0xff]
      %v5816 = vld [vmem:[#allocation2 + $0xa8] sm:$0xff]
      %v5817 = vld [vmem:[#allocation2 + $0xb0] sm:$0xff]
      %v5818 = vld [vmem:[#allocation2 + $0xb8] sm:$0xff]
      %v5819 = vld [vmem:[#allocation2 + $0xc0] sm:$0xff]
      %v5820 = vld [vmem:[#allocation2 + $0xc8] sm:$0xff]
      %v5821 = vld [vmem:[#allocation2 + $0xd0] sm:$0xff]
      %v5822 = vld [vmem:[#allocation2 + $0xd8] sm:$0xff]
      %v5823 = vld [vmem:[#allocation2 + $0xe0] sm:$0xff]
      %v5824 = vld [vmem:[#allocation2 + $0xe8] sm:$0xff]
      %v5825 = vld [vmem:[#allocation2 + $0xf0] sm:$0xff]
      %v5826 = vld [vmem:[#allocation2 + $0xf8] sm:$0xff]
      %v5827 = vld [vmem:[#allocation2 + $0x100] sm:$0xff]
      %v5828 = vld [vmem:[#allocation2 + $0x108] sm:$0xff]
      %v5829 = vld [vmem:[#allocation2 + $0x110] sm:$0xff]
      %v5830 = vld [vmem:[#allocation2 + $0x118] sm:$0xff]
      %v5831 = vld [vmem:[#allocation2 + $0x120] sm:$0xff]
      %v5832 = vld [vmem:[#allocation2 + $0x128] sm:$0xff]
      %v5833 = vld [vmem:[#allocation2 + $0x130] sm:$0xff]
      %v5834 = vld [vmem:[#allocation2 + $0x138] sm:$0xff]
      %v5835 = vld [vmem:[#allocation2 + $0x140] sm:$0xff]
      %v5836 = vld [vmem:[#allocation2 + $0x148] sm:$0xff]
      %v5837 = vld [vmem:[#allocation2 + $0x150] sm:$0xff]
      %v5838 = vld [vmem:[#allocation2 + $0x158] sm:$0xff]
      %v5839 = vld [vmem:[#allocation2 + $0x160] sm:$0xff]
      %v5840 = vld [vmem:[#allocation2 + $0x168] sm:$0xff]
      %v5841 = vld [vmem:[#allocation2 + $0x170] sm:$0xff]
      %v5842 = vld [vmem:[#allocation2 + $0x178] sm:$0xff]
      %v5843 = vld [vmem:[#allocation2 + $0x180] sm:$0xff]
      %v5844 = vld [vmem:[#allocation2 + $0x188] sm:$0xff]
      %v5845 = vld [vmem:[#allocation2 + $0x190] sm:$0xff]
      %v5846 = vld [vmem:[#allocation2 + $0x198] sm:$0xff]
      %v5847 = vld [vmem:[#allocation2 + $0x1a0] sm:$0xff]
      %v5848 = vld [vmem:[#allocation2 + $0x1a8] sm:$0xff]
      %v5849 = vld [vmem:[#allocation2 + $0x1b0] sm:$0xff]
      %v5850 = vld [vmem:[#allocation2 + $0x1b8] sm:$0xff]
      %v5851 = vld [vmem:[#allocation2 + $0x1c0] sm:$0xff]
      %v5852 = vld [vmem:[#allocation2 + $0x1c8] sm:$0xff]
      %v5853 = vld [vmem:[#allocation2 + $0x1d0] sm:$0xff]
      %v5854 = vld [vmem:[#allocation2 + $0x1d8] sm:$0xff]
      %v5855 = vld [vmem:[#allocation2 + $0x1e0] sm:$0xff]
      %v5856 = vld [vmem:[#allocation2 + $0x1e8] sm:$0xff]
      %v5857 = vld [vmem:[#allocation2 + $0x1f0] sm:$0xff]
      %v5858 = vld [vmem:[#allocation2 + $0x1f8] sm:$0xff]
      %v5859 = vld [vmem:[#allocation2 + $0x200] sm:$0xff]
      %v5860 = vld [vmem:[#allocation2 + $0x208] sm:$0xff]
      %v5861 = vld [vmem:[#allocation2 + $0x210] sm:$0xff]
      %v5862 = vld [vmem:[#allocation2 + $0x218] sm:$0xff]
      %v5863 = vld [vmem:[#allocation2 + $0x220] sm:$0xff]
      %v5864 = vld [vmem:[#allocation2 + $0x228] sm:$0xff]
      %v5865 = vld [vmem:[#allocation2 + $0x230] sm:$0xff]
      %v5866 = vld [vmem:[#allocation2 + $0x238] sm:$0xff]
      %v5867 = vld [vmem:[#allocation2 + $0x240] sm:$0xff]
      %v5868 = vld [vmem:[#allocation2 + $0x248] sm:$0xff]
      %v5869 = vld [vmem:[#allocation2 + $0x250] sm:$0xff]
      %v5870 = vld [vmem:[#allocation2 + $0x258] sm:$0xff]
      %v5871 = vld [vmem:[#allocation2 + $0x260] sm:$0xff]
      %v5872 = vld [vmem:[#allocation2 + $0x268] sm:$0xff]
      %v5873 = vld [vmem:[#allocation2 + $0x270] sm:$0xff]
      %v5874 = vld [vmem:[#allocation2 + $0x278] sm:$0xff]
      %v5875 = vld [vmem:[#allocation2 + $0x280] sm:$0xff]
      %v5876 = vld [vmem:[#allocation2 + $0x288] sm:$0xff]
      %v5877 = vld [vmem:[#allocation2 + $0x290] sm:$0xff]
      %v5878 = vld [vmem:[#allocation2 + $0x298] sm:$0xff]
      %v5879 = vld [vmem:[#allocation2 + $0x2a0] sm:$0xff]
      %v5880 = vld [vmem:[#allocation2 + $0x2a8] sm:$0xff]
      %v5881 = vld [vmem:[#allocation2 + $0x2b0] sm:$0xff]
      %v5882 = vld [vmem:[#allocation2 + $0x2b8] sm:$0xff]
      %v5883 = vld [vmem:[#allocation2 + $0x2c0] sm:$0xff]
      %v5884 = vld [vmem:[#allocation2 + $0x2c8] sm:$0xff]
      %v5885 = vld [vmem:[#allocation2 + $0x2d0] sm:$0xff]
      %v5886 = vld [vmem:[#allocation2 + $0x2d8] sm:$0xff]
      %v5887 = vld [vmem:[#allocation2 + $0x2e0] sm:$0xff]
      %v5888 = vld [vmem:[#allocation2 + $0x2e8] sm:$0xff]
      %v5889 = vld [vmem:[#allocation2 + $0x2f0] sm:$0xff]
      %v5890 = vld [vmem:[#allocation2 + $0x2f8] sm:$0xff]
      %v5891 = vld [vmem:[#allocation2 + $0x300] sm:$0xff]
      %v5892 = vld [vmem:[#allocation2 + $0x308] sm:$0xff]
      %v5893 = vld [vmem:[#allocation2 + $0x310] sm:$0xff]
      %v5894 = vld [vmem:[#allocation2 + $0x318] sm:$0xff]
      %v5895 = vld [vmem:[#allocation2 + $0x320] sm:$0xff]
      %v5896 = vld [vmem:[#allocation2 + $0x328] sm:$0xff]
      %v5897 = vld [vmem:[#allocation2 + $0x330] sm:$0xff]
      %v5898 = vld [vmem:[#allocation2 + $0x338] sm:$0xff]
      %v5899 = vld [vmem:[#allocation2 + $0x340] sm:$0xff]
      %v5900 = vld [vmem:[#allocation2 + $0x348] sm:$0xff]
      %v5901 = vld [vmem:[#allocation2 + $0x350] sm:$0xff]
      %v5902 = vld [vmem:[#allocation2 + $0x358] sm:$0xff]
      %v5903 = vld [vmem:[#allocation2 + $0x360] sm:$0xff]
      %v5904 = vld [vmem:[#allocation2 + $0x368] sm:$0xff]
      %v5905 = vld [vmem:[#allocation2 + $0x370] sm:$0xff]
      %v5906 = vld [vmem:[#allocation2 + $0x378] sm:$0xff]
      %v5907 = vld [vmem:[#allocation2 + $0x380] sm:$0xff]
      %v5908 = vld [vmem:[#allocation2 + $0x388] sm:$0xff]
      %v5909 = vld [vmem:[#allocation2 + $0x390] sm:$0xff]
      %v5910 = vld [vmem:[#allocation2 + $0x398] sm:$0xff]
      %v5911 = vld [vmem:[#allocation2 + $0x3a0] sm:$0xff]
      %v5912 = vld [vmem:[#allocation2 + $0x3a8] sm:$0xff]
      %v5913 = vld [vmem:[#allocation2 + $0x3b0] sm:$0xff]
      %v5914 = vld [vmem:[#allocation2 + $0x3b8] sm:$0xff]
      %v5915 = vld [vmem:[#allocation2 + $0x3c0] sm:$0xff]
      %v5916 = vld [vmem:[#allocation2 + $0x3c8] sm:$0xff]
      %v5917 = vld [vmem:[#allocation2 + $0x3d0] sm:$0xff]
      %v5918 = vld [vmem:[#allocation2 + $0x3d8] sm:$0xff]
      %v5919 = vld [vmem:[#allocation2 + $0x3e0] sm:$0xff]
      %v5920 = vld [vmem:[#allocation2 + $0x3e8] sm:$0xff]
      %v5921 = vld [vmem:[#allocation2 + $0x3f0] sm:$0xff]
      %v5922 = vld [vmem:[#allocation2 + $0x3f8] sm:$0xff]
      %v5923 = vld [vmem:[#allocation2 + $0x400] sm:$0xff]
      %v5924 = vld [vmem:[#allocation2 + $0x408] sm:$0xff]
      %v5925 = vld [vmem:[#allocation2 + $0x410] sm:$0xff]
      %v5926 = vld [vmem:[#allocation2 + $0x418] sm:$0xff]
      %v5927 = vld [vmem:[#allocation2 + $0x420] sm:$0xff]
      %v5928 = vld [vmem:[#allocation2 + $0x428] sm:$0xff]
      %v5929 = vld [vmem:[#allocation2 + $0x430] sm:$0xff]
      %v5930 = vld [vmem:[#allocation2 + $0x438] sm:$0xff]
      %v5931 = vld [vmem:[#allocation2 + $0x440] sm:$0xff]
      %v5932 = vld [vmem:[#allocation2 + $0x448] sm:$0xff]
      %v5933 = vld [vmem:[#allocation2 + $0x450] sm:$0xff]
      %v5934 = vld [vmem:[#allocation2 + $0x458] sm:$0xff]
      %v5935 = vld [vmem:[#allocation2 + $0x460] sm:$0xff]
      %v5936 = vld [vmem:[#allocation2 + $0x468] sm:$0xff]
      %v5937 = vld [vmem:[#allocation2 + $0x470] sm:$0xff]
      %v5938 = vld [vmem:[#allocation2 + $0x478] sm:$0xff]
      %v5939 = vld [vmem:[#allocation2 + $0x480] sm:$0xff]
      %v5940 = vld [vmem:[#allocation2 + $0x488] sm:$0xff]
      %v5941 = vld [vmem:[#allocation2 + $0x490] sm:$0xff]
      %v5942 = vld [vmem:[#allocation2 + $0x498] sm:$0xff]
      %v5943 = vld [vmem:[#allocation2 + $0x4a0] sm:$0xff]
      %v5944 = vld [vmem:[#allocation2 + $0x4a8] sm:$0xff]
      %v5945 = vld [vmem:[#allocation2 + $0x4b0] sm:$0xff]
      %v5946 = vld [vmem:[#allocation2 + $0x4b8] sm:$0xff]
      %v5947 = vld [vmem:[#allocation2 + $0x4c0] sm:$0xff]
      %v5948 = vld [vmem:[#allocation2 + $0x4c8] sm:$0xff]
      %v5949 = vld [vmem:[#allocation2 + $0x4d0] sm:$0xff]
      %v5950 = vld [vmem:[#allocation2 + $0x4d8] sm:$0xff]
      %v5951 = vld [vmem:[#allocation2 + $0x4e0] sm:$0xff]
      %v5952 = vld [vmem:[#allocation2 + $0x4e8] sm:$0xff]
      %v5953 = vld [vmem:[#allocation2 + $0x4f0] sm:$0xff]
      %v5954 = vld [vmem:[#allocation2 + $0x4f8] sm:$0xff]
      %v5955 = vld [vmem:[#allocation2 + $0x500] sm:$0xff]
      %v5956 = vld [vmem:[#allocation2 + $0x508] sm:$0xff]
      %v5957 = vld [vmem:[#allocation2 + $0x510] sm:$0xff]
      %v5958 = vld [vmem:[#allocation2 + $0x518] sm:$0xff]
      %v5959 = vld [vmem:[#allocation2 + $0x520] sm:$0xff]
      %v5960 = vld [vmem:[#allocation2 + $0x528] sm:$0xff]
      %v5961 = vld [vmem:[#allocation2 + $0x530] sm:$0xff]
      %v5962 = vld [vmem:[#allocation2 + $0x538] sm:$0xff]
      %v5963 = vld [vmem:[#allocation2 + $0x540] sm:$0xff]
      %v5964 = vld [vmem:[#allocation2 + $0x548] sm:$0xff]
      %v5965 = vld [vmem:[#allocation2 + $0x550] sm:$0xff]
      %v5966 = vld [vmem:[#allocation2 + $0x558] sm:$0xff]
      %v5967 = vld [vmem:[#allocation2 + $0x560] sm:$0xff]
      %v5968 = vld [vmem:[#allocation2 + $0x568] sm:$0xff]
      %v5969 = vld [vmem:[#allocation2 + $0x570] sm:$0xff]
      %v5970 = vld [vmem:[#allocation2 + $0x578] sm:$0xff]
      %v5971 = vld [vmem:[#allocation2 + $0x580] sm:$0xff]
      %v5972 = vld [vmem:[#allocation2 + $0x588] sm:$0xff]
      %v5973 = vld [vmem:[#allocation2 + $0x590] sm:$0xff]
      %v5974 = vld [vmem:[#allocation2 + $0x598] sm:$0xff]
      %v5975 = vld [vmem:[#allocation2 + $0x5a0] sm:$0xff]
      %v5976 = vld [vmem:[#allocation2 + $0x5a8] sm:$0xff]
      %v5977 = vld [vmem:[#allocation2 + $0x5b0] sm:$0xff]
      %v5978 = vld [vmem:[#allocation2 + $0x5b8] sm:$0xff]
      %v5979 = vld [vmem:[#allocation2 + $0x5c0] sm:$0xff]
      %v5980 = vld [vmem:[#allocation2 + $0x5c8] sm:$0xff]
      %v5981 = vld [vmem:[#allocation2 + $0x5d0] sm:$0xff]
      %v5982 = vld [vmem:[#allocation2 + $0x5d8] sm:$0xff]
      %v5983 = vld [vmem:[#allocation2 + $0x5e0] sm:$0xff]
      %v5984 = vld [vmem:[#allocation2 + $0x5e8] sm:$0xff]
      %v5985 = vld [vmem:[#allocation2 + $0x5f0] sm:$0xff]
      %v5986 = vld [vmem:[#allocation2 + $0x5f8] sm:$0xff]
      %v5987 = vld [vmem:[#allocation2 + $0x600] sm:$0xff]
      %v5988 = vld [vmem:[#allocation2 + $0x608] sm:$0xff]
      %v5989 = vld [vmem:[#allocation2 + $0x610] sm:$0xff]
      %v5990 = vld [vmem:[#allocation2 + $0x618] sm:$0xff]
      %v5991 = vld [vmem:[#allocation2 + $0x620] sm:$0xff]
      %v5992 = vld [vmem:[#allocation2 + $0x628] sm:$0xff]
      %v5993 = vld [vmem:[#allocation2 + $0x630] sm:$0xff]
      %v5994 = vld [vmem:[#allocation2 + $0x638] sm:$0xff]
      %v5995 = vld [vmem:[#allocation2 + $0x640] sm:$0xff]
      %v5996 = vld [vmem:[#allocation2 + $0x648] sm:$0xff]
      %v5997 = vld [vmem:[#allocation2 + $0x650] sm:$0xff]
      %v5998 = vld [vmem:[#allocation2 + $0x658] sm:$0xff]
      %v5999 = vld [vmem:[#allocation2 + $0x660] sm:$0xff]
      %v6000 = vld [vmem:[#allocation2 + $0x668] sm:$0xff]
      %v6001 = vld [vmem:[#allocation2 + $0x670] sm:$0xff]
      %v6002 = vld [vmem:[#allocation2 + $0x678] sm:$0xff]
      %v6003 = vld [vmem:[#allocation2 + $0x680] sm:$0xff]
      %v6004 = vld [vmem:[#allocation2 + $0x688] sm:$0xff]
      %v6005 = vld [vmem:[#allocation2 + $0x690] sm:$0xff]
      %v6006 = vld [vmem:[#allocation2 + $0x698] sm:$0xff]
      %v6007 = vld [vmem:[#allocation2 + $0x6a0] sm:$0xff]
      %v6008 = vld [vmem:[#allocation2 + $0x6a8] sm:$0xff]
      %v6009 = vld [vmem:[#allocation2 + $0x6b0] sm:$0xff]
      %v6010 = vld [vmem:[#allocation2 + $0x6b8] sm:$0xff]
      %v6011 = vld [vmem:[#allocation2 + $0x6c0] sm:$0xff]
      %v6012 = vld [vmem:[#allocation2 + $0x6c8] sm:$0xff]
      %v6013 = vld [vmem:[#allocation2 + $0x6d0] sm:$0xff]
      %v6014 = vld [vmem:[#allocation2 + $0x6d8] sm:$0xff]
      %v6015 = vld [vmem:[#allocation2 + $0x6e0] sm:$0xff]
      %v6016 = vld [vmem:[#allocation2 + $0x6e8] sm:$0xff]
      %v6017 = vld [vmem:[#allocation2 + $0x6f0] sm:$0xff]
      %v6018 = vld [vmem:[#allocation2 + $0x6f8] sm:$0xff]
      %v6019 = vld [vmem:[#allocation2 + $0x700] sm:$0xff]
      %v6020 = vld [vmem:[#allocation2 + $0x708] sm:$0xff]
      %v6021 = vld [vmem:[#allocation2 + $0x710] sm:$0xff]
      %v6022 = vld [vmem:[#allocation2 + $0x718] sm:$0xff]
      %v6023 = vld [vmem:[#allocation2 + $0x720] sm:$0xff]
      %v6024 = vld [vmem:[#allocation2 + $0x728] sm:$0xff]
      %v6025 = vld [vmem:[#allocation2 + $0x730] sm:$0xff]
      %v6026 = vld [vmem:[#allocation2 + $0x738] sm:$0xff]
      %v6027 = vld [vmem:[#allocation2 + $0x740] sm:$0xff]
      %v6028 = vld [vmem:[#allocation2 + $0x748] sm:$0xff]
      %v6029 = vld [vmem:[#allocation2 + $0x750] sm:$0xff]
      %v6030 = vld [vmem:[#allocation2 + $0x758] sm:$0xff]
      %v6031 = vld [vmem:[#allocation2 + $0x760] sm:$0xff]
      %v6032 = vld [vmem:[#allocation2 + $0x768] sm:$0xff]
      %v6033 = vld [vmem:[#allocation2 + $0x770] sm:$0xff]
      %v6034 = vld [vmem:[#allocation2 + $0x778] sm:$0xff]
      %v6035 = vld [vmem:[#allocation2 + $0x780] sm:$0xff]
      %v6036 = vld [vmem:[#allocation2 + $0x788] sm:$0xff]
      %v6037 = vld [vmem:[#allocation2 + $0x790] sm:$0xff]
      %v6038 = vld [vmem:[#allocation2 + $0x798] sm:$0xff]
      %v6039 = vld [vmem:[#allocation2 + $0x7a0] sm:$0xff]
      %v6040 = vld [vmem:[#allocation2 + $0x7a8] sm:$0xff]
      %v6041 = vld [vmem:[#allocation2 + $0x7b0] sm:$0xff]
      %v6042 = vld [vmem:[#allocation2 + $0x7b8] sm:$0xff]
      %v6043 = vld [vmem:[#allocation2 + $0x7c0] sm:$0xff]
      %v6044 = vld [vmem:[#allocation2 + $0x7c8] sm:$0xff]
      %v6045 = vld [vmem:[#allocation2 + $0x7d0] sm:$0xff]
      %v6046 = vld [vmem:[#allocation2 + $0x7d8] sm:$0xff]
      %v6047 = vld [vmem:[#allocation2 + $0x7e0] sm:$0xff]
      %v6048 = vld [vmem:[#allocation2 + $0x7e8] sm:$0xff]
      %v6049 = vld [vmem:[#allocation2 + $0x7f0] sm:$0xff]
      %v6050 = vld [vmem:[#allocation2 + $0x7f8] sm:$0xff]
      %v6051 = vld [vmem:[#allocation2 + $0x800] sm:$0xff]
      %v6052 = vld [vmem:[#allocation2 + $0x808] sm:$0xff]
      %v6053 = vld [vmem:[#allocation2 + $0x810] sm:$0xff]
      %v6054 = vld [vmem:[#allocation2 + $0x818] sm:$0xff]
      %v6055 = vld [vmem:[#allocation2 + $0x820] sm:$0xff]
      %v6056 = vld [vmem:[#allocation2 + $0x828] sm:$0xff]
      %v6057 = vld [vmem:[#allocation2 + $0x830] sm:$0xff]
      %v6058 = vld [vmem:[#allocation2 + $0x838] sm:$0xff]
      %v6059 = vld [vmem:[#allocation2 + $0x840] sm:$0xff]
      %v6060 = vld [vmem:[#allocation2 + $0x848] sm:$0xff]
      %v6061 = vld [vmem:[#allocation2 + $0x850] sm:$0xff]
      %v6062 = vld [vmem:[#allocation2 + $0x858] sm:$0xff]
      %v6063 = vld [vmem:[#allocation2 + $0x860] sm:$0xff]
      %v6064 = vld [vmem:[#allocation2 + $0x868] sm:$0xff]
      %v6065 = vld [vmem:[#allocation2 + $0x870] sm:$0xff]
      %v6066 = vld [vmem:[#allocation2 + $0x878] sm:$0xff]
      %v6067 = vld [vmem:[#allocation2 + $0x880] sm:$0xff]
      %v6068 = vld [vmem:[#allocation2 + $0x888] sm:$0xff]
      %v6069 = vld [vmem:[#allocation2 + $0x890] sm:$0xff]
      %v6070 = vld [vmem:[#allocation2 + $0x898] sm:$0xff]
      %v6071 = vld [vmem:[#allocation2 + $0x8a0] sm:$0xff]
      %v6072 = vld [vmem:[#allocation2 + $0x8a8] sm:$0xff]
      %v6073 = vld [vmem:[#allocation2 + $0x8b0] sm:$0xff]
      %v6074 = vld [vmem:[#allocation2 + $0x8b8] sm:$0xff]
      %v6075 = vld [vmem:[#allocation2 + $0x8c0] sm:$0xff]
      %v6076 = vld [vmem:[#allocation2 + $0x8c8] sm:$0xff]
      %v6077 = vld [vmem:[#allocation2 + $0x8d0] sm:$0xff]
      %v6078 = vld [vmem:[#allocation2 + $0x8d8] sm:$0xff]
      %v6079 = vld [vmem:[#allocation2 + $0x8e0] sm:$0xff]
      %v6080 = vld [vmem:[#allocation2 + $0x8e8] sm:$0xff]
      %v6081 = vld [vmem:[#allocation2 + $0x8f0] sm:$0xff]
      %v6082 = vld [vmem:[#allocation2 + $0x8f8] sm:$0xff]
      %v6083 = vld [vmem:[%s1] sm:$0xff]
      %v6084 = vld [vmem:[%s1 + $0x8] sm:$0xff]
      %v6085 = vld [vmem:[%s1 + $0x10] sm:$0xff]
      %v6086 = vld [vmem:[%s1 + $0x18] sm:$0xff]
      %v6087 = vld [vmem:[%s1 + $0x20] sm:$0xff]
      %v6088 = vld [vmem:[%s1 + $0x28] sm:$0xff]
      %v6089 = vld [vmem:[%s1 + $0x30] sm:$0xff]
      %v6090 = vld [vmem:[%s1 + $0x38] sm:$0xff]
      %v6091 = vld [vmem:[%s1 + $0x40] sm:$0xff]
      %v6092 = vld [vmem:[%s1 + $0x48] sm:$0xff]
      %v6093 = vld [vmem:[%s1 + $0x50] sm:$0xff]
      %v6094 = vld [vmem:[%s1 + $0x58] sm:$0xff]
      %v6095 = vld [vmem:[%s1 + $0x60] sm:$0xff]
      %v6096 = vld [vmem:[%s1 + $0x68] sm:$0xff]
      %v6097 = vld [vmem:[%s1 + $0x70] sm:$0xff]
      %v6098 = vld [vmem:[%s1 + $0x78] sm:$0xff]
      %v6099 = vld [vmem:[%s1 + $0x80] sm:$0xff]
      %v6100 = vld [vmem:[%s1 + $0x88] sm:$0xff]
      %v6101 = vld [vmem:[%s1 + $0x90] sm:$0xff]
      %v6102 = vld [vmem:[%s1 + $0x98] sm:$0xff]
      %v6103 = vld [vmem:[%s1 + $0xa0] sm:$0xff]
      %v6104 = vld [vmem:[%s1 + $0xa8] sm:$0xff]
      %v6105 = vld [vmem:[%s1 + $0xb0] sm:$0xff]
      %v6106 = vld [vmem:[%s1 + $0xb8] sm:$0xff]
      %v6107 = vld [vmem:[%s1 + $0xc0] sm:$0xff]
      %v6108 = vld [vmem:[%s1 + $0xc8] sm:$0xff]
      %v6109 = vld [vmem:[%s1 + $0xd0] sm:$0xff]
      %v6110 = vld [vmem:[%s1 + $0xd8] sm:$0xff]
      %v6111 = vld [vmem:[%s1 + $0xe0] sm:$0xff]
      %v6112 = vld [vmem:[%s1 + $0xe8] sm:$0xff]
      %v6113 = vld [vmem:[%s1 + $0xf0] sm:$0xff]
      %v6114 = vld [vmem:[%s1 + $0xf8] sm:$0xff]
      %v6115 = vld [vmem:[%s1 + $0x100] sm:$0xff]
      %v6116 = vld [vmem:[%s1 + $0x108] sm:$0xff]
      %v6117 = vld [vmem:[%s1 + $0x110] sm:$0xff]
      %v6118 = vld [vmem:[%s1 + $0x118] sm:$0xff]
      %v6119 = vld [vmem:[%s1 + $0x120] sm:$0xff]
      %v6120 = vld [vmem:[%s1 + $0x128] sm:$0xff]
      %v6121 = vld [vmem:[%s1 + $0x130] sm:$0xff]
      %v6122 = vld [vmem:[%s1 + $0x138] sm:$0xff]
      %v6123 = vld [vmem:[%s1 + $0x140] sm:$0xff]
      %v6124 = vld [vmem:[%s1 + $0x148] sm:$0xff]
      %v6125 = vld [vmem:[%s1 + $0x150] sm:$0xff]
      %v6126 = vld [vmem:[%s1 + $0x158] sm:$0xff]
      %v6127 = vld [vmem:[%s1 + $0x160] sm:$0xff]
      %v6128 = vld [vmem:[%s1 + $0x168] sm:$0xff]
      %v6129 = vld [vmem:[%s1 + $0x170] sm:$0xff]
      %v6130 = vld [vmem:[%s1 + $0x178] sm:$0xff]
      %v6131 = vld [vmem:[%s1 + $0x180] sm:$0xff]
      %v6132 = vld [vmem:[%s1 + $0x188] sm:$0xff]
      %v6133 = vld [vmem:[%s1 + $0x190] sm:$0xff]
      %v6134 = vld [vmem:[%s1 + $0x198] sm:$0xff]
      %v6135 = vld [vmem:[%s1 + $0x1a0] sm:$0xff]
      %v6136 = vld [vmem:[%s1 + $0x1a8] sm:$0xff]
      %v6137 = vld [vmem:[%s1 + $0x1b0] sm:$0xff]
      %v6138 = vld [vmem:[%s1 + $0x1b8] sm:$0xff]
      %v6139 = vld [vmem:[%s1 + $0x1c0] sm:$0xff]
      %v6140 = vld [vmem:[%s1 + $0x1c8] sm:$0xff]
      %v6141 = vld [vmem:[%s1 + $0x1d0] sm:$0xff]
      %v6142 = vld [vmem:[%s1 + $0x1d8] sm:$0xff]
      %v6143 = vld [vmem:[%s1 + $0x1e0] sm:$0xff]
      %v6144 = vld [vmem:[%s1 + $0x1e8] sm:$0xff]
      %v6145 = vld [vmem:[%s1 + $0x1f0] sm:$0xff]
      %v6146 = vld [vmem:[%s1 + $0x1f8] sm:$0xff]
      %v6147 = vld [vmem:[%s1 + $0x200] sm:$0xff]
      %v6148 = vld [vmem:[%s1 + $0x208] sm:$0xff]
      %v6149 = vld [vmem:[%s1 + $0x210] sm:$0xff]
      %v6150 = vld [vmem:[%s1 + $0x218] sm:$0xff]
      %v6151 = vld [vmem:[%s1 + $0x220] sm:$0xff]
      %v6152 = vld [vmem:[%s1 + $0x228] sm:$0xff]
      %v6153 = vld [vmem:[%s1 + $0x230] sm:$0xff]
      %v6154 = vld [vmem:[%s1 + $0x238] sm:$0xff]
      %v6155 = vld [vmem:[%s1 + $0x240] sm:$0xff]
      %v6156 = vld [vmem:[%s1 + $0x248] sm:$0xff]
      %v6157 = vld [vmem:[%s1 + $0x250] sm:$0xff]
      %v6158 = vld [vmem:[%s1 + $0x258] sm:$0xff]
      %v6159 = vld [vmem:[%s1 + $0x260] sm:$0xff]
      %v6160 = vld [vmem:[%s1 + $0x268] sm:$0xff]
      %v6161 = vld [vmem:[%s1 + $0x270] sm:$0xff]
      %v6162 = vld [vmem:[%s1 + $0x278] sm:$0xff]
      %v6163 = vld [vmem:[%s1 + $0x280] sm:$0xff]
      %v6164 = vld [vmem:[%s1 + $0x288] sm:$0xff]
      %v6165 = vld [vmem:[%s1 + $0x290] sm:$0xff]
      %v6166 = vld [vmem:[%s1 + $0x298] sm:$0xff]
      %v6167 = vld [vmem:[%s1 + $0x2a0] sm:$0xff]
      %v6168 = vld [vmem:[%s1 + $0x2a8] sm:$0xff]
      %v6169 = vld [vmem:[%s1 + $0x2b0] sm:$0xff]
      %v6170 = vld [vmem:[%s1 + $0x2b8] sm:$0xff]
      %v6171 = vld [vmem:[%s1 + $0x2c0] sm:$0xff]
      %v6172 = vld [vmem:[%s1 + $0x2c8] sm:$0xff]
      %v6173 = vld [vmem:[%s1 + $0x2d0] sm:$0xff]
      %v6174 = vld [vmem:[%s1 + $0x2d8] sm:$0xff]
      %v6175 = vld [vmem:[%s1 + $0x2e0] sm:$0xff]
      %v6176 = vld [vmem:[%s1 + $0x2e8] sm:$0xff]
      %v6177 = vld [vmem:[%s1 + $0x2f0] sm:$0xff]
      %v6178 = vld [vmem:[%s1 + $0x2f8] sm:$0xff]
      %v6179 = vld [vmem:[%s1 + $0x300] sm:$0xff]
      %v6180 = vld [vmem:[%s1 + $0x308] sm:$0xff]
      %v6181 = vld [vmem:[%s1 + $0x310] sm:$0xff]
      %v6182 = vld [vmem:[%s1 + $0x318] sm:$0xff]
      %v6183 = vld [vmem:[%s1 + $0x320] sm:$0xff]
      %v6184 = vld [vmem:[%s1 + $0x328] sm:$0xff]
      %v6185 = vld [vmem:[%s1 + $0x330] sm:$0xff]
      %v6186 = vld [vmem:[%s1 + $0x338] sm:$0xff]
      %v6187 = vld [vmem:[%s1 + $0x340] sm:$0xff]
      %v6188 = vld [vmem:[%s1 + $0x348] sm:$0xff]
      %v6189 = vld [vmem:[%s1 + $0x350] sm:$0xff]
      %v6190 = vld [vmem:[%s1 + $0x358] sm:$0xff]
      %v6191 = vld [vmem:[%s1 + $0x360] sm:$0xff]
      %v6192 = vld [vmem:[%s1 + $0x368] sm:$0xff]
      %v6193 = vld [vmem:[%s1 + $0x370] sm:$0xff]
      %v6194 = vld [vmem:[%s1 + $0x378] sm:$0xff]
      %v6195 = vld [vmem:[%s1 + $0x380] sm:$0xff]
      %v6196 = vld [vmem:[%s1 + $0x388] sm:$0xff]
      %v6197 = vld [vmem:[%s1 + $0x390] sm:$0xff]
      %v6198 = vld [vmem:[%s1 + $0x398] sm:$0xff]
      %v6199 = vld [vmem:[%s1 + $0x3a0] sm:$0xff]
      %v6200 = vld [vmem:[%s1 + $0x3a8] sm:$0xff]
      %v6201 = vld [vmem:[%s1 + $0x3b0] sm:$0xff]
      %v6202 = vld [vmem:[%s1 + $0x3b8] sm:$0xff]
      %v6203 = vld [vmem:[%s1 + $0x3c0] sm:$0xff]
      %v6204 = vld [vmem:[%s1 + $0x3c8] sm:$0xff]
      %v6205 = vld [vmem:[%s1 + $0x3d0] sm:$0xff]
      %v6206 = vld [vmem:[%s1 + $0x3d8] sm:$0xff]
      %v6207 = vld [vmem:[%s1 + $0x3e0] sm:$0xff]
      %v6208 = vld [vmem:[%s1 + $0x3e8] sm:$0xff]
      %v6209 = vld [vmem:[%s1 + $0x3f0] sm:$0xff]
      %v6210 = vld [vmem:[%s1 + $0x3f8] sm:$0xff]
      %v6211 = vld [vmem:[%s1 + $0x400] sm:$0xff]
      %v6212 = vld [vmem:[%s1 + $0x408] sm:$0xff]
      %v6213 = vld [vmem:[%s1 + $0x410] sm:$0xff]
      %v6214 = vld [vmem:[%s1 + $0x418] sm:$0xff]
      %v6215 = vld [vmem:[%s1 + $0x420] sm:$0xff]
      %v6216 = vld [vmem:[%s1 + $0x428] sm:$0xff]
      %v6217 = vld [vmem:[%s1 + $0x430] sm:$0xff]
      %v6218 = vld [vmem:[%s1 + $0x438] sm:$0xff]
      %v6219 = vld [vmem:[%s1 + $0x440] sm:$0xff]
      %v6220 = vld [vmem:[%s1 + $0x448] sm:$0xff]
      %v6221 = vld [vmem:[%s1 + $0x450] sm:$0xff]
      %v6222 = vld [vmem:[%s1 + $0x458] sm:$0xff]
      %v6223 = vld [vmem:[%s1 + $0x460] sm:$0xff]
      %v6224 = vld [vmem:[%s1 + $0x468] sm:$0xff]
      %v6225 = vld [vmem:[%s1 + $0x470] sm:$0xff]
      %v6226 = vld [vmem:[%s1 + $0x478] sm:$0xff]
      %6227 = vmatprep.subr.mxu0 0.0
      %6228 = vmatpush1.msra.mxu0 %v6098
      %6229 = vmatprep.subr.mxu0 0.0
      %6230 = vmatpush1.msra.mxu0 %v6097
      %6231 = vmatprep.subr.mxu0 0.0
      %6232 = vmatpush1.msra.mxu0 %v6096
      %6233 = vmatprep.subr.mxu0 0.0
      %6234 = vmatpush1.msra.mxu0 %v6095
      %6235 = vmatprep.subr.mxu0 0.0
      %6236 = vmatpush1.msra.mxu0 %v6094
      %6237 = vmatprep.subr.mxu0 0.0
      %6238 = vmatpush1.msra.mxu0 %v6093
      %6239 = vmatprep.subr.mxu0 0.0
      %6240 = vmatpush1.msra.mxu0 %v6092
      %6241 = vmatprep.subr.mxu0 0.0
      %6242 = vmatpush1.msra.mxu0 %v6091
      %6243 = vmatprep.subr.mxu0 0.0
      %6244 = vmatpush1.msra.mxu0 %v6090
      %6245 = vmatprep.subr.mxu0 0.0
      %6246 = vmatpush1.msra.mxu0 %v6089
      %6247 = vmatprep.subr.mxu0 0.0
      %6248 = vmatpush1.msra.mxu0 %v6088
      %6249 = vmatprep.subr.mxu0 0.0
      %6250 = vmatpush1.msra.mxu0 %v6087
      %6251 = vmatprep.subr.mxu0 0.0
      %6252 = vmatpush1.msra.mxu0 %v6086
      %6253 = vmatprep.subr.mxu0 0.0
      %6254 = vmatpush1.msra.mxu0 %v6085
      %6255 = vmatprep.subr.mxu0 0.0
      %6256 = vmatpush1.msra.mxu0 %v6084
      %6257 = vmatprep.subr.mxu0 0.0
      %6258 = vmatpush1.msra.mxu0 %v6083
      %6259 = vmatprep.subr.mxu0 0.0
      %6260 = vmatpush2.msra.mxu0 %v6114
      %6261 = vmatprep.subr.mxu0 0.0
      %6262 = vmatpush2.msra.mxu0 %v6113
      %6263 = vmatprep.subr.mxu0 0.0
      %6264 = vmatpush2.msra.mxu0 %v6112
      %6265 = vmatprep.subr.mxu0 0.0
      %6266 = vmatpush2.msra.mxu0 %v6111
      %6267 = vmatprep.subr.mxu0 0.0
      %6268 = vmatpush2.msra.mxu0 %v6110
      %6269 = vmatprep.subr.mxu0 0.0
      %6270 = vmatpush2.msra.mxu0 %v6109
      %6271 = vmatprep.subr.mxu0 0.0
      %6272 = vmatpush2.msra.mxu0 %v6108
      %6273 = vmatprep.subr.mxu0 0.0
      %6274 = vmatpush2.msra.mxu0 %v6107
      %6275 = vmatprep.subr.mxu0 0.0
      %6276 = vmatpush2.msra.mxu0 %v6106
      %6277 = vmatprep.subr.mxu0 0.0
      %6278 = vmatpush2.msra.mxu0 %v6105
      %6279 = vmatprep.subr.mxu0 0.0
      %6280 = vmatpush2.msra.mxu0 %v6104
      %6281 = vmatprep.subr.mxu0 0.0
      %6282 = vmatpush2.msra.mxu0 %v6103
      %6283 = vmatprep.subr.mxu0 0.0
      %6284 = vmatpush2.msra.mxu0 %v6102
      %6285 = vmatprep.subr.mxu0 0.0
      %6286 = vmatpush2.msra.mxu0 %v6101
      %6287 = vmatprep.subr.mxu0 0.0
      %6288 = vmatpush2.msra.mxu0 %v6100
      %6289 = vmatprep.subr.mxu0 0.0
      %6290 = vmatpush2.msra.mxu0 %v6099
      %6291 = vmatprep.mubr.f32.mxu0 %v5796
      %6292 = vmatmul.mubr.f32.gmra.mxu0 %v5795
      %v6293 = vpop.f32.mrf.mxu0
      %v6294 = vadd.f32 0.0, %v6293
      %v6295 = vpop.f32.mrf.mxu0
      %6296 = vmatprep.mubr.f32.mxu0 %v5805
      %6297 = vmatmul.mubr.f32.gmra.mxu0 %v5804
      %v6298 = vpop.f32.mrf.mxu0
      %v6299 = vadd.f32 0.0, %v6298
      %v6300 = vpop.f32.mrf.mxu0
      %6301 = vmatprep.mubr.f32.mxu0 %v5814
      %6302 = vmatmul.mubr.f32.gmra.mxu0 %v5813
      %v6303 = vpop.f32.mrf.mxu0
      %v6304 = vadd.f32 0.0, %v6303
      %v6305 = vpop.f32.mrf.mxu0
      %6306 = vmatprep.mubr.f32.mxu0 %v5823
      %6307 = vmatmul.mubr.f32.gmra.mxu0 %v5822
      %v6308 = vpop.f32.mrf.mxu0
      %v6309 = vadd.f32 0.0, %v6308
      %v6310 = vpop.f32.mrf.mxu0
      %6311 = vmatprep.mubr.f32.mxu0 %v5832
      %6312 = vmatmul.mubr.f32.gmra.mxu0 %v5831
      %v6313 = vpop.f32.mrf.mxu0
      %v6314 = vadd.f32 0.0, %v6313
      %v6315 = vpop.f32.mrf.mxu0
      %6316 = vmatprep.mubr.f32.mxu0 %v5841
      %6317 = vmatmul.mubr.f32.gmra.mxu0 %v5840
      %v6318 = vpop.f32.mrf.mxu0
      %v6319 = vadd.f32 0.0, %v6318
      %v6320 = vpop.f32.mrf.mxu0
      %6321 = vmatprep.mubr.f32.mxu0 %v5850
      %6322 = vmatmul.mubr.f32.gmra.mxu0 %v5849
      %v6323 = vpop.f32.mrf.mxu0
      %v6324 = vadd.f32 0.0, %v6323
      %v6325 = vpop.f32.mrf.mxu0
      %6326 = vmatprep.mubr.f32.mxu0 %v5859
      %6327 = vmatmul.mubr.f32.gmra.mxu0 %v5858
      %v6328 = vpop.f32.mrf.mxu0
      %v6329 = vadd.f32 0.0, %v6328
      %v6330 = vpop.f32.mrf.mxu0
      %6331 = vmatprep.mubr.f32.mxu0 %v5868
      %6332 = vmatmul.mubr.f32.gmra.mxu0 %v5867
      %v6333 = vpop.f32.mrf.mxu0
      %v6334 = vadd.f32 0.0, %v6333
      %v6335 = vpop.f32.mrf.mxu0
      %6336 = vmatprep.mubr.f32.mxu0 %v5877
      %6337 = vmatmul.mubr.f32.gmra.mxu0 %v5876
      %v6338 = vpop.f32.mrf.mxu0
      %v6339 = vadd.f32 0.0, %v6338
      %v6340 = vpop.f32.mrf.mxu0
      %6341 = vmatprep.mubr.f32.mxu0 %v5886
      %6342 = vmatmul.mubr.f32.gmra.mxu0 %v5885
      %v6343 = vpop.f32.mrf.mxu0
      %v6344 = vadd.f32 0.0, %v6343
      %v6345 = vpop.f32.mrf.mxu0
      %6346 = vmatprep.mubr.f32.mxu0 %v5895
      %6347 = vmatmul.mubr.f32.gmra.mxu0 %v5894
      %v6348 = vpop.f32.mrf.mxu0
      %v6349 = vadd.f32 0.0, %v6348
      %v6350 = vpop.f32.mrf.mxu0
      %6351 = vmatprep.mubr.f32.mxu0 %v5904
      %6352 = vmatmul.mubr.f32.gmra.mxu0 %v5903
      %v6353 = vpop.f32.mrf.mxu0
      %v6354 = vadd.f32 0.0, %v6353
      %v6355 = vpop.f32.mrf.mxu0
      %6356 = vmatprep.mubr.f32.mxu0 %v5913
      %6357 = vmatmul.mubr.f32.gmra.mxu0 %v5912
      %v6358 = vpop.f32.mrf.mxu0
      %v6359 = vadd.f32 0.0, %v6358
      %v6360 = vpop.f32.mrf.mxu0
      %6361 = vmatprep.mubr.f32.mxu0 %v5922
      %6362 = vmatmul.mubr.f32.gmra.mxu0 %v5921
      %v6363 = vpop.f32.mrf.mxu0
      %v6364 = vadd.f32 0.0, %v6363
      %v6365 = vpop.f32.mrf.mxu0
      %6366 = vmatprep.mubr.f32.mxu0 %v5931
      %6367 = vmatmul.mubr.f32.gmra.mxu0 %v5930
      %v6368 = vpop.f32.mrf.mxu0
      %v6369 = vadd.f32 0.0, %v6368
      %v6370 = vpop.f32.mrf.mxu0
      %6371 = vmatprep.mubr.f32.mxu0 %v5940
      %6372 = vmatmul.mubr.f32.gmra.mxu0 %v5939
      %v6373 = vpop.f32.mrf.mxu0
      %v6374 = vadd.f32 0.0, %v6373
      %v6375 = vpop.f32.mrf.mxu0
      %6376 = vmatprep.mubr.f32.mxu0 %v5949
      %6377 = vmatmul.mubr.f32.gmra.mxu0 %v5948
      %v6378 = vpop.f32.mrf.mxu0
      %v6379 = vadd.f32 0.0, %v6378
      %v6380 = vpop.f32.mrf.mxu0
      %6381 = vmatprep.mubr.f32.mxu0 %v5958
      %6382 = vmatmul.mubr.f32.gmra.mxu0 %v5957
      %v6383 = vpop.f32.mrf.mxu0
      %v6384 = vadd.f32 0.0, %v6383
      %v6385 = vpop.f32.mrf.mxu0
      %6386 = vmatprep.mubr.f32.mxu0 %v5967
      %6387 = vmatmul.mubr.f32.gmra.mxu0 %v5966
      %v6388 = vpop.f32.mrf.mxu0
      %v6389 = vadd.f32 0.0, %v6388
      %v6390 = vpop.f32.mrf.mxu0
      %6391 = vmatprep.mubr.f32.mxu0 %v5976
      %6392 = vmatmul.mubr.f32.gmra.mxu0 %v5975
      %v6393 = vpop.f32.mrf.mxu0
      %v6394 = vadd.f32 0.0, %v6393
      %v6395 = vpop.f32.mrf.mxu0
      %6396 = vmatprep.mubr.f32.mxu0 %v5985
      %6397 = vmatmul.mubr.f32.gmra.mxu0 %v5984
      %v6398 = vpop.f32.mrf.mxu0
      %v6399 = vadd.f32 0.0, %v6398
      %v6400 = vpop.f32.mrf.mxu0
      %6401 = vmatprep.mubr.f32.mxu0 %v5994
      %6402 = vmatmul.mubr.f32.gmra.mxu0 %v5993
      %v6403 = vpop.f32.mrf.mxu0
      %v6404 = vadd.f32 0.0, %v6403
      %v6405 = vpop.f32.mrf.mxu0
      %6406 = vmatprep.mubr.f32.mxu0 %v6003
      %6407 = vmatmul.mubr.f32.gmra.mxu0 %v6002
      %v6408 = vpop.f32.mrf.mxu0
      %v6409 = vadd.f32 0.0, %v6408
      %v6410 = vpop.f32.mrf.mxu0
      %6411 = vmatprep.mubr.f32.mxu0 %v6012
      %6412 = vmatmul.mubr.f32.gmra.mxu0 %v6011
      %v6413 = vpop.f32.mrf.mxu0
      %v6414 = vadd.f32 0.0, %v6413
      %v6415 = vpop.f32.mrf.mxu0
      %6416 = vmatprep.mubr.f32.mxu0 %v6021
      %6417 = vmatmul.mubr.f32.gmra.mxu0 %v6020
      %v6418 = vpop.f32.mrf.mxu0
      %v6419 = vadd.f32 0.0, %v6418
      %v6420 = vpop.f32.mrf.mxu0
      %6421 = vmatprep.mubr.f32.mxu0 %v6030
      %6422 = vmatmul.mubr.f32.gmra.mxu0 %v6029
      %v6423 = vpop.f32.mrf.mxu0
      %v6424 = vadd.f32 0.0, %v6423
      %v6425 = vpop.f32.mrf.mxu0
      %6426 = vmatprep.mubr.f32.mxu0 %v6039
      %6427 = vmatmul.mubr.f32.gmra.mxu0 %v6038
      %v6428 = vpop.f32.mrf.mxu0
      %v6429 = vadd.f32 0.0, %v6428
      %v6430 = vpop.f32.mrf.mxu0
      %6431 = vmatprep.mubr.f32.mxu0 %v6048
      %6432 = vmatmul.mubr.f32.gmra.mxu0 %v6047
      %v6433 = vpop.f32.mrf.mxu0
      %v6434 = vadd.f32 0.0, %v6433
      %v6435 = vpop.f32.mrf.mxu0
      %6436 = vmatprep.mubr.f32.mxu0 %v6057
      %6437 = vmatmul.mubr.f32.gmra.mxu0 %v6056
      %v6438 = vpop.f32.mrf.mxu0
      %v6439 = vadd.f32 0.0, %v6438
      %v6440 = vpop.f32.mrf.mxu0
      %6441 = vmatprep.mubr.f32.mxu0 %v6066
      %6442 = vmatmul.mubr.f32.gmra.mxu0 %v6065
      %v6443 = vpop.f32.mrf.mxu0
      %v6444 = vadd.f32 0.0, %v6443
      %v6445 = vpop.f32.mrf.mxu0
      %6446 = vmatprep.mubr.f32.mxu0 %v6075
      %6447 = vmatmul.mubr.f32.gmra.mxu0 %v6074
      %v6448 = vpop.f32.mrf.mxu0
      %v6449 = vadd.f32 0.0, %v6448
      %v6450 = vpop.f32.mrf.mxu0
      %6451 = vdwg.mxu0
      %6452 = vmatprep.subr.mxu0 0.0
      %6453 = vmatpush1.msra.mxu0 %v6130
      %6454 = vmatprep.subr.mxu0 0.0
      %6455 = vmatpush1.msra.mxu0 %v6129
      %6456 = vmatprep.subr.mxu0 0.0
      %6457 = vmatpush1.msra.mxu0 %v6128
      %6458 = vmatprep.subr.mxu0 0.0
      %6459 = vmatpush1.msra.mxu0 %v6127
      %6460 = vmatprep.subr.mxu0 0.0
      %6461 = vmatpush1.msra.mxu0 %v6126
      %6462 = vmatprep.subr.mxu0 0.0
      %6463 = vmatpush1.msra.mxu0 %v6125
      %6464 = vmatprep.subr.mxu0 0.0
      %6465 = vmatpush1.msra.mxu0 %v6124
      %6466 = vmatprep.subr.mxu0 0.0
      %6467 = vmatpush1.msra.mxu0 %v6123
      %6468 = vmatprep.subr.mxu0 0.0
      %6469 = vmatpush1.msra.mxu0 %v6122
      %6470 = vmatprep.subr.mxu0 0.0
      %6471 = vmatpush1.msra.mxu0 %v6121
      %6472 = vmatprep.subr.mxu0 0.0
      %6473 = vmatpush1.msra.mxu0 %v6120
      %6474 = vmatprep.subr.mxu0 0.0
      %6475 = vmatpush1.msra.mxu0 %v6119
      %6476 = vmatprep.subr.mxu0 0.0
      %6477 = vmatpush1.msra.mxu0 %v6118
      %6478 = vmatprep.subr.mxu0 0.0
      %6479 = vmatpush1.msra.mxu0 %v6117
      %6480 = vmatprep.subr.mxu0 0.0
      %6481 = vmatpush1.msra.mxu0 %v6116
      %6482 = vmatprep.subr.mxu0 0.0
      %6483 = vmatpush1.msra.mxu0 %v6115
      %6484 = vmatprep.subr.mxu0 0.0
      %6485 = vmatpush2.msra.mxu0 %v6146
      %6486 = vmatprep.subr.mxu0 0.0
      %6487 = vmatpush2.msra.mxu0 %v6145
      %6488 = vmatprep.subr.mxu0 0.0
      %6489 = vmatpush2.msra.mxu0 %v6144
      %6490 = vmatprep.subr.mxu0 0.0
      %6491 = vmatpush2.msra.mxu0 %v6143
      %6492 = vmatprep.subr.mxu0 0.0
      %6493 = vmatpush2.msra.mxu0 %v6142
      %6494 = vmatprep.subr.mxu0 0.0
      %6495 = vmatpush2.msra.mxu0 %v6141
      %6496 = vmatprep.subr.mxu0 0.0
      %6497 = vmatpush2.msra.mxu0 %v6140
      %6498 = vmatprep.subr.mxu0 0.0
      %6499 = vmatpush2.msra.mxu0 %v6139
      %6500 = vmatprep.subr.mxu0 0.0
      %6501 = vmatpush2.msra.mxu0 %v6138
      %6502 = vmatprep.subr.mxu0 0.0
      %6503 = vmatpush2.msra.mxu0 %v6137
      %6504 = vmatprep.subr.mxu0 0.0
      %6505 = vmatpush2.msra.mxu0 %v6136
      %6506 = vmatprep.subr.mxu0 0.0
      %6507 = vmatpush2.msra.mxu0 %v6135
      %6508 = vmatprep.subr.mxu0 0.0
      %6509 = vmatpush2.msra.mxu0 %v6134
      %6510 = vmatprep.subr.mxu0 0.0
      %6511 = vmatpush2.msra.mxu0 %v6133
      %6512 = vmatprep.subr.mxu0 0.0
      %6513 = vmatpush2.msra.mxu0 %v6132
      %6514 = vmatprep.subr.mxu0 0.0
      %6515 = vmatpush2.msra.mxu0 %v6131
      %6516 = vmatprep.mubr.f32.mxu0 %v5798
      %6517 = vmatmul.mubr.f32.gmra.mxu0 %v5797
      %v6518 = vpop.f32.mrf.mxu0
      %v6519 = vadd.f32 %v6294, %v6518
      %v6520 = vpop.f32.mrf.mxu0
      %6521 = vmatprep.mubr.f32.mxu0 %v5807
      %6522 = vmatmul.mubr.f32.gmra.mxu0 %v5806
      %v6523 = vpop.f32.mrf.mxu0
      %v6524 = vadd.f32 %v6299, %v6523
      %v6525 = vpop.f32.mrf.mxu0
      %6526 = vmatprep.mubr.f32.mxu0 %v5816
      %6527 = vmatmul.mubr.f32.gmra.mxu0 %v5815
      %v6528 = vpop.f32.mrf.mxu0
      %v6529 = vadd.f32 %v6304, %v6528
      %v6530 = vpop.f32.mrf.mxu0
      %6531 = vmatprep.mubr.f32.mxu0 %v5825
      %6532 = vmatmul.mubr.f32.gmra.mxu0 %v5824
      %v6533 = vpop.f32.mrf.mxu0
      %v6534 = vadd.f32 %v6309, %v6533
      %v6535 = vpop.f32.mrf.mxu0
      %6536 = vmatprep.mubr.f32.mxu0 %v5834
      %6537 = vmatmul.mubr.f32.gmra.mxu0 %v5833
      %v6538 = vpop.f32.mrf.mxu0
      %v6539 = vadd.f32 %v6314, %v6538
      %v6540 = vpop.f32.mrf.mxu0
      %6541 = vmatprep.mubr.f32.mxu0 %v5843
      %6542 = vmatmul.mubr.f32.gmra.mxu0 %v5842
      %v6543 = vpop.f32.mrf.mxu0
      %v6544 = vadd.f32 %v6319, %v6543
      %v6545 = vpop.f32.mrf.mxu0
      %6546 = vmatprep.mubr.f32.mxu0 %v5852
      %6547 = vmatmul.mubr.f32.gmra.mxu0 %v5851
      %v6548 = vpop.f32.mrf.mxu0
      %v6549 = vadd.f32 %v6324, %v6548
      %v6550 = vpop.f32.mrf.mxu0
      %6551 = vmatprep.mubr.f32.mxu0 %v5861
      %6552 = vmatmul.mubr.f32.gmra.mxu0 %v5860
      %v6553 = vpop.f32.mrf.mxu0
      %v6554 = vadd.f32 %v6329, %v6553
      %v6555 = vpop.f32.mrf.mxu0
      %6556 = vmatprep.mubr.f32.mxu0 %v5870
      %6557 = vmatmul.mubr.f32.gmra.mxu0 %v5869
      %v6558 = vpop.f32.mrf.mxu0
      %v6559 = vadd.f32 %v6334, %v6558
      %v6560 = vpop.f32.mrf.mxu0
      %6561 = vmatprep.mubr.f32.mxu0 %v5879
      %6562 = vmatmul.mubr.f32.gmra.mxu0 %v5878
      %v6563 = vpop.f32.mrf.mxu0
      %v6564 = vadd.f32 %v6339, %v6563
      %v6565 = vpop.f32.mrf.mxu0
      %6566 = vmatprep.mubr.f32.mxu0 %v5888
      %6567 = vmatmul.mubr.f32.gmra.mxu0 %v5887
      %v6568 = vpop.f32.mrf.mxu0
      %v6569 = vadd.f32 %v6344, %v6568
      %v6570 = vpop.f32.mrf.mxu0
      %6571 = vmatprep.mubr.f32.mxu0 %v5897
      %6572 = vmatmul.mubr.f32.gmra.mxu0 %v5896
      %v6573 = vpop.f32.mrf.mxu0
      %v6574 = vadd.f32 %v6349, %v6573
      %v6575 = vpop.f32.mrf.mxu0
      %6576 = vmatprep.mubr.f32.mxu0 %v5906
      %6577 = vmatmul.mubr.f32.gmra.mxu0 %v5905
      %v6578 = vpop.f32.mrf.mxu0
      %v6579 = vadd.f32 %v6354, %v6578
      %v6580 = vpop.f32.mrf.mxu0
      %6581 = vmatprep.mubr.f32.mxu0 %v5915
      %6582 = vmatmul.mubr.f32.gmra.mxu0 %v5914
      %v6583 = vpop.f32.mrf.mxu0
      %v6584 = vadd.f32 %v6359, %v6583
      %v6585 = vpop.f32.mrf.mxu0
      %6586 = vmatprep.mubr.f32.mxu0 %v5924
      %6587 = vmatmul.mubr.f32.gmra.mxu0 %v5923
      %v6588 = vpop.f32.mrf.mxu0
      %v6589 = vadd.f32 %v6364, %v6588
      %v6590 = vpop.f32.mrf.mxu0
      %6591 = vmatprep.mubr.f32.mxu0 %v5933
      %6592 = vmatmul.mubr.f32.gmra.mxu0 %v5932
      %v6593 = vpop.f32.mrf.mxu0
      %v6594 = vadd.f32 %v6369, %v6593
      %v6595 = vpop.f32.mrf.mxu0
      %6596 = vmatprep.mubr.f32.mxu0 %v5942
      %6597 = vmatmul.mubr.f32.gmra.mxu0 %v5941
      %v6598 = vpop.f32.mrf.mxu0
      %v6599 = vadd.f32 %v6374, %v6598
      %v6600 = vpop.f32.mrf.mxu0
      %6601 = vmatprep.mubr.f32.mxu0 %v5951
      %6602 = vmatmul.mubr.f32.gmra.mxu0 %v5950
      %v6603 = vpop.f32.mrf.mxu0
      %v6604 = vadd.f32 %v6379, %v6603
      %v6605 = vpop.f32.mrf.mxu0
      %6606 = vmatprep.mubr.f32.mxu0 %v5960
      %6607 = vmatmul.mubr.f32.gmra.mxu0 %v5959
      %v6608 = vpop.f32.mrf.mxu0
      %v6609 = vadd.f32 %v6384, %v6608
      %v6610 = vpop.f32.mrf.mxu0
      %6611 = vmatprep.mubr.f32.mxu0 %v5969
      %6612 = vmatmul.mubr.f32.gmra.mxu0 %v5968
      %v6613 = vpop.f32.mrf.mxu0
      %v6614 = vadd.f32 %v6389, %v6613
      %v6615 = vpop.f32.mrf.mxu0
      %6616 = vmatprep.mubr.f32.mxu0 %v5978
      %6617 = vmatmul.mubr.f32.gmra.mxu0 %v5977
      %v6618 = vpop.f32.mrf.mxu0
      %v6619 = vadd.f32 %v6394, %v6618
      %v6620 = vpop.f32.mrf.mxu0
      %6621 = vmatprep.mubr.f32.mxu0 %v5987
      %6622 = vmatmul.mubr.f32.gmra.mxu0 %v5986
      %v6623 = vpop.f32.mrf.mxu0
      %v6624 = vadd.f32 %v6399, %v6623
      %v6625 = vpop.f32.mrf.mxu0
      %6626 = vmatprep.mubr.f32.mxu0 %v5996
      %6627 = vmatmul.mubr.f32.gmra.mxu0 %v5995
      %v6628 = vpop.f32.mrf.mxu0
      %v6629 = vadd.f32 %v6404, %v6628
      %v6630 = vpop.f32.mrf.mxu0
      %6631 = vmatprep.mubr.f32.mxu0 %v6005
      %6632 = vmatmul.mubr.f32.gmra.mxu0 %v6004
      %v6633 = vpop.f32.mrf.mxu0
      %v6634 = vadd.f32 %v6409, %v6633
      %v6635 = vpop.f32.mrf.mxu0
      %6636 = vmatprep.mubr.f32.mxu0 %v6014
      %6637 = vmatmul.mubr.f32.gmra.mxu0 %v6013
      %v6638 = vpop.f32.mrf.mxu0
      %v6639 = vadd.f32 %v6414, %v6638
      %v6640 = vpop.f32.mrf.mxu0
      %6641 = vmatprep.mubr.f32.mxu0 %v6023
      %6642 = vmatmul.mubr.f32.gmra.mxu0 %v6022
      %v6643 = vpop.f32.mrf.mxu0
      %v6644 = vadd.f32 %v6419, %v6643
      %v6645 = vpop.f32.mrf.mxu0
      %6646 = vmatprep.mubr.f32.mxu0 %v6032
      %6647 = vmatmul.mubr.f32.gmra.mxu0 %v6031
      %v6648 = vpop.f32.mrf.mxu0
      %v6649 = vadd.f32 %v6424, %v6648
      %v6650 = vpop.f32.mrf.mxu0
      %6651 = vmatprep.mubr.f32.mxu0 %v6041
      %6652 = vmatmul.mubr.f32.gmra.mxu0 %v6040
      %v6653 = vpop.f32.mrf.mxu0
      %v6654 = vadd.f32 %v6429, %v6653
      %v6655 = vpop.f32.mrf.mxu0
      %6656 = vmatprep.mubr.f32.mxu0 %v6050
      %6657 = vmatmul.mubr.f32.gmra.mxu0 %v6049
      %v6658 = vpop.f32.mrf.mxu0
      %v6659 = vadd.f32 %v6434, %v6658
      %v6660 = vpop.f32.mrf.mxu0
      %6661 = vmatprep.mubr.f32.mxu0 %v6059
      %6662 = vmatmul.mubr.f32.gmra.mxu0 %v6058
      %v6663 = vpop.f32.mrf.mxu0
      %v6664 = vadd.f32 %v6439, %v6663
      %v6665 = vpop.f32.mrf.mxu0
      %6666 = vmatprep.mubr.f32.mxu0 %v6068
      %6667 = vmatmul.mubr.f32.gmra.mxu0 %v6067
      %v6668 = vpop.f32.mrf.mxu0
      %v6669 = vadd.f32 %v6444, %v6668
      %v6670 = vpop.f32.mrf.mxu0
      %6671 = vmatprep.mubr.f32.mxu0 %v6077
      %6672 = vmatmul.mubr.f32.gmra.mxu0 %v6076
      %v6673 = vpop.f32.mrf.mxu0
      %v6674 = vadd.f32 %v6449, %v6673
      %v6675 = vpop.f32.mrf.mxu0
      %6676 = vdwg.mxu0
      %6677 = vmatprep.subr.mxu0 0.0
      %6678 = vmatpush1.msra.mxu0 %v6162
      %6679 = vmatprep.subr.mxu0 0.0
      %6680 = vmatpush1.msra.mxu0 %v6161
      %6681 = vmatprep.subr.mxu0 0.0
      %6682 = vmatpush1.msra.mxu0 %v6160
      %6683 = vmatprep.subr.mxu0 0.0
      %6684 = vmatpush1.msra.mxu0 %v6159
      %6685 = vmatprep.subr.mxu0 0.0
      %6686 = vmatpush1.msra.mxu0 %v6158
      %6687 = vmatprep.subr.mxu0 0.0
      %6688 = vmatpush1.msra.mxu0 %v6157
      %6689 = vmatprep.subr.mxu0 0.0
      %6690 = vmatpush1.msra.mxu0 %v6156
      %6691 = vmatprep.subr.mxu0 0.0
      %6692 = vmatpush1.msra.mxu0 %v6155
      %6693 = vmatprep.subr.mxu0 0.0
      %6694 = vmatpush1.msra.mxu0 %v6154
      %6695 = vmatprep.subr.mxu0 0.0
      %6696 = vmatpush1.msra.mxu0 %v6153
      %6697 = vmatprep.subr.mxu0 0.0
      %6698 = vmatpush1.msra.mxu0 %v6152
      %6699 = vmatprep.subr.mxu0 0.0
      %6700 = vmatpush1.msra.mxu0 %v6151
      %6701 = vmatprep.subr.mxu0 0.0
      %6702 = vmatpush1.msra.mxu0 %v6150
      %6703 = vmatprep.subr.mxu0 0.0
      %6704 = vmatpush1.msra.mxu0 %v6149
      %6705 = vmatprep.subr.mxu0 0.0
      %6706 = vmatpush1.msra.mxu0 %v6148
      %6707 = vmatprep.subr.mxu0 0.0
      %6708 = vmatpush1.msra.mxu0 %v6147
      %6709 = vmatprep.subr.mxu0 0.0
      %6710 = vmatpush2.msra.mxu0 %v6178
      %6711 = vmatprep.subr.mxu0 0.0
      %6712 = vmatpush2.msra.mxu0 %v6177
      %6713 = vmatprep.subr.mxu0 0.0
      %6714 = vmatpush2.msra.mxu0 %v6176
      %6715 = vmatprep.subr.mxu0 0.0
      %6716 = vmatpush2.msra.mxu0 %v6175
      %6717 = vmatprep.subr.mxu0 0.0
      %6718 = vmatpush2.msra.mxu0 %v6174
      %6719 = vmatprep.subr.mxu0 0.0
      %6720 = vmatpush2.msra.mxu0 %v6173
      %6721 = vmatprep.subr.mxu0 0.0
      %6722 = vmatpush2.msra.mxu0 %v6172
      %6723 = vmatprep.subr.mxu0 0.0
      %6724 = vmatpush2.msra.mxu0 %v6171
      %6725 = vmatprep.subr.mxu0 0.0
      %6726 = vmatpush2.msra.mxu0 %v6170
      %6727 = vmatprep.subr.mxu0 0.0
      %6728 = vmatpush2.msra.mxu0 %v6169
      %6729 = vmatprep.subr.mxu0 0.0
      %6730 = vmatpush2.msra.mxu0 %v6168
      %6731 = vmatprep.subr.mxu0 0.0
      %6732 = vmatpush2.msra.mxu0 %v6167
      %6733 = vmatprep.subr.mxu0 0.0
      %6734 = vmatpush2.msra.mxu0 %v6166
      %6735 = vmatprep.subr.mxu0 0.0
      %6736 = vmatpush2.msra.mxu0 %v6165
      %6737 = vmatprep.subr.mxu0 0.0
      %6738 = vmatpush2.msra.mxu0 %v6164
      %6739 = vmatprep.subr.mxu0 0.0
      %6740 = vmatpush2.msra.mxu0 %v6163
      %6741 = vmatprep.mubr.f32.mxu0 %v5800
      %6742 = vmatmul.mubr.f32.gmra.mxu0 %v5799
      %v6743 = vpop.f32.mrf.mxu0
      %v6744 = vadd.f32 %v6519, %v6743
      %v6745 = vpop.f32.mrf.mxu0
      %6746 = vmatprep.mubr.f32.mxu0 %v5809
      %6747 = vmatmul.mubr.f32.gmra.mxu0 %v5808
      %v6748 = vpop.f32.mrf.mxu0
      %v6749 = vadd.f32 %v6524, %v6748
      %v6750 = vpop.f32.mrf.mxu0
      %6751 = vmatprep.mubr.f32.mxu0 %v5818
      %6752 = vmatmul.mubr.f32.gmra.mxu0 %v5817
      %v6753 = vpop.f32.mrf.mxu0
      %v6754 = vadd.f32 %v6529, %v6753
      %v6755 = vpop.f32.mrf.mxu0
      %6756 = vmatprep.mubr.f32.mxu0 %v5827
      %6757 = vmatmul.mubr.f32.gmra.mxu0 %v5826
      %v6758 = vpop.f32.mrf.mxu0
      %v6759 = vadd.f32 %v6534, %v6758
      %v6760 = vpop.f32.mrf.mxu0
      %6761 = vmatprep.mubr.f32.mxu0 %v5836
      %6762 = vmatmul.mubr.f32.gmra.mxu0 %v5835
      %v6763 = vpop.f32.mrf.mxu0
      %v6764 = vadd.f32 %v6539, %v6763
      %v6765 = vpop.f32.mrf.mxu0
      %6766 = vmatprep.mubr.f32.mxu0 %v5845
      %6767 = vmatmul.mubr.f32.gmra.mxu0 %v5844
      %v6768 = vpop.f32.mrf.mxu0
      %v6769 = vadd.f32 %v6544, %v6768
      %v6770 = vpop.f32.mrf.mxu0
      %6771 = vmatprep.mubr.f32.mxu0 %v5854
      %6772 = vmatmul.mubr.f32.gmra.mxu0 %v5853
      %v6773 = vpop.f32.mrf.mxu0
      %v6774 = vadd.f32 %v6549, %v6773
      %v6775 = vpop.f32.mrf.mxu0
      %6776 = vmatprep.mubr.f32.mxu0 %v5863
      %6777 = vmatmul.mubr.f32.gmra.mxu0 %v5862
      %v6778 = vpop.f32.mrf.mxu0
      %v6779 = vadd.f32 %v6554, %v6778
      %v6780 = vpop.f32.mrf.mxu0
      %6781 = vmatprep.mubr.f32.mxu0 %v5872
      %6782 = vmatmul.mubr.f32.gmra.mxu0 %v5871
      %v6783 = vpop.f32.mrf.mxu0
      %v6784 = vadd.f32 %v6559, %v6783
      %v6785 = vpop.f32.mrf.mxu0
      %6786 = vmatprep.mubr.f32.mxu0 %v5881
      %6787 = vmatmul.mubr.f32.gmra.mxu0 %v5880
      %v6788 = vpop.f32.mrf.mxu0
      %v6789 = vadd.f32 %v6564, %v6788
      %v6790 = vpop.f32.mrf.mxu0
      %6791 = vmatprep.mubr.f32.mxu0 %v5890
      %6792 = vmatmul.mubr.f32.gmra.mxu0 %v5889
      %v6793 = vpop.f32.mrf.mxu0
      %v6794 = vadd.f32 %v6569, %v6793
      %v6795 = vpop.f32.mrf.mxu0
      %6796 = vmatprep.mubr.f32.mxu0 %v5899
      %6797 = vmatmul.mubr.f32.gmra.mxu0 %v5898
      %v6798 = vpop.f32.mrf.mxu0
      %v6799 = vadd.f32 %v6574, %v6798
      %v6800 = vpop.f32.mrf.mxu0
      %6801 = vmatprep.mubr.f32.mxu0 %v5908
      %6802 = vmatmul.mubr.f32.gmra.mxu0 %v5907
      %v6803 = vpop.f32.mrf.mxu0
      %v6804 = vadd.f32 %v6579, %v6803
      %v6805 = vpop.f32.mrf.mxu0
      %6806 = vmatprep.mubr.f32.mxu0 %v5917
      %6807 = vmatmul.mubr.f32.gmra.mxu0 %v5916
      %v6808 = vpop.f32.mrf.mxu0
      %v6809 = vadd.f32 %v6584, %v6808
      %v6810 = vpop.f32.mrf.mxu0
      %6811 = vmatprep.mubr.f32.mxu0 %v5926
      %6812 = vmatmul.mubr.f32.gmra.mxu0 %v5925
      %v6813 = vpop.f32.mrf.mxu0
      %v6814 = vadd.f32 %v6589, %v6813
      %v6815 = vpop.f32.mrf.mxu0
      %6816 = vmatprep.mubr.f32.mxu0 %v5935
      %6817 = vmatmul.mubr.f32.gmra.mxu0 %v5934
      %v6818 = vpop.f32.mrf.mxu0
      %v6819 = vadd.f32 %v6594, %v6818
      %v6820 = vpop.f32.mrf.mxu0
      %6821 = vmatprep.mubr.f32.mxu0 %v5944
      %6822 = vmatmul.mubr.f32.gmra.mxu0 %v5943
      %v6823 = vpop.f32.mrf.mxu0
      %v6824 = vadd.f32 %v6599, %v6823
      %v6825 = vpop.f32.mrf.mxu0
      %6826 = vmatprep.mubr.f32.mxu0 %v5953
      %6827 = vmatmul.mubr.f32.gmra.mxu0 %v5952
      %v6828 = vpop.f32.mrf.mxu0
      %v6829 = vadd.f32 %v6604, %v6828
      %v6830 = vpop.f32.mrf.mxu0
      %6831 = vmatprep.mubr.f32.mxu0 %v5962
      %6832 = vmatmul.mubr.f32.gmra.mxu0 %v5961
      %v6833 = vpop.f32.mrf.mxu0
      %v6834 = vadd.f32 %v6609, %v6833
      %v6835 = vpop.f32.mrf.mxu0
      %6836 = vmatprep.mubr.f32.mxu0 %v5971
      %6837 = vmatmul.mubr.f32.gmra.mxu0 %v5970
      %v6838 = vpop.f32.mrf.mxu0
      %v6839 = vadd.f32 %v6614, %v6838
      %v6840 = vpop.f32.mrf.mxu0
      %6841 = vmatprep.mubr.f32.mxu0 %v5980
      %6842 = vmatmul.mubr.f32.gmra.mxu0 %v5979
      %v6843 = vpop.f32.mrf.mxu0
      %v6844 = vadd.f32 %v6619, %v6843
      %v6845 = vpop.f32.mrf.mxu0
      %6846 = vmatprep.mubr.f32.mxu0 %v5989
      %6847 = vmatmul.mubr.f32.gmra.mxu0 %v5988
      %v6848 = vpop.f32.mrf.mxu0
      %v6849 = vadd.f32 %v6624, %v6848
      %v6850 = vpop.f32.mrf.mxu0
      %6851 = vmatprep.mubr.f32.mxu0 %v5998
      %6852 = vmatmul.mubr.f32.gmra.mxu0 %v5997
      %v6853 = vpop.f32.mrf.mxu0
      %v6854 = vadd.f32 %v6629, %v6853
      %v6855 = vpop.f32.mrf.mxu0
      %6856 = vmatprep.mubr.f32.mxu0 %v6007
      %6857 = vmatmul.mubr.f32.gmra.mxu0 %v6006
      %v6858 = vpop.f32.mrf.mxu0
      %v6859 = vadd.f32 %v6634, %v6858
      %v6860 = vpop.f32.mrf.mxu0
      %6861 = vmatprep.mubr.f32.mxu0 %v6016
      %6862 = vmatmul.mubr.f32.gmra.mxu0 %v6015
      %v6863 = vpop.f32.mrf.mxu0
      %v6864 = vadd.f32 %v6639, %v6863
      %v6865 = vpop.f32.mrf.mxu0
      %6866 = vmatprep.mubr.f32.mxu0 %v6025
      %6867 = vmatmul.mubr.f32.gmra.mxu0 %v6024
      %v6868 = vpop.f32.mrf.mxu0
      %v6869 = vadd.f32 %v6644, %v6868
      %v6870 = vpop.f32.mrf.mxu0
      %6871 = vmatprep.mubr.f32.mxu0 %v6034
      %6872 = vmatmul.mubr.f32.gmra.mxu0 %v6033
      %v6873 = vpop.f32.mrf.mxu0
      %v6874 = vadd.f32 %v6649, %v6873
      %v6875 = vpop.f32.mrf.mxu0
      %6876 = vmatprep.mubr.f32.mxu0 %v6043
      %6877 = vmatmul.mubr.f32.gmra.mxu0 %v6042
      %v6878 = vpop.f32.mrf.mxu0
      %v6879 = vadd.f32 %v6654, %v6878
      %v6880 = vpop.f32.mrf.mxu0
      %6881 = vmatprep.mubr.f32.mxu0 %v6052
      %6882 = vmatmul.mubr.f32.gmra.mxu0 %v6051
      %v6883 = vpop.f32.mrf.mxu0
      %v6884 = vadd.f32 %v6659, %v6883
      %v6885 = vpop.f32.mrf.mxu0
      %6886 = vmatprep.mubr.f32.mxu0 %v6061
      %6887 = vmatmul.mubr.f32.gmra.mxu0 %v6060
      %v6888 = vpop.f32.mrf.mxu0
      %v6889 = vadd.f32 %v6664, %v6888
      %v6890 = vpop.f32.mrf.mxu0
      %6891 = vmatprep.mubr.f32.mxu0 %v6070
      %6892 = vmatmul.mubr.f32.gmra.mxu0 %v6069
      %v6893 = vpop.f32.mrf.mxu0
      %v6894 = vadd.f32 %v6669, %v6893
      %v6895 = vpop.f32.mrf.mxu0
      %6896 = vmatprep.mubr.f32.mxu0 %v6079
      %6897 = vmatmul.mubr.f32.gmra.mxu0 %v6078
      %v6898 = vpop.f32.mrf.mxu0
      %v6899 = vadd.f32 %v6674, %v6898
      %v6900 = vpop.f32.mrf.mxu0
      %6901 = vdwg.mxu0
      %6902 = vmatprep.subr.mxu0 0.0
      %6903 = vmatpush1.msra.mxu0 %v6194
      %6904 = vmatprep.subr.mxu0 0.0
      %6905 = vmatpush1.msra.mxu0 %v6193
      %6906 = vmatprep.subr.mxu0 0.0
      %6907 = vmatpush1.msra.mxu0 %v6192
      %6908 = vmatprep.subr.mxu0 0.0
      %6909 = vmatpush1.msra.mxu0 %v6191
      %6910 = vmatprep.subr.mxu0 0.0
      %6911 = vmatpush1.msra.mxu0 %v6190
      %6912 = vmatprep.subr.mxu0 0.0
      %6913 = vmatpush1.msra.mxu0 %v6189
      %6914 = vmatprep.subr.mxu0 0.0
      %6915 = vmatpush1.msra.mxu0 %v6188
      %6916 = vmatprep.subr.mxu0 0.0
      %6917 = vmatpush1.msra.mxu0 %v6187
      %6918 = vmatprep.subr.mxu0 0.0
      %6919 = vmatpush1.msra.mxu0 %v6186
      %6920 = vmatprep.subr.mxu0 0.0
      %6921 = vmatpush1.msra.mxu0 %v6185
      %6922 = vmatprep.subr.mxu0 0.0
      %6923 = vmatpush1.msra.mxu0 %v6184
      %6924 = vmatprep.subr.mxu0 0.0
      %6925 = vmatpush1.msra.mxu0 %v6183
      %6926 = vmatprep.subr.mxu0 0.0
      %6927 = vmatpush1.msra.mxu0 %v6182
      %6928 = vmatprep.subr.mxu0 0.0
      %6929 = vmatpush1.msra.mxu0 %v6181
      %6930 = vmatprep.subr.mxu0 0.0
      %6931 = vmatpush1.msra.mxu0 %v6180
      %6932 = vmatprep.subr.mxu0 0.0
      %6933 = vmatpush1.msra.mxu0 %v6179
      %6934 = vmatprep.subr.mxu0 0.0
      %6935 = vmatpush2.msra.mxu0 %v6210
      %6936 = vmatprep.subr.mxu0 0.0
      %6937 = vmatpush2.msra.mxu0 %v6209
      %6938 = vmatprep.subr.mxu0 0.0
      %6939 = vmatpush2.msra.mxu0 %v6208
      %6940 = vmatprep.subr.mxu0 0.0
      %6941 = vmatpush2.msra.mxu0 %v6207
      %6942 = vmatprep.subr.mxu0 0.0
      %6943 = vmatpush2.msra.mxu0 %v6206
      %6944 = vmatprep.subr.mxu0 0.0
      %6945 = vmatpush2.msra.mxu0 %v6205
      %6946 = vmatprep.subr.mxu0 0.0
      %6947 = vmatpush2.msra.mxu0 %v6204
      %6948 = vmatprep.subr.mxu0 0.0
      %6949 = vmatpush2.msra.mxu0 %v6203
      %6950 = vmatprep.subr.mxu0 0.0
      %6951 = vmatpush2.msra.mxu0 %v6202
      %6952 = vmatprep.subr.mxu0 0.0
      %6953 = vmatpush2.msra.mxu0 %v6201
      %6954 = vmatprep.subr.mxu0 0.0
      %6955 = vmatpush2.msra.mxu0 %v6200
      %6956 = vmatprep.subr.mxu0 0.0
      %6957 = vmatpush2.msra.mxu0 %v6199
      %6958 = vmatprep.subr.mxu0 0.0
      %6959 = vmatpush2.msra.mxu0 %v6198
      %6960 = vmatprep.subr.mxu0 0.0
      %6961 = vmatpush2.msra.mxu0 %v6197
      %6962 = vmatprep.subr.mxu0 0.0
      %6963 = vmatpush2.msra.mxu0 %v6196
      %6964 = vmatprep.subr.mxu0 0.0
      %6965 = vmatpush2.msra.mxu0 %v6195
      %6966 = vmatprep.mubr.f32.mxu0 %v5802
      %6967 = vmatmul.mubr.f32.gmra.mxu0 %v5801
      %v6968 = vpop.f32.mrf.mxu0
      %v6969 = vadd.f32 %v6744, %v6968
      %v6970 = vpop.f32.mrf.mxu0
      %6971 = vmatprep.mubr.f32.mxu0 %v5811
      %6972 = vmatmul.mubr.f32.gmra.mxu0 %v5810
      %v6973 = vpop.f32.mrf.mxu0
      %v6974 = vadd.f32 %v6749, %v6973
      %v6975 = vpop.f32.mrf.mxu0
      %6976 = vmatprep.mubr.f32.mxu0 %v5820
      %6977 = vmatmul.mubr.f32.gmra.mxu0 %v5819
      %v6978 = vpop.f32.mrf.mxu0
      %v6979 = vadd.f32 %v6754, %v6978
      %v6980 = vpop.f32.mrf.mxu0
      %6981 = vmatprep.mubr.f32.mxu0 %v5829
      %6982 = vmatmul.mubr.f32.gmra.mxu0 %v5828
      %v6983 = vpop.f32.mrf.mxu0
      %v6984 = vadd.f32 %v6759, %v6983
      %v6985 = vpop.f32.mrf.mxu0
      %6986 = vmatprep.mubr.f32.mxu0 %v5838
      %6987 = vmatmul.mubr.f32.gmra.mxu0 %v5837
      %v6988 = vpop.f32.mrf.mxu0
      %v6989 = vadd.f32 %v6764, %v6988
      %v6990 = vpop.f32.mrf.mxu0
      %6991 = vmatprep.mubr.f32.mxu0 %v5847
      %6992 = vmatmul.mubr.f32.gmra.mxu0 %v5846
      %v6993 = vpop.f32.mrf.mxu0
      %v6994 = vadd.f32 %v6769, %v6993
      %v6995 = vpop.f32.mrf.mxu0
      %6996 = vmatprep.mubr.f32.mxu0 %v5856
      %6997 = vmatmul.mubr.f32.gmra.mxu0 %v5855
      %v6998 = vpop.f32.mrf.mxu0
      %v6999 = vadd.f32 %v6774, %v6998
      %v7000 = vpop.f32.mrf.mxu0
      %7001 = vmatprep.mubr.f32.mxu0 %v5865
      %7002 = vmatmul.mubr.f32.gmra.mxu0 %v5864
      %v7003 = vpop.f32.mrf.mxu0
      %v7004 = vadd.f32 %v6779, %v7003
      %v7005 = vpop.f32.mrf.mxu0
      %7006 = vmatprep.mubr.f32.mxu0 %v5874
      %7007 = vmatmul.mubr.f32.gmra.mxu0 %v5873
      %v7008 = vpop.f32.mrf.mxu0
      %v7009 = vadd.f32 %v6784, %v7008
      %v7010 = vpop.f32.mrf.mxu0
      %7011 = vmatprep.mubr.f32.mxu0 %v5883
      %7012 = vmatmul.mubr.f32.gmra.mxu0 %v5882
      %v7013 = vpop.f32.mrf.mxu0
      %v7014 = vadd.f32 %v6789, %v7013
      %v7015 = vpop.f32.mrf.mxu0
      %7016 = vmatprep.mubr.f32.mxu0 %v5892
      %7017 = vmatmul.mubr.f32.gmra.mxu0 %v5891
      %v7018 = vpop.f32.mrf.mxu0
      %v7019 = vadd.f32 %v6794, %v7018
      %v7020 = vpop.f32.mrf.mxu0
      %7021 = vmatprep.mubr.f32.mxu0 %v5901
      %7022 = vmatmul.mubr.f32.gmra.mxu0 %v5900
      %v7023 = vpop.f32.mrf.mxu0
      %v7024 = vadd.f32 %v6799, %v7023
      %v7025 = vpop.f32.mrf.mxu0
      %7026 = vmatprep.mubr.f32.mxu0 %v5910
      %7027 = vmatmul.mubr.f32.gmra.mxu0 %v5909
      %v7028 = vpop.f32.mrf.mxu0
      %v7029 = vadd.f32 %v6804, %v7028
      %v7030 = vpop.f32.mrf.mxu0
      %7031 = vmatprep.mubr.f32.mxu0 %v5919
      %7032 = vmatmul.mubr.f32.gmra.mxu0 %v5918
      %v7033 = vpop.f32.mrf.mxu0
      %v7034 = vadd.f32 %v6809, %v7033
      %v7035 = vpop.f32.mrf.mxu0
      %7036 = vmatprep.mubr.f32.mxu0 %v5928
      %7037 = vmatmul.mubr.f32.gmra.mxu0 %v5927
      %v7038 = vpop.f32.mrf.mxu0
      %v7039 = vadd.f32 %v6814, %v7038
      %v7040 = vpop.f32.mrf.mxu0
      %7041 = vmatprep.mubr.f32.mxu0 %v5937
      %7042 = vmatmul.mubr.f32.gmra.mxu0 %v5936
      %v7043 = vpop.f32.mrf.mxu0
      %v7044 = vadd.f32 %v6819, %v7043
      %v7045 = vpop.f32.mrf.mxu0
      %7046 = vmatprep.mubr.f32.mxu0 %v5946
      %7047 = vmatmul.mubr.f32.gmra.mxu0 %v5945
      %v7048 = vpop.f32.mrf.mxu0
      %v7049 = vadd.f32 %v6824, %v7048
      %v7050 = vpop.f32.mrf.mxu0
      %7051 = vmatprep.mubr.f32.mxu0 %v5955
      %7052 = vmatmul.mubr.f32.gmra.mxu0 %v5954
      %v7053 = vpop.f32.mrf.mxu0
      %v7054 = vadd.f32 %v6829, %v7053
      %v7055 = vpop.f32.mrf.mxu0
      %7056 = vmatprep.mubr.f32.mxu0 %v5964
      %7057 = vmatmul.mubr.f32.gmra.mxu0 %v5963
      %v7058 = vpop.f32.mrf.mxu0
      %v7059 = vadd.f32 %v6834, %v7058
      %v7060 = vpop.f32.mrf.mxu0
      %7061 = vmatprep.mubr.f32.mxu0 %v5973
      %7062 = vmatmul.mubr.f32.gmra.mxu0 %v5972
      %v7063 = vpop.f32.mrf.mxu0
      %v7064 = vadd.f32 %v6839, %v7063
      %v7065 = vpop.f32.mrf.mxu0
      %7066 = vmatprep.mubr.f32.mxu0 %v5982
      %7067 = vmatmul.mubr.f32.gmra.mxu0 %v5981
      %v7068 = vpop.f32.mrf.mxu0
      %v7069 = vadd.f32 %v6844, %v7068
      %v7070 = vpop.f32.mrf.mxu0
      %7071 = vmatprep.mubr.f32.mxu0 %v5991
      %7072 = vmatmul.mubr.f32.gmra.mxu0 %v5990
      %v7073 = vpop.f32.mrf.mxu0
      %v7074 = vadd.f32 %v6849, %v7073
      %v7075 = vpop.f32.mrf.mxu0
      %7076 = vmatprep.mubr.f32.mxu0 %v6000
      %7077 = vmatmul.mubr.f32.gmra.mxu0 %v5999
      %v7078 = vpop.f32.mrf.mxu0
      %v7079 = vadd.f32 %v6854, %v7078
      %v7080 = vpop.f32.mrf.mxu0
      %7081 = vmatprep.mubr.f32.mxu0 %v6009
      %7082 = vmatmul.mubr.f32.gmra.mxu0 %v6008
      %v7083 = vpop.f32.mrf.mxu0
      %v7084 = vadd.f32 %v6859, %v7083
      %v7085 = vpop.f32.mrf.mxu0
      %7086 = vmatprep.mubr.f32.mxu0 %v6018
      %7087 = vmatmul.mubr.f32.gmra.mxu0 %v6017
      %v7088 = vpop.f32.mrf.mxu0
      %v7089 = vadd.f32 %v6864, %v7088
      %v7090 = vpop.f32.mrf.mxu0
      %7091 = vmatprep.mubr.f32.mxu0 %v6027
      %7092 = vmatmul.mubr.f32.gmra.mxu0 %v6026
      %v7093 = vpop.f32.mrf.mxu0
      %v7094 = vadd.f32 %v6869, %v7093
      %v7095 = vpop.f32.mrf.mxu0
      %7096 = vmatprep.mubr.f32.mxu0 %v6036
      %7097 = vmatmul.mubr.f32.gmra.mxu0 %v6035
      %v7098 = vpop.f32.mrf.mxu0
      %v7099 = vadd.f32 %v6874, %v7098
      %v7100 = vpop.f32.mrf.mxu0
      %7101 = vmatprep.mubr.f32.mxu0 %v6045
      %7102 = vmatmul.mubr.f32.gmra.mxu0 %v6044
      %v7103 = vpop.f32.mrf.mxu0
      %v7104 = vadd.f32 %v6879, %v7103
      %v7105 = vpop.f32.mrf.mxu0
      %7106 = vmatprep.mubr.f32.mxu0 %v6054
      %7107 = vmatmul.mubr.f32.gmra.mxu0 %v6053
      %v7108 = vpop.f32.mrf.mxu0
      %v7109 = vadd.f32 %v6884, %v7108
      %v7110 = vpop.f32.mrf.mxu0
      %7111 = vmatprep.mubr.f32.mxu0 %v6063
      %7112 = vmatmul.mubr.f32.gmra.mxu0 %v6062
      %v7113 = vpop.f32.mrf.mxu0
      %v7114 = vadd.f32 %v6889, %v7113
      %v7115 = vpop.f32.mrf.mxu0
      %7116 = vmatprep.mubr.f32.mxu0 %v6072
      %7117 = vmatmul.mubr.f32.gmra.mxu0 %v6071
      %v7118 = vpop.f32.mrf.mxu0
      %v7119 = vadd.f32 %v6894, %v7118
      %v7120 = vpop.f32.mrf.mxu0
      %7121 = vmatprep.mubr.f32.mxu0 %v6081
      %7122 = vmatmul.mubr.f32.gmra.mxu0 %v6080
      %v7123 = vpop.f32.mrf.mxu0
      %v7124 = vadd.f32 %v6899, %v7123
      %v7125 = vpop.f32.mrf.mxu0
      %7126 = vdwg.mxu0
      %7127 = vmatprep.subr.mxu0 0.0
      %7128 = vmatpush1.msra.mxu0 %v6226
      %7129 = vmatprep.subr.mxu0 0.0
      %7130 = vmatpush1.msra.mxu0 %v6225
      %7131 = vmatprep.subr.mxu0 0.0
      %7132 = vmatpush1.msra.mxu0 %v6224
      %7133 = vmatprep.subr.mxu0 0.0
      %7134 = vmatpush1.msra.mxu0 %v6223
      %7135 = vmatprep.subr.mxu0 0.0
      %7136 = vmatpush1.msra.mxu0 %v6222
      %7137 = vmatprep.subr.mxu0 0.0
      %7138 = vmatpush1.msra.mxu0 %v6221
      %7139 = vmatprep.subr.mxu0 0.0
      %7140 = vmatpush1.msra.mxu0 %v6220
      %7141 = vmatprep.subr.mxu0 0.0
      %7142 = vmatpush1.msra.mxu0 %v6219
      %7143 = vmatprep.subr.mxu0 0.0
      %7144 = vmatpush1.msra.mxu0 %v6218
      %7145 = vmatprep.subr.mxu0 0.0
      %7146 = vmatpush1.msra.mxu0 %v6217
      %7147 = vmatprep.subr.mxu0 0.0
      %7148 = vmatpush1.msra.mxu0 %v6216
      %7149 = vmatprep.subr.mxu0 0.0
      %7150 = vmatpush1.msra.mxu0 %v6215
      %7151 = vmatprep.subr.mxu0 0.0
      %7152 = vmatpush1.msra.mxu0 %v6214
      %7153 = vmatprep.subr.mxu0 0.0
      %7154 = vmatpush1.msra.mxu0 %v6213
      %7155 = vmatprep.subr.mxu0 0.0
      %7156 = vmatpush1.msra.mxu0 %v6212
      %7157 = vmatprep.subr.mxu0 0.0
      %7158 = vmatpush1.msra.mxu0 %v6211
      %7159 = vmatprep.subr.mxu0 0.0
      %7160 = vmatpush2.msra.mxu0 0.0
      %7161 = vmatprep.subr.mxu0 0.0
      %7162 = vmatpush2.msra.mxu0 0.0
      %7163 = vmatprep.subr.mxu0 0.0
      %7164 = vmatpush2.msra.mxu0 0.0
      %7165 = vmatprep.subr.mxu0 0.0
      %7166 = vmatpush2.msra.mxu0 0.0
      %7167 = vmatprep.subr.mxu0 0.0
      %7168 = vmatpush2.msra.mxu0 0.0
      %7169 = vmatprep.subr.mxu0 0.0
      %7170 = vmatpush2.msra.mxu0 0.0
      %7171 = vmatprep.subr.mxu0 0.0
      %7172 = vmatpush2.msra.mxu0 0.0
      %7173 = vmatprep.subr.mxu0 0.0
      %7174 = vmatpush2.msra.mxu0 0.0
      %7175 = vmatprep.subr.mxu0 0.0
      %7176 = vmatpush2.msra.mxu0 0.0
      %7177 = vmatprep.subr.mxu0 0.0
      %7178 = vmatpush2.msra.mxu0 0.0
      %7179 = vmatprep.subr.mxu0 0.0
      %7180 = vmatpush2.msra.mxu0 0.0
      %7181 = vmatprep.subr.mxu0 0.0
      %7182 = vmatpush2.msra.mxu0 0.0
      %7183 = vmatprep.subr.mxu0 0.0
      %7184 = vmatpush2.msra.mxu0 0.0
      %7185 = vmatprep.subr.mxu0 0.0
      %7186 = vmatpush2.msra.mxu0 0.0
      %7187 = vmatprep.subr.mxu0 0.0
      %7188 = vmatpush2.msra.mxu0 0.0
      %7189 = vmatprep.subr.mxu0 0.0
      %7190 = vmatpush2.msra.mxu0 0.0
      %7191 = vmatprep.mubr.f32.mxu0 0.0
      %7192 = vmatmul.mubr.f32.gmra.mxu0 %v5803
      %v7193 = vpop.f32.mrf.mxu0
      %v7194 = vadd.f32 %v6969, %v7193
      %v7195 = vpop.f32.mrf.mxu0
      %7196 = vmatprep.mubr.f32.mxu0 0.0
      %7197 = vmatmul.mubr.f32.gmra.mxu0 %v5812
      %v7198 = vpop.f32.mrf.mxu0
      %v7199 = vadd.f32 %v6974, %v7198
      %v7200 = vpop.f32.mrf.mxu0
      %7201 = vmatprep.mubr.f32.mxu0 0.0
      %7202 = vmatmul.mubr.f32.gmra.mxu0 %v5821
      %v7203 = vpop.f32.mrf.mxu0
      %v7204 = vadd.f32 %v6979, %v7203
      %v7205 = vpop.f32.mrf.mxu0
      %7206 = vmatprep.mubr.f32.mxu0 0.0
      %7207 = vmatmul.mubr.f32.gmra.mxu0 %v5830
      %v7208 = vpop.f32.mrf.mxu0
      %v7209 = vadd.f32 %v6984, %v7208
      %v7210 = vpop.f32.mrf.mxu0
      %7211 = vmatprep.mubr.f32.mxu0 0.0
      %7212 = vmatmul.mubr.f32.gmra.mxu0 %v5839
      %v7213 = vpop.f32.mrf.mxu0
      %v7214 = vadd.f32 %v6989, %v7213
      %v7215 = vpop.f32.mrf.mxu0
      %7216 = vmatprep.mubr.f32.mxu0 0.0
      %7217 = vmatmul.mubr.f32.gmra.mxu0 %v5848
      %v7218 = vpop.f32.mrf.mxu0
      %v7219 = vadd.f32 %v6994, %v7218
      %v7220 = vpop.f32.mrf.mxu0
      %7221 = vmatprep.mubr.f32.mxu0 0.0
      %7222 = vmatmul.mubr.f32.gmra.mxu0 %v5857
      %v7223 = vpop.f32.mrf.mxu0
      %v7224 = vadd.f32 %v6999, %v7223
      %v7225 = vpop.f32.mrf.mxu0
      %7226 = vmatprep.mubr.f32.mxu0 0.0
      %7227 = vmatmul.mubr.f32.gmra.mxu0 %v5866
      %v7228 = vpop.f32.mrf.mxu0
      %v7229 = vadd.f32 %v7004, %v7228
      %v7230 = vpop.f32.mrf.mxu0
      %7231 = vmatprep.mubr.f32.mxu0 0.0
      %7232 = vmatmul.mubr.f32.gmra.mxu0 %v5875
      %v7233 = vpop.f32.mrf.mxu0
      %v7234 = vadd.f32 %v7009, %v7233
      %v7235 = vpop.f32.mrf.mxu0
      %7236 = vmatprep.mubr.f32.mxu0 0.0
      %7237 = vmatmul.mubr.f32.gmra.mxu0 %v5884
      %v7238 = vpop.f32.mrf.mxu0
      %v7239 = vadd.f32 %v7014, %v7238
      %v7240 = vpop.f32.mrf.mxu0
      %7241 = vmatprep.mubr.f32.mxu0 0.0
      %7242 = vmatmul.mubr.f32.gmra.mxu0 %v5893
      %v7243 = vpop.f32.mrf.mxu0
      %v7244 = vadd.f32 %v7019, %v7243
      %v7245 = vpop.f32.mrf.mxu0
      %7246 = vmatprep.mubr.f32.mxu0 0.0
      %7247 = vmatmul.mubr.f32.gmra.mxu0 %v5902
      %v7248 = vpop.f32.mrf.mxu0
      %v7249 = vadd.f32 %v7024, %v7248
      %v7250 = vpop.f32.mrf.mxu0
      %7251 = vmatprep.mubr.f32.mxu0 0.0
      %7252 = vmatmul.mubr.f32.gmra.mxu0 %v5911
      %v7253 = vpop.f32.mrf.mxu0
      %v7254 = vadd.f32 %v7029, %v7253
      %v7255 = vpop.f32.mrf.mxu0
      %7256 = vmatprep.mubr.f32.mxu0 0.0
      %7257 = vmatmul.mubr.f32.gmra.mxu0 %v5920
      %v7258 = vpop.f32.mrf.mxu0
      %v7259 = vadd.f32 %v7034, %v7258
      %v7260 = vpop.f32.mrf.mxu0
      %7261 = vmatprep.mubr.f32.mxu0 0.0
      %7262 = vmatmul.mubr.f32.gmra.mxu0 %v5929
      %v7263 = vpop.f32.mrf.mxu0
      %v7264 = vadd.f32 %v7039, %v7263
      %v7265 = vpop.f32.mrf.mxu0
      %7266 = vmatprep.mubr.f32.mxu0 0.0
      %7267 = vmatmul.mubr.f32.gmra.mxu0 %v5938
      %v7268 = vpop.f32.mrf.mxu0
      %v7269 = vadd.f32 %v7044, %v7268
      %v7270 = vpop.f32.mrf.mxu0
      %7271 = vmatprep.mubr.f32.mxu0 0.0
      %7272 = vmatmul.mubr.f32.gmra.mxu0 %v5947
      %v7273 = vpop.f32.mrf.mxu0
      %v7274 = vadd.f32 %v7049, %v7273
      %v7275 = vpop.f32.mrf.mxu0
      %7276 = vmatprep.mubr.f32.mxu0 0.0
      %7277 = vmatmul.mubr.f32.gmra.mxu0 %v5956
      %v7278 = vpop.f32.mrf.mxu0
      %v7279 = vadd.f32 %v7054, %v7278
      %v7280 = vpop.f32.mrf.mxu0
      %7281 = vmatprep.mubr.f32.mxu0 0.0
      %7282 = vmatmul.mubr.f32.gmra.mxu0 %v5965
      %v7283 = vpop.f32.mrf.mxu0
      %v7284 = vadd.f32 %v7059, %v7283
      %v7285 = vpop.f32.mrf.mxu0
      %7286 = vmatprep.mubr.f32.mxu0 0.0
      %7287 = vmatmul.mubr.f32.gmra.mxu0 %v5974
      %v7288 = vpop.f32.mrf.mxu0
      %v7289 = vadd.f32 %v7064, %v7288
      %v7290 = vpop.f32.mrf.mxu0
      %7291 = vmatprep.mubr.f32.mxu0 0.0
      %7292 = vmatmul.mubr.f32.gmra.mxu0 %v5983
      %v7293 = vpop.f32.mrf.mxu0
      %v7294 = vadd.f32 %v7069, %v7293
      %v7295 = vpop.f32.mrf.mxu0
      %7296 = vmatprep.mubr.f32.mxu0 0.0
      %7297 = vmatmul.mubr.f32.gmra.mxu0 %v5992
      %v7298 = vpop.f32.mrf.mxu0
      %v7299 = vadd.f32 %v7074, %v7298
      %v7300 = vpop.f32.mrf.mxu0
      %7301 = vmatprep.mubr.f32.mxu0 0.0
      %7302 = vmatmul.mubr.f32.gmra.mxu0 %v6001
      %v7303 = vpop.f32.mrf.mxu0
      %v7304 = vadd.f32 %v7079, %v7303
      %v7305 = vpop.f32.mrf.mxu0
      %7306 = vmatprep.mubr.f32.mxu0 0.0
      %7307 = vmatmul.mubr.f32.gmra.mxu0 %v6010
      %v7308 = vpop.f32.mrf.mxu0
      %v7309 = vadd.f32 %v7084, %v7308
      %v7310 = vpop.f32.mrf.mxu0
      %7311 = vmatprep.mubr.f32.mxu0 0.0
      %7312 = vmatmul.mubr.f32.gmra.mxu0 %v6019
      %v7313 = vpop.f32.mrf.mxu0
      %v7314 = vadd.f32 %v7089, %v7313
      %v7315 = vpop.f32.mrf.mxu0
      %7316 = vmatprep.mubr.f32.mxu0 0.0
      %7317 = vmatmul.mubr.f32.gmra.mxu0 %v6028
      %v7318 = vpop.f32.mrf.mxu0
      %v7319 = vadd.f32 %v7094, %v7318
      %v7320 = vpop.f32.mrf.mxu0
      %7321 = vmatprep.mubr.f32.mxu0 0.0
      %7322 = vmatmul.mubr.f32.gmra.mxu0 %v6037
      %v7323 = vpop.f32.mrf.mxu0
      %v7324 = vadd.f32 %v7099, %v7323
      %v7325 = vpop.f32.mrf.mxu0
      %7326 = vmatprep.mubr.f32.mxu0 0.0
      %7327 = vmatmul.mubr.f32.gmra.mxu0 %v6046
      %v7328 = vpop.f32.mrf.mxu0
      %v7329 = vadd.f32 %v7104, %v7328
      %v7330 = vpop.f32.mrf.mxu0
      %7331 = vmatprep.mubr.f32.mxu0 0.0
      %7332 = vmatmul.mubr.f32.gmra.mxu0 %v6055
      %v7333 = vpop.f32.mrf.mxu0
      %v7334 = vadd.f32 %v7109, %v7333
      %v7335 = vpop.f32.mrf.mxu0
      %7336 = vmatprep.mubr.f32.mxu0 0.0
      %7337 = vmatmul.mubr.f32.gmra.mxu0 %v6064
      %v7338 = vpop.f32.mrf.mxu0
      %v7339 = vadd.f32 %v7114, %v7338
      %v7340 = vpop.f32.mrf.mxu0
      %7341 = vmatprep.mubr.f32.mxu0 0.0
      %7342 = vmatmul.mubr.f32.gmra.mxu0 %v6073
      %v7343 = vpop.f32.mrf.mxu0
      %v7344 = vadd.f32 %v7119, %v7343
      %v7345 = vpop.f32.mrf.mxu0
      %7346 = vmatprep.mubr.f32.mxu0 0.0
      %7347 = vmatmul.mubr.f32.gmra.mxu0 %v6082
      %v7348 = vpop.f32.mrf.mxu0
      %v7349 = vadd.f32 %v7124, %v7348
      %v7350 = vpop.f32.mrf.mxu0
      %7351 = vdwg.mxu0
      %v7352 = vmax.f32 %v7194, 0.0
      %v7353 = vmax.f32 %v7199, 0.0
      %v7354 = vmax.f32 %v7204, 0.0
      %v7355 = vmax.f32 %v7209, 0.0
      %v7356 = vmax.f32 %v7214, 0.0
      %v7357 = vmax.f32 %v7219, 0.0
      %v7358 = vmax.f32 %v7224, 0.0
      %v7359 = vmax.f32 %v7229, 0.0
      %v7360 = vmax.f32 %v7234, 0.0
      %v7361 = vmax.f32 %v7239, 0.0
      %v7362 = vmax.f32 %v7244, 0.0
      %v7363 = vmax.f32 %v7249, 0.0
      %v7364 = vmax.f32 %v7254, 0.0
      %v7365 = vmax.f32 %v7259, 0.0
      %v7366 = vmax.f32 %v7264, 0.0
      %v7367 = vmax.f32 %v7269, 0.0
      %v7368 = vmax.f32 %v7274, 0.0
      %v7369 = vmax.f32 %v7279, 0.0
      %v7370 = vmax.f32 %v7284, 0.0
      %v7371 = vmax.f32 %v7289, 0.0
      %v7372 = vmax.f32 %v7294, 0.0
      %v7373 = vmax.f32 %v7299, 0.0
      %v7374 = vmax.f32 %v7304, 0.0
      %v7375 = vmax.f32 %v7309, 0.0
      %v7376 = vmax.f32 %v7314, 0.0
      %v7377 = vmax.f32 %v7319, 0.0
      %v7378 = vmax.f32 %v7324, 0.0
      %v7379 = vmax.f32 %v7329, 0.0
      %v7380 = vmax.f32 %v7334, 0.0
      %v7381 = vmax.f32 %v7339, 0.0
      %v7382 = vmax.f32 %v7344, 0.0
      %v7383 = vmax.f32 %v7349, 0.0
      %v7384 = vld [vmem:[%s2] sm:$0xff]
      %v7385 = vld [vmem:[%s2 + $0x8] sm:$0xff]
      %v7386 = vld [vmem:[%s2 + $0x10] sm:$0xff]
      %v7387 = vld [vmem:[%s2 + $0x18] sm:$0xff]
      %v7388 = vld [vmem:[%s2 + $0x20] sm:$0xff]
      %v7389 = vld [vmem:[%s2 + $0x28] sm:$0xff]
      %v7390 = vld [vmem:[%s2 + $0x30] sm:$0xff]
      %v7391 = vld [vmem:[%s2 + $0x38] sm:$0xff]
      %v7392 = vld [vmem:[%s2 + $0x40] sm:$0xff]
      %v7393 = vld [vmem:[%s2 + $0x48] sm:$0xff]
      %v7394 = vld [vmem:[%s2 + $0x50] sm:$0xff]
      %v7395 = vld [vmem:[%s2 + $0x58] sm:$0xff]
      %v7396 = vld [vmem:[%s2 + $0x60] sm:$0xff]
      %v7397 = vld [vmem:[%s2 + $0x68] sm:$0xff]
      %v7398 = vld [vmem:[%s2 + $0x70] sm:$0xff]
      %v7399 = vld [vmem:[%s2 + $0x78] sm:$0xff]
      %7400 = vmatprep.subr.mxu0 0.0
      %7401 = vmatpush1.msra.mxu0 %v7399
      %7402 = vmatprep.subr.mxu0 0.0
      %7403 = vmatpush1.msra.mxu0 %v7398
      %7404 = vmatprep.subr.mxu0 0.0
      %7405 = vmatpush1.msra.mxu0 %v7397
      %7406 = vmatprep.subr.mxu0 0.0
      %7407 = vmatpush1.msra.mxu0 %v7396
      %7408 = vmatprep.subr.mxu0 0.0
      %7409 = vmatpush1.msra.mxu0 %v7395
      %7410 = vmatprep.subr.mxu0 0.0
      %7411 = vmatpush1.msra.mxu0 %v7394
      %7412 = vmatprep.subr.mxu0 0.0
      %7413 = vmatpush1.msra.mxu0 %v7393
      %7414 = vmatprep.subr.mxu0 0.0
      %7415 = vmatpush1.msra.mxu0 %v7392
      %7416 = vmatprep.subr.mxu0 0.0
      %7417 = vmatpush1.msra.mxu0 %v7391
      %7418 = vmatprep.subr.mxu0 0.0
      %7419 = vmatpush1.msra.mxu0 %v7390
      %7420 = vmatprep.subr.mxu0 0.0
      %7421 = vmatpush1.msra.mxu0 %v7389
      %7422 = vmatprep.subr.mxu0 0.0
      %7423 = vmatpush1.msra.mxu0 %v7388
      %7424 = vmatprep.subr.mxu0 0.0
      %7425 = vmatpush1.msra.mxu0 %v7387
      %7426 = vmatprep.subr.mxu0 0.0
      %7427 = vmatpush1.msra.mxu0 %v7386
      %7428 = vmatprep.subr.mxu0 0.0
      %7429 = vmatpush1.msra.mxu0 %v7385
      %7430 = vmatprep.subr.mxu0 0.0
      %7431 = vmatpush1.msra.mxu0 %v7384
      %7432 = vmatprep.subr.mxu0 0.0
      %7433 = vmatpush2.msra.mxu0 0.0
      %7434 = vmatprep.subr.mxu0 0.0
      %7435 = vmatpush2.msra.mxu0 0.0
      %7436 = vmatprep.subr.mxu0 0.0
      %7437 = vmatpush2.msra.mxu0 0.0
      %7438 = vmatprep.subr.mxu0 0.0
      %7439 = vmatpush2.msra.mxu0 0.0
      %7440 = vmatprep.subr.mxu0 0.0
      %7441 = vmatpush2.msra.mxu0 0.0
      %7442 = vmatprep.subr.mxu0 0.0
      %7443 = vmatpush2.msra.mxu0 0.0
      %7444 = vmatprep.subr.mxu0 0.0
      %7445 = vmatpush2.msra.mxu0 0.0
      %7446 = vmatprep.subr.mxu0 0.0
      %7447 = vmatpush2.msra.mxu0 0.0
      %7448 = vmatprep.subr.mxu0 0.0
      %7449 = vmatpush2.msra.mxu0 0.0
      %7450 = vmatprep.subr.mxu0 0.0
      %7451 = vmatpush2.msra.mxu0 0.0
      %7452 = vmatprep.subr.mxu0 0.0
      %7453 = vmatpush2.msra.mxu0 0.0
      %7454 = vmatprep.subr.mxu0 0.0
      %7455 = vmatpush2.msra.mxu0 0.0
      %7456 = vmatprep.subr.mxu0 0.0
      %7457 = vmatpush2.msra.mxu0 0.0
      %7458 = vmatprep.subr.mxu0 0.0
      %7459 = vmatpush2.msra.mxu0 0.0
      %7460 = vmatprep.subr.mxu0 0.0
      %7461 = vmatpush2.msra.mxu0 0.0
      %7462 = vmatprep.subr.mxu0 0.0
      %7463 = vmatpush2.msra.mxu0 0.0
      %7464 = vmatprep.mubr.f32.mxu0 0.0
      %7465 = vmatmul.mubr.f32.gmra.mxu0 %v7352
      %v7466 = vpop.f32.mrf.mxu0
      %v7467 = vadd.f32 0.0, %v7466
      %v7468 = vpop.f32.mrf.mxu0
      %7469 = vmatprep.mubr.f32.mxu0 0.0
      %7470 = vmatmul.mubr.f32.gmra.mxu0 %v7353
      %v7471 = vpop.f32.mrf.mxu0
      %v7472 = vadd.f32 0.0, %v7471
      %v7473 = vpop.f32.mrf.mxu0
      %7474 = vmatprep.mubr.f32.mxu0 0.0
      %7475 = vmatmul.mubr.f32.gmra.mxu0 %v7354
      %v7476 = vpop.f32.mrf.mxu0
      %v7477 = vadd.f32 0.0, %v7476
      %v7478 = vpop.f32.mrf.mxu0
      %7479 = vmatprep.mubr.f32.mxu0 0.0
      %7480 = vmatmul.mubr.f32.gmra.mxu0 %v7355
      %v7481 = vpop.f32.mrf.mxu0
      %v7482 = vadd.f32 0.0, %v7481
      %v7483 = vpop.f32.mrf.mxu0
      %7484 = vmatprep.mubr.f32.mxu0 0.0
      %7485 = vmatmul.mubr.f32.gmra.mxu0 %v7356
      %v7486 = vpop.f32.mrf.mxu0
      %v7487 = vadd.f32 0.0, %v7486
      %v7488 = vpop.f32.mrf.mxu0
      %7489 = vmatprep.mubr.f32.mxu0 0.0
      %7490 = vmatmul.mubr.f32.gmra.mxu0 %v7357
      %v7491 = vpop.f32.mrf.mxu0
      %v7492 = vadd.f32 0.0, %v7491
      %v7493 = vpop.f32.mrf.mxu0
      %7494 = vmatprep.mubr.f32.mxu0 0.0
      %7495 = vmatmul.mubr.f32.gmra.mxu0 %v7358
      %v7496 = vpop.f32.mrf.mxu0
      %v7497 = vadd.f32 0.0, %v7496
      %v7498 = vpop.f32.mrf.mxu0
      %7499 = vmatprep.mubr.f32.mxu0 0.0
      %7500 = vmatmul.mubr.f32.gmra.mxu0 %v7359
      %v7501 = vpop.f32.mrf.mxu0
      %v7502 = vadd.f32 0.0, %v7501
      %v7503 = vpop.f32.mrf.mxu0
      %7504 = vmatprep.mubr.f32.mxu0 0.0
      %7505 = vmatmul.mubr.f32.gmra.mxu0 %v7360
      %v7506 = vpop.f32.mrf.mxu0
      %v7507 = vadd.f32 0.0, %v7506
      %v7508 = vpop.f32.mrf.mxu0
      %7509 = vmatprep.mubr.f32.mxu0 0.0
      %7510 = vmatmul.mubr.f32.gmra.mxu0 %v7361
      %v7511 = vpop.f32.mrf.mxu0
      %v7512 = vadd.f32 0.0, %v7511
      %v7513 = vpop.f32.mrf.mxu0
      %7514 = vmatprep.mubr.f32.mxu0 0.0
      %7515 = vmatmul.mubr.f32.gmra.mxu0 %v7362
      %v7516 = vpop.f32.mrf.mxu0
      %v7517 = vadd.f32 0.0, %v7516
      %v7518 = vpop.f32.mrf.mxu0
      %7519 = vmatprep.mubr.f32.mxu0 0.0
      %7520 = vmatmul.mubr.f32.gmra.mxu0 %v7363
      %v7521 = vpop.f32.mrf.mxu0
      %v7522 = vadd.f32 0.0, %v7521
      %v7523 = vpop.f32.mrf.mxu0
      %7524 = vmatprep.mubr.f32.mxu0 0.0
      %7525 = vmatmul.mubr.f32.gmra.mxu0 %v7364
      %v7526 = vpop.f32.mrf.mxu0
      %v7527 = vadd.f32 0.0, %v7526
      %v7528 = vpop.f32.mrf.mxu0
      %7529 = vmatprep.mubr.f32.mxu0 0.0
      %7530 = vmatmul.mubr.f32.gmra.mxu0 %v7365
      %v7531 = vpop.f32.mrf.mxu0
      %v7532 = vadd.f32 0.0, %v7531
      %v7533 = vpop.f32.mrf.mxu0
      %7534 = vmatprep.mubr.f32.mxu0 0.0
      %7535 = vmatmul.mubr.f32.gmra.mxu0 %v7366
      %v7536 = vpop.f32.mrf.mxu0
      %v7537 = vadd.f32 0.0, %v7536
      %v7538 = vpop.f32.mrf.mxu0
      %7539 = vmatprep.mubr.f32.mxu0 0.0
      %7540 = vmatmul.mubr.f32.gmra.mxu0 %v7367
      %v7541 = vpop.f32.mrf.mxu0
      %v7542 = vadd.f32 0.0, %v7541
      %v7543 = vpop.f32.mrf.mxu0
      %7544 = vmatprep.mubr.f32.mxu0 0.0
      %7545 = vmatmul.mubr.f32.gmra.mxu0 %v7368
      %v7546 = vpop.f32.mrf.mxu0
      %v7547 = vadd.f32 0.0, %v7546
      %v7548 = vpop.f32.mrf.mxu0
      %7549 = vmatprep.mubr.f32.mxu0 0.0
      %7550 = vmatmul.mubr.f32.gmra.mxu0 %v7369
      %v7551 = vpop.f32.mrf.mxu0
      %v7552 = vadd.f32 0.0, %v7551
      %v7553 = vpop.f32.mrf.mxu0
      %7554 = vmatprep.mubr.f32.mxu0 0.0
      %7555 = vmatmul.mubr.f32.gmra.mxu0 %v7370
      %v7556 = vpop.f32.mrf.mxu0
      %v7557 = vadd.f32 0.0, %v7556
      %v7558 = vpop.f32.mrf.mxu0
      %7559 = vmatprep.mubr.f32.mxu0 0.0
      %7560 = vmatmul.mubr.f32.gmra.mxu0 %v7371
      %v7561 = vpop.f32.mrf.mxu0
      %v7562 = vadd.f32 0.0, %v7561
      %v7563 = vpop.f32.mrf.mxu0
      %7564 = vmatprep.mubr.f32.mxu0 0.0
      %7565 = vmatmul.mubr.f32.gmra.mxu0 %v7372
      %v7566 = vpop.f32.mrf.mxu0
      %v7567 = vadd.f32 0.0, %v7566
      %v7568 = vpop.f32.mrf.mxu0
      %7569 = vmatprep.mubr.f32.mxu0 0.0
      %7570 = vmatmul.mubr.f32.gmra.mxu0 %v7373
      %v7571 = vpop.f32.mrf.mxu0
      %v7572 = vadd.f32 0.0, %v7571
      %v7573 = vpop.f32.mrf.mxu0
      %7574 = vmatprep.mubr.f32.mxu0 0.0
      %7575 = vmatmul.mubr.f32.gmra.mxu0 %v7374
      %v7576 = vpop.f32.mrf.mxu0
      %v7577 = vadd.f32 0.0, %v7576
      %v7578 = vpop.f32.mrf.mxu0
      %7579 = vmatprep.mubr.f32.mxu0 0.0
      %7580 = vmatmul.mubr.f32.gmra.mxu0 %v7375
      %v7581 = vpop.f32.mrf.mxu0
      %v7582 = vadd.f32 0.0, %v7581
      %v7583 = vpop.f32.mrf.mxu0
      %7584 = vmatprep.mubr.f32.mxu0 0.0
      %7585 = vmatmul.mubr.f32.gmra.mxu0 %v7376
      %v7586 = vpop.f32.mrf.mxu0
      %v7587 = vadd.f32 0.0, %v7586
      %v7588 = vpop.f32.mrf.mxu0
      %7589 = vmatprep.mubr.f32.mxu0 0.0
      %7590 = vmatmul.mubr.f32.gmra.mxu0 %v7377
      %v7591 = vpop.f32.mrf.mxu0
      %v7592 = vadd.f32 0.0, %v7591
      %v7593 = vpop.f32.mrf.mxu0
      %7594 = vmatprep.mubr.f32.mxu0 0.0
      %7595 = vmatmul.mubr.f32.gmra.mxu0 %v7378
      %v7596 = vpop.f32.mrf.mxu0
      %v7597 = vadd.f32 0.0, %v7596
      %v7598 = vpop.f32.mrf.mxu0
      %7599 = vmatprep.mubr.f32.mxu0 0.0
      %7600 = vmatmul.mubr.f32.gmra.mxu0 %v7379
      %v7601 = vpop.f32.mrf.mxu0
      %v7602 = vadd.f32 0.0, %v7601
      %v7603 = vpop.f32.mrf.mxu0
      %7604 = vmatprep.mubr.f32.mxu0 0.0
      %7605 = vmatmul.mubr.f32.gmra.mxu0 %v7380
      %v7606 = vpop.f32.mrf.mxu0
      %v7607 = vadd.f32 0.0, %v7606
      %v7608 = vpop.f32.mrf.mxu0
      %7609 = vmatprep.mubr.f32.mxu0 0.0
      %7610 = vmatmul.mubr.f32.gmra.mxu0 %v7381
      %v7611 = vpop.f32.mrf.mxu0
      %v7612 = vadd.f32 0.0, %v7611
      %v7613 = vpop.f32.mrf.mxu0
      %7614 = vmatprep.mubr.f32.mxu0 0.0
      %7615 = vmatmul.mubr.f32.gmra.mxu0 %v7382
      %v7616 = vpop.f32.mrf.mxu0
      %v7617 = vadd.f32 0.0, %v7616
      %v7618 = vpop.f32.mrf.mxu0
      %7619 = vmatprep.mubr.f32.mxu0 0.0
      %7620 = vmatmul.mubr.f32.gmra.mxu0 %v7383
      %v7621 = vpop.f32.mrf.mxu0
      %v7622 = vadd.f32 0.0, %v7621
      %v7623 = vpop.f32.mrf.mxu0
      %7624 = vdwg.mxu0
      %v7625 = vld [vmem:[%s170] sm:$0xff]
      %v7626 = vld [vmem:[%s170 + $0x8] sm:$0xff]
      %v7627 = vld [vmem:[%s170 + $0x10] sm:$0xff]
      %v7628 = vld [vmem:[%s170 + $0x18] sm:$0xff]
      %v7629 = vld [vmem:[%s170 + $0x20] sm:$0xff]
      %v7630 = vld [vmem:[%s170 + $0x28] sm:$0xff]
      %v7631 = vld [vmem:[%s170 + $0x30] sm:$0xff]
      %v7632 = vld [vmem:[%s170 + $0x38] sm:$0xff]
      %v7633 = vld [vmem:[%s170 + $0x40] sm:$0xff]
      %v7634 = vld [vmem:[%s170 + $0x48] sm:$0xff]
      %v7635 = vld [vmem:[%s170 + $0x50] sm:$0xff]
      %v7636 = vld [vmem:[%s170 + $0x58] sm:$0xff]
      %v7637 = vld [vmem:[%s170 + $0x60] sm:$0xff]
      %v7638 = vld [vmem:[%s170 + $0x68] sm:$0xff]
      %v7639 = vld [vmem:[%s170 + $0x70] sm:$0xff]
      %v7640 = vld [vmem:[%s170 + $0x78] sm:$0xff]
      %v7641 = vld [vmem:[%s170 + $0x80] sm:$0xff]
      %v7642 = vld [vmem:[%s170 + $0x88] sm:$0xff]
      %v7643 = vld [vmem:[%s170 + $0x90] sm:$0xff]
      %v7644 = vld [vmem:[%s170 + $0x98] sm:$0xff]
      %v7645 = vld [vmem:[%s170 + $0xa0] sm:$0xff]
      %v7646 = vld [vmem:[%s170 + $0xa8] sm:$0xff]
      %v7647 = vld [vmem:[%s170 + $0xb0] sm:$0xff]
      %v7648 = vld [vmem:[%s170 + $0xb8] sm:$0xff]
      %v7649 = vld [vmem:[%s170 + $0xc0] sm:$0xff]
      %v7650 = vld [vmem:[%s170 + $0xc8] sm:$0xff]
      %v7651 = vld [vmem:[%s170 + $0xd0] sm:$0xff]
      %v7652 = vld [vmem:[%s170 + $0xd8] sm:$0xff]
      %v7653 = vld [vmem:[%s170 + $0xe0] sm:$0xff]
      %v7654 = vld [vmem:[%s170 + $0xe8] sm:$0xff]
      %v7655 = vld [vmem:[%s170 + $0xf0] sm:$0xff]
      %v7656 = vld [vmem:[%s170 + $0xf8] sm:$0xff]
      %v7657 = vadd.f32 %v7625, %v7467
      %v7658 = vadd.f32 %v7626, %v7472
      %v7659 = vadd.f32 %v7627, %v7477
      %v7660 = vadd.f32 %v7628, %v7482
      %v7661 = vadd.f32 %v7629, %v7487
      %v7662 = vadd.f32 %v7630, %v7492
      %v7663 = vadd.f32 %v7631, %v7497
      %v7664 = vadd.f32 %v7632, %v7502
      %v7665 = vadd.f32 %v7633, %v7507
      %v7666 = vadd.f32 %v7634, %v7512
      %v7667 = vadd.f32 %v7635, %v7517
      %v7668 = vadd.f32 %v7636, %v7522
      %v7669 = vadd.f32 %v7637, %v7527
      %v7670 = vadd.f32 %v7638, %v7532
      %v7671 = vadd.f32 %v7639, %v7537
      %v7672 = vadd.f32 %v7640, %v7542
      %v7673 = vadd.f32 %v7641, %v7547
      %v7674 = vadd.f32 %v7642, %v7552
      %v7675 = vadd.f32 %v7643, %v7557
      %v7676 = vadd.f32 %v7644, %v7562
      %v7677 = vadd.f32 %v7645, %v7567
      %v7678 = vadd.f32 %v7646, %v7572
      %v7679 = vadd.f32 %v7647, %v7577
      %v7680 = vadd.f32 %v7648, %v7582
      %v7681 = vadd.f32 %v7649, %v7587
      %v7682 = vadd.f32 %v7650, %v7592
      %v7683 = vadd.f32 %v7651, %v7597
      %v7684 = vadd.f32 %v7652, %v7602
      %v7685 = vadd.f32 %v7653, %v7607
      %v7686 = vadd.f32 %v7654, %v7612
      %v7687 = vadd.f32 %v7655, %v7617
      %v7688 = vadd.f32 %v7656, %v7622
      %7689 = vst [vmem:[%s170] sm:$0xff] %v7657
      %7690 = vst [vmem:[%s170 + $0x8] sm:$0xff] %v7658
      %7691 = vst [vmem:[%s170 + $0x10] sm:$0xff] %v7659
      %7692 = vst [vmem:[%s170 + $0x18] sm:$0xff] %v7660
      %7693 = vst [vmem:[%s170 + $0x20] sm:$0xff] %v7661
      %7694 = vst [vmem:[%s170 + $0x28] sm:$0xff] %v7662
      %7695 = vst [vmem:[%s170 + $0x30] sm:$0xff] %v7663
      %7696 = vst [vmem:[%s170 + $0x38] sm:$0xff] %v7664
      %7697 = vst [vmem:[%s170 + $0x40] sm:$0xff] %v7665
      %7698 = vst [vmem:[%s170 + $0x48] sm:$0xff] %v7666
      %7699 = vst [vmem:[%s170 + $0x50] sm:$0xff] %v7667
      %7700 = vst [vmem:[%s170 + $0x58] sm:$0xff] %v7668
      %7701 = vst [vmem:[%s170 + $0x60] sm:$0xff] %v7669
      %7702 = vst [vmem:[%s170 + $0x68] sm:$0xff] %v7670
      %7703 = vst [vmem:[%s170 + $0x70] sm:$0xff] %v7671
      %7704 = vst [vmem:[%s170 + $0x78] sm:$0xff] %v7672
      %7705 = vst [vmem:[%s170 + $0x80] sm:$0xff] %v7673
      %7706 = vst [vmem:[%s170 + $0x88] sm:$0xff] %v7674
      %7707 = vst [vmem:[%s170 + $0x90] sm:$0xff] %v7675
      %7708 = vst [vmem:[%s170 + $0x98] sm:$0xff] %v7676
      %7709 = vst [vmem:[%s170 + $0xa0] sm:$0xff] %v7677
      %7710 = vst [vmem:[%s170 + $0xa8] sm:$0xff] %v7678
      %7711 = vst [vmem:[%s170 + $0xb0] sm:$0xff] %v7679
      %7712 = vst [vmem:[%s170 + $0xb8] sm:$0xff] %v7680
      %7713 = vst [vmem:[%s170 + $0xc0] sm:$0xff] %v7681
      %7714 = vst [vmem:[%s170 + $0xc8] sm:$0xff] %v7682
      %7715 = vst [vmem:[%s170 + $0xd0] sm:$0xff] %v7683
      %7716 = vst [vmem:[%s170 + $0xd8] sm:$0xff] %v7684
      %7717 = vst [vmem:[%s170 + $0xe0] sm:$0xff] %v7685
      %7718 = vst [vmem:[%s170 + $0xe8] sm:$0xff] %v7686
      %7719 = vst [vmem:[%s170 + $0xf0] sm:$0xff] %v7687
      %7720 = vst [vmem:[%s170 + $0xf8] sm:$0xff] %v7688
      %v7721 = vld [vmem:[%s170] sm:$0xff]
      %v7722 = vld [vmem:[%s170 + $0x8] sm:$0xff]
      %v7723 = vld [vmem:[%s170 + $0x10] sm:$0xff]
      %v7724 = vld [vmem:[%s170 + $0x18] sm:$0xff]
      %v7725 = vld [vmem:[%s170 + $0x20] sm:$0xff]
      %v7726 = vld [vmem:[%s170 + $0x28] sm:$0xff]
      %v7727 = vld [vmem:[%s170 + $0x30] sm:$0xff]
      %v7728 = vld [vmem:[%s170 + $0x38] sm:$0xff]
      %v7729 = vld [vmem:[%s170 + $0x40] sm:$0xff]
      %v7730 = vld [vmem:[%s170 + $0x48] sm:$0xff]
      %v7731 = vld [vmem:[%s170 + $0x50] sm:$0xff]
      %v7732 = vld [vmem:[%s170 + $0x58] sm:$0xff]
      %v7733 = vld [vmem:[%s170 + $0x60] sm:$0xff]
      %v7734 = vld [vmem:[%s170 + $0x68] sm:$0xff]
      %v7735 = vld [vmem:[%s170 + $0x70] sm:$0xff]
      %v7736 = vld [vmem:[%s170 + $0x78] sm:$0xff]
      %v7737 = vld [vmem:[%s170 + $0x80] sm:$0xff]
      %v7738 = vld [vmem:[%s170 + $0x88] sm:$0xff]
      %v7739 = vld [vmem:[%s170 + $0x90] sm:$0xff]
      %v7740 = vld [vmem:[%s170 + $0x98] sm:$0xff]
      %v7741 = vld [vmem:[%s170 + $0xa0] sm:$0xff]
      %v7742 = vld [vmem:[%s170 + $0xa8] sm:$0xff]
      %v7743 = vld [vmem:[%s170 + $0xb0] sm:$0xff]
      %v7744 = vld [vmem:[%s170 + $0xb8] sm:$0xff]
      %v7745 = vld [vmem:[%s170 + $0xc0] sm:$0xff]
      %v7746 = vld [vmem:[%s170 + $0xc8] sm:$0xff]
      %v7747 = vld [vmem:[%s170 + $0xd0] sm:$0xff]
      %v7748 = vld [vmem:[%s170 + $0xd8] sm:$0xff]
      %v7749 = vld [vmem:[%s170 + $0xe0] sm:$0xff]
      %v7750 = vld [vmem:[%s170 + $0xe8] sm:$0xff]
      %v7751 = vld [vmem:[%s170 + $0xf0] sm:$0xff]
      %v7752 = vld [vmem:[%s170 + $0xf8] sm:$0xff]
      %v7753 = vmax.f32 %v7721, 0.0
      %v7754 = vmax.f32 %v7722, 0.0
      %v7755 = vmax.f32 %v7723, 0.0
      %v7756 = vmax.f32 %v7724, 0.0
      %v7757 = vmax.f32 %v7725, 0.0
      %v7758 = vmax.f32 %v7726, 0.0
      %v7759 = vmax.f32 %v7727, 0.0
      %v7760 = vmax.f32 %v7728, 0.0
      %v7761 = vmax.f32 %v7729, 0.0
      %v7762 = vmax.f32 %v7730, 0.0
      %v7763 = vmax.f32 %v7731, 0.0
      %v7764 = vmax.f32 %v7732, 0.0
      %v7765 = vmax.f32 %v7733, 0.0
      %v7766 = vmax.f32 %v7734, 0.0
      %v7767 = vmax.f32 %v7735, 0.0
      %v7768 = vmax.f32 %v7736, 0.0
      %v7769 = vmax.f32 %v7737, 0.0
      %v7770 = vmax.f32 %v7738, 0.0
      %v7771 = vmax.f32 %v7739, 0.0
      %v7772 = vmax.f32 %v7740, 0.0
      %v7773 = vmax.f32 %v7741, 0.0
      %v7774 = vmax.f32 %v7742, 0.0
      %v7775 = vmax.f32 %v7743, 0.0
      %v7776 = vmax.f32 %v7744, 0.0
      %v7777 = vmax.f32 %v7745, 0.0
      %v7778 = vmax.f32 %v7746, 0.0
      %v7779 = vmax.f32 %v7747, 0.0
      %v7780 = vmax.f32 %v7748, 0.0
      %v7781 = vmax.f32 %v7749, 0.0
      %v7782 = vmax.f32 %v7750, 0.0
      %v7783 = vmax.f32 %v7751, 0.0
      %v7784 = vmax.f32 %v7752, 0.0
      %7785 = vst [vmem:[%s170] sm:$0xff] %v7753
      %7786 = vst [vmem:[%s170 + $0x8] sm:$0xff] %v7754
      %7787 = vst [vmem:[%s170 + $0x10] sm:$0xff] %v7755
      %7788 = vst [vmem:[%s170 + $0x18] sm:$0xff] %v7756
      %7789 = vst [vmem:[%s170 + $0x20] sm:$0xff] %v7757
      %7790 = vst [vmem:[%s170 + $0x28] sm:$0xff] %v7758
      %7791 = vst [vmem:[%s170 + $0x30] sm:$0xff] %v7759
      %7792 = vst [vmem:[%s170 + $0x38] sm:$0xff] %v7760
      %7793 = vst [vmem:[%s170 + $0x40] sm:$0xff] %v7761
      %7794 = vst [vmem:[%s170 + $0x48] sm:$0xff] %v7762
      %7795 = vst [vmem:[%s170 + $0x50] sm:$0xff] %v7763
      %7796 = vst [vmem:[%s170 + $0x58] sm:$0xff] %v7764
      %7797 = vst [vmem:[%s170 + $0x60] sm:$0xff] %v7765
      %7798 = vst [vmem:[%s170 + $0x68] sm:$0xff] %v7766
      %7799 = vst [vmem:[%s170 + $0x70] sm:$0xff] %v7767
      %7800 = vst [vmem:[%s170 + $0x78] sm:$0xff] %v7768
      %7801 = vst [vmem:[%s170 + $0x80] sm:$0xff] %v7769
      %7802 = vst [vmem:[%s170 + $0x88] sm:$0xff] %v7770
      %7803 = vst [vmem:[%s170 + $0x90] sm:$0xff] %v7771
      %7804 = vst [vmem:[%s170 + $0x98] sm:$0xff] %v7772
      %7805 = vst [vmem:[%s170 + $0xa0] sm:$0xff] %v7773
      %7806 = vst [vmem:[%s170 + $0xa8] sm:$0xff] %v7774
      %7807 = vst [vmem:[%s170 + $0xb0] sm:$0xff] %v7775
      %7808 = vst [vmem:[%s170 + $0xb8] sm:$0xff] %v7776
      %7809 = vst [vmem:[%s170 + $0xc0] sm:$0xff] %v7777
      %7810 = vst [vmem:[%s170 + $0xc8] sm:$0xff] %v7778
      %7811 = vst [vmem:[%s170 + $0xd0] sm:$0xff] %v7779
      %7812 = vst [vmem:[%s170 + $0xd8] sm:$0xff] %v7780
      %7813 = vst [vmem:[%s170 + $0xe0] sm:$0xff] %v7781
      %7814 = vst [vmem:[%s170 + $0xe8] sm:$0xff] %v7782
      %7815 = vst [vmem:[%s170 + $0xf0] sm:$0xff] %v7783
      %7816 = vst [vmem:[%s170 + $0xf8] sm:$0xff] %v7784
      %p7817 = scmp.lt.s32.totalorder %s14, 1
      %s7818 = scalar_select %p7817, %s14, 1
      %s7819 = smul.addr %s7818, 32
      %s7820 = smul.addr %s7819, 8
      %s7821 = scalar_lea.vmem %s3, %s7820
      // Predicated region
      $region33: #{residual_stack_forward.1} parent=31 // pred_check
        %p7822 = pneg %p100
      $region34: #{residual_stack_forward.1} parent=31 // pred_check_branch
        %7824 = sbr.rel (%p7822) target = $region36
      $region35: #{residual_stack_forward.1} parent=31 // pred_region
        _
      $region36: #{residual_stack_forward.1} parent=31 // pred_fallthru
        _
    $region32: #{residual_stack_forward.1} parent=5 // pred_fallthru
      _
    %p7825 = scmp.le.s32.totalorder 2, %s9
    // Predicated region
    $region37: #{residual_stack_forward.1} parent=5 // pred_check
      %p7826 = pneg %p7825
    $region38: #{residual_stack_forward.1} parent=5 // pred_check_branch
      %7828 = sbr.rel (%p7826) target = $region40
    $region39: #{residual_stack_forward.1} parent=5 // pred_region
      %s7829 = ssub.s32 %s9, 2
      // Predicated region
      $region41: #{residual_stack_forward.1} parent=39 // pred_check
        %p7830 = pneg %p106
      $region42: #{residual_stack_forward.1} parent=39 // pred_check_branch
        %7832 = sbr.rel (%p7830) target = $region44
      $region43: #{residual_stack_forward.1} parent=39 // pred_region
        %p7833 = scmp.lt.s32.totalorder %s15, 1
        %s7834 = scalar_select %p7833, %s15, 1
        %s7835 = smul.addr %s7834, 32
        %s7836 = smul.addr %s7835, 8
        %s7837 = scalar_lea.vmem %s3, %s7836
      $region44: #{residual_stack_forward.1} parent=39 // pred_fallthru
        _
    $region40: #{residual_stack_forward.1} parent=5 // pred_fallthru
      _
  $region6: #{residual_stack_forward.1} parent=0 // loop_footer
    %s13 = sadd.s32 1, %s9
  $region7: #{residual_stack_forward.1} parent=0 // loop_footer_branch
    %8 = sbr.rel target = $region3
  $region8: #{residual_stack_forward.1} parent=0 // loop_exit
    _

</llo_original>
